<compile_context>
chip_gen: v7x
topology: tpu7x:2x2x1
jax: 0.10.0
libtpu: 0.0.40
codegen_flags: <defaults>
</compile_context>

<pallas_src>
import functools
from math import sqrt

import numpy as np
import jax
import jax.numpy as jnp
from jax import lax
from jax.experimental import pallas as pl
from jax.experimental.pallas import tpu as pltpu

NEG_SLOPE = 0.01                  # nn.LeakyReLU default
IN_EPS = 1e-5                     # nn.InstanceNorm1d default
VMEM_LIMIT = 32 * 1024 * 1024     # explicit scoped-VMEM budget (safe on v5e/v6e/v7x)


# ----------------------------------------------------------------------------
# Fused conv1..conv11 stack: one kernel, one grid step per sample
# ----------------------------------------------------------------------------
def _decoder_stack_kernel(img_ref, w1_ref, w2_ref, wa_ref, wb_ref,
                          b_ref, g_ref, bt_ref, o_ref):
    c_in = img_ref.shape[1]
    hidden = o_ref.shape[1]
    L = img_ref.shape[2]
    n_mid = wa_ref.shape[0]                      # conv3..conv11

    dot = functools.partial(jnp.dot, preferred_element_type=jnp.float32)

    # Boundary masks for the k=3 / pad=1 shifts, built ONCE and reused everywhere.
    cmax = max(c_in, hidden)
    lane = lax.broadcasted_iota(jnp.int32, (cmax, L), 1)
    has_left = lane >= 1                         # position l has a valid left neighbour
    has_right = lane <= L - 2                    # position l has a valid right neighbour

    def shifts(v):
        c = v.shape[0]
        vm1 = jnp.where(has_left[:c], pltpu.roll(v, shift=1, axis=1), 0.0)       # v[:, l-1]
        vp1 = jnp.where(has_right[:c], pltpu.roll(v, shift=L - 1, axis=1), 0.0)  # v[:, l+1]
        return vm1, vp1

    def stack3(v):
        # Stacked operand [x(l-1); x(l); x(l+1)] -> one MXU matmul per source tensor.
        vm1, vp1 = shifts(v)
        return jnp.concatenate([vm1, v, vp1], axis=0).astype(jnp.bfloat16)

    def post(y, idx):
        # LeakyReLU + InstanceNorm1d(affine=True); statistics in f32.
        y = jnp.where(y > 0, y, NEG_SLOPE * y)
        mean = jnp.mean(y, axis=1, keepdims=True)
        var = jnp.mean((y - mean) ** 2, axis=1, keepdims=True)
        y = (y - mean) * lax.rsqrt(var + IN_EPS)
        return y * g_ref[idx] + bt_ref[idx]

    # conv1: tiny contraction (K = c_in), runs once -> keep the simple 3-tap f32 dots.
    img = img_ref[0]                                             # (c_in, L)
    im1, ip1 = shifts(img)
    y = (dot(w1_ref[0], im1) + dot(w1_ref[1], img) + dot(w1_ref[2], ip1) + b_ref[0])
    x = post(y, 0)                                               # (hidden, L)

    x3 = stack3(x)                                               # (3*hidden, L), reused 10x
    x_prev = post(dot(w2_ref[...], x3) + b_ref[1], 1)            # x_1 = conv2(x)

    for j in range(n_mid):                                       # conv3 .. conv11
        p3 = stack3(x_prev)
        y = dot(wa_ref[j], x3) + dot(wb_ref[j], p3) + b_ref[2 + j]
        x_prev = post(y, 2 + j)

    o_ref[0] = x_prev                                            # x_10, lane-dense (L >= 128)


def _run_stack(image, w1t, w2f, waf, wbf, b, g, bt):
    n, c_in, L = image.shape
    hidden = w2f.shape[0]
    n_mid = waf.shape[0]
    return pl.pallas_call(
        _decoder_stack_kernel,
        out_shape=jax.ShapeDtypeStruct((n, hidden, L), jnp.float32),
        grid_spec=pltpu.PrefetchScalarGridSpec(
            num_scalar_prefetch=0,
            grid=(n,),
            in_specs=[
                pl.BlockSpec((1, c_in, L), lambda i: (i, 0, 0)),
                pl.BlockSpec((3, hidden, c_in), lambda i: (0, 0, 0)),
                pl.BlockSpec((hidden, 3 * hidden), lambda i: (0, 0)),
                pl.BlockSpec((n_mid, hidden, 3 * hidden), lambda i: (0, 0, 0)),
                pl.BlockSpec((n_mid, hidden, 3 * hidden), lambda i: (0, 0, 0)),
                pl.BlockSpec((n_mid + 2, hidden, 1), lambda i: (0, 0, 0)),
                pl.BlockSpec((n_mid + 2, hidden, 1), lambda i: (0, 0, 0)),
                pl.BlockSpec((n_mid + 2, hidden, 1), lambda i: (0, 0, 0)),
            ],
            out_specs=pl.BlockSpec((1, hidden, L), lambda i: (i, 0, 0)),
        ),
        compiler_params=pltpu.CompilerParams(
            dimension_semantics=("parallel",),       # v7x: one sample per TensorCore
            vmem_limit_bytes=VMEM_LIMIT,
        ),
    )(image, w1t, w2f, waf, wbf, b, g, bt)


# ----------------------------------------------------------------------------
# Conv2d heads: dense matmuls over UNFOLDED WEIGHTS (no activation im2col)
# ----------------------------------------------------------------------------
def _heads_kernel(x_ref, w1_ref, b1_ref, w2_ref, b2_ref, o_ref):
    y1 = jnp.dot(x_ref[...], w1_ref[...], preferred_element_type=jnp.float32) + b1_ref[...]
    o_ref[...] = jnp.dot(y1, w2_ref[...], preferred_element_type=jnp.float32) + b2_ref[...]


def _run_heads(x_flat, wh1, b1, wh2, b2):
    n, d_in = x_flat.shape
    p1 = wh1.shape[1]
    p2 = wh2.shape[1]
    return pl.pallas_call(
        _heads_kernel,
        out_shape=jax.ShapeDtypeStruct((n, p2), jnp.float32),
        grid_spec=pltpu.PrefetchScalarGridSpec(
            num_scalar_prefetch=0,
            grid=(1,),
            in_specs=[
                pl.BlockSpec((n, d_in), lambda i: (0, 0)),
                pl.BlockSpec((d_in, p1), lambda i: (0, 0)),
                pl.BlockSpec((1, 1), lambda i: (0, 0)),
                pl.BlockSpec((p1, p2), lambda i: (0, 0)),
                pl.BlockSpec((1, 1), lambda i: (0, 0)),
            ],
            out_specs=pl.BlockSpec((n, p2), lambda i: (0, 0)),
        ),
        compiler_params=pltpu.CompilerParams(vmem_limit_bytes=VMEM_LIMIT),
    )(x_flat, wh1, b1, wh2, b2)


# ----------------------------------------------------------------------------
# Parameter preprocessing (weight-only, done in XLA outside the kernels)
# ----------------------------------------------------------------------------
def _flat3(w):
    # (C_out, C_in, 3) -> (C_out, 3*C_in); column order k*C_in + c matches the
    # stacked operand [x(l-1); x(l); x(l+1)].
    c_out, c_in, k = w.shape
    return jnp.transpose(w, (0, 2, 1)).reshape(c_out, k * c_in)


def _prep_stack_params(params):
    hidden = params["conv1"]["w"].shape[0]
    w1t = jnp.transpose(params["conv1"]["w"], (2, 0, 1))                       # (3, hidden, c_in) f32
    w2f = _flat3(params["conv2"]["w"]).astype(jnp.bfloat16)                    # (hidden, 3*hidden)
    waf = jnp.stack([_flat3(params[f"conv{i}"]["w"][:, :hidden, :])            # applied to x
                     for i in range(3, 12)]).astype(jnp.bfloat16)
    wbf = jnp.stack([_flat3(params[f"conv{i}"]["w"][:, hidden:, :])            # applied to x_prev
                     for i in range(3, 12)]).astype(jnp.bfloat16)
    b = jnp.stack([params[f"conv{i}"]["b"] for i in range(1, 12)])[:, :, None]
    g = jnp.stack([params[f"conv{i}"]["gamma"] for i in range(1, 12)])[:, :, None]
    bt = jnp.stack([params[f"conv{i}"]["beta"] for i in range(1, 12)])[:, :, None]
    return w1t, w2f, waf, wbf, b, g, bt


def _unfold_conv2d_weight(w, h_in, w_in, stride, pad):
    """nn.Conv2d(C, 1, k, stride, pad) weight -> dense (C*H*W, Ho*Wo) matrix so that
    out.flatten() = x.flatten() @ dense + b (weight unfolding; no activation im2col)."""
    c, k = w.shape[1], w.shape[2]
    h_out = (h_in + 2 * pad - k) // stride + 1
    w_out = (w_in + 2 * pad - k) // stride + 1
    kh = jnp.arange(h_in)[:, None] - stride * jnp.arange(h_out)[None, :] + pad   # (H, Ho)
    kw = jnp.arange(w_in)[:, None] - stride * jnp.arange(w_out)[None, :] + pad   # (W, Wo)
    vh = (kh >= 0) & (kh < k)
    vw = (kw >= 0) & (kw < k)
    khc = jnp.clip(kh, 0, k - 1)
    kwc = jnp.clip(kw, 0, k - 1)
    dense = w[0][:, khc[:, None, :, None], kwc[None, :, None, :]]                # (C, H, W, Ho, Wo)
    valid = (vh[:, None, :, None] & vw[None, :, None, :]).astype(w.dtype)
    dense = dense * valid
    return dense.reshape(c * h_in * w_in, h_out * w_out), h_out, w_out


# ----------------------------------------------------------------------------
# Full forward
# ----------------------------------------------------------------------------
def redundant_decoder_forward(image, params):
    n, c_in, L = image.shape
    hidden = params["conv1"]["w"].shape[0]
    H = int(round(sqrt(L)))
    assert H * H == L, "sequence length must be a perfect square (L = H*H)"

    # Fused conv1..conv11 stack (one pallas_call, VMEM-resident activations).
    w1t, w2f, waf, wbf, b, g, bt = _prep_stack_params(params)
    x10 = _run_stack(image, w1t, w2f, waf, wbf, b, g, bt)          # (N, hidden, L)

    # Conv2d heads: unfold weights once, then two dense matmuls in one tiny kernel.
    wh1, ho1, wo1 = _unfold_conv2d_weight(params["conv_out"]["w"], H, H, stride=2, pad=7)
    wh2, ho2, wo2 = _unfold_conv2d_weight(params["conv_out2"]["w"], ho1, wo1, stride=1, pad=4)
    b1 = params["conv_out"]["b"].reshape(1, 1)
    b2 = params["conv_out2"]["b"].reshape(1, 1)
    x10_flat = x10.reshape(n, hidden * L)                          # contiguous -> free reshape
    out = _run_heads(x10_flat, wh1, b1, wh2, b2)                   # (N, Ho2*Wo2)
    return out.reshape(n, 1, ho2, wo2)


# ----------------------------------------------------------------------------
# Parameters (deterministic, synthetic)
# ----------------------------------------------------------------------------
def init_params(key, hidden, channels):
    keys = iter(jax.random.split(key, 16))

    def conv1d_p(c_in, c_out):
        kw, kb, kg, kbt = jax.random.split(next(keys), 4)
        s = 1.0 / sqrt(c_in * 3)
        return dict(
            w=jax.random.uniform(kw, (c_out, c_in, 3), jnp.float32, -s, s),
            b=jax.random.uniform(kb, (c_out,), jnp.float32, -s, s),
            gamma=1.0 + 0.1 * jax.random.normal(kg, (c_out,), jnp.float32),
            beta=0.1 * jax.random.normal(kbt, (c_out,), jnp.float32),
        )

    params = {"conv1": conv1d_p(channels, hidden), "conv2": conv1d_p(hidden, hidden)}
    for i in range(3, 12):
        params[f"conv{i}"] = conv1d_p(hidden * 2, hidden)

    kw, kb = jax.random.split(next(keys))
    s = 1.0 / sqrt(hidden * 15 * 15)
    params["conv_out"] = dict(
        w=jax.random.uniform(kw, (1, hidden, 15, 15), jnp.float32, -s, s),
        b=jax.random.uniform(kb, (1,), jnp.float32, -s, s))
    kw, kb = jax.random.split(next(keys))
    s = 1.0 / sqrt(9 * 9)
    params["conv_out2"] = dict(
        w=jax.random.uniform(kw, (1, 1, 9, 9), jnp.float32, -s, s),
        b=jax.random.uniform(kb, (1,), jnp.float32, -s, s))
    return params


# ----------------------------------------------------------------------------
# Pure-JAX reference (f32, HIGHEST precision) for correctness check
# ----------------------------------------------------------------------------
def reference_forward(image, params):
    def blk_ref(name, xin):
        p = params[name]
        y = lax.conv_general_dilated(xin, p["w"], (1,), [(1, 1)],
                                     dimension_numbers=("NCH", "OIH", "NCH"),
                                     precision=lax.Precision.HIGHEST)
        y = y + p["b"][None, :, None]
        y = jnp.where(y > 0, y, NEG_SLOPE * y)
        m = jnp.mean(y, axis=2, keepdims=True)
        v = jnp.mean((y - m) ** 2, axis=2, keepdims=True)
        y = (y - m) / jnp.sqrt(v + IN_EPS)
        return y * p["gamma"][None, :, None] + p["beta"][None, :, None]

    x = blk_ref("conv1", image)
    x_1 = blk_ref("conv2", x)
    x_prev = blk_ref("conv3", jnp.concatenate([x, x_1], axis=1))
    for i in range(4, 12):
        x_prev = blk_ref(f"conv{i}", jnp.concatenate([x, x_prev], axis=1))
    n, c, L = x_prev.shape
    h = int(sqrt(L))
    x4 = x_prev.reshape(n, c, h, h)

    def c2d(xin, w, b, stride, pad):
        y = lax.conv_general_dilated(xin, w, (stride, stride),
                                     [(pad, pad), (pad, pad)],
                                     dimension_numbers=("NCHW", "OIHW", "NCHW"),
                                     precision=lax.Precision.HIGHEST)
        return y + b[None, :, None, None]

    y = c2d(x4, params["conv_out"]["w"], params["conv_out"]["b"], 2, 7)
    y = c2d(y, params["conv_out2"]["w"], params["conv_out2"]["b"], 1, 4)
    return y


if __name__ == "__main__":
    key = jax.random.PRNGKey(0)
    hidden, channels = 32, 4
    N, L = 2, 256                        # L must be a perfect square; H = 16
    k_img, k_par = jax.random.split(key)
    image = jax.random.normal(k_img, (N, channels, L), jnp.float32)
    params = init_params(k_par, hidden, channels)

    out = jax.block_until_ready(jax.jit(redundant_decoder_forward)(image, params))
    ref = jax.block_until_ready(reference_forward(image, params))

    assert out.shape == (N, 1, 8, 8), out.shape
    # The fused stack uses bf16 MXU operands (f32 accumulation) per the perf review;
    # tolerance accounts for bf16-level error vs the f32 HIGHEST-precision reference.
    np.testing.assert_allclose(np.asarray(out), np.asarray(ref), rtol=5e-2, atol=5e-2)
    print("KERNEL_OK")
</pallas_src>

<mosaic_0001>
module attributes {stable_mosaic.version = 11 : i64} {
  func.func @_decoder_stack_kernel(%arg0: i32, %arg1: memref<1x4x256xf32, #tpu.memory_space<vmem>>, %arg2: memref<3x32x4xf32, #tpu.memory_space<vmem>>, %arg3: memref<32x96xbf16, #tpu.memory_space<vmem>>, %arg4: memref<9x32x96xbf16, #tpu.memory_space<vmem>>, %arg5: memref<9x32x96xbf16, #tpu.memory_space<vmem>>, %arg6: memref<11x32x1xf32, #tpu.memory_space<vmem>>, %arg7: memref<11x32x1xf32, #tpu.memory_space<vmem>>, %arg8: memref<11x32x1xf32, #tpu.memory_space<vmem>>, %arg9: memref<1x32x256xf32, #tpu.memory_space<vmem>>) attributes {dimension_semantics = [#tpu.dimension_semantics<parallel>], iteration_bounds = array<i64: 2>, scalar_prefetch = 0 : i64, scratch_operands = 0 : i64, tpu.core_type = #tpu.core_type<tc>, window_params = [{transform_indices = @transform_0, window_bounds = array<i64: 1, 4, 256>}, {pipeline_mode = #tpu.pipeline_mode<synchronous>, transform_indices = @transform_1, window_bounds = array<i64: 3, 32, 4>}, {pipeline_mode = #tpu.pipeline_mode<synchronous>, transform_indices = @transform_2, window_bounds = array<i64: 32, 96>}, {pipeline_mode = #tpu.pipeline_mode<synchronous>, transform_indices = @transform_3, window_bounds = array<i64: 9, 32, 96>}, {pipeline_mode = #tpu.pipeline_mode<synchronous>, transform_indices = @transform_4, window_bounds = array<i64: 9, 32, 96>}, {pipeline_mode = #tpu.pipeline_mode<synchronous>, transform_indices = @transform_5, window_bounds = array<i64: 11, 32, 1>}, {pipeline_mode = #tpu.pipeline_mode<synchronous>, transform_indices = @transform_6, window_bounds = array<i64: 11, 32, 1>}, {pipeline_mode = #tpu.pipeline_mode<synchronous>, transform_indices = @transform_7, window_bounds = array<i64: 11, 32, 1>}, {transform_indices = @transform_8, window_bounds = array<i64: 1, 32, 256>}]} {
    %0 = tpu.iota {dimensions = array<i32: 1>} : vector<32x256xi32>
    %c1_i32 = arith.constant 1 : i32
    %1 = vector.broadcast %c1_i32 : i32 to vector<32x256xi32>
    %2 = arith.cmpi sge, %0, %1 : vector<32x256xi32>
    %c254_i32 = arith.constant 254 : i32
    %3 = vector.broadcast %c254_i32 : i32 to vector<32x256xi32>
    %4 = arith.cmpi sle, %0, %3 : vector<32x256xi32>
    %c0 = arith.constant 0 : index
    %c0_0 = arith.constant 0 : index
    %c0_1 = arith.constant 0 : index
    %5 = vector.load %arg1[%c0, %c0_0, %c0_1] : memref<1x4x256xf32, #tpu.memory_space<vmem>>, vector<1x4x256xf32>
    %6 = vector.shape_cast %5 : vector<1x4x256xf32> to vector<4x256xf32>
    %7 = vector.extract_strided_slice %2 {offsets = [0, 0], sizes = [4, 256], strides = [1, 1]} : vector<32x256xi1> to vector<4x256xi1>
    %c1_i32_2 = arith.constant 1 : i32
    %8 = tpu.dynamic_rotate %6 by %c1_i32_2 dim 1 : vector<4x256xf32>, i32 -> vector<4x256xf32>
    %cst = arith.constant 0.000000e+00 : f32
    %9 = vector.broadcast %cst : f32 to vector<4x256xf32>
    %10 = arith.select %7, %8, %9 : vector<4x256xi1>, vector<4x256xf32>
    %11 = vector.extract_strided_slice %4 {offsets = [0, 0], sizes = [4, 256], strides = [1, 1]} : vector<32x256xi1> to vector<4x256xi1>
    %c255_i32 = arith.constant 255 : i32
    %12 = tpu.dynamic_rotate %6 by %c255_i32 dim 1 : vector<4x256xf32>, i32 -> vector<4x256xf32>
    %cst_3 = arith.constant 0.000000e+00 : f32
    %13 = vector.broadcast %cst_3 : f32 to vector<4x256xf32>
    %14 = arith.select %11, %12, %13 : vector<4x256xi1>, vector<4x256xf32>
    %c0_4 = arith.constant 0 : index
    %c0_5 = arith.constant 0 : index
    %c0_6 = arith.constant 0 : index
    %15 = vector.load %arg2[%c0_4, %c0_5, %c0_6] : memref<3x32x4xf32, #tpu.memory_space<vmem>>, vector<1x32x4xf32>
    %16 = vector.shape_cast %15 : vector<1x32x4xf32> to vector<32x4xf32>
    %cst_7 = arith.constant dense<0.000000e+00> : vector<32x256xf32>
    %17 = tpu.matmul %16, %10, %cst_7 {dimension_numbers = #tpu.dot_dimension_numbers<[1], [0], [0], [1], [0, 0, 1, 1], [], []>} : vector<32x4xf32>, vector<4x256xf32>, vector<32x256xf32> -> vector<32x256xf32>
    %c1 = arith.constant 1 : index
    %c0_8 = arith.constant 0 : index
    %c0_9 = arith.constant 0 : index
    %18 = vector.load %arg2[%c1, %c0_8, %c0_9] : memref<3x32x4xf32, #tpu.memory_space<vmem>>, vector<1x32x4xf32>
    %19 = vector.shape_cast %18 : vector<1x32x4xf32> to vector<32x4xf32>
    %cst_10 = arith.constant dense<0.000000e+00> : vector<32x256xf32>
    %20 = tpu.matmul %19, %6, %cst_10 {dimension_numbers = #tpu.dot_dimension_numbers<[1], [0], [0], [1], [0, 0, 1, 1], [], []>} : vector<32x4xf32>, vector<4x256xf32>, vector<32x256xf32> -> vector<32x256xf32>
    %21 = arith.addf %17, %20 : vector<32x256xf32>
    %c2 = arith.constant 2 : index
    %c0_11 = arith.constant 0 : index
    %c0_12 = arith.constant 0 : index
    %22 = vector.load %arg2[%c2, %c0_11, %c0_12] : memref<3x32x4xf32, #tpu.memory_space<vmem>>, vector<1x32x4xf32>
    %23 = vector.shape_cast %22 : vector<1x32x4xf32> to vector<32x4xf32>
    %cst_13 = arith.constant dense<0.000000e+00> : vector<32x256xf32>
    %24 = tpu.matmul %23, %14, %cst_13 {dimension_numbers = #tpu.dot_dimension_numbers<[1], [0], [0], [1], [0, 0, 1, 1], [], []>} : vector<32x4xf32>, vector<4x256xf32>, vector<32x256xf32> -> vector<32x256xf32>
    %25 = arith.addf %21, %24 : vector<32x256xf32>
    %c0_14 = arith.constant 0 : index
    %c0_15 = arith.constant 0 : index
    %c0_16 = arith.constant 0 : index
    %26 = vector.load %arg6[%c0_14, %c0_15, %c0_16] : memref<11x32x1xf32, #tpu.memory_space<vmem>>, vector<1x32x1xf32>
    %27 = vector.shape_cast %26 : vector<1x32x1xf32> to vector<32x1xf32>
    %28 = vector.broadcast %27 : vector<32x1xf32> to vector<32x256xf32>
    %29 = arith.addf %25, %28 : vector<32x256xf32>
    %cst_17 = arith.constant 0.000000e+00 : f32
    %30 = vector.broadcast %cst_17 : f32 to vector<32x256xf32>
    %31 = arith.cmpf ogt, %29, %30 : vector<32x256xf32>
    %cst_18 = arith.constant 0.00999999977 : f32
    %32 = vector.broadcast %cst_18 : f32 to vector<32x256xf32>
    %33 = arith.mulf %32, %29 : vector<32x256xf32>
    %34 = arith.select %31, %29, %33 : vector<32x256xi1>, vector<32x256xf32>
    %cst_19 = arith.constant dense<0.000000e+00> : vector<32xf32>
    %35 = vector.multi_reduction <add>, %34, %cst_19 [1] : vector<32x256xf32> to vector<32xf32>
    %36 = vector.shape_cast %35 : vector<32xf32> to vector<32x1xf32>
    %cst_20 = arith.constant 2.560000e+02 : f32
    %37 = vector.broadcast %cst_20 : f32 to vector<32x1xf32>
    %38 = arith.divf %36, %37 : vector<32x1xf32>
    %39 = vector.broadcast %38 : vector<32x1xf32> to vector<32x256xf32>
    %40 = arith.subf %34, %39 : vector<32x256xf32>
    %41 = arith.mulf %40, %40 : vector<32x256xf32>
    %cst_21 = arith.constant dense<0.000000e+00> : vector<32xf32>
    %42 = vector.multi_reduction <add>, %41, %cst_21 [1] : vector<32x256xf32> to vector<32xf32>
    %43 = vector.shape_cast %42 : vector<32xf32> to vector<32x1xf32>
    %cst_22 = arith.constant 2.560000e+02 : f32
    %44 = vector.broadcast %cst_22 : f32 to vector<32x1xf32>
    %45 = arith.divf %43, %44 : vector<32x1xf32>
    %46 = vector.broadcast %38 : vector<32x1xf32> to vector<32x256xf32>
    %47 = arith.subf %34, %46 : vector<32x256xf32>
    %cst_23 = arith.constant 9.99999974E-6 : f32
    %48 = vector.broadcast %cst_23 : f32 to vector<32x1xf32>
    %49 = arith.addf %45, %48 : vector<32x1xf32>
    %50 = math.rsqrt %49 : vector<32x1xf32>
    %51 = vector.broadcast %50 : vector<32x1xf32> to vector<32x256xf32>
    %52 = arith.mulf %47, %51 : vector<32x256xf32>
    %c0_24 = arith.constant 0 : index
    %c0_25 = arith.constant 0 : index
    %c0_26 = arith.constant 0 : index
    %53 = vector.load %arg7[%c0_24, %c0_25, %c0_26] : memref<11x32x1xf32, #tpu.memory_space<vmem>>, vector<1x32x1xf32>
    %54 = vector.shape_cast %53 : vector<1x32x1xf32> to vector<32x1xf32>
    %55 = vector.broadcast %54 : vector<32x1xf32> to vector<32x256xf32>
    %56 = arith.mulf %52, %55 : vector<32x256xf32>
    %c0_27 = arith.constant 0 : index
    %c0_28 = arith.constant 0 : index
    %c0_29 = arith.constant 0 : index
    %57 = vector.load %arg8[%c0_27, %c0_28, %c0_29] : memref<11x32x1xf32, #tpu.memory_space<vmem>>, vector<1x32x1xf32>
    %58 = vector.shape_cast %57 : vector<1x32x1xf32> to vector<32x1xf32>
    %59 = vector.broadcast %58 : vector<32x1xf32> to vector<32x256xf32>
    %60 = arith.addf %56, %59 : vector<32x256xf32>
    %c1_i32_30 = arith.constant 1 : i32
    %61 = tpu.dynamic_rotate %60 by %c1_i32_30 dim 1 : vector<32x256xf32>, i32 -> vector<32x256xf32>
    %cst_31 = arith.constant 0.000000e+00 : f32
    %62 = vector.broadcast %cst_31 : f32 to vector<32x256xf32>
    %63 = arith.select %2, %61, %62 : vector<32x256xi1>, vector<32x256xf32>
    %c255_i32_32 = arith.constant 255 : i32
    %64 = tpu.dynamic_rotate %60 by %c255_i32_32 dim 1 : vector<32x256xf32>, i32 -> vector<32x256xf32>
    %cst_33 = arith.constant 0.000000e+00 : f32
    %65 = vector.broadcast %cst_33 : f32 to vector<32x256xf32>
    %66 = arith.select %4, %64, %65 : vector<32x256xi1>, vector<32x256xf32>
    %67 = tpu.concatenate %63, %60, %66 in 0 : vector<32x256xf32>, vector<32x256xf32>, vector<32x256xf32> -> vector<96x256xf32>
    %68 = arith.truncf %67 : vector<96x256xf32> to vector<96x256xbf16>
    %c0_34 = arith.constant 0 : index
    %c0_35 = arith.constant 0 : index
    %69 = vector.load %arg3[%c0_34, %c0_35] : memref<32x96xbf16, #tpu.memory_space<vmem>>, vector<32x96xbf16>
    %cst_36 = arith.constant dense<0.000000e+00> : vector<32x256xf32>
    %70 = tpu.matmul %69, %68, %cst_36 {dimension_numbers = #tpu.dot_dimension_numbers<[1], [0], [0], [1], [0, 0, 1, 1], [], []>} : vector<32x96xbf16>, vector<96x256xbf16>, vector<32x256xf32> -> vector<32x256xf32>
    %c1_37 = arith.constant 1 : index
    %c0_38 = arith.constant 0 : index
    %c0_39 = arith.constant 0 : index
    %71 = vector.load %arg6[%c1_37, %c0_38, %c0_39] : memref<11x32x1xf32, #tpu.memory_space<vmem>>, vector<1x32x1xf32>
    %72 = vector.shape_cast %71 : vector<1x32x1xf32> to vector<32x1xf32>
    %73 = vector.broadcast %72 : vector<32x1xf32> to vector<32x256xf32>
    %74 = arith.addf %70, %73 : vector<32x256xf32>
    %cst_40 = arith.constant 0.000000e+00 : f32
    %75 = vector.broadcast %cst_40 : f32 to vector<32x256xf32>
    %76 = arith.cmpf ogt, %74, %75 : vector<32x256xf32>
    %cst_41 = arith.constant 0.00999999977 : f32
    %77 = vector.broadcast %cst_41 : f32 to vector<32x256xf32>
    %78 = arith.mulf %77, %74 : vector<32x256xf32>
    %79 = arith.select %76, %74, %78 : vector<32x256xi1>, vector<32x256xf32>
    %cst_42 = arith.constant dense<0.000000e+00> : vector<32xf32>
    %80 = vector.multi_reduction <add>, %79, %cst_42 [1] : vector<32x256xf32> to vector<32xf32>
    %81 = vector.shape_cast %80 : vector<32xf32> to vector<32x1xf32>
    %cst_43 = arith.constant 2.560000e+02 : f32
    %82 = vector.broadcast %cst_43 : f32 to vector<32x1xf32>
    %83 = arith.divf %81, %82 : vector<32x1xf32>
    %84 = vector.broadcast %83 : vector<32x1xf32> to vector<32x256xf32>
    %85 = arith.subf %79, %84 : vector<32x256xf32>
    %86 = arith.mulf %85, %85 : vector<32x256xf32>
    %cst_44 = arith.constant dense<0.000000e+00> : vector<32xf32>
    %87 = vector.multi_reduction <add>, %86, %cst_44 [1] : vector<32x256xf32> to vector<32xf32>
    %88 = vector.shape_cast %87 : vector<32xf32> to vector<32x1xf32>
    %cst_45 = arith.constant 2.560000e+02 : f32
    %89 = vector.broadcast %cst_45 : f32 to vector<32x1xf32>
    %90 = arith.divf %88, %89 : vector<32x1xf32>
    %91 = vector.broadcast %83 : vector<32x1xf32> to vector<32x256xf32>
    %92 = arith.subf %79, %91 : vector<32x256xf32>
    %cst_46 = arith.constant 9.99999974E-6 : f32
    %93 = vector.broadcast %cst_46 : f32 to vector<32x1xf32>
    %94 = arith.addf %90, %93 : vector<32x1xf32>
    %95 = math.rsqrt %94 : vector<32x1xf32>
    %96 = vector.broadcast %95 : vector<32x1xf32> to vector<32x256xf32>
    %97 = arith.mulf %92, %96 : vector<32x256xf32>
    %c1_47 = arith.constant 1 : index
    %c0_48 = arith.constant 0 : index
    %c0_49 = arith.constant 0 : index
    %98 = vector.load %arg7[%c1_47, %c0_48, %c0_49] : memref<11x32x1xf32, #tpu.memory_space<vmem>>, vector<1x32x1xf32>
    %99 = vector.shape_cast %98 : vector<1x32x1xf32> to vector<32x1xf32>
    %100 = vector.broadcast %99 : vector<32x1xf32> to vector<32x256xf32>
    %101 = arith.mulf %97, %100 : vector<32x256xf32>
    %c1_50 = arith.constant 1 : index
    %c0_51 = arith.constant 0 : index
    %c0_52 = arith.constant 0 : index
    %102 = vector.load %arg8[%c1_50, %c0_51, %c0_52] : memref<11x32x1xf32, #tpu.memory_space<vmem>>, vector<1x32x1xf32>
    %103 = vector.shape_cast %102 : vector<1x32x1xf32> to vector<32x1xf32>
    %104 = vector.broadcast %103 : vector<32x1xf32> to vector<32x256xf32>
    %105 = arith.addf %101, %104 : vector<32x256xf32>
    %c1_i32_53 = arith.constant 1 : i32
    %106 = tpu.dynamic_rotate %105 by %c1_i32_53 dim 1 : vector<32x256xf32>, i32 -> vector<32x256xf32>
    %cst_54 = arith.constant 0.000000e+00 : f32
    %107 = vector.broadcast %cst_54 : f32 to vector<32x256xf32>
    %108 = arith.select %2, %106, %107 : vector<32x256xi1>, vector<32x256xf32>
    %c255_i32_55 = arith.constant 255 : i32
    %109 = tpu.dynamic_rotate %105 by %c255_i32_55 dim 1 : vector<32x256xf32>, i32 -> vector<32x256xf32>
    %cst_56 = arith.constant 0.000000e+00 : f32
    %110 = vector.broadcast %cst_56 : f32 to vector<32x256xf32>
    %111 = arith.select %4, %109, %110 : vector<32x256xi1>, vector<32x256xf32>
    %112 = tpu.concatenate %108, %105, %111 in 0 : vector<32x256xf32>, vector<32x256xf32>, vector<32x256xf32> -> vector<96x256xf32>
    %113 = arith.truncf %112 : vector<96x256xf32> to vector<96x256xbf16>
    %c0_57 = arith.constant 0 : index
    %c0_58 = arith.constant 0 : index
    %c0_59 = arith.constant 0 : index
    %114 = vector.load %arg4[%c0_57, %c0_58, %c0_59] : memref<9x32x96xbf16, #tpu.memory_space<vmem>>, vector<1x32x96xbf16>
    %115 = vector.shape_cast %114 : vector<1x32x96xbf16> to vector<32x96xbf16>
    %cst_60 = arith.constant dense<0.000000e+00> : vector<32x256xf32>
    %116 = tpu.matmul %115, %68, %cst_60 {dimension_numbers = #tpu.dot_dimension_numbers<[1], [0], [0], [1], [0, 0, 1, 1], [], []>} : vector<32x96xbf16>, vector<96x256xbf16>, vector<32x256xf32> -> vector<32x256xf32>
    %c0_61 = arith.constant 0 : index
    %c0_62 = arith.constant 0 : index
    %c0_63 = arith.constant 0 : index
    %117 = vector.load %arg5[%c0_61, %c0_62, %c0_63] : memref<9x32x96xbf16, #tpu.memory_space<vmem>>, vector<1x32x96xbf16>
    %118 = vector.shape_cast %117 : vector<1x32x96xbf16> to vector<32x96xbf16>
    %cst_64 = arith.constant dense<0.000000e+00> : vector<32x256xf32>
    %119 = tpu.matmul %118, %113, %cst_64 {dimension_numbers = #tpu.dot_dimension_numbers<[1], [0], [0], [1], [0, 0, 1, 1], [], []>} : vector<32x96xbf16>, vector<96x256xbf16>, vector<32x256xf32> -> vector<32x256xf32>
    %120 = arith.addf %116, %119 : vector<32x256xf32>
    %c2_65 = arith.constant 2 : index
    %c0_66 = arith.constant 0 : index
    %c0_67 = arith.constant 0 : index
    %121 = vector.load %arg6[%c2_65, %c0_66, %c0_67] : memref<11x32x1xf32, #tpu.memory_space<vmem>>, vector<1x32x1xf32>
    %122 = vector.shape_cast %121 : vector<1x32x1xf32> to vector<32x1xf32>
    %123 = vector.broadcast %122 : vector<32x1xf32> to vector<32x256xf32>
    %124 = arith.addf %120, %123 : vector<32x256xf32>
    %cst_68 = arith.constant 0.000000e+00 : f32
    %125 = vector.broadcast %cst_68 : f32 to vector<32x256xf32>
    %126 = arith.cmpf ogt, %124, %125 : vector<32x256xf32>
    %cst_69 = arith.constant 0.00999999977 : f32
    %127 = vector.broadcast %cst_69 : f32 to vector<32x256xf32>
    %128 = arith.mulf %127, %124 : vector<32x256xf32>
    %129 = arith.select %126, %124, %128 : vector<32x256xi1>, vector<32x256xf32>
    %cst_70 = arith.constant dense<0.000000e+00> : vector<32xf32>
    %130 = vector.multi_reduction <add>, %129, %cst_70 [1] : vector<32x256xf32> to vector<32xf32>
    %131 = vector.shape_cast %130 : vector<32xf32> to vector<32x1xf32>
    %cst_71 = arith.constant 2.560000e+02 : f32
    %132 = vector.broadcast %cst_71 : f32 to vector<32x1xf32>
    %133 = arith.divf %131, %132 : vector<32x1xf32>
    %134 = vector.broadcast %133 : vector<32x1xf32> to vector<32x256xf32>
    %135 = arith.subf %129, %134 : vector<32x256xf32>
    %136 = arith.mulf %135, %135 : vector<32x256xf32>
    %cst_72 = arith.constant dense<0.000000e+00> : vector<32xf32>
    %137 = vector.multi_reduction <add>, %136, %cst_72 [1] : vector<32x256xf32> to vector<32xf32>
    %138 = vector.shape_cast %137 : vector<32xf32> to vector<32x1xf32>
    %cst_73 = arith.constant 2.560000e+02 : f32
    %139 = vector.broadcast %cst_73 : f32 to vector<32x1xf32>
    %140 = arith.divf %138, %139 : vector<32x1xf32>
    %141 = vector.broadcast %133 : vector<32x1xf32> to vector<32x256xf32>
    %142 = arith.subf %129, %141 : vector<32x256xf32>
    %cst_74 = arith.constant 9.99999974E-6 : f32
    %143 = vector.broadcast %cst_74 : f32 to vector<32x1xf32>
    %144 = arith.addf %140, %143 : vector<32x1xf32>
    %145 = math.rsqrt %144 : vector<32x1xf32>
    %146 = vector.broadcast %145 : vector<32x1xf32> to vector<32x256xf32>
    %147 = arith.mulf %142, %146 : vector<32x256xf32>
    %c2_75 = arith.constant 2 : index
    %c0_76 = arith.constant 0 : index
    %c0_77 = arith.constant 0 : index
    %148 = vector.load %arg7[%c2_75, %c0_76, %c0_77] : memref<11x32x1xf32, #tpu.memory_space<vmem>>, vector<1x32x1xf32>
    %149 = vector.shape_cast %148 : vector<1x32x1xf32> to vector<32x1xf32>
    %150 = vector.broadcast %149 : vector<32x1xf32> to vector<32x256xf32>
    %151 = arith.mulf %147, %150 : vector<32x256xf32>
    %c2_78 = arith.constant 2 : index
    %c0_79 = arith.constant 0 : index
    %c0_80 = arith.constant 0 : index
    %152 = vector.load %arg8[%c2_78, %c0_79, %c0_80] : memref<11x32x1xf32, #tpu.memory_space<vmem>>, vector<1x32x1xf32>
    %153 = vector.shape_cast %152 : vector<1x32x1xf32> to vector<32x1xf32>
    %154 = vector.broadcast %153 : vector<32x1xf32> to vector<32x256xf32>
    %155 = arith.addf %151, %154 : vector<32x256xf32>
    %c1_i32_81 = arith.constant 1 : i32
    %156 = tpu.dynamic_rotate %155 by %c1_i32_81 dim 1 : vector<32x256xf32>, i32 -> vector<32x256xf32>
    %cst_82 = arith.constant 0.000000e+00 : f32
    %157 = vector.broadcast %cst_82 : f32 to vector<32x256xf32>
    %158 = arith.select %2, %156, %157 : vector<32x256xi1>, vector<32x256xf32>
    %c255_i32_83 = arith.constant 255 : i32
    %159 = tpu.dynamic_rotate %155 by %c255_i32_83 dim 1 : vector<32x256xf32>, i32 -> vector<32x256xf32>
    %cst_84 = arith.constant 0.000000e+00 : f32
    %160 = vector.broadcast %cst_84 : f32 to vector<32x256xf32>
    %161 = arith.select %4, %159, %160 : vector<32x256xi1>, vector<32x256xf32>
    %162 = tpu.concatenate %158, %155, %161 in 0 : vector<32x256xf32>, vector<32x256xf32>, vector<32x256xf32> -> vector<96x256xf32>
    %163 = arith.truncf %162 : vector<96x256xf32> to vector<96x256xbf16>
    %c1_85 = arith.constant 1 : index
    %c0_86 = arith.constant 0 : index
    %c0_87 = arith.constant 0 : index
    %164 = vector.load %arg4[%c1_85, %c0_86, %c0_87] : memref<9x32x96xbf16, #tpu.memory_space<vmem>>, vector<1x32x96xbf16>
    %165 = vector.shape_cast %164 : vector<1x32x96xbf16> to vector<32x96xbf16>
    %cst_88 = arith.constant dense<0.000000e+00> : vector<32x256xf32>
    %166 = tpu.matmul %165, %68, %cst_88 {dimension_numbers = #tpu.dot_dimension_numbers<[1], [0], [0], [1], [0, 0, 1, 1], [], []>} : vector<32x96xbf16>, vector<96x256xbf16>, vector<32x256xf32> -> vector<32x256xf32>
    %c1_89 = arith.constant 1 : index
    %c0_90 = arith.constant 0 : index
    %c0_91 = arith.constant 0 : index
    %167 = vector.load %arg5[%c1_89, %c0_90, %c0_91] : memref<9x32x96xbf16, #tpu.memory_space<vmem>>, vector<1x32x96xbf16>
    %168 = vector.shape_cast %167 : vector<1x32x96xbf16> to vector<32x96xbf16>
    %cst_92 = arith.constant dense<0.000000e+00> : vector<32x256xf32>
    %169 = tpu.matmul %168, %163, %cst_92 {dimension_numbers = #tpu.dot_dimension_numbers<[1], [0], [0], [1], [0, 0, 1, 1], [], []>} : vector<32x96xbf16>, vector<96x256xbf16>, vector<32x256xf32> -> vector<32x256xf32>
    %170 = arith.addf %166, %169 : vector<32x256xf32>
    %c3 = arith.constant 3 : index
    %c0_93 = arith.constant 0 : index
    %c0_94 = arith.constant 0 : index
    %171 = vector.load %arg6[%c3, %c0_93, %c0_94] : memref<11x32x1xf32, #tpu.memory_space<vmem>>, vector<1x32x1xf32>
    %172 = vector.shape_cast %171 : vector<1x32x1xf32> to vector<32x1xf32>
    %173 = vector.broadcast %172 : vector<32x1xf32> to vector<32x256xf32>
    %174 = arith.addf %170, %173 : vector<32x256xf32>
    %cst_95 = arith.constant 0.000000e+00 : f32
    %175 = vector.broadcast %cst_95 : f32 to vector<32x256xf32>
    %176 = arith.cmpf ogt, %174, %175 : vector<32x256xf32>
    %cst_96 = arith.constant 0.00999999977 : f32
    %177 = vector.broadcast %cst_96 : f32 to vector<32x256xf32>
    %178 = arith.mulf %177, %174 : vector<32x256xf32>
    %179 = arith.select %176, %174, %178 : vector<32x256xi1>, vector<32x256xf32>
    %cst_97 = arith.constant dense<0.000000e+00> : vector<32xf32>
    %180 = vector.multi_reduction <add>, %179, %cst_97 [1] : vector<32x256xf32> to vector<32xf32>
    %181 = vector.shape_cast %180 : vector<32xf32> to vector<32x1xf32>
    %cst_98 = arith.constant 2.560000e+02 : f32
    %182 = vector.broadcast %cst_98 : f32 to vector<32x1xf32>
    %183 = arith.divf %181, %182 : vector<32x1xf32>
    %184 = vector.broadcast %183 : vector<32x1xf32> to vector<32x256xf32>
    %185 = arith.subf %179, %184 : vector<32x256xf32>
    %186 = arith.mulf %185, %185 : vector<32x256xf32>
    %cst_99 = arith.constant dense<0.000000e+00> : vector<32xf32>
    %187 = vector.multi_reduction <add>, %186, %cst_99 [1] : vector<32x256xf32> to vector<32xf32>
    %188 = vector.shape_cast %187 : vector<32xf32> to vector<32x1xf32>
    %cst_100 = arith.constant 2.560000e+02 : f32
    %189 = vector.broadcast %cst_100 : f32 to vector<32x1xf32>
    %190 = arith.divf %188, %189 : vector<32x1xf32>
    %191 = vector.broadcast %183 : vector<32x1xf32> to vector<32x256xf32>
    %192 = arith.subf %179, %191 : vector<32x256xf32>
    %cst_101 = arith.constant 9.99999974E-6 : f32
    %193 = vector.broadcast %cst_101 : f32 to vector<32x1xf32>
    %194 = arith.addf %190, %193 : vector<32x1xf32>
    %195 = math.rsqrt %194 : vector<32x1xf32>
    %196 = vector.broadcast %195 : vector<32x1xf32> to vector<32x256xf32>
    %197 = arith.mulf %192, %196 : vector<32x256xf32>
    %c3_102 = arith.constant 3 : index
    %c0_103 = arith.constant 0 : index
    %c0_104 = arith.constant 0 : index
    %198 = vector.load %arg7[%c3_102, %c0_103, %c0_104] : memref<11x32x1xf32, #tpu.memory_space<vmem>>, vector<1x32x1xf32>
    %199 = vector.shape_cast %198 : vector<1x32x1xf32> to vector<32x1xf32>
    %200 = vector.broadcast %199 : vector<32x1xf32> to vector<32x256xf32>
    %201 = arith.mulf %197, %200 : vector<32x256xf32>
    %c3_105 = arith.constant 3 : index
    %c0_106 = arith.constant 0 : index
    %c0_107 = arith.constant 0 : index
    %202 = vector.load %arg8[%c3_105, %c0_106, %c0_107] : memref<11x32x1xf32, #tpu.memory_space<vmem>>, vector<1x32x1xf32>
    %203 = vector.shape_cast %202 : vector<1x32x1xf32> to vector<32x1xf32>
    %204 = vector.broadcast %203 : vector<32x1xf32> to vector<32x256xf32>
    %205 = arith.addf %201, %204 : vector<32x256xf32>
    %c1_i32_108 = arith.constant 1 : i32
    %206 = tpu.dynamic_rotate %205 by %c1_i32_108 dim 1 : vector<32x256xf32>, i32 -> vector<32x256xf32>
    %cst_109 = arith.constant 0.000000e+00 : f32
    %207 = vector.broadcast %cst_109 : f32 to vector<32x256xf32>
    %208 = arith.select %2, %206, %207 : vector<32x256xi1>, vector<32x256xf32>
    %c255_i32_110 = arith.constant 255 : i32
    %209 = tpu.dynamic_rotate %205 by %c255_i32_110 dim 1 : vector<32x256xf32>, i32 -> vector<32x256xf32>
    %cst_111 = arith.constant 0.000000e+00 : f32
    %210 = vector.broadcast %cst_111 : f32 to vector<32x256xf32>
    %211 = arith.select %4, %209, %210 : vector<32x256xi1>, vector<32x256xf32>
    %212 = tpu.concatenate %208, %205, %211 in 0 : vector<32x256xf32>, vector<32x256xf32>, vector<32x256xf32> -> vector<96x256xf32>
    %213 = arith.truncf %212 : vector<96x256xf32> to vector<96x256xbf16>
    %c2_112 = arith.constant 2 : index
    %c0_113 = arith.constant 0 : index
    %c0_114 = arith.constant 0 : index
    %214 = vector.load %arg4[%c2_112, %c0_113, %c0_114] : memref<9x32x96xbf16, #tpu.memory_space<vmem>>, vector<1x32x96xbf16>
    %215 = vector.shape_cast %214 : vector<1x32x96xbf16> to vector<32x96xbf16>
    %cst_115 = arith.constant dense<0.000000e+00> : vector<32x256xf32>
    %216 = tpu.matmul %215, %68, %cst_115 {dimension_numbers = #tpu.dot_dimension_numbers<[1], [0], [0], [1], [0, 0, 1, 1], [], []>} : vector<32x96xbf16>, vector<96x256xbf16>, vector<32x256xf32> -> vector<32x256xf32>
    %c2_116 = arith.constant 2 : index
    %c0_117 = arith.constant 0 : index
    %c0_118 = arith.constant 0 : index
    %217 = vector.load %arg5[%c2_116, %c0_117, %c0_118] : memref<9x32x96xbf16, #tpu.memory_space<vmem>>, vector<1x32x96xbf16>
    %218 = vector.shape_cast %217 : vector<1x32x96xbf16> to vector<32x96xbf16>
    %cst_119 = arith.constant dense<0.000000e+00> : vector<32x256xf32>
    %219 = tpu.matmul %218, %213, %cst_119 {dimension_numbers = #tpu.dot_dimension_numbers<[1], [0], [0], [1], [0, 0, 1, 1], [], []>} : vector<32x96xbf16>, vector<96x256xbf16>, vector<32x256xf32> -> vector<32x256xf32>
    %220 = arith.addf %216, %219 : vector<32x256xf32>
    %c4 = arith.constant 4 : index
    %c0_120 = arith.constant 0 : index
    %c0_121 = arith.constant 0 : index
    %221 = vector.load %arg6[%c4, %c0_120, %c0_121] : memref<11x32x1xf32, #tpu.memory_space<vmem>>, vector<1x32x1xf32>
    %222 = vector.shape_cast %221 : vector<1x32x1xf32> to vector<32x1xf32>
    %223 = vector.broadcast %222 : vector<32x1xf32> to vector<32x256xf32>
    %224 = arith.addf %220, %223 : vector<32x256xf32>
    %cst_122 = arith.constant 0.000000e+00 : f32
    %225 = vector.broadcast %cst_122 : f32 to vector<32x256xf32>
    %226 = arith.cmpf ogt, %224, %225 : vector<32x256xf32>
    %cst_123 = arith.constant 0.00999999977 : f32
    %227 = vector.broadcast %cst_123 : f32 to vector<32x256xf32>
    %228 = arith.mulf %227, %224 : vector<32x256xf32>
    %229 = arith.select %226, %224, %228 : vector<32x256xi1>, vector<32x256xf32>
    %cst_124 = arith.constant dense<0.000000e+00> : vector<32xf32>
    %230 = vector.multi_reduction <add>, %229, %cst_124 [1] : vector<32x256xf32> to vector<32xf32>
    %231 = vector.shape_cast %230 : vector<32xf32> to vector<32x1xf32>
    %cst_125 = arith.constant 2.560000e+02 : f32
    %232 = vector.broadcast %cst_125 : f32 to vector<32x1xf32>
    %233 = arith.divf %231, %232 : vector<32x1xf32>
    %234 = vector.broadcast %233 : vector<32x1xf32> to vector<32x256xf32>
    %235 = arith.subf %229, %234 : vector<32x256xf32>
    %236 = arith.mulf %235, %235 : vector<32x256xf32>
    %cst_126 = arith.constant dense<0.000000e+00> : vector<32xf32>
    %237 = vector.multi_reduction <add>, %236, %cst_126 [1] : vector<32x256xf32> to vector<32xf32>
    %238 = vector.shape_cast %237 : vector<32xf32> to vector<32x1xf32>
    %cst_127 = arith.constant 2.560000e+02 : f32
    %239 = vector.broadcast %cst_127 : f32 to vector<32x1xf32>
    %240 = arith.divf %238, %239 : vector<32x1xf32>
    %241 = vector.broadcast %233 : vector<32x1xf32> to vector<32x256xf32>
    %242 = arith.subf %229, %241 : vector<32x256xf32>
    %cst_128 = arith.constant 9.99999974E-6 : f32
    %243 = vector.broadcast %cst_128 : f32 to vector<32x1xf32>
    %244 = arith.addf %240, %243 : vector<32x1xf32>
    %245 = math.rsqrt %244 : vector<32x1xf32>
    %246 = vector.broadcast %245 : vector<32x1xf32> to vector<32x256xf32>
    %247 = arith.mulf %242, %246 : vector<32x256xf32>
    %c4_129 = arith.constant 4 : index
    %c0_130 = arith.constant 0 : index
    %c0_131 = arith.constant 0 : index
    %248 = vector.load %arg7[%c4_129, %c0_130, %c0_131] : memref<11x32x1xf32, #tpu.memory_space<vmem>>, vector<1x32x1xf32>
    %249 = vector.shape_cast %248 : vector<1x32x1xf32> to vector<32x1xf32>
    %250 = vector.broadcast %249 : vector<32x1xf32> to vector<32x256xf32>
    %251 = arith.mulf %247, %250 : vector<32x256xf32>
    %c4_132 = arith.constant 4 : index
    %c0_133 = arith.constant 0 : index
    %c0_134 = arith.constant 0 : index
    %252 = vector.load %arg8[%c4_132, %c0_133, %c0_134] : memref<11x32x1xf32, #tpu.memory_space<vmem>>, vector<1x32x1xf32>
    %253 = vector.shape_cast %252 : vector<1x32x1xf32> to vector<32x1xf32>
    %254 = vector.broadcast %253 : vector<32x1xf32> to vector<32x256xf32>
    %255 = arith.addf %251, %254 : vector<32x256xf32>
    %c1_i32_135 = arith.constant 1 : i32
    %256 = tpu.dynamic_rotate %255 by %c1_i32_135 dim 1 : vector<32x256xf32>, i32 -> vector<32x256xf32>
    %cst_136 = arith.constant 0.000000e+00 : f32
    %257 = vector.broadcast %cst_136 : f32 to vector<32x256xf32>
    %258 = arith.select %2, %256, %257 : vector<32x256xi1>, vector<32x256xf32>
    %c255_i32_137 = arith.constant 255 : i32
    %259 = tpu.dynamic_rotate %255 by %c255_i32_137 dim 1 : vector<32x256xf32>, i32 -> vector<32x256xf32>
    %cst_138 = arith.constant 0.000000e+00 : f32
    %260 = vector.broadcast %cst_138 : f32 to vector<32x256xf32>
    %261 = arith.select %4, %259, %260 : vector<32x256xi1>, vector<32x256xf32>
    %262 = tpu.concatenate %258, %255, %261 in 0 : vector<32x256xf32>, vector<32x256xf32>, vector<32x256xf32> -> vector<96x256xf32>
    %263 = arith.truncf %262 : vector<96x256xf32> to vector<96x256xbf16>
    %c3_139 = arith.constant 3 : index
    %c0_140 = arith.constant 0 : index
    %c0_141 = arith.constant 0 : index
    %264 = vector.load %arg4[%c3_139, %c0_140, %c0_141] : memref<9x32x96xbf16, #tpu.memory_space<vmem>>, vector<1x32x96xbf16>
    %265 = vector.shape_cast %264 : vector<1x32x96xbf16> to vector<32x96xbf16>
    %cst_142 = arith.constant dense<0.000000e+00> : vector<32x256xf32>
    %266 = tpu.matmul %265, %68, %cst_142 {dimension_numbers = #tpu.dot_dimension_numbers<[1], [0], [0], [1], [0, 0, 1, 1], [], []>} : vector<32x96xbf16>, vector<96x256xbf16>, vector<32x256xf32> -> vector<32x256xf32>
    %c3_143 = arith.constant 3 : index
    %c0_144 = arith.constant 0 : index
    %c0_145 = arith.constant 0 : index
    %267 = vector.load %arg5[%c3_143, %c0_144, %c0_145] : memref<9x32x96xbf16, #tpu.memory_space<vmem>>, vector<1x32x96xbf16>
    %268 = vector.shape_cast %267 : vector<1x32x96xbf16> to vector<32x96xbf16>
    %cst_146 = arith.constant dense<0.000000e+00> : vector<32x256xf32>
    %269 = tpu.matmul %268, %263, %cst_146 {dimension_numbers = #tpu.dot_dimension_numbers<[1], [0], [0], [1], [0, 0, 1, 1], [], []>} : vector<32x96xbf16>, vector<96x256xbf16>, vector<32x256xf32> -> vector<32x256xf32>
    %270 = arith.addf %266, %269 : vector<32x256xf32>
    %c5 = arith.constant 5 : index
    %c0_147 = arith.constant 0 : index
    %c0_148 = arith.constant 0 : index
    %271 = vector.load %arg6[%c5, %c0_147, %c0_148] : memref<11x32x1xf32, #tpu.memory_space<vmem>>, vector<1x32x1xf32>
    %272 = vector.shape_cast %271 : vector<1x32x1xf32> to vector<32x1xf32>
    %273 = vector.broadcast %272 : vector<32x1xf32> to vector<32x256xf32>
    %274 = arith.addf %270, %273 : vector<32x256xf32>
    %cst_149 = arith.constant 0.000000e+00 : f32
    %275 = vector.broadcast %cst_149 : f32 to vector<32x256xf32>
    %276 = arith.cmpf ogt, %274, %275 : vector<32x256xf32>
    %cst_150 = arith.constant 0.00999999977 : f32
    %277 = vector.broadcast %cst_150 : f32 to vector<32x256xf32>
    %278 = arith.mulf %277, %274 : vector<32x256xf32>
    %279 = arith.select %276, %274, %278 : vector<32x256xi1>, vector<32x256xf32>
    %cst_151 = arith.constant dense<0.000000e+00> : vector<32xf32>
    %280 = vector.multi_reduction <add>, %279, %cst_151 [1] : vector<32x256xf32> to vector<32xf32>
    %281 = vector.shape_cast %280 : vector<32xf32> to vector<32x1xf32>
    %cst_152 = arith.constant 2.560000e+02 : f32
    %282 = vector.broadcast %cst_152 : f32 to vector<32x1xf32>
    %283 = arith.divf %281, %282 : vector<32x1xf32>
    %284 = vector.broadcast %283 : vector<32x1xf32> to vector<32x256xf32>
    %285 = arith.subf %279, %284 : vector<32x256xf32>
    %286 = arith.mulf %285, %285 : vector<32x256xf32>
    %cst_153 = arith.constant dense<0.000000e+00> : vector<32xf32>
    %287 = vector.multi_reduction <add>, %286, %cst_153 [1] : vector<32x256xf32> to vector<32xf32>
    %288 = vector.shape_cast %287 : vector<32xf32> to vector<32x1xf32>
    %cst_154 = arith.constant 2.560000e+02 : f32
    %289 = vector.broadcast %cst_154 : f32 to vector<32x1xf32>
    %290 = arith.divf %288, %289 : vector<32x1xf32>
    %291 = vector.broadcast %283 : vector<32x1xf32> to vector<32x256xf32>
    %292 = arith.subf %279, %291 : vector<32x256xf32>
    %cst_155 = arith.constant 9.99999974E-6 : f32
    %293 = vector.broadcast %cst_155 : f32 to vector<32x1xf32>
    %294 = arith.addf %290, %293 : vector<32x1xf32>
    %295 = math.rsqrt %294 : vector<32x1xf32>
    %296 = vector.broadcast %295 : vector<32x1xf32> to vector<32x256xf32>
    %297 = arith.mulf %292, %296 : vector<32x256xf32>
    %c5_156 = arith.constant 5 : index
    %c0_157 = arith.constant 0 : index
    %c0_158 = arith.constant 0 : index
    %298 = vector.load %arg7[%c5_156, %c0_157, %c0_158] : memref<11x32x1xf32, #tpu.memory_space<vmem>>, vector<1x32x1xf32>
    %299 = vector.shape_cast %298 : vector<1x32x1xf32> to vector<32x1xf32>
    %300 = vector.broadcast %299 : vector<32x1xf32> to vector<32x256xf32>
    %301 = arith.mulf %297, %300 : vector<32x256xf32>
    %c5_159 = arith.constant 5 : index
    %c0_160 = arith.constant 0 : index
    %c0_161 = arith.constant 0 : index
    %302 = vector.load %arg8[%c5_159, %c0_160, %c0_161] : memref<11x32x1xf32, #tpu.memory_space<vmem>>, vector<1x32x1xf32>
    %303 = vector.shape_cast %302 : vector<1x32x1xf32> to vector<32x1xf32>
    %304 = vector.broadcast %303 : vector<32x1xf32> to vector<32x256xf32>
    %305 = arith.addf %301, %304 : vector<32x256xf32>
    %c1_i32_162 = arith.constant 1 : i32
    %306 = tpu.dynamic_rotate %305 by %c1_i32_162 dim 1 : vector<32x256xf32>, i32 -> vector<32x256xf32>
    %cst_163 = arith.constant 0.000000e+00 : f32
    %307 = vector.broadcast %cst_163 : f32 to vector<32x256xf32>
    %308 = arith.select %2, %306, %307 : vector<32x256xi1>, vector<32x256xf32>
    %c255_i32_164 = arith.constant 255 : i32
    %309 = tpu.dynamic_rotate %305 by %c255_i32_164 dim 1 : vector<32x256xf32>, i32 -> vector<32x256xf32>
    %cst_165 = arith.constant 0.000000e+00 : f32
    %310 = vector.broadcast %cst_165 : f32 to vector<32x256xf32>
    %311 = arith.select %4, %309, %310 : vector<32x256xi1>, vector<32x256xf32>
    %312 = tpu.concatenate %308, %305, %311 in 0 : vector<32x256xf32>, vector<32x256xf32>, vector<32x256xf32> -> vector<96x256xf32>
    %313 = arith.truncf %312 : vector<96x256xf32> to vector<96x256xbf16>
    %c4_166 = arith.constant 4 : index
    %c0_167 = arith.constant 0 : index
    %c0_168 = arith.constant 0 : index
    %314 = vector.load %arg4[%c4_166, %c0_167, %c0_168] : memref<9x32x96xbf16, #tpu.memory_space<vmem>>, vector<1x32x96xbf16>
    %315 = vector.shape_cast %314 : vector<1x32x96xbf16> to vector<32x96xbf16>
    %cst_169 = arith.constant dense<0.000000e+00> : vector<32x256xf32>
    %316 = tpu.matmul %315, %68, %cst_169 {dimension_numbers = #tpu.dot_dimension_numbers<[1], [0], [0], [1], [0, 0, 1, 1], [], []>} : vector<32x96xbf16>, vector<96x256xbf16>, vector<32x256xf32> -> vector<32x256xf32>
    %c4_170 = arith.constant 4 : index
    %c0_171 = arith.constant 0 : index
    %c0_172 = arith.constant 0 : index
    %317 = vector.load %arg5[%c4_170, %c0_171, %c0_172] : memref<9x32x96xbf16, #tpu.memory_space<vmem>>, vector<1x32x96xbf16>
    %318 = vector.shape_cast %317 : vector<1x32x96xbf16> to vector<32x96xbf16>
    %cst_173 = arith.constant dense<0.000000e+00> : vector<32x256xf32>
    %319 = tpu.matmul %318, %313, %cst_173 {dimension_numbers = #tpu.dot_dimension_numbers<[1], [0], [0], [1], [0, 0, 1, 1], [], []>} : vector<32x96xbf16>, vector<96x256xbf16>, vector<32x256xf32> -> vector<32x256xf32>
    %320 = arith.addf %316, %319 : vector<32x256xf32>
    %c6 = arith.constant 6 : index
    %c0_174 = arith.constant 0 : index
    %c0_175 = arith.constant 0 : index
    %321 = vector.load %arg6[%c6, %c0_174, %c0_175] : memref<11x32x1xf32, #tpu.memory_space<vmem>>, vector<1x32x1xf32>
    %322 = vector.shape_cast %321 : vector<1x32x1xf32> to vector<32x1xf32>
    %323 = vector.broadcast %322 : vector<32x1xf32> to vector<32x256xf32>
    %324 = arith.addf %320, %323 : vector<32x256xf32>
    %cst_176 = arith.constant 0.000000e+00 : f32
    %325 = vector.broadcast %cst_176 : f32 to vector<32x256xf32>
    %326 = arith.cmpf ogt, %324, %325 : vector<32x256xf32>
    %cst_177 = arith.constant 0.00999999977 : f32
    %327 = vector.broadcast %cst_177 : f32 to vector<32x256xf32>
    %328 = arith.mulf %327, %324 : vector<32x256xf32>
    %329 = arith.select %326, %324, %328 : vector<32x256xi1>, vector<32x256xf32>
    %cst_178 = arith.constant dense<0.000000e+00> : vector<32xf32>
    %330 = vector.multi_reduction <add>, %329, %cst_178 [1] : vector<32x256xf32> to vector<32xf32>
    %331 = vector.shape_cast %330 : vector<32xf32> to vector<32x1xf32>
    %cst_179 = arith.constant 2.560000e+02 : f32
    %332 = vector.broadcast %cst_179 : f32 to vector<32x1xf32>
    %333 = arith.divf %331, %332 : vector<32x1xf32>
    %334 = vector.broadcast %333 : vector<32x1xf32> to vector<32x256xf32>
    %335 = arith.subf %329, %334 : vector<32x256xf32>
    %336 = arith.mulf %335, %335 : vector<32x256xf32>
    %cst_180 = arith.constant dense<0.000000e+00> : vector<32xf32>
    %337 = vector.multi_reduction <add>, %336, %cst_180 [1] : vector<32x256xf32> to vector<32xf32>
    %338 = vector.shape_cast %337 : vector<32xf32> to vector<32x1xf32>
    %cst_181 = arith.constant 2.560000e+02 : f32
    %339 = vector.broadcast %cst_181 : f32 to vector<32x1xf32>
    %340 = arith.divf %338, %339 : vector<32x1xf32>
    %341 = vector.broadcast %333 : vector<32x1xf32> to vector<32x256xf32>
    %342 = arith.subf %329, %341 : vector<32x256xf32>
    %cst_182 = arith.constant 9.99999974E-6 : f32
    %343 = vector.broadcast %cst_182 : f32 to vector<32x1xf32>
    %344 = arith.addf %340, %343 : vector<32x1xf32>
    %345 = math.rsqrt %344 : vector<32x1xf32>
    %346 = vector.broadcast %345 : vector<32x1xf32> to vector<32x256xf32>
    %347 = arith.mulf %342, %346 : vector<32x256xf32>
    %c6_183 = arith.constant 6 : index
    %c0_184 = arith.constant 0 : index
    %c0_185 = arith.constant 0 : index
    %348 = vector.load %arg7[%c6_183, %c0_184, %c0_185] : memref<11x32x1xf32, #tpu.memory_space<vmem>>, vector<1x32x1xf32>
    %349 = vector.shape_cast %348 : vector<1x32x1xf32> to vector<32x1xf32>
    %350 = vector.broadcast %349 : vector<32x1xf32> to vector<32x256xf32>
    %351 = arith.mulf %347, %350 : vector<32x256xf32>
    %c6_186 = arith.constant 6 : index
    %c0_187 = arith.constant 0 : index
    %c0_188 = arith.constant 0 : index
    %352 = vector.load %arg8[%c6_186, %c0_187, %c0_188] : memref<11x32x1xf32, #tpu.memory_space<vmem>>, vector<1x32x1xf32>
    %353 = vector.shape_cast %352 : vector<1x32x1xf32> to vector<32x1xf32>
    %354 = vector.broadcast %353 : vector<32x1xf32> to vector<32x256xf32>
    %355 = arith.addf %351, %354 : vector<32x256xf32>
    %c1_i32_189 = arith.constant 1 : i32
    %356 = tpu.dynamic_rotate %355 by %c1_i32_189 dim 1 : vector<32x256xf32>, i32 -> vector<32x256xf32>
    %cst_190 = arith.constant 0.000000e+00 : f32
    %357 = vector.broadcast %cst_190 : f32 to vector<32x256xf32>
    %358 = arith.select %2, %356, %357 : vector<32x256xi1>, vector<32x256xf32>
    %c255_i32_191 = arith.constant 255 : i32
    %359 = tpu.dynamic_rotate %355 by %c255_i32_191 dim 1 : vector<32x256xf32>, i32 -> vector<32x256xf32>
    %cst_192 = arith.constant 0.000000e+00 : f32
    %360 = vector.broadcast %cst_192 : f32 to vector<32x256xf32>
    %361 = arith.select %4, %359, %360 : vector<32x256xi1>, vector<32x256xf32>
    %362 = tpu.concatenate %358, %355, %361 in 0 : vector<32x256xf32>, vector<32x256xf32>, vector<32x256xf32> -> vector<96x256xf32>
    %363 = arith.truncf %362 : vector<96x256xf32> to vector<96x256xbf16>
    %c5_193 = arith.constant 5 : index
    %c0_194 = arith.constant 0 : index
    %c0_195 = arith.constant 0 : index
    %364 = vector.load %arg4[%c5_193, %c0_194, %c0_195] : memref<9x32x96xbf16, #tpu.memory_space<vmem>>, vector<1x32x96xbf16>
    %365 = vector.shape_cast %364 : vector<1x32x96xbf16> to vector<32x96xbf16>
    %cst_196 = arith.constant dense<0.000000e+00> : vector<32x256xf32>
    %366 = tpu.matmul %365, %68, %cst_196 {dimension_numbers = #tpu.dot_dimension_numbers<[1], [0], [0], [1], [0, 0, 1, 1], [], []>} : vector<32x96xbf16>, vector<96x256xbf16>, vector<32x256xf32> -> vector<32x256xf32>
    %c5_197 = arith.constant 5 : index
    %c0_198 = arith.constant 0 : index
    %c0_199 = arith.constant 0 : index
    %367 = vector.load %arg5[%c5_197, %c0_198, %c0_199] : memref<9x32x96xbf16, #tpu.memory_space<vmem>>, vector<1x32x96xbf16>
    %368 = vector.shape_cast %367 : vector<1x32x96xbf16> to vector<32x96xbf16>
    %cst_200 = arith.constant dense<0.000000e+00> : vector<32x256xf32>
    %369 = tpu.matmul %368, %363, %cst_200 {dimension_numbers = #tpu.dot_dimension_numbers<[1], [0], [0], [1], [0, 0, 1, 1], [], []>} : vector<32x96xbf16>, vector<96x256xbf16>, vector<32x256xf32> -> vector<32x256xf32>
    %370 = arith.addf %366, %369 : vector<32x256xf32>
    %c7 = arith.constant 7 : index
    %c0_201 = arith.constant 0 : index
    %c0_202 = arith.constant 0 : index
    %371 = vector.load %arg6[%c7, %c0_201, %c0_202] : memref<11x32x1xf32, #tpu.memory_space<vmem>>, vector<1x32x1xf32>
    %372 = vector.shape_cast %371 : vector<1x32x1xf32> to vector<32x1xf32>
    %373 = vector.broadcast %372 : vector<32x1xf32> to vector<32x256xf32>
    %374 = arith.addf %370, %373 : vector<32x256xf32>
    %cst_203 = arith.constant 0.000000e+00 : f32
    %375 = vector.broadcast %cst_203 : f32 to vector<32x256xf32>
    %376 = arith.cmpf ogt, %374, %375 : vector<32x256xf32>
    %cst_204 = arith.constant 0.00999999977 : f32
    %377 = vector.broadcast %cst_204 : f32 to vector<32x256xf32>
    %378 = arith.mulf %377, %374 : vector<32x256xf32>
    %379 = arith.select %376, %374, %378 : vector<32x256xi1>, vector<32x256xf32>
    %cst_205 = arith.constant dense<0.000000e+00> : vector<32xf32>
    %380 = vector.multi_reduction <add>, %379, %cst_205 [1] : vector<32x256xf32> to vector<32xf32>
    %381 = vector.shape_cast %380 : vector<32xf32> to vector<32x1xf32>
    %cst_206 = arith.constant 2.560000e+02 : f32
    %382 = vector.broadcast %cst_206 : f32 to vector<32x1xf32>
    %383 = arith.divf %381, %382 : vector<32x1xf32>
    %384 = vector.broadcast %383 : vector<32x1xf32> to vector<32x256xf32>
    %385 = arith.subf %379, %384 : vector<32x256xf32>
    %386 = arith.mulf %385, %385 : vector<32x256xf32>
    %cst_207 = arith.constant dense<0.000000e+00> : vector<32xf32>
    %387 = vector.multi_reduction <add>, %386, %cst_207 [1] : vector<32x256xf32> to vector<32xf32>
    %388 = vector.shape_cast %387 : vector<32xf32> to vector<32x1xf32>
    %cst_208 = arith.constant 2.560000e+02 : f32
    %389 = vector.broadcast %cst_208 : f32 to vector<32x1xf32>
    %390 = arith.divf %388, %389 : vector<32x1xf32>
    %391 = vector.broadcast %383 : vector<32x1xf32> to vector<32x256xf32>
    %392 = arith.subf %379, %391 : vector<32x256xf32>
    %cst_209 = arith.constant 9.99999974E-6 : f32
    %393 = vector.broadcast %cst_209 : f32 to vector<32x1xf32>
    %394 = arith.addf %390, %393 : vector<32x1xf32>
    %395 = math.rsqrt %394 : vector<32x1xf32>
    %396 = vector.broadcast %395 : vector<32x1xf32> to vector<32x256xf32>
    %397 = arith.mulf %392, %396 : vector<32x256xf32>
    %c7_210 = arith.constant 7 : index
    %c0_211 = arith.constant 0 : index
    %c0_212 = arith.constant 0 : index
    %398 = vector.load %arg7[%c7_210, %c0_211, %c0_212] : memref<11x32x1xf32, #tpu.memory_space<vmem>>, vector<1x32x1xf32>
    %399 = vector.shape_cast %398 : vector<1x32x1xf32> to vector<32x1xf32>
    %400 = vector.broadcast %399 : vector<32x1xf32> to vector<32x256xf32>
    %401 = arith.mulf %397, %400 : vector<32x256xf32>
    %c7_213 = arith.constant 7 : index
    %c0_214 = arith.constant 0 : index
    %c0_215 = arith.constant 0 : index
    %402 = vector.load %arg8[%c7_213, %c0_214, %c0_215] : memref<11x32x1xf32, #tpu.memory_space<vmem>>, vector<1x32x1xf32>
    %403 = vector.shape_cast %402 : vector<1x32x1xf32> to vector<32x1xf32>
    %404 = vector.broadcast %403 : vector<32x1xf32> to vector<32x256xf32>
    %405 = arith.addf %401, %404 : vector<32x256xf32>
    %c1_i32_216 = arith.constant 1 : i32
    %406 = tpu.dynamic_rotate %405 by %c1_i32_216 dim 1 : vector<32x256xf32>, i32 -> vector<32x256xf32>
    %cst_217 = arith.constant 0.000000e+00 : f32
    %407 = vector.broadcast %cst_217 : f32 to vector<32x256xf32>
    %408 = arith.select %2, %406, %407 : vector<32x256xi1>, vector<32x256xf32>
    %c255_i32_218 = arith.constant 255 : i32
    %409 = tpu.dynamic_rotate %405 by %c255_i32_218 dim 1 : vector<32x256xf32>, i32 -> vector<32x256xf32>
    %cst_219 = arith.constant 0.000000e+00 : f32
    %410 = vector.broadcast %cst_219 : f32 to vector<32x256xf32>
    %411 = arith.select %4, %409, %410 : vector<32x256xi1>, vector<32x256xf32>
    %412 = tpu.concatenate %408, %405, %411 in 0 : vector<32x256xf32>, vector<32x256xf32>, vector<32x256xf32> -> vector<96x256xf32>
    %413 = arith.truncf %412 : vector<96x256xf32> to vector<96x256xbf16>
    %c6_220 = arith.constant 6 : index
    %c0_221 = arith.constant 0 : index
    %c0_222 = arith.constant 0 : index
    %414 = vector.load %arg4[%c6_220, %c0_221, %c0_222] : memref<9x32x96xbf16, #tpu.memory_space<vmem>>, vector<1x32x96xbf16>
    %415 = vector.shape_cast %414 : vector<1x32x96xbf16> to vector<32x96xbf16>
    %cst_223 = arith.constant dense<0.000000e+00> : vector<32x256xf32>
    %416 = tpu.matmul %415, %68, %cst_223 {dimension_numbers = #tpu.dot_dimension_numbers<[1], [0], [0], [1], [0, 0, 1, 1], [], []>} : vector<32x96xbf16>, vector<96x256xbf16>, vector<32x256xf32> -> vector<32x256xf32>
    %c6_224 = arith.constant 6 : index
    %c0_225 = arith.constant 0 : index
    %c0_226 = arith.constant 0 : index
    %417 = vector.load %arg5[%c6_224, %c0_225, %c0_226] : memref<9x32x96xbf16, #tpu.memory_space<vmem>>, vector<1x32x96xbf16>
    %418 = vector.shape_cast %417 : vector<1x32x96xbf16> to vector<32x96xbf16>
    %cst_227 = arith.constant dense<0.000000e+00> : vector<32x256xf32>
    %419 = tpu.matmul %418, %413, %cst_227 {dimension_numbers = #tpu.dot_dimension_numbers<[1], [0], [0], [1], [0, 0, 1, 1], [], []>} : vector<32x96xbf16>, vector<96x256xbf16>, vector<32x256xf32> -> vector<32x256xf32>
    %420 = arith.addf %416, %419 : vector<32x256xf32>
    %c8 = arith.constant 8 : index
    %c0_228 = arith.constant 0 : index
    %c0_229 = arith.constant 0 : index
    %421 = vector.load %arg6[%c8, %c0_228, %c0_229] : memref<11x32x1xf32, #tpu.memory_space<vmem>>, vector<1x32x1xf32>
    %422 = vector.shape_cast %421 : vector<1x32x1xf32> to vector<32x1xf32>
    %423 = vector.broadcast %422 : vector<32x1xf32> to vector<32x256xf32>
    %424 = arith.addf %420, %423 : vector<32x256xf32>
    %cst_230 = arith.constant 0.000000e+00 : f32
    %425 = vector.broadcast %cst_230 : f32 to vector<32x256xf32>
    %426 = arith.cmpf ogt, %424, %425 : vector<32x256xf32>
    %cst_231 = arith.constant 0.00999999977 : f32
    %427 = vector.broadcast %cst_231 : f32 to vector<32x256xf32>
    %428 = arith.mulf %427, %424 : vector<32x256xf32>
    %429 = arith.select %426, %424, %428 : vector<32x256xi1>, vector<32x256xf32>
    %cst_232 = arith.constant dense<0.000000e+00> : vector<32xf32>
    %430 = vector.multi_reduction <add>, %429, %cst_232 [1] : vector<32x256xf32> to vector<32xf32>
    %431 = vector.shape_cast %430 : vector<32xf32> to vector<32x1xf32>
    %cst_233 = arith.constant 2.560000e+02 : f32
    %432 = vector.broadcast %cst_233 : f32 to vector<32x1xf32>
    %433 = arith.divf %431, %432 : vector<32x1xf32>
    %434 = vector.broadcast %433 : vector<32x1xf32> to vector<32x256xf32>
    %435 = arith.subf %429, %434 : vector<32x256xf32>
    %436 = arith.mulf %435, %435 : vector<32x256xf32>
    %cst_234 = arith.constant dense<0.000000e+00> : vector<32xf32>
    %437 = vector.multi_reduction <add>, %436, %cst_234 [1] : vector<32x256xf32> to vector<32xf32>
    %438 = vector.shape_cast %437 : vector<32xf32> to vector<32x1xf32>
    %cst_235 = arith.constant 2.560000e+02 : f32
    %439 = vector.broadcast %cst_235 : f32 to vector<32x1xf32>
    %440 = arith.divf %438, %439 : vector<32x1xf32>
    %441 = vector.broadcast %433 : vector<32x1xf32> to vector<32x256xf32>
    %442 = arith.subf %429, %441 : vector<32x256xf32>
    %cst_236 = arith.constant 9.99999974E-6 : f32
    %443 = vector.broadcast %cst_236 : f32 to vector<32x1xf32>
    %444 = arith.addf %440, %443 : vector<32x1xf32>
    %445 = math.rsqrt %444 : vector<32x1xf32>
    %446 = vector.broadcast %445 : vector<32x1xf32> to vector<32x256xf32>
    %447 = arith.mulf %442, %446 : vector<32x256xf32>
    %c8_237 = arith.constant 8 : index
    %c0_238 = arith.constant 0 : index
    %c0_239 = arith.constant 0 : index
    %448 = vector.load %arg7[%c8_237, %c0_238, %c0_239] : memref<11x32x1xf32, #tpu.memory_space<vmem>>, vector<1x32x1xf32>
    %449 = vector.shape_cast %448 : vector<1x32x1xf32> to vector<32x1xf32>
    %450 = vector.broadcast %449 : vector<32x1xf32> to vector<32x256xf32>
    %451 = arith.mulf %447, %450 : vector<32x256xf32>
    %c8_240 = arith.constant 8 : index
    %c0_241 = arith.constant 0 : index
    %c0_242 = arith.constant 0 : index
    %452 = vector.load %arg8[%c8_240, %c0_241, %c0_242] : memref<11x32x1xf32, #tpu.memory_space<vmem>>, vector<1x32x1xf32>
    %453 = vector.shape_cast %452 : vector<1x32x1xf32> to vector<32x1xf32>
    %454 = vector.broadcast %453 : vector<32x1xf32> to vector<32x256xf32>
    %455 = arith.addf %451, %454 : vector<32x256xf32>
    %c1_i32_243 = arith.constant 1 : i32
    %456 = tpu.dynamic_rotate %455 by %c1_i32_243 dim 1 : vector<32x256xf32>, i32 -> vector<32x256xf32>
    %cst_244 = arith.constant 0.000000e+00 : f32
    %457 = vector.broadcast %cst_244 : f32 to vector<32x256xf32>
    %458 = arith.select %2, %456, %457 : vector<32x256xi1>, vector<32x256xf32>
    %c255_i32_245 = arith.constant 255 : i32
    %459 = tpu.dynamic_rotate %455 by %c255_i32_245 dim 1 : vector<32x256xf32>, i32 -> vector<32x256xf32>
    %cst_246 = arith.constant 0.000000e+00 : f32
    %460 = vector.broadcast %cst_246 : f32 to vector<32x256xf32>
    %461 = arith.select %4, %459, %460 : vector<32x256xi1>, vector<32x256xf32>
    %462 = tpu.concatenate %458, %455, %461 in 0 : vector<32x256xf32>, vector<32x256xf32>, vector<32x256xf32> -> vector<96x256xf32>
    %463 = arith.truncf %462 : vector<96x256xf32> to vector<96x256xbf16>
    %c7_247 = arith.constant 7 : index
    %c0_248 = arith.constant 0 : index
    %c0_249 = arith.constant 0 : index
    %464 = vector.load %arg4[%c7_247, %c0_248, %c0_249] : memref<9x32x96xbf16, #tpu.memory_space<vmem>>, vector<1x32x96xbf16>
    %465 = vector.shape_cast %464 : vector<1x32x96xbf16> to vector<32x96xbf16>
    %cst_250 = arith.constant dense<0.000000e+00> : vector<32x256xf32>
    %466 = tpu.matmul %465, %68, %cst_250 {dimension_numbers = #tpu.dot_dimension_numbers<[1], [0], [0], [1], [0, 0, 1, 1], [], []>} : vector<32x96xbf16>, vector<96x256xbf16>, vector<32x256xf32> -> vector<32x256xf32>
    %c7_251 = arith.constant 7 : index
    %c0_252 = arith.constant 0 : index
    %c0_253 = arith.constant 0 : index
    %467 = vector.load %arg5[%c7_251, %c0_252, %c0_253] : memref<9x32x96xbf16, #tpu.memory_space<vmem>>, vector<1x32x96xbf16>
    %468 = vector.shape_cast %467 : vector<1x32x96xbf16> to vector<32x96xbf16>
    %cst_254 = arith.constant dense<0.000000e+00> : vector<32x256xf32>
    %469 = tpu.matmul %468, %463, %cst_254 {dimension_numbers = #tpu.dot_dimension_numbers<[1], [0], [0], [1], [0, 0, 1, 1], [], []>} : vector<32x96xbf16>, vector<96x256xbf16>, vector<32x256xf32> -> vector<32x256xf32>
    %470 = arith.addf %466, %469 : vector<32x256xf32>
    %c9 = arith.constant 9 : index
    %c0_255 = arith.constant 0 : index
    %c0_256 = arith.constant 0 : index
    %471 = vector.load %arg6[%c9, %c0_255, %c0_256] : memref<11x32x1xf32, #tpu.memory_space<vmem>>, vector<1x32x1xf32>
    %472 = vector.shape_cast %471 : vector<1x32x1xf32> to vector<32x1xf32>
    %473 = vector.broadcast %472 : vector<32x1xf32> to vector<32x256xf32>
    %474 = arith.addf %470, %473 : vector<32x256xf32>
    %cst_257 = arith.constant 0.000000e+00 : f32
    %475 = vector.broadcast %cst_257 : f32 to vector<32x256xf32>
    %476 = arith.cmpf ogt, %474, %475 : vector<32x256xf32>
    %cst_258 = arith.constant 0.00999999977 : f32
    %477 = vector.broadcast %cst_258 : f32 to vector<32x256xf32>
    %478 = arith.mulf %477, %474 : vector<32x256xf32>
    %479 = arith.select %476, %474, %478 : vector<32x256xi1>, vector<32x256xf32>
    %cst_259 = arith.constant dense<0.000000e+00> : vector<32xf32>
    %480 = vector.multi_reduction <add>, %479, %cst_259 [1] : vector<32x256xf32> to vector<32xf32>
    %481 = vector.shape_cast %480 : vector<32xf32> to vector<32x1xf32>
    %cst_260 = arith.constant 2.560000e+02 : f32
    %482 = vector.broadcast %cst_260 : f32 to vector<32x1xf32>
    %483 = arith.divf %481, %482 : vector<32x1xf32>
    %484 = vector.broadcast %483 : vector<32x1xf32> to vector<32x256xf32>
    %485 = arith.subf %479, %484 : vector<32x256xf32>
    %486 = arith.mulf %485, %485 : vector<32x256xf32>
    %cst_261 = arith.constant dense<0.000000e+00> : vector<32xf32>
    %487 = vector.multi_reduction <add>, %486, %cst_261 [1] : vector<32x256xf32> to vector<32xf32>
    %488 = vector.shape_cast %487 : vector<32xf32> to vector<32x1xf32>
    %cst_262 = arith.constant 2.560000e+02 : f32
    %489 = vector.broadcast %cst_262 : f32 to vector<32x1xf32>
    %490 = arith.divf %488, %489 : vector<32x1xf32>
    %491 = vector.broadcast %483 : vector<32x1xf32> to vector<32x256xf32>
    %492 = arith.subf %479, %491 : vector<32x256xf32>
    %cst_263 = arith.constant 9.99999974E-6 : f32
    %493 = vector.broadcast %cst_263 : f32 to vector<32x1xf32>
    %494 = arith.addf %490, %493 : vector<32x1xf32>
    %495 = math.rsqrt %494 : vector<32x1xf32>
    %496 = vector.broadcast %495 : vector<32x1xf32> to vector<32x256xf32>
    %497 = arith.mulf %492, %496 : vector<32x256xf32>
    %c9_264 = arith.constant 9 : index
    %c0_265 = arith.constant 0 : index
    %c0_266 = arith.constant 0 : index
    %498 = vector.load %arg7[%c9_264, %c0_265, %c0_266] : memref<11x32x1xf32, #tpu.memory_space<vmem>>, vector<1x32x1xf32>
    %499 = vector.shape_cast %498 : vector<1x32x1xf32> to vector<32x1xf32>
    %500 = vector.broadcast %499 : vector<32x1xf32> to vector<32x256xf32>
    %501 = arith.mulf %497, %500 : vector<32x256xf32>
    %c9_267 = arith.constant 9 : index
    %c0_268 = arith.constant 0 : index
    %c0_269 = arith.constant 0 : index
    %502 = vector.load %arg8[%c9_267, %c0_268, %c0_269] : memref<11x32x1xf32, #tpu.memory_space<vmem>>, vector<1x32x1xf32>
    %503 = vector.shape_cast %502 : vector<1x32x1xf32> to vector<32x1xf32>
    %504 = vector.broadcast %503 : vector<32x1xf32> to vector<32x256xf32>
    %505 = arith.addf %501, %504 : vector<32x256xf32>
    %c1_i32_270 = arith.constant 1 : i32
    %506 = tpu.dynamic_rotate %505 by %c1_i32_270 dim 1 : vector<32x256xf32>, i32 -> vector<32x256xf32>
    %cst_271 = arith.constant 0.000000e+00 : f32
    %507 = vector.broadcast %cst_271 : f32 to vector<32x256xf32>
    %508 = arith.select %2, %506, %507 : vector<32x256xi1>, vector<32x256xf32>
    %c255_i32_272 = arith.constant 255 : i32
    %509 = tpu.dynamic_rotate %505 by %c255_i32_272 dim 1 : vector<32x256xf32>, i32 -> vector<32x256xf32>
    %cst_273 = arith.constant 0.000000e+00 : f32
    %510 = vector.broadcast %cst_273 : f32 to vector<32x256xf32>
    %511 = arith.select %4, %509, %510 : vector<32x256xi1>, vector<32x256xf32>
    %512 = tpu.concatenate %508, %505, %511 in 0 : vector<32x256xf32>, vector<32x256xf32>, vector<32x256xf32> -> vector<96x256xf32>
    %513 = arith.truncf %512 : vector<96x256xf32> to vector<96x256xbf16>
    %c8_274 = arith.constant 8 : index
    %c0_275 = arith.constant 0 : index
    %c0_276 = arith.constant 0 : index
    %514 = vector.load %arg4[%c8_274, %c0_275, %c0_276] : memref<9x32x96xbf16, #tpu.memory_space<vmem>>, vector<1x32x96xbf16>
    %515 = vector.shape_cast %514 : vector<1x32x96xbf16> to vector<32x96xbf16>
    %cst_277 = arith.constant dense<0.000000e+00> : vector<32x256xf32>
    %516 = tpu.matmul %515, %68, %cst_277 {dimension_numbers = #tpu.dot_dimension_numbers<[1], [0], [0], [1], [0, 0, 1, 1], [], []>} : vector<32x96xbf16>, vector<96x256xbf16>, vector<32x256xf32> -> vector<32x256xf32>
    %c8_278 = arith.constant 8 : index
    %c0_279 = arith.constant 0 : index
    %c0_280 = arith.constant 0 : index
    %517 = vector.load %arg5[%c8_278, %c0_279, %c0_280] : memref<9x32x96xbf16, #tpu.memory_space<vmem>>, vector<1x32x96xbf16>
    %518 = vector.shape_cast %517 : vector<1x32x96xbf16> to vector<32x96xbf16>
    %cst_281 = arith.constant dense<0.000000e+00> : vector<32x256xf32>
    %519 = tpu.matmul %518, %513, %cst_281 {dimension_numbers = #tpu.dot_dimension_numbers<[1], [0], [0], [1], [0, 0, 1, 1], [], []>} : vector<32x96xbf16>, vector<96x256xbf16>, vector<32x256xf32> -> vector<32x256xf32>
    %520 = arith.addf %516, %519 : vector<32x256xf32>
    %c10 = arith.constant 10 : index
    %c0_282 = arith.constant 0 : index
    %c0_283 = arith.constant 0 : index
    %521 = vector.load %arg6[%c10, %c0_282, %c0_283] : memref<11x32x1xf32, #tpu.memory_space<vmem>>, vector<1x32x1xf32>
    %522 = vector.shape_cast %521 : vector<1x32x1xf32> to vector<32x1xf32>
    %523 = vector.broadcast %522 : vector<32x1xf32> to vector<32x256xf32>
    %524 = arith.addf %520, %523 : vector<32x256xf32>
    %cst_284 = arith.constant 0.000000e+00 : f32
    %525 = vector.broadcast %cst_284 : f32 to vector<32x256xf32>
    %526 = arith.cmpf ogt, %524, %525 : vector<32x256xf32>
    %cst_285 = arith.constant 0.00999999977 : f32
    %527 = vector.broadcast %cst_285 : f32 to vector<32x256xf32>
    %528 = arith.mulf %527, %524 : vector<32x256xf32>
    %529 = arith.select %526, %524, %528 : vector<32x256xi1>, vector<32x256xf32>
    %cst_286 = arith.constant dense<0.000000e+00> : vector<32xf32>
    %530 = vector.multi_reduction <add>, %529, %cst_286 [1] : vector<32x256xf32> to vector<32xf32>
    %531 = vector.shape_cast %530 : vector<32xf32> to vector<32x1xf32>
    %cst_287 = arith.constant 2.560000e+02 : f32
    %532 = vector.broadcast %cst_287 : f32 to vector<32x1xf32>
    %533 = arith.divf %531, %532 : vector<32x1xf32>
    %534 = vector.broadcast %533 : vector<32x1xf32> to vector<32x256xf32>
    %535 = arith.subf %529, %534 : vector<32x256xf32>
    %536 = arith.mulf %535, %535 : vector<32x256xf32>
    %cst_288 = arith.constant dense<0.000000e+00> : vector<32xf32>
    %537 = vector.multi_reduction <add>, %536, %cst_288 [1] : vector<32x256xf32> to vector<32xf32>
    %538 = vector.shape_cast %537 : vector<32xf32> to vector<32x1xf32>
    %cst_289 = arith.constant 2.560000e+02 : f32
    %539 = vector.broadcast %cst_289 : f32 to vector<32x1xf32>
    %540 = arith.divf %538, %539 : vector<32x1xf32>
    %541 = vector.broadcast %533 : vector<32x1xf32> to vector<32x256xf32>
    %542 = arith.subf %529, %541 : vector<32x256xf32>
    %cst_290 = arith.constant 9.99999974E-6 : f32
    %543 = vector.broadcast %cst_290 : f32 to vector<32x1xf32>
    %544 = arith.addf %540, %543 : vector<32x1xf32>
    %545 = math.rsqrt %544 : vector<32x1xf32>
    %546 = vector.broadcast %545 : vector<32x1xf32> to vector<32x256xf32>
    %547 = arith.mulf %542, %546 : vector<32x256xf32>
    %c10_291 = arith.constant 10 : index
    %c0_292 = arith.constant 0 : index
    %c0_293 = arith.constant 0 : index
    %548 = vector.load %arg7[%c10_291, %c0_292, %c0_293] : memref<11x32x1xf32, #tpu.memory_space<vmem>>, vector<1x32x1xf32>
    %549 = vector.shape_cast %548 : vector<1x32x1xf32> to vector<32x1xf32>
    %550 = vector.broadcast %549 : vector<32x1xf32> to vector<32x256xf32>
    %551 = arith.mulf %547, %550 : vector<32x256xf32>
    %c10_294 = arith.constant 10 : index
    %c0_295 = arith.constant 0 : index
    %c0_296 = arith.constant 0 : index
    %552 = vector.load %arg8[%c10_294, %c0_295, %c0_296] : memref<11x32x1xf32, #tpu.memory_space<vmem>>, vector<1x32x1xf32>
    %553 = vector.shape_cast %552 : vector<1x32x1xf32> to vector<32x1xf32>
    %554 = vector.broadcast %553 : vector<32x1xf32> to vector<32x256xf32>
    %555 = arith.addf %551, %554 : vector<32x256xf32>
    %c0_297 = arith.constant 0 : index
    %c0_298 = arith.constant 0 : index
    %c0_299 = arith.constant 0 : index
    %556 = vector.load %arg9[%c0_297, %c0_298, %c0_299] : memref<1x32x256xf32, #tpu.memory_space<vmem>>, vector<1x32x256xf32>
    %557 = vector.shape_cast %556 : vector<1x32x256xf32> to vector<32x256xf32>
    %558 = vector.shape_cast %555 : vector<32x256xf32> to vector<1x32x256xf32>
    tpu.vector_store %arg9[%c0_297, %c0_298, %c0_299], %558 {strides = array<i32>} : memref<1x32x256xf32, #tpu.memory_space<vmem>>, vector<1x32x256xf32>,
    return
  }
  func.func @transform_0(%arg0: i32) -> (i32, i32, i32) {
    %c0_i32 = arith.constant 0 : i32
    %c0_i32_0 = arith.constant 0 : i32
    %c0_i32_1 = arith.constant 0 : i32
    return %arg0, %c0_i32, %c0_i32_0 : i32, i32, i32
  }
  func.func @transform_1(%arg0: i32) -> (i32, i32, i32) {
    %c0_i32 = arith.constant 0 : i32
    %c0_i32_0 = arith.constant 0 : i32
    %c0_i32_1 = arith.constant 0 : i32
    %c0_i32_2 = arith.constant 0 : i32
    return %c0_i32, %c0_i32_0, %c0_i32_1 : i32, i32, i32
  }
  func.func @transform_2(%arg0: i32) -> (i32, i32) {
    %c0_i32 = arith.constant 0 : i32
    %c0_i32_0 = arith.constant 0 : i32
    %c0_i32_1 = arith.constant 0 : i32
    return %c0_i32, %c0_i32_0 : i32, i32
  }
  func.func @transform_3(%arg0: i32) -> (i32, i32, i32) {
    %c0_i32 = arith.constant 0 : i32
    %c0_i32_0 = arith.constant 0 : i32
    %c0_i32_1 = arith.constant 0 : i32
    %c0_i32_2 = arith.constant 0 : i32
    return %c0_i32, %c0_i32_0, %c0_i32_1 : i32, i32, i32
  }
  func.func @transform_4(%arg0: i32) -> (i32, i32, i32) {
    %c0_i32 = arith.constant 0 : i32
    %c0_i32_0 = arith.constant 0 : i32
    %c0_i32_1 = arith.constant 0 : i32
    %c0_i32_2 = arith.constant 0 : i32
    return %c0_i32, %c0_i32_0, %c0_i32_1 : i32, i32, i32
  }
  func.func @transform_5(%arg0: i32) -> (i32, i32, i32) {
    %c0_i32 = arith.constant 0 : i32
    %c0_i32_0 = arith.constant 0 : i32
    %c0_i32_1 = arith.constant 0 : i32
    %c0_i32_2 = arith.constant 0 : i32
    return %c0_i32, %c0_i32_0, %c0_i32_1 : i32, i32, i32
  }
  func.func @transform_6(%arg0: i32) -> (i32, i32, i32) {
    %c0_i32 = arith.constant 0 : i32
    %c0_i32_0 = arith.constant 0 : i32
    %c0_i32_1 = arith.constant 0 : i32
    %c0_i32_2 = arith.constant 0 : i32
    return %c0_i32, %c0_i32_0, %c0_i32_1 : i32, i32, i32
  }
  func.func @transform_7(%arg0: i32) -> (i32, i32, i32) {
    %c0_i32 = arith.constant 0 : i32
    %c0_i32_0 = arith.constant 0 : i32
    %c0_i32_1 = arith.constant 0 : i32
    %c0_i32_2 = arith.constant 0 : i32
    return %c0_i32, %c0_i32_0, %c0_i32_1 : i32, i32, i32
  }
  func.func @transform_8(%arg0: i32) -> (i32, i32, i32) {
    %c0_i32 = arith.constant 0 : i32
    %c0_i32_0 = arith.constant 0 : i32
    %c0_i32_1 = arith.constant 0 : i32
    return %arg0, %c0_i32, %c0_i32_0 : i32, i32, i32
  }
}

module attributes {stable_mosaic.version = 11 : i64} {
  func.func @_heads_kernel(%arg0: i32, %arg1: memref<2x8192xf32, #tpu.memory_space<vmem>>, %arg2: memref<8192x64xf32, #tpu.memory_space<vmem>>, %arg3: memref<1x1xf32, #tpu.memory_space<vmem>>, %arg4: memref<64x64xf32, #tpu.memory_space<vmem>>, %arg5: memref<1x1xf32, #tpu.memory_space<vmem>>, %arg6: memref<2x64xf32, #tpu.memory_space<vmem>>) attributes {dimension_semantics = [#tpu.dimension_semantics<arbitrary>], iteration_bounds = array<i64: 1>, scalar_prefetch = 0 : i64, scratch_operands = 0 : i64, tpu.core_type = #tpu.core_type<tc>, window_params = [{pipeline_mode = #tpu.pipeline_mode<synchronous>, transform_indices = @transform_0, window_bounds = array<i64: 2, 8192>}, {pipeline_mode = #tpu.pipeline_mode<synchronous>, transform_indices = @transform_1, window_bounds = array<i64: 8192, 64>}, {pipeline_mode = #tpu.pipeline_mode<synchronous>, transform_indices = @transform_2, window_bounds = array<i64: 1, 1>}, {pipeline_mode = #tpu.pipeline_mode<synchronous>, transform_indices = @transform_3, window_bounds = array<i64: 64, 64>}, {pipeline_mode = #tpu.pipeline_mode<synchronous>, transform_indices = @transform_4, window_bounds = array<i64: 1, 1>}, {pipeline_mode = #tpu.pipeline_mode<synchronous>, transform_indices = @transform_5, window_bounds = array<i64: 2, 64>}]} {
    %c0 = arith.constant 0 : index
    %c0_0 = arith.constant 0 : index
    %0 = vector.load %arg1[%c0, %c0_0] : memref<2x8192xf32, #tpu.memory_space<vmem>>, vector<2x8192xf32>
    %c0_1 = arith.constant 0 : index
    %c0_2 = arith.constant 0 : index
    %1 = vector.load %arg2[%c0_1, %c0_2] : memref<8192x64xf32, #tpu.memory_space<vmem>>, vector<8192x64xf32>
    %cst = arith.constant dense<0.000000e+00> : vector<2x64xf32>
    %2 = tpu.matmul %0, %1, %cst {dimension_numbers = #tpu.dot_dimension_numbers<[1], [0], [0], [1], [0, 0, 1, 1], [], []>} : vector<2x8192xf32>, vector<8192x64xf32>, vector<2x64xf32> -> vector<2x64xf32>
    %c0_3 = arith.constant 0 : index
    %c0_4 = arith.constant 0 : index
    %3 = vector.load %arg3[%c0_3, %c0_4] : memref<1x1xf32, #tpu.memory_space<vmem>>, vector<1x1xf32>
    %4 = vector.broadcast %3 : vector<1x1xf32> to vector<2x64xf32>
    %5 = arith.addf %2, %4 : vector<2x64xf32>
    %c0_5 = arith.constant 0 : index
    %c0_6 = arith.constant 0 : index
    %6 = vector.load %arg4[%c0_5, %c0_6] : memref<64x64xf32, #tpu.memory_space<vmem>>, vector<64x64xf32>
    %cst_7 = arith.constant dense<0.000000e+00> : vector<2x64xf32>
    %7 = tpu.matmul %5, %6, %cst_7 {dimension_numbers = #tpu.dot_dimension_numbers<[1], [0], [0], [1], [0, 0, 1, 1], [], []>} : vector<2x64xf32>, vector<64x64xf32>, vector<2x64xf32> -> vector<2x64xf32>
    %c0_8 = arith.constant 0 : index
    %c0_9 = arith.constant 0 : index
    %8 = vector.load %arg5[%c0_8, %c0_9] : memref<1x1xf32, #tpu.memory_space<vmem>>, vector<1x1xf32>
    %9 = vector.broadcast %8 : vector<1x1xf32> to vector<2x64xf32>
    %10 = arith.addf %7, %9 : vector<2x64xf32>
    %c0_10 = arith.constant 0 : index
    %c0_11 = arith.constant 0 : index
    %11 = vector.load %arg6[%c0_10, %c0_11] : memref<2x64xf32, #tpu.memory_space<vmem>>, vector<2x64xf32>
    tpu.vector_store %arg6[%c0_10, %c0_11], %10 {strides = array<i32>} : memref<2x64xf32, #tpu.memory_space<vmem>>, vector<2x64xf32>,
    return
  }
  func.func @transform_0(%arg0: i32) -> (i32, i32) {
    %c0_i32 = arith.constant 0 : i32
    %c0_i32_0 = arith.constant 0 : i32
    %c0_i32_1 = arith.constant 0 : i32
    return %c0_i32, %c0_i32_0 : i32, i32
  }
  func.func @transform_1(%arg0: i32) -> (i32, i32) {
    %c0_i32 = arith.constant 0 : i32
    %c0_i32_0 = arith.constant 0 : i32
    %c0_i32_1 = arith.constant 0 : i32
    return %c0_i32, %c0_i32_0 : i32, i32
  }
  func.func @transform_2(%arg0: i32) -> (i32, i32) {
    %c0_i32 = arith.constant 0 : i32
    %c0_i32_0 = arith.constant 0 : i32
    %c0_i32_1 = arith.constant 0 : i32
    return %c0_i32, %c0_i32_0 : i32, i32
  }
  func.func @transform_3(%arg0: i32) -> (i32, i32) {
    %c0_i32 = arith.constant 0 : i32
    %c0_i32_0 = arith.constant 0 : i32
    %c0_i32_1 = arith.constant 0 : i32
    return %c0_i32, %c0_i32_0 : i32, i32
  }
  func.func @transform_4(%arg0: i32) -> (i32, i32) {
    %c0_i32 = arith.constant 0 : i32
    %c0_i32_0 = arith.constant 0 : i32
    %c0_i32_1 = arith.constant 0 : i32
    return %c0_i32, %c0_i32_0 : i32, i32
  }
  func.func @transform_5(%arg0: i32) -> (i32, i32) {
    %c0_i32 = arith.constant 0 : i32
    %c0_i32_0 = arith.constant 0 : i32
    %c0_i32_1 = arith.constant 0 : i32
    return %c0_i32, %c0_i32_0 : i32, i32
  }
}

</mosaic_0001>

<llo_original>
// kernel: redundant_decoder_forward.2
$region0: #{redundant_decoder_forward.2}
  #allocation0 [shape = 'u32[]', space=smem, size = 0x4, offset = 0x4, fixed_abs, tag = 'smem constant byte address 0x4 - core index']
  #allocation1 [shape = 'u32[144,128]{1,0:T(1,128)}', space=vmem, size = 0x12000, scoped, tag = 'internal scratch']
  %s0 = inlined_call_operand.hbm [shape: f32[2,4,256], index: 0, kind: input, shape index: {}]
  %s1 = inlined_call_operand.vmem [shape: f32[3,32,4], index: 1, kind: input, shape index: {}]
  %s2 = inlined_call_operand.vmem [shape: bf16[32,96], index: 2, kind: input, shape index: {}]
  %s3 = inlined_call_operand.vmem [shape: bf16[9,32,96], index: 3, kind: input, shape index: {}]
  %s4 = inlined_call_operand.vmem [shape: bf16[9,32,96], index: 4, kind: input, shape index: {}]
  %s5 = inlined_call_operand.vmem [shape: f32[11,32,1], index: 5, kind: input, shape index: {}]
  %s6 = inlined_call_operand.vmem [shape: f32[11,32,1], index: 6, kind: input, shape index: {}]
  %s7 = inlined_call_operand.vmem [shape: f32[11,32,1], index: 7, kind: input, shape index: {}]
  %s8 = inlined_call_operand.vmem [shape: f32[2,32,256], index: 8, kind: output, shape index: {}]
  %s9 = sld [smem:[#allocation0]]
  $region69: #{redundant_decoder_forward.2} parent=0
    _
  %s11 = ssub.s32 1, %s9
  %s12 = scalar_select 0, %s11, %s9
  $region1: #{redundant_decoder_forward.2} parent=0
    #allocation2 [shape = 'u8[8192]{0}', space=vmem, size = 0x2000, scoped, tag = 'input window, operand 0']
    #allocation3 [shape = 's32[2]{0}', space=sflag, size = 0x8, scoped, tag = 'scoped memory for redundant_decoder_forward.2']
    %13 = vsyncpa [#allocation3], 0
    %s14 = scalar_lea.sflag [#allocation3], 1
    %15 = vsyncpa %s14, 0
    loop: start=0, step=1, limit=4
    $region2: #{redundant_decoder_forward.2} parent=1 // loop_pre_header
      _
    $region3: #{redundant_decoder_forward.2} parent=1 // loop_header
      %s17 = sphi 0, %s21
      %p18 = scmp.ge.s32.totalorder %s17, 4
      %s27 = sphi 0, %s29
      %s30 = sphi 0, %s27
      %s31 = sphi 0, %s30
      %s47 = sphi 0, %s31
      %s51 = sphi 0, %s51
      %s53 = sphi 0, %s51
      %s54 = sphi 0, %s53
      %s68 = sphi 0, %s54
      %s72 = sphi 0, %s72
      %s74 = sphi 0, %s72
      %s75 = sphi 0, %s74
      %s89 = sphi 0, %s75
      %s93 = sphi 0, %s93
      %s95 = sphi 0, %s93
      %s96 = sphi 0, %s95
      %s110 = sphi 0, %s96
      %s114 = sphi 0, %s114
      %s116 = sphi 0, %s114
      %s117 = sphi 0, %s116
      %s131 = sphi 0, %s117
      %s135 = sphi 0, %s135
      %s137 = sphi 0, %s135
      %s138 = sphi 0, %s137
      %s152 = sphi 0, %s138
      %s156 = sphi 0, %s156
      %s158 = sphi 0, %s156
      %s159 = sphi 0, %s158
      %s173 = sphi 0, %s159
      %s177 = sphi 0, %s177
      %s179 = sphi 0, %s177
      %s180 = sphi 0, %s179
      %s194 = sphi 0, %s180
      %s200 = sphi 0, %s202
      %s203 = sphi 0, %s200
      %s204 = sphi 0, %s203
      %s220 = sphi 0, %s204
    $region4: #{redundant_decoder_forward.2} parent=1 // loop_header_branch
      %20 = sbr.rel (%p18) target = $region8
    $region5: #{redundant_decoder_forward.2} parent=1 // loop_body
      %s22 = ssub.s32 %s17, 1
      %s23 = ssub.s32 %s17, 2
      %s24 = sadd.s32 %s17, 1
      %s25 = ssub.s32 %s17, %s24
      %p26 = scmp.eq.s32.totalorder %s25, 0
      %s28 = sadd.s32 %s27, 1
      %s29 = scalar_select %p26, %s27, %s28
      %p32 = pneg %p26
      %p33 = scmp.eq.s32.totalorder %s17, 1
      %p34 = por %p32, %p33
      %p35 = scmp.ne.s32.totalorder %s27, %s30
      %p36 = scmp.eq.s32.totalorder %s17, 0
      %p37 = por %p35, %p36
      %p38 = scmp.ne.s32.totalorder %s27, %s30
      %p39 = scmp.eq.s32.totalorder %s22, 1
      %p40 = por %p38, %p39
      %p41 = scmp.ne.s32.totalorder %s30, %s31
      %p42 = scmp.eq.s32.totalorder %s22, 0
      %p43 = por %p41, %p42
      %p44 = scmp.ne.s32.totalorder %s30, %s31
      %p45 = scmp.eq.s32.totalorder %s23, 1
      %p46 = por %p44, %p45
      %p48 = scmp.ne.s32.totalorder %s31, %s47
      %p49 = scmp.eq.s32.totalorder %s23, 0
      %p50 = por %p48, %p49
      %s52 = sadd.s32 %s51, 1
      %p55 = scmp.eq.s32.totalorder %s17, 1
      %p56 = scmp.ne.s32.totalorder %s51, %s53
      %p57 = scmp.eq.s32.totalorder %s17, 0
      %p58 = por %p56, %p57
      %p59 = scmp.ne.s32.totalorder %s51, %s53
      %p60 = scmp.eq.s32.totalorder %s22, 1
      %p61 = por %p59, %p60
      %p62 = scmp.ne.s32.totalorder %s53, %s54
      %p63 = scmp.eq.s32.totalorder %s22, 0
      %p64 = por %p62, %p63
      %p65 = scmp.ne.s32.totalorder %s53, %s54
      %p66 = scmp.eq.s32.totalorder %s23, 1
      %p67 = por %p65, %p66
      %p69 = scmp.ne.s32.totalorder %s54, %s68
      %p70 = scmp.eq.s32.totalorder %s23, 0
      %p71 = por %p69, %p70
      %s73 = sadd.s32 %s72, 1
      %p76 = scmp.eq.s32.totalorder %s17, 1
      %p77 = scmp.ne.s32.totalorder %s72, %s74
      %p78 = scmp.eq.s32.totalorder %s17, 0
      %p79 = por %p77, %p78
      %p80 = scmp.ne.s32.totalorder %s72, %s74
      %p81 = scmp.eq.s32.totalorder %s22, 1
      %p82 = por %p80, %p81
      %p83 = scmp.ne.s32.totalorder %s74, %s75
      %p84 = scmp.eq.s32.totalorder %s22, 0
      %p85 = por %p83, %p84
      %p86 = scmp.ne.s32.totalorder %s74, %s75
      %p87 = scmp.eq.s32.totalorder %s23, 1
      %p88 = por %p86, %p87
      %p90 = scmp.ne.s32.totalorder %s75, %s89
      %p91 = scmp.eq.s32.totalorder %s23, 0
      %p92 = por %p90, %p91
      %s94 = sadd.s32 %s93, 1
      %p97 = scmp.eq.s32.totalorder %s17, 1
      %p98 = scmp.ne.s32.totalorder %s93, %s95
      %p99 = scmp.eq.s32.totalorder %s17, 0
      %p100 = por %p98, %p99
      %p101 = scmp.ne.s32.totalorder %s93, %s95
      %p102 = scmp.eq.s32.totalorder %s22, 1
      %p103 = por %p101, %p102
      %p104 = scmp.ne.s32.totalorder %s95, %s96
      %p105 = scmp.eq.s32.totalorder %s22, 0
      %p106 = por %p104, %p105
      %p107 = scmp.ne.s32.totalorder %s95, %s96
      %p108 = scmp.eq.s32.totalorder %s23, 1
      %p109 = por %p107, %p108
      %p111 = scmp.ne.s32.totalorder %s96, %s110
      %p112 = scmp.eq.s32.totalorder %s23, 0
      %p113 = por %p111, %p112
      %s115 = sadd.s32 %s114, 1
      %p118 = scmp.eq.s32.totalorder %s17, 1
      %p119 = scmp.ne.s32.totalorder %s114, %s116
      %p120 = scmp.eq.s32.totalorder %s17, 0
      %p121 = por %p119, %p120
      %p122 = scmp.ne.s32.totalorder %s114, %s116
      %p123 = scmp.eq.s32.totalorder %s22, 1
      %p124 = por %p122, %p123
      %p125 = scmp.ne.s32.totalorder %s116, %s117
      %p126 = scmp.eq.s32.totalorder %s22, 0
      %p127 = por %p125, %p126
      %p128 = scmp.ne.s32.totalorder %s116, %s117
      %p129 = scmp.eq.s32.totalorder %s23, 1
      %p130 = por %p128, %p129
      %p132 = scmp.ne.s32.totalorder %s117, %s131
      %p133 = scmp.eq.s32.totalorder %s23, 0
      %p134 = por %p132, %p133
      %s136 = sadd.s32 %s135, 1
      %p139 = scmp.eq.s32.totalorder %s17, 1
      %p140 = scmp.ne.s32.totalorder %s135, %s137
      %p141 = scmp.eq.s32.totalorder %s17, 0
      %p142 = por %p140, %p141
      %p143 = scmp.ne.s32.totalorder %s135, %s137
      %p144 = scmp.eq.s32.totalorder %s22, 1
      %p145 = por %p143, %p144
      %p146 = scmp.ne.s32.totalorder %s137, %s138
      %p147 = scmp.eq.s32.totalorder %s22, 0
      %p148 = por %p146, %p147
      %p149 = scmp.ne.s32.totalorder %s137, %s138
      %p150 = scmp.eq.s32.totalorder %s23, 1
      %p151 = por %p149, %p150
      %p153 = scmp.ne.s32.totalorder %s138, %s152
      %p154 = scmp.eq.s32.totalorder %s23, 0
      %p155 = por %p153, %p154
      %s157 = sadd.s32 %s156, 1
      %p160 = scmp.eq.s32.totalorder %s17, 1
      %p161 = scmp.ne.s32.totalorder %s156, %s158
      %p162 = scmp.eq.s32.totalorder %s17, 0
      %p163 = por %p161, %p162
      %p164 = scmp.ne.s32.totalorder %s156, %s158
      %p165 = scmp.eq.s32.totalorder %s22, 1
      %p166 = por %p164, %p165
      %p167 = scmp.ne.s32.totalorder %s158, %s159
      %p168 = scmp.eq.s32.totalorder %s22, 0
      %p169 = por %p167, %p168
      %p170 = scmp.ne.s32.totalorder %s158, %s159
      %p171 = scmp.eq.s32.totalorder %s23, 1
      %p172 = por %p170, %p171
      %p174 = scmp.ne.s32.totalorder %s159, %s173
      %p175 = scmp.eq.s32.totalorder %s23, 0
      %p176 = por %p174, %p175
      %s178 = sadd.s32 %s177, 1
      %p181 = scmp.eq.s32.totalorder %s17, 1
      %p182 = scmp.ne.s32.totalorder %s177, %s179
      %p183 = scmp.eq.s32.totalorder %s17, 0
      %p184 = por %p182, %p183
      %p185 = scmp.ne.s32.totalorder %s177, %s179
      %p186 = scmp.eq.s32.totalorder %s22, 1
      %p187 = por %p185, %p186
      %p188 = scmp.ne.s32.totalorder %s179, %s180
      %p189 = scmp.eq.s32.totalorder %s22, 0
      %p190 = por %p188, %p189
      %p191 = scmp.ne.s32.totalorder %s179, %s180
      %p192 = scmp.eq.s32.totalorder %s23, 1
      %p193 = por %p191, %p192
      %p195 = scmp.ne.s32.totalorder %s180, %s194
      %p196 = scmp.eq.s32.totalorder %s23, 0
      %p197 = por %p195, %p196
      %s198 = ssub.s32 %s17, %s24
      %p199 = scmp.eq.s32.totalorder %s198, 0
      %s201 = sadd.s32 %s200, 1
      %s202 = scalar_select %p199, %s200, %s201
      %p205 = pneg %p199
      %p206 = scmp.eq.s32.totalorder %s17, 1
      %p207 = por %p205, %p206
      %p208 = scmp.ne.s32.totalorder %s200, %s203
      %p209 = scmp.eq.s32.totalorder %s17, 0
      %p210 = por %p208, %p209
      %p211 = scmp.ne.s32.totalorder %s200, %s203
      %p212 = scmp.eq.s32.totalorder %s22, 1
      %p213 = por %p211, %p212
      %p214 = scmp.ne.s32.totalorder %s203, %s204
      %p215 = scmp.eq.s32.totalorder %s22, 0
      %p216 = por %p214, %p215
      %p217 = scmp.ne.s32.totalorder %s203, %s204
      %p218 = scmp.eq.s32.totalorder %s23, 1
      %p219 = por %p217, %p218
      %p221 = scmp.ne.s32.totalorder %s204, %s220
      %p222 = scmp.eq.s32.totalorder %s23, 0
      %p223 = por %p221, %p222
      %p224 = scmp.le.s32.totalorder 1, %s17
      %p225 = scmp.lt.s32.totalorder %s17, 3
      %p226 = pnand %p224, %p225
      %p227 = pneg %p226
      // Predicated region
      $region9: #{redundant_decoder_forward.2} parent=5 // pred_check
        _
      $region10: #{redundant_decoder_forward.2} parent=5 // pred_check_branch
        %229 = sbr.rel (%p226) target = $region12
      $region11: #{redundant_decoder_forward.2} parent=5 // pred_region
        %s230 = ssub.s32 %s17, 1
        // Predicated region
        $region13: #{redundant_decoder_forward.2} parent=11 // pred_check
          %p231 = pneg %p64
        $region14: #{redundant_decoder_forward.2} parent=11 // pred_check_branch
          %233 = sbr.rel (%p231) target = $region16
        $region15: #{redundant_decoder_forward.2} parent=11 // pred_region
          _
        $region16: #{redundant_decoder_forward.2} parent=11 // pred_fallthru
          _
        // Predicated region
        $region17: #{redundant_decoder_forward.2} parent=11 // pred_check
          %p234 = pneg %p85
        $region18: #{redundant_decoder_forward.2} parent=11 // pred_check_branch
          %236 = sbr.rel (%p234) target = $region20
        $region19: #{redundant_decoder_forward.2} parent=11 // pred_region
          _
        $region20: #{redundant_decoder_forward.2} parent=11 // pred_fallthru
          _
        // Predicated region
        $region21: #{redundant_decoder_forward.2} parent=11 // pred_check
          %p237 = pneg %p106
        $region22: #{redundant_decoder_forward.2} parent=11 // pred_check_branch
          %239 = sbr.rel (%p237) target = $region24
        $region23: #{redundant_decoder_forward.2} parent=11 // pred_region
          _
        $region24: #{redundant_decoder_forward.2} parent=11 // pred_fallthru
          _
        // Predicated region
        $region25: #{redundant_decoder_forward.2} parent=11 // pred_check
          %p240 = pneg %p127
        $region26: #{redundant_decoder_forward.2} parent=11 // pred_check_branch
          %242 = sbr.rel (%p240) target = $region28
        $region27: #{redundant_decoder_forward.2} parent=11 // pred_region
          _
        $region28: #{redundant_decoder_forward.2} parent=11 // pred_fallthru
          _
        // Predicated region
        $region29: #{redundant_decoder_forward.2} parent=11 // pred_check
          %p243 = pneg %p148
        $region30: #{redundant_decoder_forward.2} parent=11 // pred_check_branch
          %245 = sbr.rel (%p243) target = $region32
        $region31: #{redundant_decoder_forward.2} parent=11 // pred_region
          _
        $region32: #{redundant_decoder_forward.2} parent=11 // pred_fallthru
          _
        // Predicated region
        $region33: #{redundant_decoder_forward.2} parent=11 // pred_check
          %p246 = pneg %p169
        $region34: #{redundant_decoder_forward.2} parent=11 // pred_check_branch
          %248 = sbr.rel (%p246) target = $region36
        $region35: #{redundant_decoder_forward.2} parent=11 // pred_region
          _
        $region36: #{redundant_decoder_forward.2} parent=11 // pred_fallthru
          _
        // Predicated region
        $region37: #{redundant_decoder_forward.2} parent=11 // pred_check
          %p249 = pneg %p190
        $region38: #{redundant_decoder_forward.2} parent=11 // pred_check_branch
          %251 = sbr.rel (%p249) target = $region40
        $region39: #{redundant_decoder_forward.2} parent=11 // pred_region
          _
        $region40: #{redundant_decoder_forward.2} parent=11 // pred_fallthru
          _
      $region12: #{redundant_decoder_forward.2} parent=5 // pred_fallthru
        _
      %p252 = scmp.lt.s32.totalorder %s17, 2
      // Predicated region
      $region41: #{redundant_decoder_forward.2} parent=5 // pred_check
        %p253 = pneg %p252
      $region42: #{redundant_decoder_forward.2} parent=5 // pred_check_branch
        %255 = sbr.rel (%p253) target = $region44
      $region43: #{redundant_decoder_forward.2} parent=5 // pred_region
        // Predicated region
        $region45: #{redundant_decoder_forward.2} parent=43 // pred_check
          %p256 = pneg %p37
        $region46: #{redundant_decoder_forward.2} parent=43 // pred_check_branch
          %258 = sbr.rel (%p256) target = $region48
        $region47: #{redundant_decoder_forward.2} parent=43 // pred_region
          %s259 = sand.u32 %s27, 1
          %s260 = scalar_lea.sflag [#allocation3], %s259
          %s261 = sand.u32 %s27, 1
          %s262 = smul.addr %s261, 8
          %s263 = scalar_lea.vmem [#allocation2], %s262
          %s265 = ssub.s32 128, 128
          %266 = vsyncadd %s260, %s265
          %s267 = smul.addr %s17, 2
          %s268 = smul.addr %s267, 64
          %s269 = scalar_lea.hbm %s0, %s268
          %s271 = sshll.u32 %s263, 4
          %s272 = int_to_ptr.vmem [resolvable:$true] %s271
          %274 = dma.hbm_to_vmem [thread:$0]  %s269, 128, %s272, %s260
        $region48: #{redundant_decoder_forward.2} parent=43 // pred_fallthru
          _
      $region44: #{redundant_decoder_forward.2} parent=5 // pred_fallthru
        _
      %p275 = scmp.le.s32.totalorder 1, %s17
      %p276 = scmp.lt.s32.totalorder %s17, 3
      %p277 = pnand %p275, %p276
      %p278 = pneg %p277
      // Predicated region
      $region49: #{redundant_decoder_forward.2} parent=5 // pred_check
        _
      $region50: #{redundant_decoder_forward.2} parent=5 // pred_check_branch
        %280 = sbr.rel (%p277) target = $region52
      $region51: #{redundant_decoder_forward.2} parent=5 // pred_region
        %s281 = ssub.s32 %s17, 1
        %s282 = sand.u32 %s30, 1
        %s283 = scalar_lea.sflag [#allocation3], %s282
        %s284 = sand.u32 %s30, 1
        %s285 = smul.addr %s284, 8
        %s286 = scalar_lea.vmem [#allocation2], %s285
        // Predicated region
        $region53: #{redundant_decoder_forward.2} parent=51 // pred_check
          %p287 = pneg %p43
        $region54: #{redundant_decoder_forward.2} parent=51 // pred_check_branch
          %289 = sbr.rel (%p287) target = $region56
        $region55: #{redundant_decoder_forward.2} parent=51 // pred_region
          %290 = dma.done %s283, 128
        $region56: #{redundant_decoder_forward.2} parent=51 // pred_fallthru
          _
        %s291 = sand.u32 %s30, 1
        %s292 = scalar_lea.sflag [#allocation3], %s291
        %s293 = sand.u32 %s30, 1
        %s294 = smul.addr %s293, 8
        %s295 = scalar_lea.vmem [#allocation2], %s294
        %p296 = pneg %p43
        %p297 = pneg %p40
        %p298 = pneg %p64
        %p299 = pneg %p61
        %p300 = pneg %p85
        %p301 = pneg %p82
        %p302 = pneg %p106
        %p303 = pneg %p103
        %p304 = pneg %p127
        %p305 = pneg %p124
        %p306 = pneg %p148
        %p307 = pneg %p145
        %p308 = pneg %p169
        %p309 = pneg %p166
        %p310 = pneg %p190
        %p311 = pneg %p187
        %p312 = pneg %p216
        %p313 = pneg %p213
        %p314 = scmp.lt.s32.totalorder %s22, 1
        %s315 = scalar_select %p314, %s22, 1
        %s316 = smul.addr %s315, 8
        %s317 = smul.addr %s316, 8
        %s318 = scalar_lea.vmem %s8, %s317
        %p319 = scmp.lt.s32.totalorder %s22, 1
        %s320 = scalar_select %p319, %s22, 1
        %s321 = smul.addr %s320, 8
        %s322 = smul.addr %s321, 8
        %s323 = scalar_lea.vmem %s8, %s322
        %v325 = vlaneseq
        %v326 = vand.u32 %v325, 127
        %v327 = vadd.s32 %v326, 128
        %vm328 = vcmp.ge.s32.totalorder %v326, 1
        %vm329 = vcmp.ge.s32.totalorder %v327, 1
        %vm330 = vcmp.le.s32.totalorder %v326, 254
        %vm331 = vcmp.le.s32.totalorder %v327, 254
        %v332 = vld [vmem:[%s286] sm:$0xff]
        %v334 = vcombine.high %v332, %v332
        %336 = vrot.lane.b32.xlu0 %v332, 1
        %v337 = vpop.permute.xlu0 %336
        %338 = vrot.lane.b32.xlu0 %v334, 1
        %v339 = vpop.permute.xlu0 %338
        %vm340 = vcmp.lt.s32.totalorder %v326, 1
        %v341 = vsel %vm340, %v337, %v339
        %v342 = vsel %vm340, %v339, %v337
        %v343 = vsel %vm328, %v342, 0.0
        %v344 = vsel %vm329, %v341, 0.0
        %345 = vrot.lane.b32.xlu0 %v332, 127
        %v346 = vpop.permute.xlu0 %345
        %347 = vrot.lane.b32.xlu0 %v334, 127
        %v348 = vpop.permute.xlu0 %347
        %vm349 = vcmp.lt.s32.totalorder %v326, 127
        %v350 = vsel %vm349, %v346, %v348
        %v351 = vsel %vm349, %v348, %v346
        %v352 = vsel %vm330, %v350, 0.0
        %v353 = vsel %vm331, %v351, 0.0
        %v354 = vld [vmem:[%s1] sm:$0xff]
        %v355 = vld [vmem:[%s1 + $0x8] sm:$0xff]
        %v356 = vld [vmem:[%s1 + $0x10] sm:$0xff]
        %v357 = vld [vmem:[%s1 + $0x18] sm:$0xff]
        %s358 = scalar_lea.vmem %s1, 32
        %v359 = vld [vmem:[%s358] sm:$0xff]
        %v360 = vld [vmem:[%s358 + $0x8] sm:$0xff]
        %v361 = vld [vmem:[%s358 + $0x10] sm:$0xff]
        %v362 = vld [vmem:[%s358 + $0x18] sm:$0xff]
        %vm363 = vcmask 31744
        %v365 = vsel %vm363, %v359, 0
        %v368 = vsel %vm363, %v360, 0
        %v371 = vsel %vm363, %v361, 0
        %v374 = vsel %vm363, %v362, 0
        %vm376 = vcmask 1043456
        %v377 = vsel %vm376, %v332, 0
        %v379 = vsel %vm376, %v334, 0
        %381 = vmatprep.subr.mxu0 %v379
        %382 = vmatpush1.msra.mxu0 %v377
        %383 = vmatprep.subr.mxu0 0.0
        %384 = vmatpush1.msra.mxu0 0.0
        %385 = vmatprep.subr.mxu0 0.0
        %386 = vmatpush1.msra.mxu0 0.0
        %387 = vmatprep.subr.mxu0 0.0
        %388 = vmatpush1.msra.mxu0 0.0
        %389 = vmatprep.subr.mxu0 0.0
        %390 = vmatpush1.msra.mxu0 0.0
        %391 = vmatprep.subr.mxu0 0.0
        %392 = vmatpush1.msra.mxu0 0.0
        %393 = vmatprep.subr.mxu0 0.0
        %394 = vmatpush1.msra.mxu0 0.0
        %395 = vmatprep.subr.mxu0 0.0
        %396 = vmatpush1.msra.mxu0 0.0
        %397 = vmatprep.subr.mxu0 0.0
        %398 = vmatpush1.msra.mxu0 0.0
        %399 = vmatprep.subr.mxu0 0.0
        %400 = vmatpush1.msra.mxu0 0.0
        %401 = vmatprep.subr.mxu0 0.0
        %402 = vmatpush1.msra.mxu0 0.0
        %403 = vmatprep.subr.mxu0 0.0
        %404 = vmatpush1.msra.mxu0 0.0
        %405 = vmatprep.subr.mxu0 0.0
        %406 = vmatpush1.msra.mxu0 0.0
        %407 = vmatprep.subr.mxu0 0.0
        %408 = vmatpush1.msra.mxu0 0.0
        %409 = vmatprep.subr.mxu0 0.0
        %410 = vmatpush1.msra.mxu0 0.0
        %411 = vmatprep.subr.mxu0 0.0
        %412 = vmatpush1.msra.mxu0 0.0
        %413 = vmatprep.subr.mxu0 0.0
        %414 = vmatpush1.msra.mxu0 0.0
        %415 = vmatprep.subr.mxu0 0.0
        %416 = vmatpush1.msra.mxu0 0.0
        %417 = vmatprep.subr.mxu0 0.0
        %418 = vmatpush1.msra.mxu0 0.0
        %419 = vmatprep.subr.mxu0 0.0
        %420 = vmatpush1.msra.mxu0 0.0
        %421 = vmatprep.subr.mxu0 0.0
        %422 = vmatpush1.msra.mxu0 0.0
        %423 = vmatprep.subr.mxu0 0.0
        %424 = vmatpush1.msra.mxu0 0.0
        %425 = vmatprep.subr.mxu0 0.0
        %426 = vmatpush1.msra.mxu0 0.0
        %427 = vmatprep.subr.mxu0 0.0
        %428 = vmatpush1.msra.mxu0 0.0
        %429 = vmatprep.subr.mxu0 0.0
        %430 = vmatpush1.msra.mxu0 0.0
        %431 = vmatprep.subr.mxu0 0.0
        %432 = vmatpush1.msra.mxu0 0.0
        %433 = vmatprep.subr.mxu0 0.0
        %434 = vmatpush1.msra.mxu0 0.0
        %435 = vmatprep.subr.mxu0 0.0
        %436 = vmatpush1.msra.mxu0 0.0
        %437 = vmatprep.subr.mxu0 0.0
        %438 = vmatpush1.msra.mxu0 0.0
        %439 = vmatprep.subr.mxu0 0.0
        %440 = vmatpush1.msra.mxu0 0.0
        %441 = vmatprep.subr.mxu0 0.0
        %442 = vmatpush1.msra.mxu0 0.0
        %443 = vmatprep.subr.mxu0 0.0
        %444 = vmatpush1.msra.mxu0 0.0
        %445 = vmatprep.mubr.f32.mxu0 0.0
        %446 = vmatmul.mubr.f32.gmra.mrb[0].mxu0 %v365
        %v447 = vpop.f32.mrb[0].mxu0
        %v448 = vadd.f32 0.0, %v447
        %v449 = vpop.f32.mrb[0].mxu0
        %v450 = vadd.f32 0.0, %v449
        %451 = vmatprep.mubr.f32.mxu0 0.0
        %452 = vmatmul.mubr.f32.gmra.mrb[0].mxu0 %v368
        %v453 = vpop.f32.mrb[0].mxu0
        %v454 = vadd.f32 0.0, %v453
        %v455 = vpop.f32.mrb[0].mxu0
        %v456 = vadd.f32 0.0, %v455
        %457 = vmatprep.mubr.f32.mxu0 0.0
        %458 = vmatmul.mubr.f32.gmra.mrb[0].mxu0 %v371
        %v459 = vpop.f32.mrb[0].mxu0
        %v460 = vadd.f32 0.0, %v459
        %v461 = vpop.f32.mrb[0].mxu0
        %v462 = vadd.f32 0.0, %v461
        %463 = vmatprep.mubr.f32.mxu0 0.0
        %464 = vmatmul.mubr.f32.gmra.mrb[0].mxu0 %v374
        %v465 = vpop.f32.mrb[0].mxu0
        %v466 = vadd.f32 0.0, %v465
        %v467 = vpop.f32.mrb[0].mxu0
        %v468 = vadd.f32 0.0, %v467
        %469 = vdwg.mxu0
        %v471 = vsel %vm363, %v354, 0
        %v474 = vsel %vm363, %v355, 0
        %v477 = vsel %vm363, %v356, 0
        %v480 = vsel %vm363, %v357, 0
        %v483 = vsel %vm376, %v343, 0
        %v486 = vsel %vm376, %v344, 0
        %488 = vmatprep.subr.mxu0 %v486
        %489 = vmatpush1.msra.mxu0 %v483
        %490 = vmatprep.subr.mxu0 0.0
        %491 = vmatpush1.msra.mxu0 0.0
        %492 = vmatprep.subr.mxu0 0.0
        %493 = vmatpush1.msra.mxu0 0.0
        %494 = vmatprep.subr.mxu0 0.0
        %495 = vmatpush1.msra.mxu0 0.0
        %496 = vmatprep.subr.mxu0 0.0
        %497 = vmatpush1.msra.mxu0 0.0
        %498 = vmatprep.subr.mxu0 0.0
        %499 = vmatpush1.msra.mxu0 0.0
        %500 = vmatprep.subr.mxu0 0.0
        %501 = vmatpush1.msra.mxu0 0.0
        %502 = vmatprep.subr.mxu0 0.0
        %503 = vmatpush1.msra.mxu0 0.0
        %504 = vmatprep.subr.mxu0 0.0
        %505 = vmatpush1.msra.mxu0 0.0
        %506 = vmatprep.subr.mxu0 0.0
        %507 = vmatpush1.msra.mxu0 0.0
        %508 = vmatprep.subr.mxu0 0.0
        %509 = vmatpush1.msra.mxu0 0.0
        %510 = vmatprep.subr.mxu0 0.0
        %511 = vmatpush1.msra.mxu0 0.0
        %512 = vmatprep.subr.mxu0 0.0
        %513 = vmatpush1.msra.mxu0 0.0
        %514 = vmatprep.subr.mxu0 0.0
        %515 = vmatpush1.msra.mxu0 0.0
        %516 = vmatprep.subr.mxu0 0.0
        %517 = vmatpush1.msra.mxu0 0.0
        %518 = vmatprep.subr.mxu0 0.0
        %519 = vmatpush1.msra.mxu0 0.0
        %520 = vmatprep.subr.mxu0 0.0
        %521 = vmatpush1.msra.mxu0 0.0
        %522 = vmatprep.subr.mxu0 0.0
        %523 = vmatpush1.msra.mxu0 0.0
        %524 = vmatprep.subr.mxu0 0.0
        %525 = vmatpush1.msra.mxu0 0.0
        %526 = vmatprep.subr.mxu0 0.0
        %527 = vmatpush1.msra.mxu0 0.0
        %528 = vmatprep.subr.mxu0 0.0
        %529 = vmatpush1.msra.mxu0 0.0
        %530 = vmatprep.subr.mxu0 0.0
        %531 = vmatpush1.msra.mxu0 0.0
        %532 = vmatprep.subr.mxu0 0.0
        %533 = vmatpush1.msra.mxu0 0.0
        %534 = vmatprep.subr.mxu0 0.0
        %535 = vmatpush1.msra.mxu0 0.0
        %536 = vmatprep.subr.mxu0 0.0
        %537 = vmatpush1.msra.mxu0 0.0
        %538 = vmatprep.subr.mxu0 0.0
        %539 = vmatpush1.msra.mxu0 0.0
        %540 = vmatprep.subr.mxu0 0.0
        %541 = vmatpush1.msra.mxu0 0.0
        %542 = vmatprep.subr.mxu0 0.0
        %543 = vmatpush1.msra.mxu0 0.0
        %544 = vmatprep.subr.mxu0 0.0
        %545 = vmatpush1.msra.mxu0 0.0
        %546 = vmatprep.subr.mxu0 0.0
        %547 = vmatpush1.msra.mxu0 0.0
        %548 = vmatprep.subr.mxu0 0.0
        %549 = vmatpush1.msra.mxu0 0.0
        %550 = vmatprep.subr.mxu0 0.0
        %551 = vmatpush1.msra.mxu0 0.0
        %552 = vmatprep.mubr.f32.mxu0 0.0
        %553 = vmatmul.mubr.f32.gmra.mrb[0].mxu0 %v471
        %v554 = vpop.f32.mrb[0].mxu0
        %v555 = vadd.f32 %v448, %v554
        %v556 = vpop.f32.mrb[0].mxu0
        %v557 = vadd.f32 %v450, %v556
        %558 = vmatprep.mubr.f32.mxu0 0.0
        %559 = vmatmul.mubr.f32.gmra.mrb[0].mxu0 %v474
        %v560 = vpop.f32.mrb[0].mxu0
        %v561 = vadd.f32 %v454, %v560
        %v562 = vpop.f32.mrb[0].mxu0
        %v563 = vadd.f32 %v456, %v562
        %564 = vmatprep.mubr.f32.mxu0 0.0
        %565 = vmatmul.mubr.f32.gmra.mrb[0].mxu0 %v477
        %v566 = vpop.f32.mrb[0].mxu0
        %v567 = vadd.f32 %v460, %v566
        %v568 = vpop.f32.mrb[0].mxu0
        %v569 = vadd.f32 %v462, %v568
        %570 = vmatprep.mubr.f32.mxu0 0.0
        %571 = vmatmul.mubr.f32.gmra.mrb[0].mxu0 %v480
        %v572 = vpop.f32.mrb[0].mxu0
        %v573 = vadd.f32 %v466, %v572
        %v574 = vpop.f32.mrb[0].mxu0
        %v575 = vadd.f32 %v468, %v574
        %576 = vdwg.mxu0
        %s577 = scalar_lea.vmem %s1, 64
        %v578 = vld [vmem:[%s577] sm:$0xff]
        %v579 = vld [vmem:[%s577 + $0x8] sm:$0xff]
        %v580 = vld [vmem:[%s577 + $0x10] sm:$0xff]
        %v581 = vld [vmem:[%s577 + $0x18] sm:$0xff]
        %v583 = vsel %vm363, %v578, 0
        %v586 = vsel %vm363, %v579, 0
        %v589 = vsel %vm363, %v580, 0
        %v592 = vsel %vm363, %v581, 0
        %v595 = vsel %vm376, %v352, 0
        %v598 = vsel %vm376, %v353, 0
        %600 = vmatprep.subr.mxu0 %v598
        %601 = vmatpush1.msra.mxu0 %v595
        %602 = vmatprep.subr.mxu0 0.0
        %603 = vmatpush1.msra.mxu0 0.0
        %604 = vmatprep.subr.mxu0 0.0
        %605 = vmatpush1.msra.mxu0 0.0
        %606 = vmatprep.subr.mxu0 0.0
        %607 = vmatpush1.msra.mxu0 0.0
        %608 = vmatprep.subr.mxu0 0.0
        %609 = vmatpush1.msra.mxu0 0.0
        %610 = vmatprep.subr.mxu0 0.0
        %611 = vmatpush1.msra.mxu0 0.0
        %612 = vmatprep.subr.mxu0 0.0
        %613 = vmatpush1.msra.mxu0 0.0
        %614 = vmatprep.subr.mxu0 0.0
        %615 = vmatpush1.msra.mxu0 0.0
        %616 = vmatprep.subr.mxu0 0.0
        %617 = vmatpush1.msra.mxu0 0.0
        %618 = vmatprep.subr.mxu0 0.0
        %619 = vmatpush1.msra.mxu0 0.0
        %620 = vmatprep.subr.mxu0 0.0
        %621 = vmatpush1.msra.mxu0 0.0
        %622 = vmatprep.subr.mxu0 0.0
        %623 = vmatpush1.msra.mxu0 0.0
        %624 = vmatprep.subr.mxu0 0.0
        %625 = vmatpush1.msra.mxu0 0.0
        %626 = vmatprep.subr.mxu0 0.0
        %627 = vmatpush1.msra.mxu0 0.0
        %628 = vmatprep.subr.mxu0 0.0
        %629 = vmatpush1.msra.mxu0 0.0
        %630 = vmatprep.subr.mxu0 0.0
        %631 = vmatpush1.msra.mxu0 0.0
        %632 = vmatprep.subr.mxu0 0.0
        %633 = vmatpush1.msra.mxu0 0.0
        %634 = vmatprep.subr.mxu0 0.0
        %635 = vmatpush1.msra.mxu0 0.0
        %636 = vmatprep.subr.mxu0 0.0
        %637 = vmatpush1.msra.mxu0 0.0
        %638 = vmatprep.subr.mxu0 0.0
        %639 = vmatpush1.msra.mxu0 0.0
        %640 = vmatprep.subr.mxu0 0.0
        %641 = vmatpush1.msra.mxu0 0.0
        %642 = vmatprep.subr.mxu0 0.0
        %643 = vmatpush1.msra.mxu0 0.0
        %644 = vmatprep.subr.mxu0 0.0
        %645 = vmatpush1.msra.mxu0 0.0
        %646 = vmatprep.subr.mxu0 0.0
        %647 = vmatpush1.msra.mxu0 0.0
        %648 = vmatprep.subr.mxu0 0.0
        %649 = vmatpush1.msra.mxu0 0.0
        %650 = vmatprep.subr.mxu0 0.0
        %651 = vmatpush1.msra.mxu0 0.0
        %652 = vmatprep.subr.mxu0 0.0
        %653 = vmatpush1.msra.mxu0 0.0
        %654 = vmatprep.subr.mxu0 0.0
        %655 = vmatpush1.msra.mxu0 0.0
        %656 = vmatprep.subr.mxu0 0.0
        %657 = vmatpush1.msra.mxu0 0.0
        %658 = vmatprep.subr.mxu0 0.0
        %659 = vmatpush1.msra.mxu0 0.0
        %660 = vmatprep.subr.mxu0 0.0
        %661 = vmatpush1.msra.mxu0 0.0
        %662 = vmatprep.subr.mxu0 0.0
        %663 = vmatpush1.msra.mxu0 0.0
        %664 = vmatprep.mubr.f32.mxu0 0.0
        %665 = vmatmul.mubr.f32.gmra.mrb[0].mxu0 %v583
        %v666 = vpop.f32.mrb[0].mxu0
        %v667 = vadd.f32 0.0, %v666
        %v668 = vpop.f32.mrb[0].mxu0
        %v669 = vadd.f32 0.0, %v668
        %670 = vmatprep.mubr.f32.mxu0 0.0
        %671 = vmatmul.mubr.f32.gmra.mrb[0].mxu0 %v586
        %v672 = vpop.f32.mrb[0].mxu0
        %v673 = vadd.f32 0.0, %v672
        %v674 = vpop.f32.mrb[0].mxu0
        %v675 = vadd.f32 0.0, %v674
        %676 = vmatprep.mubr.f32.mxu0 0.0
        %677 = vmatmul.mubr.f32.gmra.mrb[0].mxu0 %v589
        %v678 = vpop.f32.mrb[0].mxu0
        %v679 = vadd.f32 0.0, %v678
        %v680 = vpop.f32.mrb[0].mxu0
        %v681 = vadd.f32 0.0, %v680
        %682 = vmatprep.mubr.f32.mxu0 0.0
        %683 = vmatmul.mubr.f32.gmra.mrb[0].mxu0 %v592
        %v684 = vpop.f32.mrb[0].mxu0
        %v685 = vadd.f32 0.0, %v684
        %v686 = vpop.f32.mrb[0].mxu0
        %v687 = vadd.f32 0.0, %v686
        %688 = vdwg.mxu0
        %v689 = vadd.f32 %v555, %v667
        %v690 = vadd.f32 %v557, %v669
        %v691 = vadd.f32 %v561, %v673
        %v692 = vadd.f32 %v563, %v675
        %v693 = vadd.f32 %v567, %v679
        %v694 = vadd.f32 %v569, %v681
        %v695 = vadd.f32 %v573, %v685
        %v696 = vadd.f32 %v575, %v687
        %v697 = vld [vmem:[%s5] sm:$0xff]
        %v698 = vld [vmem:[%s5 + $0x8] sm:$0xff]
        %v699 = vld [vmem:[%s5 + $0x10] sm:$0xff]
        %v700 = vld [vmem:[%s5 + $0x18] sm:$0xff]
        %702 = vset.pattern.permute.xlu0 0
        %703 = vperm.xlu0 %702, %v697
        %v704 = vpop.permute.xlu0 %703
        %707 = vset.pattern.permute.xlu0 0
        %708 = vperm.xlu0 %707, %v698
        %v709 = vpop.permute.xlu0 %708
        %712 = vset.pattern.permute.xlu0 0
        %713 = vperm.xlu0 %712, %v699
        %v714 = vpop.permute.xlu0 %713
        %717 = vset.pattern.permute.xlu0 0
        %718 = vperm.xlu0 %717, %v700
        %v719 = vpop.permute.xlu0 %718
        %v721 = vadd.f32 %v689, %v704
        %v722 = vadd.f32 %v690, %v704
        %v723 = vadd.f32 %v691, %v709
        %v724 = vadd.f32 %v692, %v709
        %v725 = vadd.f32 %v693, %v714
        %v726 = vadd.f32 %v694, %v714
        %v727 = vadd.f32 %v695, %v719
        %v728 = vadd.f32 %v696, %v719
        %vm729 = vcmp.gt.f32.partialorder %v721, 0.0
        %vm730 = vcmp.gt.f32.partialorder %v722, 0.0
        %vm731 = vcmp.gt.f32.partialorder %v723, 0.0
        %vm732 = vcmp.gt.f32.partialorder %v724, 0.0
        %vm733 = vcmp.gt.f32.partialorder %v725, 0.0
        %vm734 = vcmp.gt.f32.partialorder %v726, 0.0
        %vm735 = vcmp.gt.f32.partialorder %v727, 0.0
        %vm736 = vcmp.gt.f32.partialorder %v728, 0.0
        %v737 = vmul.f32 %v721, 0.01
        %v738 = vmul.f32 %v722, 0.01
        %v739 = vmul.f32 %v723, 0.01
        %v740 = vmul.f32 %v724, 0.01
        %v741 = vmul.f32 %v725, 0.01
        %v742 = vmul.f32 %v726, 0.01
        %v743 = vmul.f32 %v727, 0.01
        %v744 = vmul.f32 %v728, 0.01
        %v745 = vsel %vm729, %v721, %v737
        %v746 = vsel %vm730, %v722, %v738
        %v747 = vsel %vm731, %v723, %v739
        %v748 = vsel %vm732, %v724, %v740
        %v749 = vsel %vm733, %v725, %v741
        %v750 = vsel %vm734, %v726, %v742
        %v751 = vsel %vm735, %v727, %v743
        %v752 = vsel %vm736, %v728, %v744
        %v753 = vadd.f32 %v745, %v746
        %754 = vadd.xlane.f32.xlu0 %v753
        %v755 = vpop.xlane.xlu0 %754
        %v756 = vadd.f32 %v747, %v748
        %757 = vadd.xlane.f32.xlu0 %v756
        %v758 = vpop.xlane.xlu0 %757
        %v759 = vadd.f32 %v749, %v750
        %760 = vadd.xlane.f32.xlu0 %v759
        %v761 = vpop.xlane.xlu0 %760
        %v762 = vadd.f32 %v751, %v752
        %763 = vadd.xlane.f32.xlu0 %v762
        %v764 = vpop.xlane.xlu0 %763
        %v765 = vrcp.pop 256.0
        %v766 = vmul.f32 %v755, %v765
        %v767 = vmul.f32 %v758, %v765
        %v768 = vmul.f32 %v761, %v765
        %v769 = vmul.f32 %v764, %v765
        %v770 = vsub.f32 %v745, %v766
        %v771 = vsub.f32 %v746, %v766
        %v772 = vsub.f32 %v747, %v767
        %v773 = vsub.f32 %v748, %v767
        %v774 = vsub.f32 %v749, %v768
        %v775 = vsub.f32 %v750, %v768
        %v776 = vsub.f32 %v751, %v769
        %v777 = vsub.f32 %v752, %v769
        %v778 = vmul.f32 %v770, %v770
        %v779 = vmul.f32 %v771, %v771
        %v780 = vmul.f32 %v772, %v772
        %v781 = vmul.f32 %v773, %v773
        %v782 = vmul.f32 %v774, %v774
        %v783 = vmul.f32 %v775, %v775
        %v784 = vmul.f32 %v776, %v776
        %v785 = vmul.f32 %v777, %v777
        %v786 = vadd.f32 %v778, %v779
        %787 = vadd.xlane.f32.xlu0 %v786
        %v788 = vpop.xlane.xlu0 %787
        %v789 = vadd.f32 %v780, %v781
        %790 = vadd.xlane.f32.xlu0 %v789
        %v791 = vpop.xlane.xlu0 %790
        %v792 = vadd.f32 %v782, %v783
        %793 = vadd.xlane.f32.xlu0 %v792
        %v794 = vpop.xlane.xlu0 %793
        %v795 = vadd.f32 %v784, %v785
        %796 = vadd.xlane.f32.xlu0 %v795
        %v797 = vpop.xlane.xlu0 %796
        %v798 = vmul.f32 %v788, %v765
        %v799 = vmul.f32 %v791, %v765
        %v800 = vmul.f32 %v794, %v765
        %v801 = vmul.f32 %v797, %v765
        %v802 = vadd.f32 %v798, 1e-05
        %v803 = vadd.f32 %v799, 1e-05
        %v804 = vadd.f32 %v800, 1e-05
        %v805 = vadd.f32 %v801, 1e-05
        %v806 = vrsqrt.pop %v802
        %v807 = vrsqrt.pop %v803
        %v808 = vrsqrt.pop %v804
        %v809 = vrsqrt.pop %v805
        %v810 = vmul.f32 %v770, %v806
        %v811 = vmul.f32 %v771, %v806
        %v812 = vmul.f32 %v772, %v807
        %v813 = vmul.f32 %v773, %v807
        %v814 = vmul.f32 %v774, %v808
        %v815 = vmul.f32 %v775, %v808
        %v816 = vmul.f32 %v776, %v809
        %v817 = vmul.f32 %v777, %v809
        %v818 = vld [vmem:[%s6] sm:$0xff]
        %v819 = vld [vmem:[%s6 + $0x8] sm:$0xff]
        %v820 = vld [vmem:[%s6 + $0x10] sm:$0xff]
        %v821 = vld [vmem:[%s6 + $0x18] sm:$0xff]
        %823 = vset.pattern.permute.xlu0 0
        %824 = vperm.xlu0 %823, %v818
        %v825 = vpop.permute.xlu0 %824
        %828 = vset.pattern.permute.xlu0 0
        %829 = vperm.xlu0 %828, %v819
        %v830 = vpop.permute.xlu0 %829
        %833 = vset.pattern.permute.xlu0 0
        %834 = vperm.xlu0 %833, %v820
        %v835 = vpop.permute.xlu0 %834
        %838 = vset.pattern.permute.xlu0 0
        %839 = vperm.xlu0 %838, %v821
        %v840 = vpop.permute.xlu0 %839
        %v842 = vmul.f32 %v810, %v825
        %v843 = vmul.f32 %v811, %v825
        %v844 = vmul.f32 %v812, %v830
        %v845 = vmul.f32 %v813, %v830
        %v846 = vmul.f32 %v814, %v835
        %v847 = vmul.f32 %v815, %v835
        %v848 = vmul.f32 %v816, %v840
        %v849 = vmul.f32 %v817, %v840
        %v850 = vld [vmem:[%s7] sm:$0xff]
        %v851 = vld [vmem:[%s7 + $0x8] sm:$0xff]
        %v852 = vld [vmem:[%s7 + $0x10] sm:$0xff]
        %v853 = vld [vmem:[%s7 + $0x18] sm:$0xff]
        %855 = vset.pattern.permute.xlu0 0
        %856 = vperm.xlu0 %855, %v850
        %v857 = vpop.permute.xlu0 %856
        %860 = vset.pattern.permute.xlu0 0
        %861 = vperm.xlu0 %860, %v851
        %v862 = vpop.permute.xlu0 %861
        %865 = vset.pattern.permute.xlu0 0
        %866 = vperm.xlu0 %865, %v852
        %v867 = vpop.permute.xlu0 %866
        %870 = vset.pattern.permute.xlu0 0
        %871 = vperm.xlu0 %870, %v853
        %v872 = vpop.permute.xlu0 %871
        %v874 = vadd.f32 %v842, %v857
        %v875 = vadd.f32 %v843, %v857
        %v876 = vadd.f32 %v844, %v862
        %v877 = vadd.f32 %v845, %v862
        %v878 = vadd.f32 %v846, %v867
        %v879 = vadd.f32 %v847, %v867
        %v880 = vadd.f32 %v848, %v872
        %v881 = vadd.f32 %v849, %v872
        %882 = vrot.lane.b32.xlu0 %v874, 1
        %v883 = vpop.permute.xlu0 %882
        %884 = vrot.lane.b32.xlu0 %v876, 1
        %v885 = vpop.permute.xlu0 %884
        %886 = vrot.lane.b32.xlu0 %v878, 1
        %v887 = vpop.permute.xlu0 %886
        %888 = vrot.lane.b32.xlu0 %v880, 1
        %v889 = vpop.permute.xlu0 %888
        %890 = vrot.lane.b32.xlu0 %v875, 1
        %v891 = vpop.permute.xlu0 %890
        %892 = vrot.lane.b32.xlu0 %v877, 1
        %v893 = vpop.permute.xlu0 %892
        %894 = vrot.lane.b32.xlu0 %v879, 1
        %v895 = vpop.permute.xlu0 %894
        %896 = vrot.lane.b32.xlu0 %v881, 1
        %v897 = vpop.permute.xlu0 %896
        %v898 = vsel %vm340, %v883, %v891
        %v899 = vsel %vm340, %v885, %v893
        %v900 = vsel %vm340, %v887, %v895
        %v901 = vsel %vm340, %v889, %v897
        %v902 = vsel %vm340, %v891, %v883
        %v903 = vsel %vm340, %v893, %v885
        %v904 = vsel %vm340, %v895, %v887
        %v905 = vsel %vm340, %v897, %v889
        %v906 = vsel %vm328, %v902, 0.0
        %v907 = vsel %vm329, %v898, 0.0
        %v908 = vsel %vm328, %v903, 0.0
        %v909 = vsel %vm329, %v899, 0.0
        %v910 = vsel %vm328, %v904, 0.0
        %v911 = vsel %vm329, %v900, 0.0
        %v912 = vsel %vm328, %v905, 0.0
        %v913 = vsel %vm329, %v901, 0.0
        %914 = vrot.lane.b32.xlu0 %v874, 127
        %v915 = vpop.permute.xlu0 %914
        %916 = vrot.lane.b32.xlu0 %v876, 127
        %v917 = vpop.permute.xlu0 %916
        %918 = vrot.lane.b32.xlu0 %v878, 127
        %v919 = vpop.permute.xlu0 %918
        %920 = vrot.lane.b32.xlu0 %v880, 127
        %v921 = vpop.permute.xlu0 %920
        %922 = vrot.lane.b32.xlu0 %v875, 127
        %v923 = vpop.permute.xlu0 %922
        %924 = vrot.lane.b32.xlu0 %v877, 127
        %v925 = vpop.permute.xlu0 %924
        %926 = vrot.lane.b32.xlu0 %v879, 127
        %v927 = vpop.permute.xlu0 %926
        %928 = vrot.lane.b32.xlu0 %v881, 127
        %v929 = vpop.permute.xlu0 %928
        %v930 = vsel %vm349, %v915, %v923
        %v931 = vsel %vm349, %v917, %v925
        %v932 = vsel %vm349, %v919, %v927
        %v933 = vsel %vm349, %v921, %v929
        %v934 = vsel %vm349, %v923, %v915
        %v935 = vsel %vm349, %v925, %v917
        %v936 = vsel %vm349, %v927, %v919
        %v937 = vsel %vm349, %v929, %v921
        %v938 = vsel %vm330, %v930, 0.0
        %v939 = vsel %vm331, %v934, 0.0
        %v940 = vsel %vm330, %v931, 0.0
        %v941 = vsel %vm331, %v935, 0.0
        %v942 = vsel %vm330, %v932, 0.0
        %v943 = vsel %vm331, %v936, 0.0
        %v944 = vsel %vm330, %v933, 0.0
        %v945 = vsel %vm331, %v937, 0.0
        %v946 = vpack.c.bf16 %v908, %v906
        %v947 = vpack.c.bf16 %v909, %v907
        %v948 = vpack.c.bf16 %v912, %v910
        %v949 = vpack.c.bf16 %v913, %v911
        %v950 = vpack.c.bf16 %v876, %v874
        %v951 = vpack.c.bf16 %v877, %v875
        %v952 = vpack.c.bf16 %v880, %v878
        %v953 = vpack.c.bf16 %v881, %v879
        %v954 = vpack.c.bf16 %v940, %v938
        %v955 = vpack.c.bf16 %v941, %v939
        %v956 = vpack.c.bf16 %v944, %v942
        %v957 = vpack.c.bf16 %v945, %v943
        %v958 = vld [vmem:[%s2] sm:$0xf]
        %v959 = vld [vmem:[%s2 + $0x4] sm:$0xf]
        %v960 = vld [vmem:[%s2 + $0x8] sm:$0xf]
        %v961 = vld [vmem:[%s2 + $0xc] sm:$0xf]
        %s962 = scalar_lea.vmem %s5, 32
        %v963 = vld [vmem:[%s962] sm:$0xff]
        %v964 = vld [vmem:[%s962 + $0x8] sm:$0xff]
        %v965 = vld [vmem:[%s962 + $0x10] sm:$0xff]
        %v966 = vld [vmem:[%s962 + $0x18] sm:$0xff]
        %968 = vset.pattern.permute.xlu0 0
        %969 = vperm.xlu0 %968, %v963
        %v970 = vpop.permute.xlu0 %969
        %973 = vset.pattern.permute.xlu0 0
        %974 = vperm.xlu0 %973, %v964
        %v975 = vpop.permute.xlu0 %974
        %978 = vset.pattern.permute.xlu0 0
        %979 = vperm.xlu0 %978, %v965
        %v980 = vpop.permute.xlu0 %979
        %983 = vset.pattern.permute.xlu0 0
        %984 = vperm.xlu0 %983, %v966
        %v985 = vpop.permute.xlu0 %984
        %v991 = vunpack.c.l.b16 %v958
        %v992 = vunpack.c.l.b16 %v959
        %v993 = vunpack.c.l.b16 %v960
        %v994 = vunpack.c.l.b16 %v961
        %v995 = vpack.c.b16 %v992, %v991
        %v996 = vpack.c.b16 %v994, %v993
        %vm997 = vcmask 785408
        %v999 = vsel %vm997, %v995, 0
        %v1002 = vsel %vm997, %v996, 0
        %1004 = vmatprep.subr.bf16.mxu0 %v947
        %1005 = vmatpush1.bf16.msra.mxu0 %v946
        %1006 = vmatprep.subr.bf16.mxu0 %v949
        %1007 = vmatpush1.bf16.msra.mxu0 %v948
        %1008 = vmatprep.subr.bf16.mxu0 %v951
        %1009 = vmatpush1.bf16.msra.mxu0 %v950
        %1010 = vmatprep.subr.bf16.mxu0 %v953
        %1011 = vmatpush1.bf16.msra.mxu0 %v952
        %1012 = vmatprep.subr.bf16.mxu0 %v955
        %1013 = vmatpush1.bf16.msra.mxu0 %v954
        %1014 = vmatprep.subr.bf16.mxu0 %v957
        %1015 = vmatpush1.bf16.msra.mxu0 %v956
        %1016 = vmatprep.subr.bf16.mxu0 0
        %1017 = vmatpush1.bf16.msra.mxu0 0
        %1018 = vmatprep.subr.bf16.mxu0 0
        %1019 = vmatpush1.bf16.msra.mxu0 0
        %1020 = vmatprep.subr.bf16.mxu0 0
        %1021 = vmatpush1.bf16.msra.mxu0 0
        %1022 = vmatprep.subr.bf16.mxu0 0
        %1023 = vmatpush1.bf16.msra.mxu0 0
        %1024 = vmatprep.subr.bf16.mxu0 0
        %1025 = vmatpush1.bf16.msra.mxu0 0
        %1026 = vmatprep.subr.bf16.mxu0 0
        %1027 = vmatpush1.bf16.msra.mxu0 0
        %1028 = vmatprep.subr.bf16.mxu0 0
        %1029 = vmatpush1.bf16.msra.mxu0 0
        %1030 = vmatprep.subr.bf16.mxu0 0
        %1031 = vmatpush1.bf16.msra.mxu0 0
        %1032 = vmatprep.subr.bf16.mxu0 0
        %1033 = vmatpush1.bf16.msra.mxu0 0
        %1034 = vmatprep.subr.bf16.mxu0 0
        %1035 = vmatpush1.bf16.msra.mxu0 0
        %1036 = vmatprep.mubr.bf16.mxu0 0
        %1037 = vmatmul.mubr.bf16.gmra.mrb[0].mxu0 %v999
        %v1038 = vpop.f32.mrb[0].mxu0
        %v1039 = vadd.f32 %v970, %v1038
        %v1040 = vpop.f32.mrb[0].mxu0
        %v1041 = vadd.f32 %v970, %v1040
        %v1042 = vpop.f32.mrb[0].mxu0
        %v1043 = vadd.f32 %v975, %v1042
        %v1044 = vpop.f32.mrb[0].mxu0
        %v1045 = vadd.f32 %v975, %v1044
        %1046 = vmatprep.mubr.bf16.mxu0 0
        %1047 = vmatmul.mubr.bf16.gmra.mrb[0].mxu0 %v1002
        %v1048 = vpop.f32.mrb[0].mxu0
        %v1049 = vadd.f32 %v980, %v1048
        %v1050 = vpop.f32.mrb[0].mxu0
        %v1051 = vadd.f32 %v980, %v1050
        %v1052 = vpop.f32.mrb[0].mxu0
        %v1053 = vadd.f32 %v985, %v1052
        %v1054 = vpop.f32.mrb[0].mxu0
        %v1055 = vadd.f32 %v985, %v1054
        %1056 = vdwg.mxu0
        %vm1057 = vcmp.gt.f32.partialorder %v1039, 0.0
        %vm1058 = vcmp.gt.f32.partialorder %v1041, 0.0
        %vm1059 = vcmp.gt.f32.partialorder %v1043, 0.0
        %vm1060 = vcmp.gt.f32.partialorder %v1045, 0.0
        %vm1061 = vcmp.gt.f32.partialorder %v1049, 0.0
        %vm1062 = vcmp.gt.f32.partialorder %v1051, 0.0
        %vm1063 = vcmp.gt.f32.partialorder %v1053, 0.0
        %vm1064 = vcmp.gt.f32.partialorder %v1055, 0.0
        %v1065 = vmul.f32 %v1039, 0.01
        %v1066 = vmul.f32 %v1041, 0.01
        %v1067 = vmul.f32 %v1043, 0.01
        %v1068 = vmul.f32 %v1045, 0.01
        %v1069 = vmul.f32 %v1049, 0.01
        %v1070 = vmul.f32 %v1051, 0.01
        %v1071 = vmul.f32 %v1053, 0.01
        %v1072 = vmul.f32 %v1055, 0.01
        %v1073 = vsel %vm1057, %v1039, %v1065
        %v1074 = vsel %vm1058, %v1041, %v1066
        %v1075 = vsel %vm1059, %v1043, %v1067
        %v1076 = vsel %vm1060, %v1045, %v1068
        %v1077 = vsel %vm1061, %v1049, %v1069
        %v1078 = vsel %vm1062, %v1051, %v1070
        %v1079 = vsel %vm1063, %v1053, %v1071
        %v1080 = vsel %vm1064, %v1055, %v1072
        %v1081 = vadd.f32 %v1073, %v1074
        %1082 = vadd.xlane.f32.xlu0 %v1081
        %v1083 = vpop.xlane.xlu0 %1082
        %v1084 = vadd.f32 %v1075, %v1076
        %1085 = vadd.xlane.f32.xlu0 %v1084
        %v1086 = vpop.xlane.xlu0 %1085
        %v1087 = vadd.f32 %v1077, %v1078
        %1088 = vadd.xlane.f32.xlu0 %v1087
        %v1089 = vpop.xlane.xlu0 %1088
        %v1090 = vadd.f32 %v1079, %v1080
        %1091 = vadd.xlane.f32.xlu0 %v1090
        %v1092 = vpop.xlane.xlu0 %1091
        %v1093 = vmul.f32 %v1083, %v765
        %v1094 = vmul.f32 %v1086, %v765
        %v1095 = vmul.f32 %v1089, %v765
        %v1096 = vmul.f32 %v1092, %v765
        %v1097 = vsub.f32 %v1073, %v1093
        %v1098 = vsub.f32 %v1074, %v1093
        %v1099 = vsub.f32 %v1075, %v1094
        %v1100 = vsub.f32 %v1076, %v1094
        %v1101 = vsub.f32 %v1077, %v1095
        %v1102 = vsub.f32 %v1078, %v1095
        %v1103 = vsub.f32 %v1079, %v1096
        %v1104 = vsub.f32 %v1080, %v1096
        %v1105 = vmul.f32 %v1097, %v1097
        %v1106 = vmul.f32 %v1098, %v1098
        %v1107 = vmul.f32 %v1099, %v1099
        %v1108 = vmul.f32 %v1100, %v1100
        %v1109 = vmul.f32 %v1101, %v1101
        %v1110 = vmul.f32 %v1102, %v1102
        %v1111 = vmul.f32 %v1103, %v1103
        %v1112 = vmul.f32 %v1104, %v1104
        %v1113 = vadd.f32 %v1105, %v1106
        %1114 = vadd.xlane.f32.xlu0 %v1113
        %v1115 = vpop.xlane.xlu0 %1114
        %v1116 = vadd.f32 %v1107, %v1108
        %1117 = vadd.xlane.f32.xlu0 %v1116
        %v1118 = vpop.xlane.xlu0 %1117
        %v1119 = vadd.f32 %v1109, %v1110
        %1120 = vadd.xlane.f32.xlu0 %v1119
        %v1121 = vpop.xlane.xlu0 %1120
        %v1122 = vadd.f32 %v1111, %v1112
        %1123 = vadd.xlane.f32.xlu0 %v1122
        %v1124 = vpop.xlane.xlu0 %1123
        %v1125 = vmul.f32 %v1115, %v765
        %v1126 = vmul.f32 %v1118, %v765
        %v1127 = vmul.f32 %v1121, %v765
        %v1128 = vmul.f32 %v1124, %v765
        %v1129 = vadd.f32 %v1125, 1e-05
        %v1130 = vadd.f32 %v1126, 1e-05
        %v1131 = vadd.f32 %v1127, 1e-05
        %v1132 = vadd.f32 %v1128, 1e-05
        %v1133 = vrsqrt.pop %v1129
        %v1134 = vrsqrt.pop %v1130
        %v1135 = vrsqrt.pop %v1131
        %v1136 = vrsqrt.pop %v1132
        %v1137 = vmul.f32 %v1097, %v1133
        %v1138 = vmul.f32 %v1098, %v1133
        %v1139 = vmul.f32 %v1099, %v1134
        %v1140 = vmul.f32 %v1100, %v1134
        %v1141 = vmul.f32 %v1101, %v1135
        %v1142 = vmul.f32 %v1102, %v1135
        %v1143 = vmul.f32 %v1103, %v1136
        %v1144 = vmul.f32 %v1104, %v1136
        %s1145 = scalar_lea.vmem %s6, 32
        %v1146 = vld [vmem:[%s1145] sm:$0xff]
        %v1147 = vld [vmem:[%s1145 + $0x8] sm:$0xff]
        %v1148 = vld [vmem:[%s1145 + $0x10] sm:$0xff]
        %v1149 = vld [vmem:[%s1145 + $0x18] sm:$0xff]
        %1151 = vset.pattern.permute.xlu0 0
        %1152 = vperm.xlu0 %1151, %v1146
        %v1153 = vpop.permute.xlu0 %1152
        %1156 = vset.pattern.permute.xlu0 0
        %1157 = vperm.xlu0 %1156, %v1147
        %v1158 = vpop.permute.xlu0 %1157
        %1161 = vset.pattern.permute.xlu0 0
        %1162 = vperm.xlu0 %1161, %v1148
        %v1163 = vpop.permute.xlu0 %1162
        %1166 = vset.pattern.permute.xlu0 0
        %1167 = vperm.xlu0 %1166, %v1149
        %v1168 = vpop.permute.xlu0 %1167
        %v1170 = vmul.f32 %v1137, %v1153
        %v1171 = vmul.f32 %v1138, %v1153
        %v1172 = vmul.f32 %v1139, %v1158
        %v1173 = vmul.f32 %v1140, %v1158
        %v1174 = vmul.f32 %v1141, %v1163
        %v1175 = vmul.f32 %v1142, %v1163
        %v1176 = vmul.f32 %v1143, %v1168
        %v1177 = vmul.f32 %v1144, %v1168
        %s1178 = scalar_lea.vmem %s7, 32
        %v1179 = vld [vmem:[%s1178] sm:$0xff]
        %v1180 = vld [vmem:[%s1178 + $0x8] sm:$0xff]
        %v1181 = vld [vmem:[%s1178 + $0x10] sm:$0xff]
        %v1182 = vld [vmem:[%s1178 + $0x18] sm:$0xff]
        %1184 = vset.pattern.permute.xlu0 0
        %1185 = vperm.xlu0 %1184, %v1179
        %v1186 = vpop.permute.xlu0 %1185
        %1189 = vset.pattern.permute.xlu0 0
        %1190 = vperm.xlu0 %1189, %v1180
        %v1191 = vpop.permute.xlu0 %1190
        %1194 = vset.pattern.permute.xlu0 0
        %1195 = vperm.xlu0 %1194, %v1181
        %v1196 = vpop.permute.xlu0 %1195
        %1199 = vset.pattern.permute.xlu0 0
        %1200 = vperm.xlu0 %1199, %v1182
        %v1201 = vpop.permute.xlu0 %1200
        %v1203 = vadd.f32 %v1170, %v1186
        %v1204 = vadd.f32 %v1171, %v1186
        %v1205 = vadd.f32 %v1172, %v1191
        %v1206 = vadd.f32 %v1173, %v1191
        %v1207 = vadd.f32 %v1174, %v1196
        %v1208 = vadd.f32 %v1175, %v1196
        %v1209 = vadd.f32 %v1176, %v1201
        %v1210 = vadd.f32 %v1177, %v1201
        %1211 = vrot.lane.b32.xlu0 %v1203, 1
        %v1212 = vpop.permute.xlu0 %1211
        %1213 = vrot.lane.b32.xlu0 %v1205, 1
        %v1214 = vpop.permute.xlu0 %1213
        %1215 = vrot.lane.b32.xlu0 %v1207, 1
        %v1216 = vpop.permute.xlu0 %1215
        %1217 = vrot.lane.b32.xlu0 %v1209, 1
        %v1218 = vpop.permute.xlu0 %1217
        %1219 = vrot.lane.b32.xlu0 %v1204, 1
        %v1220 = vpop.permute.xlu0 %1219
        %1221 = vrot.lane.b32.xlu0 %v1206, 1
        %v1222 = vpop.permute.xlu0 %1221
        %1223 = vrot.lane.b32.xlu0 %v1208, 1
        %v1224 = vpop.permute.xlu0 %1223
        %1225 = vrot.lane.b32.xlu0 %v1210, 1
        %v1226 = vpop.permute.xlu0 %1225
        %v1227 = vsel %vm340, %v1212, %v1220
        %v1228 = vsel %vm340, %v1214, %v1222
        %v1229 = vsel %vm340, %v1216, %v1224
        %v1230 = vsel %vm340, %v1218, %v1226
        %v1231 = vsel %vm340, %v1220, %v1212
        %v1232 = vsel %vm340, %v1222, %v1214
        %v1233 = vsel %vm340, %v1224, %v1216
        %v1234 = vsel %vm340, %v1226, %v1218
        %v1235 = vsel %vm328, %v1231, 0.0
        %v1236 = vsel %vm329, %v1227, 0.0
        %v1237 = vsel %vm328, %v1232, 0.0
        %v1238 = vsel %vm329, %v1228, 0.0
        %v1239 = vsel %vm328, %v1233, 0.0
        %v1240 = vsel %vm329, %v1229, 0.0
        %v1241 = vsel %vm328, %v1234, 0.0
        %v1242 = vsel %vm329, %v1230, 0.0
        %1243 = vrot.lane.b32.xlu0 %v1203, 127
        %v1244 = vpop.permute.xlu0 %1243
        %1245 = vrot.lane.b32.xlu0 %v1205, 127
        %v1246 = vpop.permute.xlu0 %1245
        %1247 = vrot.lane.b32.xlu0 %v1207, 127
        %v1248 = vpop.permute.xlu0 %1247
        %1249 = vrot.lane.b32.xlu0 %v1209, 127
        %v1250 = vpop.permute.xlu0 %1249
        %1251 = vrot.lane.b32.xlu0 %v1204, 127
        %v1252 = vpop.permute.xlu0 %1251
        %1253 = vrot.lane.b32.xlu0 %v1206, 127
        %v1254 = vpop.permute.xlu0 %1253
        %1255 = vrot.lane.b32.xlu0 %v1208, 127
        %v1256 = vpop.permute.xlu0 %1255
        %1257 = vrot.lane.b32.xlu0 %v1210, 127
        %v1258 = vpop.permute.xlu0 %1257
        %v1259 = vsel %vm349, %v1244, %v1252
        %v1260 = vsel %vm349, %v1246, %v1254
        %v1261 = vsel %vm349, %v1248, %v1256
        %v1262 = vsel %vm349, %v1250, %v1258
        %v1263 = vsel %vm349, %v1252, %v1244
        %v1264 = vsel %vm349, %v1254, %v1246
        %v1265 = vsel %vm349, %v1256, %v1248
        %v1266 = vsel %vm349, %v1258, %v1250
        %v1267 = vsel %vm330, %v1259, 0.0
        %v1268 = vsel %vm331, %v1263, 0.0
        %v1269 = vsel %vm330, %v1260, 0.0
        %v1270 = vsel %vm331, %v1264, 0.0
        %v1271 = vsel %vm330, %v1261, 0.0
        %v1272 = vsel %vm331, %v1265, 0.0
        %v1273 = vsel %vm330, %v1262, 0.0
        %v1274 = vsel %vm331, %v1266, 0.0
        %v1275 = vpack.c.bf16 %v1237, %v1235
        %v1276 = vpack.c.bf16 %v1238, %v1236
        %v1277 = vpack.c.bf16 %v1241, %v1239
        %v1278 = vpack.c.bf16 %v1242, %v1240
        %v1279 = vpack.c.bf16 %v1205, %v1203
        %v1280 = vpack.c.bf16 %v1206, %v1204
        %v1281 = vpack.c.bf16 %v1209, %v1207
        %v1282 = vpack.c.bf16 %v1210, %v1208
        %v1283 = vpack.c.bf16 %v1269, %v1267
        %v1284 = vpack.c.bf16 %v1270, %v1268
        %v1285 = vpack.c.bf16 %v1273, %v1271
        %v1286 = vpack.c.bf16 %v1274, %v1272
        %v1287 = vld [vmem:[%s3] sm:$0xf]
        %v1288 = vld [vmem:[%s3 + $0x4] sm:$0xf]
        %v1289 = vld [vmem:[%s3 + $0x8] sm:$0xf]
        %v1290 = vld [vmem:[%s3 + $0xc] sm:$0xf]
        %v1291 = vld [vmem:[%s4] sm:$0xf]
        %v1292 = vld [vmem:[%s4 + $0x4] sm:$0xf]
        %v1293 = vld [vmem:[%s4 + $0x8] sm:$0xf]
        %v1294 = vld [vmem:[%s4 + $0xc] sm:$0xf]
        %v1299 = vunpack.c.l.b16 %v1291
        %v1300 = vunpack.c.l.b16 %v1292
        %v1301 = vunpack.c.l.b16 %v1293
        %v1302 = vunpack.c.l.b16 %v1294
        %v1303 = vpack.c.b16 %v1300, %v1299
        %v1304 = vpack.c.b16 %v1302, %v1301
        %v1306 = vsel %vm997, %v1303, 0
        %v1309 = vsel %vm997, %v1304, 0
        %1311 = vmatprep.subr.bf16.mxu0 %v1276
        %1312 = vmatpush1.bf16.msra.mxu0 %v1275
        %1313 = vmatprep.subr.bf16.mxu0 %v1278
        %1314 = vmatpush1.bf16.msra.mxu0 %v1277
        %1315 = vmatprep.subr.bf16.mxu0 %v1280
        %1316 = vmatpush1.bf16.msra.mxu0 %v1279
        %1317 = vmatprep.subr.bf16.mxu0 %v1282
        %1318 = vmatpush1.bf16.msra.mxu0 %v1281
        %1319 = vmatprep.subr.bf16.mxu0 %v1284
        %1320 = vmatpush1.bf16.msra.mxu0 %v1283
        %1321 = vmatprep.subr.bf16.mxu0 %v1286
        %1322 = vmatpush1.bf16.msra.mxu0 %v1285
        %1323 = vmatprep.subr.bf16.mxu0 0
        %1324 = vmatpush1.bf16.msra.mxu0 0
        %1325 = vmatprep.subr.bf16.mxu0 0
        %1326 = vmatpush1.bf16.msra.mxu0 0
        %1327 = vmatprep.subr.bf16.mxu0 0
        %1328 = vmatpush1.bf16.msra.mxu0 0
        %1329 = vmatprep.subr.bf16.mxu0 0
        %1330 = vmatpush1.bf16.msra.mxu0 0
        %1331 = vmatprep.subr.bf16.mxu0 0
        %1332 = vmatpush1.bf16.msra.mxu0 0
        %1333 = vmatprep.subr.bf16.mxu0 0
        %1334 = vmatpush1.bf16.msra.mxu0 0
        %1335 = vmatprep.subr.bf16.mxu0 0
        %1336 = vmatpush1.bf16.msra.mxu0 0
        %1337 = vmatprep.subr.bf16.mxu0 0
        %1338 = vmatpush1.bf16.msra.mxu0 0
        %1339 = vmatprep.subr.bf16.mxu0 0
        %1340 = vmatpush1.bf16.msra.mxu0 0
        %1341 = vmatprep.subr.bf16.mxu0 0
        %1342 = vmatpush1.bf16.msra.mxu0 0
        %1343 = vmatprep.mubr.bf16.mxu0 0
        %1344 = vmatmul.mubr.bf16.gmra.mrb[0].mxu0 %v1306
        %v1345 = vpop.f32.mrb[0].mxu0
        %v1346 = vadd.f32 0.0, %v1345
        %v1347 = vpop.f32.mrb[0].mxu0
        %v1348 = vadd.f32 0.0, %v1347
        %v1349 = vpop.f32.mrb[0].mxu0
        %v1350 = vadd.f32 0.0, %v1349
        %v1351 = vpop.f32.mrb[0].mxu0
        %v1352 = vadd.f32 0.0, %v1351
        %1353 = vmatprep.mubr.bf16.mxu0 0
        %1354 = vmatmul.mubr.bf16.gmra.mrb[0].mxu0 %v1309
        %v1355 = vpop.f32.mrb[0].mxu0
        %v1356 = vadd.f32 0.0, %v1355
        %v1357 = vpop.f32.mrb[0].mxu0
        %v1358 = vadd.f32 0.0, %v1357
        %v1359 = vpop.f32.mrb[0].mxu0
        %v1360 = vadd.f32 0.0, %v1359
        %v1361 = vpop.f32.mrb[0].mxu0
        %v1362 = vadd.f32 0.0, %v1361
        %1363 = vdwg.mxu0
        %v1368 = vunpack.c.l.b16 %v1287
        %v1369 = vunpack.c.l.b16 %v1288
        %v1370 = vunpack.c.l.b16 %v1289
        %v1371 = vunpack.c.l.b16 %v1290
        %v1372 = vpack.c.b16 %v1369, %v1368
        %v1373 = vpack.c.b16 %v1371, %v1370
        %v1375 = vsel %vm997, %v1372, 0
        %v1378 = vsel %vm997, %v1373, 0
        %1380 = vmatprep.subr.bf16.mxu0 %v947
        %1381 = vmatpush1.bf16.msra.mxu0 %v946
        %1382 = vmatprep.subr.bf16.mxu0 %v949
        %1383 = vmatpush1.bf16.msra.mxu0 %v948
        %1384 = vmatprep.subr.bf16.mxu0 %v951
        %1385 = vmatpush1.bf16.msra.mxu0 %v950
        %1386 = vmatprep.subr.bf16.mxu0 %v953
        %1387 = vmatpush1.bf16.msra.mxu0 %v952
        %1388 = vmatprep.subr.bf16.mxu0 %v955
        %1389 = vmatpush1.bf16.msra.mxu0 %v954
        %1390 = vmatprep.subr.bf16.mxu0 %v957
        %1391 = vmatpush1.bf16.msra.mxu0 %v956
        %1392 = vmatprep.subr.bf16.mxu0 0
        %1393 = vmatpush1.bf16.msra.mxu0 0
        %1394 = vmatprep.subr.bf16.mxu0 0
        %1395 = vmatpush1.bf16.msra.mxu0 0
        %1396 = vmatprep.subr.bf16.mxu0 0
        %1397 = vmatpush1.bf16.msra.mxu0 0
        %1398 = vmatprep.subr.bf16.mxu0 0
        %1399 = vmatpush1.bf16.msra.mxu0 0
        %1400 = vmatprep.subr.bf16.mxu0 0
        %1401 = vmatpush1.bf16.msra.mxu0 0
        %1402 = vmatprep.subr.bf16.mxu0 0
        %1403 = vmatpush1.bf16.msra.mxu0 0
        %1404 = vmatprep.subr.bf16.mxu0 0
        %1405 = vmatpush1.bf16.msra.mxu0 0
        %1406 = vmatprep.subr.bf16.mxu0 0
        %1407 = vmatpush1.bf16.msra.mxu0 0
        %1408 = vmatprep.subr.bf16.mxu0 0
        %1409 = vmatpush1.bf16.msra.mxu0 0
        %1410 = vmatprep.subr.bf16.mxu0 0
        %1411 = vmatpush1.bf16.msra.mxu0 0
        %1412 = vmatprep.mubr.bf16.mxu0 0
        %1413 = vmatmul.mubr.bf16.gmra.mrb[0].mxu0 %v1375
        %v1414 = vpop.f32.mrb[0].mxu0
        %v1415 = vadd.f32 %v1346, %v1414
        %v1416 = vpop.f32.mrb[0].mxu0
        %v1417 = vadd.f32 %v1348, %v1416
        %v1418 = vpop.f32.mrb[0].mxu0
        %v1419 = vadd.f32 %v1350, %v1418
        %v1420 = vpop.f32.mrb[0].mxu0
        %v1421 = vadd.f32 %v1352, %v1420
        %1422 = vmatprep.mubr.bf16.mxu0 0
        %1423 = vmatmul.mubr.bf16.gmra.mrb[0].mxu0 %v1378
        %v1424 = vpop.f32.mrb[0].mxu0
        %v1425 = vadd.f32 %v1356, %v1424
        %v1426 = vpop.f32.mrb[0].mxu0
        %v1427 = vadd.f32 %v1358, %v1426
        %v1428 = vpop.f32.mrb[0].mxu0
        %v1429 = vadd.f32 %v1360, %v1428
        %v1430 = vpop.f32.mrb[0].mxu0
        %v1431 = vadd.f32 %v1362, %v1430
        %1432 = vdwg.mxu0
        %s1433 = scalar_lea.vmem %s5, 64
        %v1434 = vld [vmem:[%s1433] sm:$0xff]
        %v1435 = vld [vmem:[%s1433 + $0x8] sm:$0xff]
        %v1436 = vld [vmem:[%s1433 + $0x10] sm:$0xff]
        %v1437 = vld [vmem:[%s1433 + $0x18] sm:$0xff]
        %1439 = vset.pattern.permute.xlu0 0
        %1440 = vperm.xlu0 %1439, %v1434
        %v1441 = vpop.permute.xlu0 %1440
        %1444 = vset.pattern.permute.xlu0 0
        %1445 = vperm.xlu0 %1444, %v1435
        %v1446 = vpop.permute.xlu0 %1445
        %1449 = vset.pattern.permute.xlu0 0
        %1450 = vperm.xlu0 %1449, %v1436
        %v1451 = vpop.permute.xlu0 %1450
        %1454 = vset.pattern.permute.xlu0 0
        %1455 = vperm.xlu0 %1454, %v1437
        %v1456 = vpop.permute.xlu0 %1455
        %v1458 = vadd.f32 %v1415, %v1441
        %v1459 = vadd.f32 %v1417, %v1441
        %v1460 = vadd.f32 %v1419, %v1446
        %v1461 = vadd.f32 %v1421, %v1446
        %v1462 = vadd.f32 %v1425, %v1451
        %v1463 = vadd.f32 %v1427, %v1451
        %v1464 = vadd.f32 %v1429, %v1456
        %v1465 = vadd.f32 %v1431, %v1456
        %vm1466 = vcmp.gt.f32.partialorder %v1458, 0.0
        %vm1467 = vcmp.gt.f32.partialorder %v1459, 0.0
        %vm1468 = vcmp.gt.f32.partialorder %v1460, 0.0
        %vm1469 = vcmp.gt.f32.partialorder %v1461, 0.0
        %vm1470 = vcmp.gt.f32.partialorder %v1462, 0.0
        %vm1471 = vcmp.gt.f32.partialorder %v1463, 0.0
        %vm1472 = vcmp.gt.f32.partialorder %v1464, 0.0
        %vm1473 = vcmp.gt.f32.partialorder %v1465, 0.0
        %v1474 = vmul.f32 %v1458, 0.01
        %v1475 = vmul.f32 %v1459, 0.01
        %v1476 = vmul.f32 %v1460, 0.01
        %v1477 = vmul.f32 %v1461, 0.01
        %v1478 = vmul.f32 %v1462, 0.01
        %v1479 = vmul.f32 %v1463, 0.01
        %v1480 = vmul.f32 %v1464, 0.01
        %v1481 = vmul.f32 %v1465, 0.01
        %v1482 = vsel %vm1466, %v1458, %v1474
        %v1483 = vsel %vm1467, %v1459, %v1475
        %v1484 = vsel %vm1468, %v1460, %v1476
        %v1485 = vsel %vm1469, %v1461, %v1477
        %v1486 = vsel %vm1470, %v1462, %v1478
        %v1487 = vsel %vm1471, %v1463, %v1479
        %v1488 = vsel %vm1472, %v1464, %v1480
        %v1489 = vsel %vm1473, %v1465, %v1481
        %v1490 = vadd.f32 %v1482, %v1483
        %1491 = vadd.xlane.f32.xlu0 %v1490
        %v1492 = vpop.xlane.xlu0 %1491
        %v1493 = vadd.f32 %v1484, %v1485
        %1494 = vadd.xlane.f32.xlu0 %v1493
        %v1495 = vpop.xlane.xlu0 %1494
        %v1496 = vadd.f32 %v1486, %v1487
        %1497 = vadd.xlane.f32.xlu0 %v1496
        %v1498 = vpop.xlane.xlu0 %1497
        %v1499 = vadd.f32 %v1488, %v1489
        %1500 = vadd.xlane.f32.xlu0 %v1499
        %v1501 = vpop.xlane.xlu0 %1500
        %v1502 = vmul.f32 %v1492, %v765
        %v1503 = vmul.f32 %v1495, %v765
        %v1504 = vmul.f32 %v1498, %v765
        %v1505 = vmul.f32 %v1501, %v765
        %v1506 = vsub.f32 %v1482, %v1502
        %v1507 = vsub.f32 %v1483, %v1502
        %v1508 = vsub.f32 %v1484, %v1503
        %v1509 = vsub.f32 %v1485, %v1503
        %v1510 = vsub.f32 %v1486, %v1504
        %v1511 = vsub.f32 %v1487, %v1504
        %v1512 = vsub.f32 %v1488, %v1505
        %v1513 = vsub.f32 %v1489, %v1505
        %v1514 = vmul.f32 %v1506, %v1506
        %v1515 = vmul.f32 %v1507, %v1507
        %v1516 = vmul.f32 %v1508, %v1508
        %v1517 = vmul.f32 %v1509, %v1509
        %v1518 = vmul.f32 %v1510, %v1510
        %v1519 = vmul.f32 %v1511, %v1511
        %v1520 = vmul.f32 %v1512, %v1512
        %v1521 = vmul.f32 %v1513, %v1513
        %v1522 = vadd.f32 %v1514, %v1515
        %1523 = vadd.xlane.f32.xlu0 %v1522
        %v1524 = vpop.xlane.xlu0 %1523
        %v1525 = vadd.f32 %v1516, %v1517
        %1526 = vadd.xlane.f32.xlu0 %v1525
        %v1527 = vpop.xlane.xlu0 %1526
        %v1528 = vadd.f32 %v1518, %v1519
        %1529 = vadd.xlane.f32.xlu0 %v1528
        %v1530 = vpop.xlane.xlu0 %1529
        %v1531 = vadd.f32 %v1520, %v1521
        %1532 = vadd.xlane.f32.xlu0 %v1531
        %v1533 = vpop.xlane.xlu0 %1532
        %v1534 = vmul.f32 %v1524, %v765
        %v1535 = vmul.f32 %v1527, %v765
        %v1536 = vmul.f32 %v1530, %v765
        %v1537 = vmul.f32 %v1533, %v765
        %v1538 = vadd.f32 %v1534, 1e-05
        %v1539 = vadd.f32 %v1535, 1e-05
        %v1540 = vadd.f32 %v1536, 1e-05
        %v1541 = vadd.f32 %v1537, 1e-05
        %v1542 = vrsqrt.pop %v1538
        %v1543 = vrsqrt.pop %v1539
        %v1544 = vrsqrt.pop %v1540
        %v1545 = vrsqrt.pop %v1541
        %v1546 = vmul.f32 %v1506, %v1542
        %v1547 = vmul.f32 %v1507, %v1542
        %v1548 = vmul.f32 %v1508, %v1543
        %v1549 = vmul.f32 %v1509, %v1543
        %v1550 = vmul.f32 %v1510, %v1544
        %v1551 = vmul.f32 %v1511, %v1544
        %v1552 = vmul.f32 %v1512, %v1545
        %v1553 = vmul.f32 %v1513, %v1545
        %s1554 = scalar_lea.vmem %s6, 64
        %v1555 = vld [vmem:[%s1554] sm:$0xff]
        %v1556 = vld [vmem:[%s1554 + $0x8] sm:$0xff]
        %v1557 = vld [vmem:[%s1554 + $0x10] sm:$0xff]
        %v1558 = vld [vmem:[%s1554 + $0x18] sm:$0xff]
        %1560 = vset.pattern.permute.xlu0 0
        %1561 = vperm.xlu0 %1560, %v1555
        %v1562 = vpop.permute.xlu0 %1561
        %1565 = vset.pattern.permute.xlu0 0
        %1566 = vperm.xlu0 %1565, %v1556
        %v1567 = vpop.permute.xlu0 %1566
        %1570 = vset.pattern.permute.xlu0 0
        %1571 = vperm.xlu0 %1570, %v1557
        %v1572 = vpop.permute.xlu0 %1571
        %1575 = vset.pattern.permute.xlu0 0
        %1576 = vperm.xlu0 %1575, %v1558
        %v1577 = vpop.permute.xlu0 %1576
        %v1579 = vmul.f32 %v1546, %v1562
        %v1580 = vmul.f32 %v1547, %v1562
        %v1581 = vmul.f32 %v1548, %v1567
        %v1582 = vmul.f32 %v1549, %v1567
        %v1583 = vmul.f32 %v1550, %v1572
        %v1584 = vmul.f32 %v1551, %v1572
        %v1585 = vmul.f32 %v1552, %v1577
        %v1586 = vmul.f32 %v1553, %v1577
        %s1587 = scalar_lea.vmem %s7, 64
        %v1588 = vld [vmem:[%s1587] sm:$0xff]
        %v1589 = vld [vmem:[%s1587 + $0x8] sm:$0xff]
        %v1590 = vld [vmem:[%s1587 + $0x10] sm:$0xff]
        %v1591 = vld [vmem:[%s1587 + $0x18] sm:$0xff]
        %1593 = vset.pattern.permute.xlu0 0
        %1594 = vperm.xlu0 %1593, %v1588
        %v1595 = vpop.permute.xlu0 %1594
        %1598 = vset.pattern.permute.xlu0 0
        %1599 = vperm.xlu0 %1598, %v1589
        %v1600 = vpop.permute.xlu0 %1599
        %1603 = vset.pattern.permute.xlu0 0
        %1604 = vperm.xlu0 %1603, %v1590
        %v1605 = vpop.permute.xlu0 %1604
        %1608 = vset.pattern.permute.xlu0 0
        %1609 = vperm.xlu0 %1608, %v1591
        %v1610 = vpop.permute.xlu0 %1609
        %v1612 = vadd.f32 %v1579, %v1595
        %v1613 = vadd.f32 %v1580, %v1595
        %v1614 = vadd.f32 %v1581, %v1600
        %v1615 = vadd.f32 %v1582, %v1600
        %v1616 = vadd.f32 %v1583, %v1605
        %v1617 = vadd.f32 %v1584, %v1605
        %v1618 = vadd.f32 %v1585, %v1610
        %v1619 = vadd.f32 %v1586, %v1610
        %1620 = vrot.lane.b32.xlu0 %v1612, 1
        %v1621 = vpop.permute.xlu0 %1620
        %1622 = vrot.lane.b32.xlu0 %v1614, 1
        %v1623 = vpop.permute.xlu0 %1622
        %1624 = vrot.lane.b32.xlu0 %v1616, 1
        %v1625 = vpop.permute.xlu0 %1624
        %1626 = vrot.lane.b32.xlu0 %v1618, 1
        %v1627 = vpop.permute.xlu0 %1626
        %1628 = vrot.lane.b32.xlu0 %v1613, 1
        %v1629 = vpop.permute.xlu0 %1628
        %1630 = vrot.lane.b32.xlu0 %v1615, 1
        %v1631 = vpop.permute.xlu0 %1630
        %1632 = vrot.lane.b32.xlu0 %v1617, 1
        %v1633 = vpop.permute.xlu0 %1632
        %1634 = vrot.lane.b32.xlu0 %v1619, 1
        %v1635 = vpop.permute.xlu0 %1634
        %v1636 = vsel %vm340, %v1621, %v1629
        %v1637 = vsel %vm340, %v1623, %v1631
        %v1638 = vsel %vm340, %v1625, %v1633
        %v1639 = vsel %vm340, %v1627, %v1635
        %v1640 = vsel %vm340, %v1629, %v1621
        %v1641 = vsel %vm340, %v1631, %v1623
        %v1642 = vsel %vm340, %v1633, %v1625
        %v1643 = vsel %vm340, %v1635, %v1627
        %v1644 = vsel %vm328, %v1640, 0.0
        %v1645 = vsel %vm329, %v1636, 0.0
        %v1646 = vsel %vm328, %v1641, 0.0
        %v1647 = vsel %vm329, %v1637, 0.0
        %v1648 = vsel %vm328, %v1642, 0.0
        %v1649 = vsel %vm329, %v1638, 0.0
        %v1650 = vsel %vm328, %v1643, 0.0
        %v1651 = vsel %vm329, %v1639, 0.0
        %1652 = vrot.lane.b32.xlu0 %v1612, 127
        %v1653 = vpop.permute.xlu0 %1652
        %1654 = vrot.lane.b32.xlu0 %v1614, 127
        %v1655 = vpop.permute.xlu0 %1654
        %1656 = vrot.lane.b32.xlu0 %v1616, 127
        %v1657 = vpop.permute.xlu0 %1656
        %1658 = vrot.lane.b32.xlu0 %v1618, 127
        %v1659 = vpop.permute.xlu0 %1658
        %1660 = vrot.lane.b32.xlu0 %v1613, 127
        %v1661 = vpop.permute.xlu0 %1660
        %1662 = vrot.lane.b32.xlu0 %v1615, 127
        %v1663 = vpop.permute.xlu0 %1662
        %1664 = vrot.lane.b32.xlu0 %v1617, 127
        %v1665 = vpop.permute.xlu0 %1664
        %1666 = vrot.lane.b32.xlu0 %v1619, 127
        %v1667 = vpop.permute.xlu0 %1666
        %v1668 = vsel %vm349, %v1653, %v1661
        %v1669 = vsel %vm349, %v1655, %v1663
        %v1670 = vsel %vm349, %v1657, %v1665
        %v1671 = vsel %vm349, %v1659, %v1667
        %v1672 = vsel %vm349, %v1661, %v1653
        %v1673 = vsel %vm349, %v1663, %v1655
        %v1674 = vsel %vm349, %v1665, %v1657
        %v1675 = vsel %vm349, %v1667, %v1659
        %v1676 = vsel %vm330, %v1668, 0.0
        %v1677 = vsel %vm331, %v1672, 0.0
        %v1678 = vsel %vm330, %v1669, 0.0
        %v1679 = vsel %vm331, %v1673, 0.0
        %v1680 = vsel %vm330, %v1670, 0.0
        %v1681 = vsel %vm331, %v1674, 0.0
        %v1682 = vsel %vm330, %v1671, 0.0
        %v1683 = vsel %vm331, %v1675, 0.0
        %v1684 = vpack.c.bf16 %v1646, %v1644
        %v1685 = vpack.c.bf16 %v1647, %v1645
        %v1686 = vpack.c.bf16 %v1650, %v1648
        %v1687 = vpack.c.bf16 %v1651, %v1649
        %v1688 = vpack.c.bf16 %v1614, %v1612
        %v1689 = vpack.c.bf16 %v1615, %v1613
        %v1690 = vpack.c.bf16 %v1618, %v1616
        %v1691 = vpack.c.bf16 %v1619, %v1617
        %v1692 = vpack.c.bf16 %v1678, %v1676
        %v1693 = vpack.c.bf16 %v1679, %v1677
        %v1694 = vpack.c.bf16 %v1682, %v1680
        %v1695 = vpack.c.bf16 %v1683, %v1681
        %s1696 = scalar_lea.vmem %s3, 16
        %v1697 = vld [vmem:[%s1696] sm:$0xf]
        %v1698 = vld [vmem:[%s1696 + $0x4] sm:$0xf]
        %v1699 = vld [vmem:[%s1696 + $0x8] sm:$0xf]
        %v1700 = vld [vmem:[%s1696 + $0xc] sm:$0xf]
        %s1701 = scalar_lea.vmem %s4, 16
        %v1702 = vld [vmem:[%s1701] sm:$0xf]
        %v1703 = vld [vmem:[%s1701 + $0x4] sm:$0xf]
        %v1704 = vld [vmem:[%s1701 + $0x8] sm:$0xf]
        %v1705 = vld [vmem:[%s1701 + $0xc] sm:$0xf]
        %v1710 = vunpack.c.l.b16 %v1702
        %v1711 = vunpack.c.l.b16 %v1703
        %v1712 = vunpack.c.l.b16 %v1704
        %v1713 = vunpack.c.l.b16 %v1705
        %v1714 = vpack.c.b16 %v1711, %v1710
        %v1715 = vpack.c.b16 %v1713, %v1712
        %v1717 = vsel %vm997, %v1714, 0
        %v1720 = vsel %vm997, %v1715, 0
        %1722 = vmatprep.subr.bf16.mxu0 %v1685
        %1723 = vmatpush1.bf16.msra.mxu0 %v1684
        %1724 = vmatprep.subr.bf16.mxu0 %v1687
        %1725 = vmatpush1.bf16.msra.mxu0 %v1686
        %1726 = vmatprep.subr.bf16.mxu0 %v1689
        %1727 = vmatpush1.bf16.msra.mxu0 %v1688
        %1728 = vmatprep.subr.bf16.mxu0 %v1691
        %1729 = vmatpush1.bf16.msra.mxu0 %v1690
        %1730 = vmatprep.subr.bf16.mxu0 %v1693
        %1731 = vmatpush1.bf16.msra.mxu0 %v1692
        %1732 = vmatprep.subr.bf16.mxu0 %v1695
        %1733 = vmatpush1.bf16.msra.mxu0 %v1694
        %1734 = vmatprep.subr.bf16.mxu0 0
        %1735 = vmatpush1.bf16.msra.mxu0 0
        %1736 = vmatprep.subr.bf16.mxu0 0
        %1737 = vmatpush1.bf16.msra.mxu0 0
        %1738 = vmatprep.subr.bf16.mxu0 0
        %1739 = vmatpush1.bf16.msra.mxu0 0
        %1740 = vmatprep.subr.bf16.mxu0 0
        %1741 = vmatpush1.bf16.msra.mxu0 0
        %1742 = vmatprep.subr.bf16.mxu0 0
        %1743 = vmatpush1.bf16.msra.mxu0 0
        %1744 = vmatprep.subr.bf16.mxu0 0
        %1745 = vmatpush1.bf16.msra.mxu0 0
        %1746 = vmatprep.subr.bf16.mxu0 0
        %1747 = vmatpush1.bf16.msra.mxu0 0
        %1748 = vmatprep.subr.bf16.mxu0 0
        %1749 = vmatpush1.bf16.msra.mxu0 0
        %1750 = vmatprep.subr.bf16.mxu0 0
        %1751 = vmatpush1.bf16.msra.mxu0 0
        %1752 = vmatprep.subr.bf16.mxu0 0
        %1753 = vmatpush1.bf16.msra.mxu0 0
        %1754 = vmatprep.mubr.bf16.mxu0 0
        %1755 = vmatmul.mubr.bf16.gmra.mrb[0].mxu0 %v1717
        %v1756 = vpop.f32.mrb[0].mxu0
        %v1757 = vadd.f32 0.0, %v1756
        %v1758 = vpop.f32.mrb[0].mxu0
        %v1759 = vadd.f32 0.0, %v1758
        %v1760 = vpop.f32.mrb[0].mxu0
        %v1761 = vadd.f32 0.0, %v1760
        %v1762 = vpop.f32.mrb[0].mxu0
        %v1763 = vadd.f32 0.0, %v1762
        %1764 = vmatprep.mubr.bf16.mxu0 0
        %1765 = vmatmul.mubr.bf16.gmra.mrb[0].mxu0 %v1720
        %v1766 = vpop.f32.mrb[0].mxu0
        %v1767 = vadd.f32 0.0, %v1766
        %v1768 = vpop.f32.mrb[0].mxu0
        %v1769 = vadd.f32 0.0, %v1768
        %v1770 = vpop.f32.mrb[0].mxu0
        %v1771 = vadd.f32 0.0, %v1770
        %v1772 = vpop.f32.mrb[0].mxu0
        %v1773 = vadd.f32 0.0, %v1772
        %1774 = vdwg.mxu0
        %v1779 = vunpack.c.l.b16 %v1697
        %v1780 = vunpack.c.l.b16 %v1698
        %v1781 = vunpack.c.l.b16 %v1699
        %v1782 = vunpack.c.l.b16 %v1700
        %v1783 = vpack.c.b16 %v1780, %v1779
        %v1784 = vpack.c.b16 %v1782, %v1781
        %v1786 = vsel %vm997, %v1783, 0
        %v1789 = vsel %vm997, %v1784, 0
        %1791 = vmatprep.subr.bf16.mxu0 %v947
        %1792 = vmatpush1.bf16.msra.mxu0 %v946
        %1793 = vmatprep.subr.bf16.mxu0 %v949
        %1794 = vmatpush1.bf16.msra.mxu0 %v948
        %1795 = vmatprep.subr.bf16.mxu0 %v951
        %1796 = vmatpush1.bf16.msra.mxu0 %v950
        %1797 = vmatprep.subr.bf16.mxu0 %v953
        %1798 = vmatpush1.bf16.msra.mxu0 %v952
        %1799 = vmatprep.subr.bf16.mxu0 %v955
        %1800 = vmatpush1.bf16.msra.mxu0 %v954
        %1801 = vmatprep.subr.bf16.mxu0 %v957
        %1802 = vmatpush1.bf16.msra.mxu0 %v956
        %1803 = vmatprep.subr.bf16.mxu0 0
        %1804 = vmatpush1.bf16.msra.mxu0 0
        %1805 = vmatprep.subr.bf16.mxu0 0
        %1806 = vmatpush1.bf16.msra.mxu0 0
        %1807 = vmatprep.subr.bf16.mxu0 0
        %1808 = vmatpush1.bf16.msra.mxu0 0
        %1809 = vmatprep.subr.bf16.mxu0 0
        %1810 = vmatpush1.bf16.msra.mxu0 0
        %1811 = vmatprep.subr.bf16.mxu0 0
        %1812 = vmatpush1.bf16.msra.mxu0 0
        %1813 = vmatprep.subr.bf16.mxu0 0
        %1814 = vmatpush1.bf16.msra.mxu0 0
        %1815 = vmatprep.subr.bf16.mxu0 0
        %1816 = vmatpush1.bf16.msra.mxu0 0
        %1817 = vmatprep.subr.bf16.mxu0 0
        %1818 = vmatpush1.bf16.msra.mxu0 0
        %1819 = vmatprep.subr.bf16.mxu0 0
        %1820 = vmatpush1.bf16.msra.mxu0 0
        %1821 = vmatprep.subr.bf16.mxu0 0
        %1822 = vmatpush1.bf16.msra.mxu0 0
        %1823 = vmatprep.mubr.bf16.mxu0 0
        %1824 = vmatmul.mubr.bf16.gmra.mrb[0].mxu0 %v1786
        %v1825 = vpop.f32.mrb[0].mxu0
        %v1826 = vadd.f32 %v1757, %v1825
        %v1827 = vpop.f32.mrb[0].mxu0
        %v1828 = vadd.f32 %v1759, %v1827
        %v1829 = vpop.f32.mrb[0].mxu0
        %v1830 = vadd.f32 %v1761, %v1829
        %v1831 = vpop.f32.mrb[0].mxu0
        %v1832 = vadd.f32 %v1763, %v1831
        %1833 = vmatprep.mubr.bf16.mxu0 0
        %1834 = vmatmul.mubr.bf16.gmra.mrb[0].mxu0 %v1789
        %v1835 = vpop.f32.mrb[0].mxu0
        %v1836 = vadd.f32 %v1767, %v1835
        %v1837 = vpop.f32.mrb[0].mxu0
        %v1838 = vadd.f32 %v1769, %v1837
        %v1839 = vpop.f32.mrb[0].mxu0
        %v1840 = vadd.f32 %v1771, %v1839
        %v1841 = vpop.f32.mrb[0].mxu0
        %v1842 = vadd.f32 %v1773, %v1841
        %1843 = vdwg.mxu0
        %s1844 = scalar_lea.vmem %s5, 96
        %v1845 = vld [vmem:[%s1844] sm:$0xff]
        %v1846 = vld [vmem:[%s1844 + $0x8] sm:$0xff]
        %v1847 = vld [vmem:[%s1844 + $0x10] sm:$0xff]
        %v1848 = vld [vmem:[%s1844 + $0x18] sm:$0xff]
        %1850 = vset.pattern.permute.xlu0 0
        %1851 = vperm.xlu0 %1850, %v1845
        %v1852 = vpop.permute.xlu0 %1851
        %1855 = vset.pattern.permute.xlu0 0
        %1856 = vperm.xlu0 %1855, %v1846
        %v1857 = vpop.permute.xlu0 %1856
        %1860 = vset.pattern.permute.xlu0 0
        %1861 = vperm.xlu0 %1860, %v1847
        %v1862 = vpop.permute.xlu0 %1861
        %1865 = vset.pattern.permute.xlu0 0
        %1866 = vperm.xlu0 %1865, %v1848
        %v1867 = vpop.permute.xlu0 %1866
        %v1869 = vadd.f32 %v1826, %v1852
        %v1870 = vadd.f32 %v1828, %v1852
        %v1871 = vadd.f32 %v1830, %v1857
        %v1872 = vadd.f32 %v1832, %v1857
        %v1873 = vadd.f32 %v1836, %v1862
        %v1874 = vadd.f32 %v1838, %v1862
        %v1875 = vadd.f32 %v1840, %v1867
        %v1876 = vadd.f32 %v1842, %v1867
        %vm1877 = vcmp.gt.f32.partialorder %v1869, 0.0
        %vm1878 = vcmp.gt.f32.partialorder %v1870, 0.0
        %vm1879 = vcmp.gt.f32.partialorder %v1871, 0.0
        %vm1880 = vcmp.gt.f32.partialorder %v1872, 0.0
        %vm1881 = vcmp.gt.f32.partialorder %v1873, 0.0
        %vm1882 = vcmp.gt.f32.partialorder %v1874, 0.0
        %vm1883 = vcmp.gt.f32.partialorder %v1875, 0.0
        %vm1884 = vcmp.gt.f32.partialorder %v1876, 0.0
        %v1885 = vmul.f32 %v1869, 0.01
        %v1886 = vmul.f32 %v1870, 0.01
        %v1887 = vmul.f32 %v1871, 0.01
        %v1888 = vmul.f32 %v1872, 0.01
        %v1889 = vmul.f32 %v1873, 0.01
        %v1890 = vmul.f32 %v1874, 0.01
        %v1891 = vmul.f32 %v1875, 0.01
        %v1892 = vmul.f32 %v1876, 0.01
        %v1893 = vsel %vm1877, %v1869, %v1885
        %v1894 = vsel %vm1878, %v1870, %v1886
        %v1895 = vsel %vm1879, %v1871, %v1887
        %v1896 = vsel %vm1880, %v1872, %v1888
        %v1897 = vsel %vm1881, %v1873, %v1889
        %v1898 = vsel %vm1882, %v1874, %v1890
        %v1899 = vsel %vm1883, %v1875, %v1891
        %v1900 = vsel %vm1884, %v1876, %v1892
        %v1901 = vadd.f32 %v1893, %v1894
        %1902 = vadd.xlane.f32.xlu0 %v1901
        %v1903 = vpop.xlane.xlu0 %1902
        %v1904 = vadd.f32 %v1895, %v1896
        %1905 = vadd.xlane.f32.xlu0 %v1904
        %v1906 = vpop.xlane.xlu0 %1905
        %v1907 = vadd.f32 %v1897, %v1898
        %1908 = vadd.xlane.f32.xlu0 %v1907
        %v1909 = vpop.xlane.xlu0 %1908
        %v1910 = vadd.f32 %v1899, %v1900
        %1911 = vadd.xlane.f32.xlu0 %v1910
        %v1912 = vpop.xlane.xlu0 %1911
        %v1913 = vmul.f32 %v1903, %v765
        %v1914 = vmul.f32 %v1906, %v765
        %v1915 = vmul.f32 %v1909, %v765
        %v1916 = vmul.f32 %v1912, %v765
        %v1917 = vsub.f32 %v1893, %v1913
        %v1918 = vsub.f32 %v1894, %v1913
        %v1919 = vsub.f32 %v1895, %v1914
        %v1920 = vsub.f32 %v1896, %v1914
        %v1921 = vsub.f32 %v1897, %v1915
        %v1922 = vsub.f32 %v1898, %v1915
        %v1923 = vsub.f32 %v1899, %v1916
        %v1924 = vsub.f32 %v1900, %v1916
        %v1925 = vmul.f32 %v1917, %v1917
        %v1926 = vmul.f32 %v1918, %v1918
        %v1927 = vmul.f32 %v1919, %v1919
        %v1928 = vmul.f32 %v1920, %v1920
        %v1929 = vmul.f32 %v1921, %v1921
        %v1930 = vmul.f32 %v1922, %v1922
        %v1931 = vmul.f32 %v1923, %v1923
        %v1932 = vmul.f32 %v1924, %v1924
        %v1933 = vadd.f32 %v1925, %v1926
        %1934 = vadd.xlane.f32.xlu0 %v1933
        %v1935 = vpop.xlane.xlu0 %1934
        %v1936 = vadd.f32 %v1927, %v1928
        %1937 = vadd.xlane.f32.xlu0 %v1936
        %v1938 = vpop.xlane.xlu0 %1937
        %v1939 = vadd.f32 %v1929, %v1930
        %1940 = vadd.xlane.f32.xlu0 %v1939
        %v1941 = vpop.xlane.xlu0 %1940
        %v1942 = vadd.f32 %v1931, %v1932
        %1943 = vadd.xlane.f32.xlu0 %v1942
        %v1944 = vpop.xlane.xlu0 %1943
        %v1945 = vmul.f32 %v1935, %v765
        %v1946 = vmul.f32 %v1938, %v765
        %v1947 = vmul.f32 %v1941, %v765
        %v1948 = vmul.f32 %v1944, %v765
        %v1949 = vadd.f32 %v1945, 1e-05
        %v1950 = vadd.f32 %v1946, 1e-05
        %v1951 = vadd.f32 %v1947, 1e-05
        %v1952 = vadd.f32 %v1948, 1e-05
        %v1953 = vrsqrt.pop %v1949
        %v1954 = vrsqrt.pop %v1950
        %v1955 = vrsqrt.pop %v1951
        %v1956 = vrsqrt.pop %v1952
        %v1957 = vmul.f32 %v1917, %v1953
        %v1958 = vmul.f32 %v1918, %v1953
        %v1959 = vmul.f32 %v1919, %v1954
        %v1960 = vmul.f32 %v1920, %v1954
        %v1961 = vmul.f32 %v1921, %v1955
        %v1962 = vmul.f32 %v1922, %v1955
        %v1963 = vmul.f32 %v1923, %v1956
        %v1964 = vmul.f32 %v1924, %v1956
        %s1965 = scalar_lea.vmem %s6, 96
        %v1966 = vld [vmem:[%s1965] sm:$0xff]
        %v1967 = vld [vmem:[%s1965 + $0x8] sm:$0xff]
        %v1968 = vld [vmem:[%s1965 + $0x10] sm:$0xff]
        %v1969 = vld [vmem:[%s1965 + $0x18] sm:$0xff]
        %1971 = vset.pattern.permute.xlu0 0
        %1972 = vperm.xlu0 %1971, %v1966
        %v1973 = vpop.permute.xlu0 %1972
        %1976 = vset.pattern.permute.xlu0 0
        %1977 = vperm.xlu0 %1976, %v1967
        %v1978 = vpop.permute.xlu0 %1977
        %1981 = vset.pattern.permute.xlu0 0
        %1982 = vperm.xlu0 %1981, %v1968
        %v1983 = vpop.permute.xlu0 %1982
        %1986 = vset.pattern.permute.xlu0 0
        %1987 = vperm.xlu0 %1986, %v1969
        %v1988 = vpop.permute.xlu0 %1987
        %v1990 = vmul.f32 %v1957, %v1973
        %v1991 = vmul.f32 %v1958, %v1973
        %v1992 = vmul.f32 %v1959, %v1978
        %v1993 = vmul.f32 %v1960, %v1978
        %v1994 = vmul.f32 %v1961, %v1983
        %v1995 = vmul.f32 %v1962, %v1983
        %v1996 = vmul.f32 %v1963, %v1988
        %v1997 = vmul.f32 %v1964, %v1988
        %s1998 = scalar_lea.vmem %s7, 96
        %v1999 = vld [vmem:[%s1998] sm:$0xff]
        %v2000 = vld [vmem:[%s1998 + $0x8] sm:$0xff]
        %v2001 = vld [vmem:[%s1998 + $0x10] sm:$0xff]
        %v2002 = vld [vmem:[%s1998 + $0x18] sm:$0xff]
        %2004 = vset.pattern.permute.xlu0 0
        %2005 = vperm.xlu0 %2004, %v1999
        %v2006 = vpop.permute.xlu0 %2005
        %2009 = vset.pattern.permute.xlu0 0
        %2010 = vperm.xlu0 %2009, %v2000
        %v2011 = vpop.permute.xlu0 %2010
        %2014 = vset.pattern.permute.xlu0 0
        %2015 = vperm.xlu0 %2014, %v2001
        %v2016 = vpop.permute.xlu0 %2015
        %2019 = vset.pattern.permute.xlu0 0
        %2020 = vperm.xlu0 %2019, %v2002
        %v2021 = vpop.permute.xlu0 %2020
        %v2023 = vadd.f32 %v1990, %v2006
        %v2024 = vadd.f32 %v1991, %v2006
        %v2025 = vadd.f32 %v1992, %v2011
        %v2026 = vadd.f32 %v1993, %v2011
        %v2027 = vadd.f32 %v1994, %v2016
        %v2028 = vadd.f32 %v1995, %v2016
        %v2029 = vadd.f32 %v1996, %v2021
        %v2030 = vadd.f32 %v1997, %v2021
        %2031 = vrot.lane.b32.xlu0 %v2023, 1
        %v2032 = vpop.permute.xlu0 %2031
        %2033 = vrot.lane.b32.xlu0 %v2025, 1
        %v2034 = vpop.permute.xlu0 %2033
        %2035 = vrot.lane.b32.xlu0 %v2027, 1
        %v2036 = vpop.permute.xlu0 %2035
        %2037 = vrot.lane.b32.xlu0 %v2029, 1
        %v2038 = vpop.permute.xlu0 %2037
        %2039 = vrot.lane.b32.xlu0 %v2024, 1
        %v2040 = vpop.permute.xlu0 %2039
        %2041 = vrot.lane.b32.xlu0 %v2026, 1
        %v2042 = vpop.permute.xlu0 %2041
        %2043 = vrot.lane.b32.xlu0 %v2028, 1
        %v2044 = vpop.permute.xlu0 %2043
        %2045 = vrot.lane.b32.xlu0 %v2030, 1
        %v2046 = vpop.permute.xlu0 %2045
        %v2047 = vsel %vm340, %v2032, %v2040
        %v2048 = vsel %vm340, %v2034, %v2042
        %v2049 = vsel %vm340, %v2036, %v2044
        %v2050 = vsel %vm340, %v2038, %v2046
        %v2051 = vsel %vm340, %v2040, %v2032
        %v2052 = vsel %vm340, %v2042, %v2034
        %v2053 = vsel %vm340, %v2044, %v2036
        %v2054 = vsel %vm340, %v2046, %v2038
        %v2055 = vsel %vm328, %v2051, 0.0
        %v2056 = vsel %vm329, %v2047, 0.0
        %v2057 = vsel %vm328, %v2052, 0.0
        %v2058 = vsel %vm329, %v2048, 0.0
        %v2059 = vsel %vm328, %v2053, 0.0
        %v2060 = vsel %vm329, %v2049, 0.0
        %v2061 = vsel %vm328, %v2054, 0.0
        %v2062 = vsel %vm329, %v2050, 0.0
        %2063 = vrot.lane.b32.xlu0 %v2023, 127
        %v2064 = vpop.permute.xlu0 %2063
        %2065 = vrot.lane.b32.xlu0 %v2025, 127
        %v2066 = vpop.permute.xlu0 %2065
        %2067 = vrot.lane.b32.xlu0 %v2027, 127
        %v2068 = vpop.permute.xlu0 %2067
        %2069 = vrot.lane.b32.xlu0 %v2029, 127
        %v2070 = vpop.permute.xlu0 %2069
        %2071 = vrot.lane.b32.xlu0 %v2024, 127
        %v2072 = vpop.permute.xlu0 %2071
        %2073 = vrot.lane.b32.xlu0 %v2026, 127
        %v2074 = vpop.permute.xlu0 %2073
        %2075 = vrot.lane.b32.xlu0 %v2028, 127
        %v2076 = vpop.permute.xlu0 %2075
        %2077 = vrot.lane.b32.xlu0 %v2030, 127
        %v2078 = vpop.permute.xlu0 %2077
        %v2079 = vsel %vm349, %v2064, %v2072
        %v2080 = vsel %vm349, %v2066, %v2074
        %v2081 = vsel %vm349, %v2068, %v2076
        %v2082 = vsel %vm349, %v2070, %v2078
        %v2083 = vsel %vm349, %v2072, %v2064
        %v2084 = vsel %vm349, %v2074, %v2066
        %v2085 = vsel %vm349, %v2076, %v2068
        %v2086 = vsel %vm349, %v2078, %v2070
        %v2087 = vsel %vm330, %v2079, 0.0
        %v2088 = vsel %vm331, %v2083, 0.0
        %v2089 = vsel %vm330, %v2080, 0.0
        %v2090 = vsel %vm331, %v2084, 0.0
        %v2091 = vsel %vm330, %v2081, 0.0
        %v2092 = vsel %vm331, %v2085, 0.0
        %v2093 = vsel %vm330, %v2082, 0.0
        %v2094 = vsel %vm331, %v2086, 0.0
        %v2095 = vpack.c.bf16 %v2057, %v2055
        %v2096 = vpack.c.bf16 %v2058, %v2056
        %v2097 = vpack.c.bf16 %v2061, %v2059
        %v2098 = vpack.c.bf16 %v2062, %v2060
        %v2099 = vpack.c.bf16 %v2025, %v2023
        %v2100 = vpack.c.bf16 %v2026, %v2024
        %v2101 = vpack.c.bf16 %v2029, %v2027
        %v2102 = vpack.c.bf16 %v2030, %v2028
        %v2103 = vpack.c.bf16 %v2089, %v2087
        %v2104 = vpack.c.bf16 %v2090, %v2088
        %v2105 = vpack.c.bf16 %v2093, %v2091
        %v2106 = vpack.c.bf16 %v2094, %v2092
        %s2107 = scalar_lea.vmem %s3, 32
        %v2108 = vld [vmem:[%s2107] sm:$0xf]
        %v2109 = vld [vmem:[%s2107 + $0x4] sm:$0xf]
        %v2110 = vld [vmem:[%s2107 + $0x8] sm:$0xf]
        %v2111 = vld [vmem:[%s2107 + $0xc] sm:$0xf]
        %s2112 = scalar_lea.vmem %s4, 32
        %v2113 = vld [vmem:[%s2112] sm:$0xf]
        %v2114 = vld [vmem:[%s2112 + $0x4] sm:$0xf]
        %v2115 = vld [vmem:[%s2112 + $0x8] sm:$0xf]
        %v2116 = vld [vmem:[%s2112 + $0xc] sm:$0xf]
        %v2121 = vunpack.c.l.b16 %v2113
        %v2122 = vunpack.c.l.b16 %v2114
        %v2123 = vunpack.c.l.b16 %v2115
        %v2124 = vunpack.c.l.b16 %v2116
        %v2125 = vpack.c.b16 %v2122, %v2121
        %v2126 = vpack.c.b16 %v2124, %v2123
        %v2128 = vsel %vm997, %v2125, 0
        %v2131 = vsel %vm997, %v2126, 0
        %2133 = vmatprep.subr.bf16.mxu0 %v2096
        %2134 = vmatpush1.bf16.msra.mxu0 %v2095
        %2135 = vmatprep.subr.bf16.mxu0 %v2098
        %2136 = vmatpush1.bf16.msra.mxu0 %v2097
        %2137 = vmatprep.subr.bf16.mxu0 %v2100
        %2138 = vmatpush1.bf16.msra.mxu0 %v2099
        %2139 = vmatprep.subr.bf16.mxu0 %v2102
        %2140 = vmatpush1.bf16.msra.mxu0 %v2101
        %2141 = vmatprep.subr.bf16.mxu0 %v2104
        %2142 = vmatpush1.bf16.msra.mxu0 %v2103
        %2143 = vmatprep.subr.bf16.mxu0 %v2106
        %2144 = vmatpush1.bf16.msra.mxu0 %v2105
        %2145 = vmatprep.subr.bf16.mxu0 0
        %2146 = vmatpush1.bf16.msra.mxu0 0
        %2147 = vmatprep.subr.bf16.mxu0 0
        %2148 = vmatpush1.bf16.msra.mxu0 0
        %2149 = vmatprep.subr.bf16.mxu0 0
        %2150 = vmatpush1.bf16.msra.mxu0 0
        %2151 = vmatprep.subr.bf16.mxu0 0
        %2152 = vmatpush1.bf16.msra.mxu0 0
        %2153 = vmatprep.subr.bf16.mxu0 0
        %2154 = vmatpush1.bf16.msra.mxu0 0
        %2155 = vmatprep.subr.bf16.mxu0 0
        %2156 = vmatpush1.bf16.msra.mxu0 0
        %2157 = vmatprep.subr.bf16.mxu0 0
        %2158 = vmatpush1.bf16.msra.mxu0 0
        %2159 = vmatprep.subr.bf16.mxu0 0
        %2160 = vmatpush1.bf16.msra.mxu0 0
        %2161 = vmatprep.subr.bf16.mxu0 0
        %2162 = vmatpush1.bf16.msra.mxu0 0
        %2163 = vmatprep.subr.bf16.mxu0 0
        %2164 = vmatpush1.bf16.msra.mxu0 0
        %2165 = vmatprep.mubr.bf16.mxu0 0
        %2166 = vmatmul.mubr.bf16.gmra.mrb[0].mxu0 %v2128
        %v2167 = vpop.f32.mrb[0].mxu0
        %v2168 = vadd.f32 0.0, %v2167
        %v2169 = vpop.f32.mrb[0].mxu0
        %v2170 = vadd.f32 0.0, %v2169
        %v2171 = vpop.f32.mrb[0].mxu0
        %v2172 = vadd.f32 0.0, %v2171
        %v2173 = vpop.f32.mrb[0].mxu0
        %v2174 = vadd.f32 0.0, %v2173
        %2175 = vmatprep.mubr.bf16.mxu0 0
        %2176 = vmatmul.mubr.bf16.gmra.mrb[0].mxu0 %v2131
        %v2177 = vpop.f32.mrb[0].mxu0
        %v2178 = vadd.f32 0.0, %v2177
        %v2179 = vpop.f32.mrb[0].mxu0
        %v2180 = vadd.f32 0.0, %v2179
        %v2181 = vpop.f32.mrb[0].mxu0
        %v2182 = vadd.f32 0.0, %v2181
        %v2183 = vpop.f32.mrb[0].mxu0
        %v2184 = vadd.f32 0.0, %v2183
        %2185 = vdwg.mxu0
        %v2190 = vunpack.c.l.b16 %v2108
        %v2191 = vunpack.c.l.b16 %v2109
        %v2192 = vunpack.c.l.b16 %v2110
        %v2193 = vunpack.c.l.b16 %v2111
        %v2194 = vpack.c.b16 %v2191, %v2190
        %v2195 = vpack.c.b16 %v2193, %v2192
        %v2197 = vsel %vm997, %v2194, 0
        %v2200 = vsel %vm997, %v2195, 0
        %2202 = vmatprep.subr.bf16.mxu0 %v947
        %2203 = vmatpush1.bf16.msra.mxu0 %v946
        %2204 = vmatprep.subr.bf16.mxu0 %v949
        %2205 = vmatpush1.bf16.msra.mxu0 %v948
        %2206 = vmatprep.subr.bf16.mxu0 %v951
        %2207 = vmatpush1.bf16.msra.mxu0 %v950
        %2208 = vmatprep.subr.bf16.mxu0 %v953
        %2209 = vmatpush1.bf16.msra.mxu0 %v952
        %2210 = vmatprep.subr.bf16.mxu0 %v955
        %2211 = vmatpush1.bf16.msra.mxu0 %v954
        %2212 = vmatprep.subr.bf16.mxu0 %v957
        %2213 = vmatpush1.bf16.msra.mxu0 %v956
        %2214 = vmatprep.subr.bf16.mxu0 0
        %2215 = vmatpush1.bf16.msra.mxu0 0
        %2216 = vmatprep.subr.bf16.mxu0 0
        %2217 = vmatpush1.bf16.msra.mxu0 0
        %2218 = vmatprep.subr.bf16.mxu0 0
        %2219 = vmatpush1.bf16.msra.mxu0 0
        %2220 = vmatprep.subr.bf16.mxu0 0
        %2221 = vmatpush1.bf16.msra.mxu0 0
        %2222 = vmatprep.subr.bf16.mxu0 0
        %2223 = vmatpush1.bf16.msra.mxu0 0
        %2224 = vmatprep.subr.bf16.mxu0 0
        %2225 = vmatpush1.bf16.msra.mxu0 0
        %2226 = vmatprep.subr.bf16.mxu0 0
        %2227 = vmatpush1.bf16.msra.mxu0 0
        %2228 = vmatprep.subr.bf16.mxu0 0
        %2229 = vmatpush1.bf16.msra.mxu0 0
        %2230 = vmatprep.subr.bf16.mxu0 0
        %2231 = vmatpush1.bf16.msra.mxu0 0
        %2232 = vmatprep.subr.bf16.mxu0 0
        %2233 = vmatpush1.bf16.msra.mxu0 0
        %2234 = vmatprep.mubr.bf16.mxu0 0
        %2235 = vmatmul.mubr.bf16.gmra.mrb[0].mxu0 %v2197
        %v2236 = vpop.f32.mrb[0].mxu0
        %v2237 = vadd.f32 %v2168, %v2236
        %v2238 = vpop.f32.mrb[0].mxu0
        %v2239 = vadd.f32 %v2170, %v2238
        %v2240 = vpop.f32.mrb[0].mxu0
        %v2241 = vadd.f32 %v2172, %v2240
        %v2242 = vpop.f32.mrb[0].mxu0
        %v2243 = vadd.f32 %v2174, %v2242
        %2244 = vmatprep.mubr.bf16.mxu0 0
        %2245 = vmatmul.mubr.bf16.gmra.mrb[0].mxu0 %v2200
        %v2246 = vpop.f32.mrb[0].mxu0
        %v2247 = vadd.f32 %v2178, %v2246
        %v2248 = vpop.f32.mrb[0].mxu0
        %v2249 = vadd.f32 %v2180, %v2248
        %v2250 = vpop.f32.mrb[0].mxu0
        %v2251 = vadd.f32 %v2182, %v2250
        %v2252 = vpop.f32.mrb[0].mxu0
        %v2253 = vadd.f32 %v2184, %v2252
        %2254 = vdwg.mxu0
        %s2255 = scalar_lea.vmem %s5, 128
        %v2256 = vld [vmem:[%s2255] sm:$0xff]
        %v2257 = vld [vmem:[%s2255 + $0x8] sm:$0xff]
        %v2258 = vld [vmem:[%s2255 + $0x10] sm:$0xff]
        %v2259 = vld [vmem:[%s2255 + $0x18] sm:$0xff]
        %2261 = vset.pattern.permute.xlu0 0
        %2262 = vperm.xlu0 %2261, %v2256
        %v2263 = vpop.permute.xlu0 %2262
        %2266 = vset.pattern.permute.xlu0 0
        %2267 = vperm.xlu0 %2266, %v2257
        %v2268 = vpop.permute.xlu0 %2267
        %2271 = vset.pattern.permute.xlu0 0
        %2272 = vperm.xlu0 %2271, %v2258
        %v2273 = vpop.permute.xlu0 %2272
        %2276 = vset.pattern.permute.xlu0 0
        %2277 = vperm.xlu0 %2276, %v2259
        %v2278 = vpop.permute.xlu0 %2277
        %v2280 = vadd.f32 %v2237, %v2263
        %v2281 = vadd.f32 %v2239, %v2263
        %v2282 = vadd.f32 %v2241, %v2268
        %v2283 = vadd.f32 %v2243, %v2268
        %v2284 = vadd.f32 %v2247, %v2273
        %v2285 = vadd.f32 %v2249, %v2273
        %v2286 = vadd.f32 %v2251, %v2278
        %v2287 = vadd.f32 %v2253, %v2278
        %vm2288 = vcmp.gt.f32.partialorder %v2280, 0.0
        %vm2289 = vcmp.gt.f32.partialorder %v2281, 0.0
        %vm2290 = vcmp.gt.f32.partialorder %v2282, 0.0
        %vm2291 = vcmp.gt.f32.partialorder %v2283, 0.0
        %vm2292 = vcmp.gt.f32.partialorder %v2284, 0.0
        %vm2293 = vcmp.gt.f32.partialorder %v2285, 0.0
        %vm2294 = vcmp.gt.f32.partialorder %v2286, 0.0
        %vm2295 = vcmp.gt.f32.partialorder %v2287, 0.0
        %v2296 = vmul.f32 %v2280, 0.01
        %v2297 = vmul.f32 %v2281, 0.01
        %v2298 = vmul.f32 %v2282, 0.01
        %v2299 = vmul.f32 %v2283, 0.01
        %v2300 = vmul.f32 %v2284, 0.01
        %v2301 = vmul.f32 %v2285, 0.01
        %v2302 = vmul.f32 %v2286, 0.01
        %v2303 = vmul.f32 %v2287, 0.01
        %v2304 = vsel %vm2288, %v2280, %v2296
        %v2305 = vsel %vm2289, %v2281, %v2297
        %v2306 = vsel %vm2290, %v2282, %v2298
        %v2307 = vsel %vm2291, %v2283, %v2299
        %v2308 = vsel %vm2292, %v2284, %v2300
        %v2309 = vsel %vm2293, %v2285, %v2301
        %v2310 = vsel %vm2294, %v2286, %v2302
        %v2311 = vsel %vm2295, %v2287, %v2303
        %v2312 = vadd.f32 %v2304, %v2305
        %2313 = vadd.xlane.f32.xlu0 %v2312
        %v2314 = vpop.xlane.xlu0 %2313
        %v2315 = vadd.f32 %v2306, %v2307
        %2316 = vadd.xlane.f32.xlu0 %v2315
        %v2317 = vpop.xlane.xlu0 %2316
        %v2318 = vadd.f32 %v2308, %v2309
        %2319 = vadd.xlane.f32.xlu0 %v2318
        %v2320 = vpop.xlane.xlu0 %2319
        %v2321 = vadd.f32 %v2310, %v2311
        %2322 = vadd.xlane.f32.xlu0 %v2321
        %v2323 = vpop.xlane.xlu0 %2322
        %v2324 = vmul.f32 %v2314, %v765
        %v2325 = vmul.f32 %v2317, %v765
        %v2326 = vmul.f32 %v2320, %v765
        %v2327 = vmul.f32 %v2323, %v765
        %v2328 = vsub.f32 %v2304, %v2324
        %v2329 = vsub.f32 %v2305, %v2324
        %v2330 = vsub.f32 %v2306, %v2325
        %v2331 = vsub.f32 %v2307, %v2325
        %v2332 = vsub.f32 %v2308, %v2326
        %v2333 = vsub.f32 %v2309, %v2326
        %v2334 = vsub.f32 %v2310, %v2327
        %v2335 = vsub.f32 %v2311, %v2327
        %v2336 = vmul.f32 %v2328, %v2328
        %v2337 = vmul.f32 %v2329, %v2329
        %v2338 = vmul.f32 %v2330, %v2330
        %v2339 = vmul.f32 %v2331, %v2331
        %v2340 = vmul.f32 %v2332, %v2332
        %v2341 = vmul.f32 %v2333, %v2333
        %v2342 = vmul.f32 %v2334, %v2334
        %v2343 = vmul.f32 %v2335, %v2335
        %v2344 = vadd.f32 %v2336, %v2337
        %2345 = vadd.xlane.f32.xlu0 %v2344
        %v2346 = vpop.xlane.xlu0 %2345
        %v2347 = vadd.f32 %v2338, %v2339
        %2348 = vadd.xlane.f32.xlu0 %v2347
        %v2349 = vpop.xlane.xlu0 %2348
        %v2350 = vadd.f32 %v2340, %v2341
        %2351 = vadd.xlane.f32.xlu0 %v2350
        %v2352 = vpop.xlane.xlu0 %2351
        %v2353 = vadd.f32 %v2342, %v2343
        %2354 = vadd.xlane.f32.xlu0 %v2353
        %v2355 = vpop.xlane.xlu0 %2354
        %v2356 = vmul.f32 %v2346, %v765
        %v2357 = vmul.f32 %v2349, %v765
        %v2358 = vmul.f32 %v2352, %v765
        %v2359 = vmul.f32 %v2355, %v765
        %v2360 = vadd.f32 %v2356, 1e-05
        %v2361 = vadd.f32 %v2357, 1e-05
        %v2362 = vadd.f32 %v2358, 1e-05
        %v2363 = vadd.f32 %v2359, 1e-05
        %v2364 = vrsqrt.pop %v2360
        %v2365 = vrsqrt.pop %v2361
        %v2366 = vrsqrt.pop %v2362
        %v2367 = vrsqrt.pop %v2363
        %v2368 = vmul.f32 %v2328, %v2364
        %v2369 = vmul.f32 %v2329, %v2364
        %v2370 = vmul.f32 %v2330, %v2365
        %v2371 = vmul.f32 %v2331, %v2365
        %v2372 = vmul.f32 %v2332, %v2366
        %v2373 = vmul.f32 %v2333, %v2366
        %v2374 = vmul.f32 %v2334, %v2367
        %v2375 = vmul.f32 %v2335, %v2367
        %s2376 = scalar_lea.vmem %s6, 128
        %v2377 = vld [vmem:[%s2376] sm:$0xff]
        %v2378 = vld [vmem:[%s2376 + $0x8] sm:$0xff]
        %v2379 = vld [vmem:[%s2376 + $0x10] sm:$0xff]
        %v2380 = vld [vmem:[%s2376 + $0x18] sm:$0xff]
        %2382 = vset.pattern.permute.xlu0 0
        %2383 = vperm.xlu0 %2382, %v2377
        %v2384 = vpop.permute.xlu0 %2383
        %2387 = vset.pattern.permute.xlu0 0
        %2388 = vperm.xlu0 %2387, %v2378
        %v2389 = vpop.permute.xlu0 %2388
        %2392 = vset.pattern.permute.xlu0 0
        %2393 = vperm.xlu0 %2392, %v2379
        %v2394 = vpop.permute.xlu0 %2393
        %2397 = vset.pattern.permute.xlu0 0
        %2398 = vperm.xlu0 %2397, %v2380
        %v2399 = vpop.permute.xlu0 %2398
        %v2401 = vmul.f32 %v2368, %v2384
        %v2402 = vmul.f32 %v2369, %v2384
        %v2403 = vmul.f32 %v2370, %v2389
        %v2404 = vmul.f32 %v2371, %v2389
        %v2405 = vmul.f32 %v2372, %v2394
        %v2406 = vmul.f32 %v2373, %v2394
        %v2407 = vmul.f32 %v2374, %v2399
        %v2408 = vmul.f32 %v2375, %v2399
        %s2409 = scalar_lea.vmem %s7, 128
        %v2410 = vld [vmem:[%s2409] sm:$0xff]
        %v2411 = vld [vmem:[%s2409 + $0x8] sm:$0xff]
        %v2412 = vld [vmem:[%s2409 + $0x10] sm:$0xff]
        %v2413 = vld [vmem:[%s2409 + $0x18] sm:$0xff]
        %2415 = vset.pattern.permute.xlu0 0
        %2416 = vperm.xlu0 %2415, %v2410
        %v2417 = vpop.permute.xlu0 %2416
        %2420 = vset.pattern.permute.xlu0 0
        %2421 = vperm.xlu0 %2420, %v2411
        %v2422 = vpop.permute.xlu0 %2421
        %2425 = vset.pattern.permute.xlu0 0
        %2426 = vperm.xlu0 %2425, %v2412
        %v2427 = vpop.permute.xlu0 %2426
        %2430 = vset.pattern.permute.xlu0 0
        %2431 = vperm.xlu0 %2430, %v2413
        %v2432 = vpop.permute.xlu0 %2431
        %v2434 = vadd.f32 %v2401, %v2417
        %v2435 = vadd.f32 %v2402, %v2417
        %v2436 = vadd.f32 %v2403, %v2422
        %v2437 = vadd.f32 %v2404, %v2422
        %v2438 = vadd.f32 %v2405, %v2427
        %v2439 = vadd.f32 %v2406, %v2427
        %v2440 = vadd.f32 %v2407, %v2432
        %v2441 = vadd.f32 %v2408, %v2432
        %2442 = vrot.lane.b32.xlu0 %v2434, 1
        %v2443 = vpop.permute.xlu0 %2442
        %2444 = vrot.lane.b32.xlu0 %v2436, 1
        %v2445 = vpop.permute.xlu0 %2444
        %2446 = vrot.lane.b32.xlu0 %v2438, 1
        %v2447 = vpop.permute.xlu0 %2446
        %2448 = vrot.lane.b32.xlu0 %v2440, 1
        %v2449 = vpop.permute.xlu0 %2448
        %2450 = vrot.lane.b32.xlu0 %v2435, 1
        %v2451 = vpop.permute.xlu0 %2450
        %2452 = vrot.lane.b32.xlu0 %v2437, 1
        %v2453 = vpop.permute.xlu0 %2452
        %2454 = vrot.lane.b32.xlu0 %v2439, 1
        %v2455 = vpop.permute.xlu0 %2454
        %2456 = vrot.lane.b32.xlu0 %v2441, 1
        %v2457 = vpop.permute.xlu0 %2456
        %v2458 = vsel %vm340, %v2443, %v2451
        %v2459 = vsel %vm340, %v2445, %v2453
        %v2460 = vsel %vm340, %v2447, %v2455
        %v2461 = vsel %vm340, %v2449, %v2457
        %v2462 = vsel %vm340, %v2451, %v2443
        %v2463 = vsel %vm340, %v2453, %v2445
        %v2464 = vsel %vm340, %v2455, %v2447
        %v2465 = vsel %vm340, %v2457, %v2449
        %v2466 = vsel %vm328, %v2462, 0.0
        %v2467 = vsel %vm329, %v2458, 0.0
        %v2468 = vsel %vm328, %v2463, 0.0
        %v2469 = vsel %vm329, %v2459, 0.0
        %v2470 = vsel %vm328, %v2464, 0.0
        %v2471 = vsel %vm329, %v2460, 0.0
        %v2472 = vsel %vm328, %v2465, 0.0
        %v2473 = vsel %vm329, %v2461, 0.0
        %2474 = vrot.lane.b32.xlu0 %v2434, 127
        %v2475 = vpop.permute.xlu0 %2474
        %2476 = vrot.lane.b32.xlu0 %v2436, 127
        %v2477 = vpop.permute.xlu0 %2476
        %2478 = vrot.lane.b32.xlu0 %v2438, 127
        %v2479 = vpop.permute.xlu0 %2478
        %2480 = vrot.lane.b32.xlu0 %v2440, 127
        %v2481 = vpop.permute.xlu0 %2480
        %2482 = vrot.lane.b32.xlu0 %v2435, 127
        %v2483 = vpop.permute.xlu0 %2482
        %2484 = vrot.lane.b32.xlu0 %v2437, 127
        %v2485 = vpop.permute.xlu0 %2484
        %2486 = vrot.lane.b32.xlu0 %v2439, 127
        %v2487 = vpop.permute.xlu0 %2486
        %2488 = vrot.lane.b32.xlu0 %v2441, 127
        %v2489 = vpop.permute.xlu0 %2488
        %v2490 = vsel %vm349, %v2475, %v2483
        %v2491 = vsel %vm349, %v2477, %v2485
        %v2492 = vsel %vm349, %v2479, %v2487
        %v2493 = vsel %vm349, %v2481, %v2489
        %v2494 = vsel %vm349, %v2483, %v2475
        %v2495 = vsel %vm349, %v2485, %v2477
        %v2496 = vsel %vm349, %v2487, %v2479
        %v2497 = vsel %vm349, %v2489, %v2481
        %v2498 = vsel %vm330, %v2490, 0.0
        %v2499 = vsel %vm331, %v2494, 0.0
        %v2500 = vsel %vm330, %v2491, 0.0
        %v2501 = vsel %vm331, %v2495, 0.0
        %v2502 = vsel %vm330, %v2492, 0.0
        %v2503 = vsel %vm331, %v2496, 0.0
        %v2504 = vsel %vm330, %v2493, 0.0
        %v2505 = vsel %vm331, %v2497, 0.0
        %v2506 = vpack.c.bf16 %v2468, %v2466
        %v2507 = vpack.c.bf16 %v2469, %v2467
        %v2508 = vpack.c.bf16 %v2472, %v2470
        %v2509 = vpack.c.bf16 %v2473, %v2471
        %v2510 = vpack.c.bf16 %v2436, %v2434
        %v2511 = vpack.c.bf16 %v2437, %v2435
        %v2512 = vpack.c.bf16 %v2440, %v2438
        %v2513 = vpack.c.bf16 %v2441, %v2439
        %v2514 = vpack.c.bf16 %v2500, %v2498
        %v2515 = vpack.c.bf16 %v2501, %v2499
        %v2516 = vpack.c.bf16 %v2504, %v2502
        %v2517 = vpack.c.bf16 %v2505, %v2503
        %s2518 = scalar_lea.vmem %s3, 48
        %v2519 = vld [vmem:[%s2518] sm:$0xf]
        %v2520 = vld [vmem:[%s2518 + $0x4] sm:$0xf]
        %v2521 = vld [vmem:[%s2518 + $0x8] sm:$0xf]
        %v2522 = vld [vmem:[%s2518 + $0xc] sm:$0xf]
        %s2523 = scalar_lea.vmem %s4, 48
        %v2524 = vld [vmem:[%s2523] sm:$0xf]
        %v2525 = vld [vmem:[%s2523 + $0x4] sm:$0xf]
        %v2526 = vld [vmem:[%s2523 + $0x8] sm:$0xf]
        %v2527 = vld [vmem:[%s2523 + $0xc] sm:$0xf]
        %v2532 = vunpack.c.l.b16 %v2524
        %v2533 = vunpack.c.l.b16 %v2525
        %v2534 = vunpack.c.l.b16 %v2526
        %v2535 = vunpack.c.l.b16 %v2527
        %v2536 = vpack.c.b16 %v2533, %v2532
        %v2537 = vpack.c.b16 %v2535, %v2534
        %v2539 = vsel %vm997, %v2536, 0
        %v2542 = vsel %vm997, %v2537, 0
        %2544 = vmatprep.subr.bf16.mxu0 %v2507
        %2545 = vmatpush1.bf16.msra.mxu0 %v2506
        %2546 = vmatprep.subr.bf16.mxu0 %v2509
        %2547 = vmatpush1.bf16.msra.mxu0 %v2508
        %2548 = vmatprep.subr.bf16.mxu0 %v2511
        %2549 = vmatpush1.bf16.msra.mxu0 %v2510
        %2550 = vmatprep.subr.bf16.mxu0 %v2513
        %2551 = vmatpush1.bf16.msra.mxu0 %v2512
        %2552 = vmatprep.subr.bf16.mxu0 %v2515
        %2553 = vmatpush1.bf16.msra.mxu0 %v2514
        %2554 = vmatprep.subr.bf16.mxu0 %v2517
        %2555 = vmatpush1.bf16.msra.mxu0 %v2516
        %2556 = vmatprep.subr.bf16.mxu0 0
        %2557 = vmatpush1.bf16.msra.mxu0 0
        %2558 = vmatprep.subr.bf16.mxu0 0
        %2559 = vmatpush1.bf16.msra.mxu0 0
        %2560 = vmatprep.subr.bf16.mxu0 0
        %2561 = vmatpush1.bf16.msra.mxu0 0
        %2562 = vmatprep.subr.bf16.mxu0 0
        %2563 = vmatpush1.bf16.msra.mxu0 0
        %2564 = vmatprep.subr.bf16.mxu0 0
        %2565 = vmatpush1.bf16.msra.mxu0 0
        %2566 = vmatprep.subr.bf16.mxu0 0
        %2567 = vmatpush1.bf16.msra.mxu0 0
        %2568 = vmatprep.subr.bf16.mxu0 0
        %2569 = vmatpush1.bf16.msra.mxu0 0
        %2570 = vmatprep.subr.bf16.mxu0 0
        %2571 = vmatpush1.bf16.msra.mxu0 0
        %2572 = vmatprep.subr.bf16.mxu0 0
        %2573 = vmatpush1.bf16.msra.mxu0 0
        %2574 = vmatprep.subr.bf16.mxu0 0
        %2575 = vmatpush1.bf16.msra.mxu0 0
        %2576 = vmatprep.mubr.bf16.mxu0 0
        %2577 = vmatmul.mubr.bf16.gmra.mrb[0].mxu0 %v2539
        %v2578 = vpop.f32.mrb[0].mxu0
        %v2579 = vadd.f32 0.0, %v2578
        %v2580 = vpop.f32.mrb[0].mxu0
        %v2581 = vadd.f32 0.0, %v2580
        %v2582 = vpop.f32.mrb[0].mxu0
        %v2583 = vadd.f32 0.0, %v2582
        %v2584 = vpop.f32.mrb[0].mxu0
        %v2585 = vadd.f32 0.0, %v2584
        %2586 = vmatprep.mubr.bf16.mxu0 0
        %2587 = vmatmul.mubr.bf16.gmra.mrb[0].mxu0 %v2542
        %v2588 = vpop.f32.mrb[0].mxu0
        %v2589 = vadd.f32 0.0, %v2588
        %v2590 = vpop.f32.mrb[0].mxu0
        %v2591 = vadd.f32 0.0, %v2590
        %v2592 = vpop.f32.mrb[0].mxu0
        %v2593 = vadd.f32 0.0, %v2592
        %v2594 = vpop.f32.mrb[0].mxu0
        %v2595 = vadd.f32 0.0, %v2594
        %2596 = vdwg.mxu0
        %v2601 = vunpack.c.l.b16 %v2519
        %v2602 = vunpack.c.l.b16 %v2520
        %v2603 = vunpack.c.l.b16 %v2521
        %v2604 = vunpack.c.l.b16 %v2522
        %v2605 = vpack.c.b16 %v2602, %v2601
        %v2606 = vpack.c.b16 %v2604, %v2603
        %v2608 = vsel %vm997, %v2605, 0
        %v2611 = vsel %vm997, %v2606, 0
        %2613 = vmatprep.subr.bf16.mxu0 %v947
        %2614 = vmatpush1.bf16.msra.mxu0 %v946
        %2615 = vmatprep.subr.bf16.mxu0 %v949
        %2616 = vmatpush1.bf16.msra.mxu0 %v948
        %2617 = vmatprep.subr.bf16.mxu0 %v951
        %2618 = vmatpush1.bf16.msra.mxu0 %v950
        %2619 = vmatprep.subr.bf16.mxu0 %v953
        %2620 = vmatpush1.bf16.msra.mxu0 %v952
        %2621 = vmatprep.subr.bf16.mxu0 %v955
        %2622 = vmatpush1.bf16.msra.mxu0 %v954
        %2623 = vmatprep.subr.bf16.mxu0 %v957
        %2624 = vmatpush1.bf16.msra.mxu0 %v956
        %2625 = vmatprep.subr.bf16.mxu0 0
        %2626 = vmatpush1.bf16.msra.mxu0 0
        %2627 = vmatprep.subr.bf16.mxu0 0
        %2628 = vmatpush1.bf16.msra.mxu0 0
        %2629 = vmatprep.subr.bf16.mxu0 0
        %2630 = vmatpush1.bf16.msra.mxu0 0
        %2631 = vmatprep.subr.bf16.mxu0 0
        %2632 = vmatpush1.bf16.msra.mxu0 0
        %2633 = vmatprep.subr.bf16.mxu0 0
        %2634 = vmatpush1.bf16.msra.mxu0 0
        %2635 = vmatprep.subr.bf16.mxu0 0
        %2636 = vmatpush1.bf16.msra.mxu0 0
        %2637 = vmatprep.subr.bf16.mxu0 0
        %2638 = vmatpush1.bf16.msra.mxu0 0
        %2639 = vmatprep.subr.bf16.mxu0 0
        %2640 = vmatpush1.bf16.msra.mxu0 0
        %2641 = vmatprep.subr.bf16.mxu0 0
        %2642 = vmatpush1.bf16.msra.mxu0 0
        %2643 = vmatprep.subr.bf16.mxu0 0
        %2644 = vmatpush1.bf16.msra.mxu0 0
        %2645 = vmatprep.mubr.bf16.mxu0 0
        %2646 = vmatmul.mubr.bf16.gmra.mrb[0].mxu0 %v2608
        %v2647 = vpop.f32.mrb[0].mxu0
        %v2648 = vadd.f32 %v2579, %v2647
        %v2649 = vpop.f32.mrb[0].mxu0
        %v2650 = vadd.f32 %v2581, %v2649
        %v2651 = vpop.f32.mrb[0].mxu0
        %v2652 = vadd.f32 %v2583, %v2651
        %v2653 = vpop.f32.mrb[0].mxu0
        %v2654 = vadd.f32 %v2585, %v2653
        %2655 = vmatprep.mubr.bf16.mxu0 0
        %2656 = vmatmul.mubr.bf16.gmra.mrb[0].mxu0 %v2611
        %v2657 = vpop.f32.mrb[0].mxu0
        %v2658 = vadd.f32 %v2589, %v2657
        %v2659 = vpop.f32.mrb[0].mxu0
        %v2660 = vadd.f32 %v2591, %v2659
        %v2661 = vpop.f32.mrb[0].mxu0
        %v2662 = vadd.f32 %v2593, %v2661
        %v2663 = vpop.f32.mrb[0].mxu0
        %v2664 = vadd.f32 %v2595, %v2663
        %2665 = vdwg.mxu0
        %s2666 = scalar_lea.vmem %s5, 160
        %v2667 = vld [vmem:[%s2666] sm:$0xff]
        %v2668 = vld [vmem:[%s2666 + $0x8] sm:$0xff]
        %v2669 = vld [vmem:[%s2666 + $0x10] sm:$0xff]
        %v2670 = vld [vmem:[%s2666 + $0x18] sm:$0xff]
        %2672 = vset.pattern.permute.xlu0 0
        %2673 = vperm.xlu0 %2672, %v2667
        %v2674 = vpop.permute.xlu0 %2673
        %2677 = vset.pattern.permute.xlu0 0
        %2678 = vperm.xlu0 %2677, %v2668
        %v2679 = vpop.permute.xlu0 %2678
        %2682 = vset.pattern.permute.xlu0 0
        %2683 = vperm.xlu0 %2682, %v2669
        %v2684 = vpop.permute.xlu0 %2683
        %2687 = vset.pattern.permute.xlu0 0
        %2688 = vperm.xlu0 %2687, %v2670
        %v2689 = vpop.permute.xlu0 %2688
        %v2691 = vadd.f32 %v2648, %v2674
        %v2692 = vadd.f32 %v2650, %v2674
        %v2693 = vadd.f32 %v2652, %v2679
        %v2694 = vadd.f32 %v2654, %v2679
        %v2695 = vadd.f32 %v2658, %v2684
        %v2696 = vadd.f32 %v2660, %v2684
        %v2697 = vadd.f32 %v2662, %v2689
        %v2698 = vadd.f32 %v2664, %v2689
        %vm2699 = vcmp.gt.f32.partialorder %v2691, 0.0
        %vm2700 = vcmp.gt.f32.partialorder %v2692, 0.0
        %vm2701 = vcmp.gt.f32.partialorder %v2693, 0.0
        %vm2702 = vcmp.gt.f32.partialorder %v2694, 0.0
        %vm2703 = vcmp.gt.f32.partialorder %v2695, 0.0
        %vm2704 = vcmp.gt.f32.partialorder %v2696, 0.0
        %vm2705 = vcmp.gt.f32.partialorder %v2697, 0.0
        %vm2706 = vcmp.gt.f32.partialorder %v2698, 0.0
        %v2707 = vmul.f32 %v2691, 0.01
        %v2708 = vmul.f32 %v2692, 0.01
        %v2709 = vmul.f32 %v2693, 0.01
        %v2710 = vmul.f32 %v2694, 0.01
        %v2711 = vmul.f32 %v2695, 0.01
        %v2712 = vmul.f32 %v2696, 0.01
        %v2713 = vmul.f32 %v2697, 0.01
        %v2714 = vmul.f32 %v2698, 0.01
        %v2715 = vsel %vm2699, %v2691, %v2707
        %v2716 = vsel %vm2700, %v2692, %v2708
        %v2717 = vsel %vm2701, %v2693, %v2709
        %v2718 = vsel %vm2702, %v2694, %v2710
        %v2719 = vsel %vm2703, %v2695, %v2711
        %v2720 = vsel %vm2704, %v2696, %v2712
        %v2721 = vsel %vm2705, %v2697, %v2713
        %v2722 = vsel %vm2706, %v2698, %v2714
        %v2723 = vadd.f32 %v2715, %v2716
        %2724 = vadd.xlane.f32.xlu0 %v2723
        %v2725 = vpop.xlane.xlu0 %2724
        %v2726 = vadd.f32 %v2717, %v2718
        %2727 = vadd.xlane.f32.xlu0 %v2726
        %v2728 = vpop.xlane.xlu0 %2727
        %v2729 = vadd.f32 %v2719, %v2720
        %2730 = vadd.xlane.f32.xlu0 %v2729
        %v2731 = vpop.xlane.xlu0 %2730
        %v2732 = vadd.f32 %v2721, %v2722
        %2733 = vadd.xlane.f32.xlu0 %v2732
        %v2734 = vpop.xlane.xlu0 %2733
        %v2735 = vmul.f32 %v2725, %v765
        %v2736 = vmul.f32 %v2728, %v765
        %v2737 = vmul.f32 %v2731, %v765
        %v2738 = vmul.f32 %v2734, %v765
        %v2739 = vsub.f32 %v2715, %v2735
        %v2740 = vsub.f32 %v2716, %v2735
        %v2741 = vsub.f32 %v2717, %v2736
        %v2742 = vsub.f32 %v2718, %v2736
        %v2743 = vsub.f32 %v2719, %v2737
        %v2744 = vsub.f32 %v2720, %v2737
        %v2745 = vsub.f32 %v2721, %v2738
        %v2746 = vsub.f32 %v2722, %v2738
        %v2747 = vmul.f32 %v2739, %v2739
        %v2748 = vmul.f32 %v2740, %v2740
        %v2749 = vmul.f32 %v2741, %v2741
        %v2750 = vmul.f32 %v2742, %v2742
        %v2751 = vmul.f32 %v2743, %v2743
        %v2752 = vmul.f32 %v2744, %v2744
        %v2753 = vmul.f32 %v2745, %v2745
        %v2754 = vmul.f32 %v2746, %v2746
        %v2755 = vadd.f32 %v2747, %v2748
        %2756 = vadd.xlane.f32.xlu0 %v2755
        %v2757 = vpop.xlane.xlu0 %2756
        %v2758 = vadd.f32 %v2749, %v2750
        %2759 = vadd.xlane.f32.xlu0 %v2758
        %v2760 = vpop.xlane.xlu0 %2759
        %v2761 = vadd.f32 %v2751, %v2752
        %2762 = vadd.xlane.f32.xlu0 %v2761
        %v2763 = vpop.xlane.xlu0 %2762
        %v2764 = vadd.f32 %v2753, %v2754
        %2765 = vadd.xlane.f32.xlu0 %v2764
        %v2766 = vpop.xlane.xlu0 %2765
        %v2767 = vmul.f32 %v2757, %v765
        %v2768 = vmul.f32 %v2760, %v765
        %v2769 = vmul.f32 %v2763, %v765
        %v2770 = vmul.f32 %v2766, %v765
        %v2771 = vadd.f32 %v2767, 1e-05
        %v2772 = vadd.f32 %v2768, 1e-05
        %v2773 = vadd.f32 %v2769, 1e-05
        %v2774 = vadd.f32 %v2770, 1e-05
        %v2775 = vrsqrt.pop %v2771
        %v2776 = vrsqrt.pop %v2772
        %v2777 = vrsqrt.pop %v2773
        %v2778 = vrsqrt.pop %v2774
        %v2779 = vmul.f32 %v2739, %v2775
        %v2780 = vmul.f32 %v2740, %v2775
        %v2781 = vmul.f32 %v2741, %v2776
        %v2782 = vmul.f32 %v2742, %v2776
        %v2783 = vmul.f32 %v2743, %v2777
        %v2784 = vmul.f32 %v2744, %v2777
        %v2785 = vmul.f32 %v2745, %v2778
        %v2786 = vmul.f32 %v2746, %v2778
        %s2787 = scalar_lea.vmem %s6, 160
        %v2788 = vld [vmem:[%s2787] sm:$0xff]
        %v2789 = vld [vmem:[%s2787 + $0x8] sm:$0xff]
        %v2790 = vld [vmem:[%s2787 + $0x10] sm:$0xff]
        %v2791 = vld [vmem:[%s2787 + $0x18] sm:$0xff]
        %2793 = vset.pattern.permute.xlu0 0
        %2794 = vperm.xlu0 %2793, %v2788
        %v2795 = vpop.permute.xlu0 %2794
        %2798 = vset.pattern.permute.xlu0 0
        %2799 = vperm.xlu0 %2798, %v2789
        %v2800 = vpop.permute.xlu0 %2799
        %2803 = vset.pattern.permute.xlu0 0
        %2804 = vperm.xlu0 %2803, %v2790
        %v2805 = vpop.permute.xlu0 %2804
        %2808 = vset.pattern.permute.xlu0 0
        %2809 = vperm.xlu0 %2808, %v2791
        %v2810 = vpop.permute.xlu0 %2809
        %v2812 = vmul.f32 %v2779, %v2795
        %v2813 = vmul.f32 %v2780, %v2795
        %v2814 = vmul.f32 %v2781, %v2800
        %v2815 = vmul.f32 %v2782, %v2800
        %v2816 = vmul.f32 %v2783, %v2805
        %v2817 = vmul.f32 %v2784, %v2805
        %v2818 = vmul.f32 %v2785, %v2810
        %v2819 = vmul.f32 %v2786, %v2810
        %s2820 = scalar_lea.vmem %s7, 160
        %v2821 = vld [vmem:[%s2820] sm:$0xff]
        %v2822 = vld [vmem:[%s2820 + $0x8] sm:$0xff]
        %v2823 = vld [vmem:[%s2820 + $0x10] sm:$0xff]
        %v2824 = vld [vmem:[%s2820 + $0x18] sm:$0xff]
        %2826 = vset.pattern.permute.xlu0 0
        %2827 = vperm.xlu0 %2826, %v2821
        %v2828 = vpop.permute.xlu0 %2827
        %2831 = vset.pattern.permute.xlu0 0
        %2832 = vperm.xlu0 %2831, %v2822
        %v2833 = vpop.permute.xlu0 %2832
        %2836 = vset.pattern.permute.xlu0 0
        %2837 = vperm.xlu0 %2836, %v2823
        %v2838 = vpop.permute.xlu0 %2837
        %2841 = vset.pattern.permute.xlu0 0
        %2842 = vperm.xlu0 %2841, %v2824
        %v2843 = vpop.permute.xlu0 %2842
        %v2845 = vadd.f32 %v2812, %v2828
        %v2846 = vadd.f32 %v2813, %v2828
        %v2847 = vadd.f32 %v2814, %v2833
        %v2848 = vadd.f32 %v2815, %v2833
        %v2849 = vadd.f32 %v2816, %v2838
        %v2850 = vadd.f32 %v2817, %v2838
        %v2851 = vadd.f32 %v2818, %v2843
        %v2852 = vadd.f32 %v2819, %v2843
        %2853 = vrot.lane.b32.xlu0 %v2845, 1
        %v2854 = vpop.permute.xlu0 %2853
        %2855 = vrot.lane.b32.xlu0 %v2847, 1
        %v2856 = vpop.permute.xlu0 %2855
        %2857 = vrot.lane.b32.xlu0 %v2849, 1
        %v2858 = vpop.permute.xlu0 %2857
        %2859 = vrot.lane.b32.xlu0 %v2851, 1
        %v2860 = vpop.permute.xlu0 %2859
        %2861 = vrot.lane.b32.xlu0 %v2846, 1
        %v2862 = vpop.permute.xlu0 %2861
        %2863 = vrot.lane.b32.xlu0 %v2848, 1
        %v2864 = vpop.permute.xlu0 %2863
        %2865 = vrot.lane.b32.xlu0 %v2850, 1
        %v2866 = vpop.permute.xlu0 %2865
        %2867 = vrot.lane.b32.xlu0 %v2852, 1
        %v2868 = vpop.permute.xlu0 %2867
        %v2869 = vsel %vm340, %v2854, %v2862
        %v2870 = vsel %vm340, %v2856, %v2864
        %v2871 = vsel %vm340, %v2858, %v2866
        %v2872 = vsel %vm340, %v2860, %v2868
        %v2873 = vsel %vm340, %v2862, %v2854
        %v2874 = vsel %vm340, %v2864, %v2856
        %v2875 = vsel %vm340, %v2866, %v2858
        %v2876 = vsel %vm340, %v2868, %v2860
        %v2877 = vsel %vm328, %v2873, 0.0
        %v2878 = vsel %vm329, %v2869, 0.0
        %v2879 = vsel %vm328, %v2874, 0.0
        %v2880 = vsel %vm329, %v2870, 0.0
        %v2881 = vsel %vm328, %v2875, 0.0
        %v2882 = vsel %vm329, %v2871, 0.0
        %v2883 = vsel %vm328, %v2876, 0.0
        %v2884 = vsel %vm329, %v2872, 0.0
        %2885 = vrot.lane.b32.xlu0 %v2845, 127
        %v2886 = vpop.permute.xlu0 %2885
        %2887 = vrot.lane.b32.xlu0 %v2847, 127
        %v2888 = vpop.permute.xlu0 %2887
        %2889 = vrot.lane.b32.xlu0 %v2849, 127
        %v2890 = vpop.permute.xlu0 %2889
        %2891 = vrot.lane.b32.xlu0 %v2851, 127
        %v2892 = vpop.permute.xlu0 %2891
        %2893 = vrot.lane.b32.xlu0 %v2846, 127
        %v2894 = vpop.permute.xlu0 %2893
        %2895 = vrot.lane.b32.xlu0 %v2848, 127
        %v2896 = vpop.permute.xlu0 %2895
        %2897 = vrot.lane.b32.xlu0 %v2850, 127
        %v2898 = vpop.permute.xlu0 %2897
        %2899 = vrot.lane.b32.xlu0 %v2852, 127
        %v2900 = vpop.permute.xlu0 %2899
        %v2901 = vsel %vm349, %v2886, %v2894
        %v2902 = vsel %vm349, %v2888, %v2896
        %v2903 = vsel %vm349, %v2890, %v2898
        %v2904 = vsel %vm349, %v2892, %v2900
        %v2905 = vsel %vm349, %v2894, %v2886
        %v2906 = vsel %vm349, %v2896, %v2888
        %v2907 = vsel %vm349, %v2898, %v2890
        %v2908 = vsel %vm349, %v2900, %v2892
        %v2909 = vsel %vm330, %v2901, 0.0
        %v2910 = vsel %vm331, %v2905, 0.0
        %v2911 = vsel %vm330, %v2902, 0.0
        %v2912 = vsel %vm331, %v2906, 0.0
        %v2913 = vsel %vm330, %v2903, 0.0
        %v2914 = vsel %vm331, %v2907, 0.0
        %v2915 = vsel %vm330, %v2904, 0.0
        %v2916 = vsel %vm331, %v2908, 0.0
        %v2917 = vpack.c.bf16 %v2879, %v2877
        %v2918 = vpack.c.bf16 %v2880, %v2878
        %v2919 = vpack.c.bf16 %v2883, %v2881
        %v2920 = vpack.c.bf16 %v2884, %v2882
        %v2921 = vpack.c.bf16 %v2847, %v2845
        %v2922 = vpack.c.bf16 %v2848, %v2846
        %v2923 = vpack.c.bf16 %v2851, %v2849
        %v2924 = vpack.c.bf16 %v2852, %v2850
        %v2925 = vpack.c.bf16 %v2911, %v2909
        %v2926 = vpack.c.bf16 %v2912, %v2910
        %v2927 = vpack.c.bf16 %v2915, %v2913
        %v2928 = vpack.c.bf16 %v2916, %v2914
        %s2929 = scalar_lea.vmem %s3, 64
        %v2930 = vld [vmem:[%s2929] sm:$0xf]
        %v2931 = vld [vmem:[%s2929 + $0x4] sm:$0xf]
        %v2932 = vld [vmem:[%s2929 + $0x8] sm:$0xf]
        %v2933 = vld [vmem:[%s2929 + $0xc] sm:$0xf]
        %s2934 = scalar_lea.vmem %s4, 64
        %v2935 = vld [vmem:[%s2934] sm:$0xf]
        %v2936 = vld [vmem:[%s2934 + $0x4] sm:$0xf]
        %v2937 = vld [vmem:[%s2934 + $0x8] sm:$0xf]
        %v2938 = vld [vmem:[%s2934 + $0xc] sm:$0xf]
        %v2943 = vunpack.c.l.b16 %v2935
        %v2944 = vunpack.c.l.b16 %v2936
        %v2945 = vunpack.c.l.b16 %v2937
        %v2946 = vunpack.c.l.b16 %v2938
        %v2947 = vpack.c.b16 %v2944, %v2943
        %v2948 = vpack.c.b16 %v2946, %v2945
        %v2950 = vsel %vm997, %v2947, 0
        %v2953 = vsel %vm997, %v2948, 0
        %2955 = vmatprep.subr.bf16.mxu0 %v2918
        %2956 = vmatpush1.bf16.msra.mxu0 %v2917
        %2957 = vmatprep.subr.bf16.mxu0 %v2920
        %2958 = vmatpush1.bf16.msra.mxu0 %v2919
        %2959 = vmatprep.subr.bf16.mxu0 %v2922
        %2960 = vmatpush1.bf16.msra.mxu0 %v2921
        %2961 = vmatprep.subr.bf16.mxu0 %v2924
        %2962 = vmatpush1.bf16.msra.mxu0 %v2923
        %2963 = vmatprep.subr.bf16.mxu0 %v2926
        %2964 = vmatpush1.bf16.msra.mxu0 %v2925
        %2965 = vmatprep.subr.bf16.mxu0 %v2928
        %2966 = vmatpush1.bf16.msra.mxu0 %v2927
        %2967 = vmatprep.subr.bf16.mxu0 0
        %2968 = vmatpush1.bf16.msra.mxu0 0
        %2969 = vmatprep.subr.bf16.mxu0 0
        %2970 = vmatpush1.bf16.msra.mxu0 0
        %2971 = vmatprep.subr.bf16.mxu0 0
        %2972 = vmatpush1.bf16.msra.mxu0 0
        %2973 = vmatprep.subr.bf16.mxu0 0
        %2974 = vmatpush1.bf16.msra.mxu0 0
        %2975 = vmatprep.subr.bf16.mxu0 0
        %2976 = vmatpush1.bf16.msra.mxu0 0
        %2977 = vmatprep.subr.bf16.mxu0 0
        %2978 = vmatpush1.bf16.msra.mxu0 0
        %2979 = vmatprep.subr.bf16.mxu0 0
        %2980 = vmatpush1.bf16.msra.mxu0 0
        %2981 = vmatprep.subr.bf16.mxu0 0
        %2982 = vmatpush1.bf16.msra.mxu0 0
        %2983 = vmatprep.subr.bf16.mxu0 0
        %2984 = vmatpush1.bf16.msra.mxu0 0
        %2985 = vmatprep.subr.bf16.mxu0 0
        %2986 = vmatpush1.bf16.msra.mxu0 0
        %2987 = vmatprep.mubr.bf16.mxu0 0
        %2988 = vmatmul.mubr.bf16.gmra.mrb[0].mxu0 %v2950
        %v2989 = vpop.f32.mrb[0].mxu0
        %v2990 = vadd.f32 0.0, %v2989
        %v2991 = vpop.f32.mrb[0].mxu0
        %v2992 = vadd.f32 0.0, %v2991
        %v2993 = vpop.f32.mrb[0].mxu0
        %v2994 = vadd.f32 0.0, %v2993
        %v2995 = vpop.f32.mrb[0].mxu0
        %v2996 = vadd.f32 0.0, %v2995
        %2997 = vmatprep.mubr.bf16.mxu0 0
        %2998 = vmatmul.mubr.bf16.gmra.mrb[0].mxu0 %v2953
        %v2999 = vpop.f32.mrb[0].mxu0
        %v3000 = vadd.f32 0.0, %v2999
        %v3001 = vpop.f32.mrb[0].mxu0
        %v3002 = vadd.f32 0.0, %v3001
        %v3003 = vpop.f32.mrb[0].mxu0
        %v3004 = vadd.f32 0.0, %v3003
        %v3005 = vpop.f32.mrb[0].mxu0
        %v3006 = vadd.f32 0.0, %v3005
        %3007 = vdwg.mxu0
        %v3012 = vunpack.c.l.b16 %v2930
        %v3013 = vunpack.c.l.b16 %v2931
        %v3014 = vunpack.c.l.b16 %v2932
        %v3015 = vunpack.c.l.b16 %v2933
        %v3016 = vpack.c.b16 %v3013, %v3012
        %v3017 = vpack.c.b16 %v3015, %v3014
        %v3019 = vsel %vm997, %v3016, 0
        %v3022 = vsel %vm997, %v3017, 0
        %3024 = vmatprep.subr.bf16.mxu0 %v947
        %3025 = vmatpush1.bf16.msra.mxu0 %v946
        %3026 = vmatprep.subr.bf16.mxu0 %v949
        %3027 = vmatpush1.bf16.msra.mxu0 %v948
        %3028 = vmatprep.subr.bf16.mxu0 %v951
        %3029 = vmatpush1.bf16.msra.mxu0 %v950
        %3030 = vmatprep.subr.bf16.mxu0 %v953
        %3031 = vmatpush1.bf16.msra.mxu0 %v952
        %3032 = vmatprep.subr.bf16.mxu0 %v955
        %3033 = vmatpush1.bf16.msra.mxu0 %v954
        %3034 = vmatprep.subr.bf16.mxu0 %v957
        %3035 = vmatpush1.bf16.msra.mxu0 %v956
        %3036 = vmatprep.subr.bf16.mxu0 0
        %3037 = vmatpush1.bf16.msra.mxu0 0
        %3038 = vmatprep.subr.bf16.mxu0 0
        %3039 = vmatpush1.bf16.msra.mxu0 0
        %3040 = vmatprep.subr.bf16.mxu0 0
        %3041 = vmatpush1.bf16.msra.mxu0 0
        %3042 = vmatprep.subr.bf16.mxu0 0
        %3043 = vmatpush1.bf16.msra.mxu0 0
        %3044 = vmatprep.subr.bf16.mxu0 0
        %3045 = vmatpush1.bf16.msra.mxu0 0
        %3046 = vmatprep.subr.bf16.mxu0 0
        %3047 = vmatpush1.bf16.msra.mxu0 0
        %3048 = vmatprep.subr.bf16.mxu0 0
        %3049 = vmatpush1.bf16.msra.mxu0 0
        %3050 = vmatprep.subr.bf16.mxu0 0
        %3051 = vmatpush1.bf16.msra.mxu0 0
        %3052 = vmatprep.subr.bf16.mxu0 0
        %3053 = vmatpush1.bf16.msra.mxu0 0
        %3054 = vmatprep.subr.bf16.mxu0 0
        %3055 = vmatpush1.bf16.msra.mxu0 0
        %3056 = vmatprep.mubr.bf16.mxu0 0
        %3057 = vmatmul.mubr.bf16.gmra.mrb[0].mxu0 %v3019
        %v3058 = vpop.f32.mrb[0].mxu0
        %v3059 = vadd.f32 %v2990, %v3058
        %v3060 = vpop.f32.mrb[0].mxu0
        %v3061 = vadd.f32 %v2992, %v3060
        %v3062 = vpop.f32.mrb[0].mxu0
        %v3063 = vadd.f32 %v2994, %v3062
        %v3064 = vpop.f32.mrb[0].mxu0
        %v3065 = vadd.f32 %v2996, %v3064
        %3066 = vmatprep.mubr.bf16.mxu0 0
        %3067 = vmatmul.mubr.bf16.gmra.mrb[0].mxu0 %v3022
        %v3068 = vpop.f32.mrb[0].mxu0
        %v3069 = vadd.f32 %v3000, %v3068
        %v3070 = vpop.f32.mrb[0].mxu0
        %v3071 = vadd.f32 %v3002, %v3070
        %v3072 = vpop.f32.mrb[0].mxu0
        %v3073 = vadd.f32 %v3004, %v3072
        %v3074 = vpop.f32.mrb[0].mxu0
        %v3075 = vadd.f32 %v3006, %v3074
        %3076 = vdwg.mxu0
        %s3077 = scalar_lea.vmem %s5, 192
        %v3078 = vld [vmem:[%s3077] sm:$0xff]
        %v3079 = vld [vmem:[%s3077 + $0x8] sm:$0xff]
        %v3080 = vld [vmem:[%s3077 + $0x10] sm:$0xff]
        %v3081 = vld [vmem:[%s3077 + $0x18] sm:$0xff]
        %3083 = vset.pattern.permute.xlu0 0
        %3084 = vperm.xlu0 %3083, %v3078
        %v3085 = vpop.permute.xlu0 %3084
        %3088 = vset.pattern.permute.xlu0 0
        %3089 = vperm.xlu0 %3088, %v3079
        %v3090 = vpop.permute.xlu0 %3089
        %3093 = vset.pattern.permute.xlu0 0
        %3094 = vperm.xlu0 %3093, %v3080
        %v3095 = vpop.permute.xlu0 %3094
        %3098 = vset.pattern.permute.xlu0 0
        %3099 = vperm.xlu0 %3098, %v3081
        %v3100 = vpop.permute.xlu0 %3099
        %v3102 = vadd.f32 %v3059, %v3085
        %v3103 = vadd.f32 %v3061, %v3085
        %v3104 = vadd.f32 %v3063, %v3090
        %v3105 = vadd.f32 %v3065, %v3090
        %v3106 = vadd.f32 %v3069, %v3095
        %v3107 = vadd.f32 %v3071, %v3095
        %v3108 = vadd.f32 %v3073, %v3100
        %v3109 = vadd.f32 %v3075, %v3100
        %vm3110 = vcmp.gt.f32.partialorder %v3102, 0.0
        %vm3111 = vcmp.gt.f32.partialorder %v3103, 0.0
        %vm3112 = vcmp.gt.f32.partialorder %v3104, 0.0
        %vm3113 = vcmp.gt.f32.partialorder %v3105, 0.0
        %vm3114 = vcmp.gt.f32.partialorder %v3106, 0.0
        %vm3115 = vcmp.gt.f32.partialorder %v3107, 0.0
        %vm3116 = vcmp.gt.f32.partialorder %v3108, 0.0
        %vm3117 = vcmp.gt.f32.partialorder %v3109, 0.0
        %v3118 = vmul.f32 %v3102, 0.01
        %v3119 = vmul.f32 %v3103, 0.01
        %v3120 = vmul.f32 %v3104, 0.01
        %v3121 = vmul.f32 %v3105, 0.01
        %v3122 = vmul.f32 %v3106, 0.01
        %v3123 = vmul.f32 %v3107, 0.01
        %v3124 = vmul.f32 %v3108, 0.01
        %v3125 = vmul.f32 %v3109, 0.01
        %v3126 = vsel %vm3110, %v3102, %v3118
        %v3127 = vsel %vm3111, %v3103, %v3119
        %v3128 = vsel %vm3112, %v3104, %v3120
        %v3129 = vsel %vm3113, %v3105, %v3121
        %v3130 = vsel %vm3114, %v3106, %v3122
        %v3131 = vsel %vm3115, %v3107, %v3123
        %v3132 = vsel %vm3116, %v3108, %v3124
        %v3133 = vsel %vm3117, %v3109, %v3125
        %v3134 = vadd.f32 %v3126, %v3127
        %3135 = vadd.xlane.f32.xlu0 %v3134
        %v3136 = vpop.xlane.xlu0 %3135
        %v3137 = vadd.f32 %v3128, %v3129
        %3138 = vadd.xlane.f32.xlu0 %v3137
        %v3139 = vpop.xlane.xlu0 %3138
        %v3140 = vadd.f32 %v3130, %v3131
        %3141 = vadd.xlane.f32.xlu0 %v3140
        %v3142 = vpop.xlane.xlu0 %3141
        %v3143 = vadd.f32 %v3132, %v3133
        %3144 = vadd.xlane.f32.xlu0 %v3143
        %v3145 = vpop.xlane.xlu0 %3144
        %v3146 = vmul.f32 %v3136, %v765
        %v3147 = vmul.f32 %v3139, %v765
        %v3148 = vmul.f32 %v3142, %v765
        %v3149 = vmul.f32 %v3145, %v765
        %v3150 = vsub.f32 %v3126, %v3146
        %v3151 = vsub.f32 %v3127, %v3146
        %v3152 = vsub.f32 %v3128, %v3147
        %v3153 = vsub.f32 %v3129, %v3147
        %v3154 = vsub.f32 %v3130, %v3148
        %v3155 = vsub.f32 %v3131, %v3148
        %v3156 = vsub.f32 %v3132, %v3149
        %v3157 = vsub.f32 %v3133, %v3149
        %v3158 = vmul.f32 %v3150, %v3150
        %v3159 = vmul.f32 %v3151, %v3151
        %v3160 = vmul.f32 %v3152, %v3152
        %v3161 = vmul.f32 %v3153, %v3153
        %v3162 = vmul.f32 %v3154, %v3154
        %v3163 = vmul.f32 %v3155, %v3155
        %v3164 = vmul.f32 %v3156, %v3156
        %v3165 = vmul.f32 %v3157, %v3157
        %v3166 = vadd.f32 %v3158, %v3159
        %3167 = vadd.xlane.f32.xlu0 %v3166
        %v3168 = vpop.xlane.xlu0 %3167
        %v3169 = vadd.f32 %v3160, %v3161
        %3170 = vadd.xlane.f32.xlu0 %v3169
        %v3171 = vpop.xlane.xlu0 %3170
        %v3172 = vadd.f32 %v3162, %v3163
        %3173 = vadd.xlane.f32.xlu0 %v3172
        %v3174 = vpop.xlane.xlu0 %3173
        %v3175 = vadd.f32 %v3164, %v3165
        %3176 = vadd.xlane.f32.xlu0 %v3175
        %v3177 = vpop.xlane.xlu0 %3176
        %v3178 = vmul.f32 %v3168, %v765
        %v3179 = vmul.f32 %v3171, %v765
        %v3180 = vmul.f32 %v3174, %v765
        %v3181 = vmul.f32 %v3177, %v765
        %v3182 = vadd.f32 %v3178, 1e-05
        %v3183 = vadd.f32 %v3179, 1e-05
        %v3184 = vadd.f32 %v3180, 1e-05
        %v3185 = vadd.f32 %v3181, 1e-05
        %v3186 = vrsqrt.pop %v3182
        %v3187 = vrsqrt.pop %v3183
        %v3188 = vrsqrt.pop %v3184
        %v3189 = vrsqrt.pop %v3185
        %v3190 = vmul.f32 %v3150, %v3186
        %v3191 = vmul.f32 %v3151, %v3186
        %v3192 = vmul.f32 %v3152, %v3187
        %v3193 = vmul.f32 %v3153, %v3187
        %v3194 = vmul.f32 %v3154, %v3188
        %v3195 = vmul.f32 %v3155, %v3188
        %v3196 = vmul.f32 %v3156, %v3189
        %v3197 = vmul.f32 %v3157, %v3189
        %s3198 = scalar_lea.vmem %s6, 192
        %v3199 = vld [vmem:[%s3198] sm:$0xff]
        %v3200 = vld [vmem:[%s3198 + $0x8] sm:$0xff]
        %v3201 = vld [vmem:[%s3198 + $0x10] sm:$0xff]
        %v3202 = vld [vmem:[%s3198 + $0x18] sm:$0xff]
        %3204 = vset.pattern.permute.xlu0 0
        %3205 = vperm.xlu0 %3204, %v3199
        %v3206 = vpop.permute.xlu0 %3205
        %3209 = vset.pattern.permute.xlu0 0
        %3210 = vperm.xlu0 %3209, %v3200
        %v3211 = vpop.permute.xlu0 %3210
        %3214 = vset.pattern.permute.xlu0 0
        %3215 = vperm.xlu0 %3214, %v3201
        %v3216 = vpop.permute.xlu0 %3215
        %3219 = vset.pattern.permute.xlu0 0
        %3220 = vperm.xlu0 %3219, %v3202
        %v3221 = vpop.permute.xlu0 %3220
        %v3223 = vmul.f32 %v3190, %v3206
        %v3224 = vmul.f32 %v3191, %v3206
        %v3225 = vmul.f32 %v3192, %v3211
        %v3226 = vmul.f32 %v3193, %v3211
        %v3227 = vmul.f32 %v3194, %v3216
        %v3228 = vmul.f32 %v3195, %v3216
        %v3229 = vmul.f32 %v3196, %v3221
        %v3230 = vmul.f32 %v3197, %v3221
        %s3231 = scalar_lea.vmem %s7, 192
        %v3232 = vld [vmem:[%s3231] sm:$0xff]
        %v3233 = vld [vmem:[%s3231 + $0x8] sm:$0xff]
        %v3234 = vld [vmem:[%s3231 + $0x10] sm:$0xff]
        %v3235 = vld [vmem:[%s3231 + $0x18] sm:$0xff]
        %3237 = vset.pattern.permute.xlu0 0
        %3238 = vperm.xlu0 %3237, %v3232
        %v3239 = vpop.permute.xlu0 %3238
        %3242 = vset.pattern.permute.xlu0 0
        %3243 = vperm.xlu0 %3242, %v3233
        %v3244 = vpop.permute.xlu0 %3243
        %3247 = vset.pattern.permute.xlu0 0
        %3248 = vperm.xlu0 %3247, %v3234
        %v3249 = vpop.permute.xlu0 %3248
        %3252 = vset.pattern.permute.xlu0 0
        %3253 = vperm.xlu0 %3252, %v3235
        %v3254 = vpop.permute.xlu0 %3253
        %v3256 = vadd.f32 %v3223, %v3239
        %v3257 = vadd.f32 %v3224, %v3239
        %v3258 = vadd.f32 %v3225, %v3244
        %v3259 = vadd.f32 %v3226, %v3244
        %v3260 = vadd.f32 %v3227, %v3249
        %v3261 = vadd.f32 %v3228, %v3249
        %v3262 = vadd.f32 %v3229, %v3254
        %v3263 = vadd.f32 %v3230, %v3254
        %3264 = vrot.lane.b32.xlu0 %v3256, 1
        %v3265 = vpop.permute.xlu0 %3264
        %3266 = vrot.lane.b32.xlu0 %v3258, 1
        %v3267 = vpop.permute.xlu0 %3266
        %3268 = vrot.lane.b32.xlu0 %v3260, 1
        %v3269 = vpop.permute.xlu0 %3268
        %3270 = vrot.lane.b32.xlu0 %v3262, 1
        %v3271 = vpop.permute.xlu0 %3270
        %3272 = vrot.lane.b32.xlu0 %v3257, 1
        %v3273 = vpop.permute.xlu0 %3272
        %3274 = vrot.lane.b32.xlu0 %v3259, 1
        %v3275 = vpop.permute.xlu0 %3274
        %3276 = vrot.lane.b32.xlu0 %v3261, 1
        %v3277 = vpop.permute.xlu0 %3276
        %3278 = vrot.lane.b32.xlu0 %v3263, 1
        %v3279 = vpop.permute.xlu0 %3278
        %v3280 = vsel %vm340, %v3265, %v3273
        %v3281 = vsel %vm340, %v3267, %v3275
        %v3282 = vsel %vm340, %v3269, %v3277
        %v3283 = vsel %vm340, %v3271, %v3279
        %v3284 = vsel %vm340, %v3273, %v3265
        %v3285 = vsel %vm340, %v3275, %v3267
        %v3286 = vsel %vm340, %v3277, %v3269
        %v3287 = vsel %vm340, %v3279, %v3271
        %v3288 = vsel %vm328, %v3284, 0.0
        %v3289 = vsel %vm329, %v3280, 0.0
        %v3290 = vsel %vm328, %v3285, 0.0
        %v3291 = vsel %vm329, %v3281, 0.0
        %v3292 = vsel %vm328, %v3286, 0.0
        %v3293 = vsel %vm329, %v3282, 0.0
        %v3294 = vsel %vm328, %v3287, 0.0
        %v3295 = vsel %vm329, %v3283, 0.0
        %3296 = vrot.lane.b32.xlu0 %v3256, 127
        %v3297 = vpop.permute.xlu0 %3296
        %3298 = vrot.lane.b32.xlu0 %v3258, 127
        %v3299 = vpop.permute.xlu0 %3298
        %3300 = vrot.lane.b32.xlu0 %v3260, 127
        %v3301 = vpop.permute.xlu0 %3300
        %3302 = vrot.lane.b32.xlu0 %v3262, 127
        %v3303 = vpop.permute.xlu0 %3302
        %3304 = vrot.lane.b32.xlu0 %v3257, 127
        %v3305 = vpop.permute.xlu0 %3304
        %3306 = vrot.lane.b32.xlu0 %v3259, 127
        %v3307 = vpop.permute.xlu0 %3306
        %3308 = vrot.lane.b32.xlu0 %v3261, 127
        %v3309 = vpop.permute.xlu0 %3308
        %3310 = vrot.lane.b32.xlu0 %v3263, 127
        %v3311 = vpop.permute.xlu0 %3310
        %v3312 = vsel %vm349, %v3297, %v3305
        %v3313 = vsel %vm349, %v3299, %v3307
        %v3314 = vsel %vm349, %v3301, %v3309
        %v3315 = vsel %vm349, %v3303, %v3311
        %v3316 = vsel %vm349, %v3305, %v3297
        %v3317 = vsel %vm349, %v3307, %v3299
        %v3318 = vsel %vm349, %v3309, %v3301
        %v3319 = vsel %vm349, %v3311, %v3303
        %v3320 = vsel %vm330, %v3312, 0.0
        %v3321 = vsel %vm331, %v3316, 0.0
        %v3322 = vsel %vm330, %v3313, 0.0
        %v3323 = vsel %vm331, %v3317, 0.0
        %v3324 = vsel %vm330, %v3314, 0.0
        %v3325 = vsel %vm331, %v3318, 0.0
        %v3326 = vsel %vm330, %v3315, 0.0
        %v3327 = vsel %vm331, %v3319, 0.0
        %v3328 = vpack.c.bf16 %v3290, %v3288
        %v3329 = vpack.c.bf16 %v3291, %v3289
        %v3330 = vpack.c.bf16 %v3294, %v3292
        %v3331 = vpack.c.bf16 %v3295, %v3293
        %v3332 = vpack.c.bf16 %v3258, %v3256
        %v3333 = vpack.c.bf16 %v3259, %v3257
        %v3334 = vpack.c.bf16 %v3262, %v3260
        %v3335 = vpack.c.bf16 %v3263, %v3261
        %v3336 = vpack.c.bf16 %v3322, %v3320
        %v3337 = vpack.c.bf16 %v3323, %v3321
        %v3338 = vpack.c.bf16 %v3326, %v3324
        %v3339 = vpack.c.bf16 %v3327, %v3325
        %s3340 = scalar_lea.vmem %s3, 80
        %v3341 = vld [vmem:[%s3340] sm:$0xf]
        %v3342 = vld [vmem:[%s3340 + $0x4] sm:$0xf]
        %v3343 = vld [vmem:[%s3340 + $0x8] sm:$0xf]
        %v3344 = vld [vmem:[%s3340 + $0xc] sm:$0xf]
        %s3345 = scalar_lea.vmem %s4, 80
        %v3346 = vld [vmem:[%s3345] sm:$0xf]
        %v3347 = vld [vmem:[%s3345 + $0x4] sm:$0xf]
        %v3348 = vld [vmem:[%s3345 + $0x8] sm:$0xf]
        %v3349 = vld [vmem:[%s3345 + $0xc] sm:$0xf]
        %v3354 = vunpack.c.l.b16 %v3346
        %v3355 = vunpack.c.l.b16 %v3347
        %v3356 = vunpack.c.l.b16 %v3348
        %v3357 = vunpack.c.l.b16 %v3349
        %v3358 = vpack.c.b16 %v3355, %v3354
        %v3359 = vpack.c.b16 %v3357, %v3356
        %v3361 = vsel %vm997, %v3358, 0
        %v3364 = vsel %vm997, %v3359, 0
        %3366 = vmatprep.subr.bf16.mxu0 %v3329
        %3367 = vmatpush1.bf16.msra.mxu0 %v3328
        %3368 = vmatprep.subr.bf16.mxu0 %v3331
        %3369 = vmatpush1.bf16.msra.mxu0 %v3330
        %3370 = vmatprep.subr.bf16.mxu0 %v3333
        %3371 = vmatpush1.bf16.msra.mxu0 %v3332
        %3372 = vmatprep.subr.bf16.mxu0 %v3335
        %3373 = vmatpush1.bf16.msra.mxu0 %v3334
        %3374 = vmatprep.subr.bf16.mxu0 %v3337
        %3375 = vmatpush1.bf16.msra.mxu0 %v3336
        %3376 = vmatprep.subr.bf16.mxu0 %v3339
        %3377 = vmatpush1.bf16.msra.mxu0 %v3338
        %3378 = vmatprep.subr.bf16.mxu0 0
        %3379 = vmatpush1.bf16.msra.mxu0 0
        %3380 = vmatprep.subr.bf16.mxu0 0
        %3381 = vmatpush1.bf16.msra.mxu0 0
        %3382 = vmatprep.subr.bf16.mxu0 0
        %3383 = vmatpush1.bf16.msra.mxu0 0
        %3384 = vmatprep.subr.bf16.mxu0 0
        %3385 = vmatpush1.bf16.msra.mxu0 0
        %3386 = vmatprep.subr.bf16.mxu0 0
        %3387 = vmatpush1.bf16.msra.mxu0 0
        %3388 = vmatprep.subr.bf16.mxu0 0
        %3389 = vmatpush1.bf16.msra.mxu0 0
        %3390 = vmatprep.subr.bf16.mxu0 0
        %3391 = vmatpush1.bf16.msra.mxu0 0
        %3392 = vmatprep.subr.bf16.mxu0 0
        %3393 = vmatpush1.bf16.msra.mxu0 0
        %3394 = vmatprep.subr.bf16.mxu0 0
        %3395 = vmatpush1.bf16.msra.mxu0 0
        %3396 = vmatprep.subr.bf16.mxu0 0
        %3397 = vmatpush1.bf16.msra.mxu0 0
        %3398 = vmatprep.mubr.bf16.mxu0 0
        %3399 = vmatmul.mubr.bf16.gmra.mrb[0].mxu0 %v3361
        %v3400 = vpop.f32.mrb[0].mxu0
        %v3401 = vadd.f32 0.0, %v3400
        %v3402 = vpop.f32.mrb[0].mxu0
        %v3403 = vadd.f32 0.0, %v3402
        %v3404 = vpop.f32.mrb[0].mxu0
        %v3405 = vadd.f32 0.0, %v3404
        %v3406 = vpop.f32.mrb[0].mxu0
        %v3407 = vadd.f32 0.0, %v3406
        %3408 = vmatprep.mubr.bf16.mxu0 0
        %3409 = vmatmul.mubr.bf16.gmra.mrb[0].mxu0 %v3364
        %v3410 = vpop.f32.mrb[0].mxu0
        %v3411 = vadd.f32 0.0, %v3410
        %v3412 = vpop.f32.mrb[0].mxu0
        %v3413 = vadd.f32 0.0, %v3412
        %v3414 = vpop.f32.mrb[0].mxu0
        %v3415 = vadd.f32 0.0, %v3414
        %v3416 = vpop.f32.mrb[0].mxu0
        %v3417 = vadd.f32 0.0, %v3416
        %3418 = vdwg.mxu0
        %v3423 = vunpack.c.l.b16 %v3341
        %v3424 = vunpack.c.l.b16 %v3342
        %v3425 = vunpack.c.l.b16 %v3343
        %v3426 = vunpack.c.l.b16 %v3344
        %v3427 = vpack.c.b16 %v3424, %v3423
        %v3428 = vpack.c.b16 %v3426, %v3425
        %v3430 = vsel %vm997, %v3427, 0
        %v3433 = vsel %vm997, %v3428, 0
        %3435 = vmatprep.subr.bf16.mxu0 %v947
        %3436 = vmatpush1.bf16.msra.mxu0 %v946
        %3437 = vmatprep.subr.bf16.mxu0 %v949
        %3438 = vmatpush1.bf16.msra.mxu0 %v948
        %3439 = vmatprep.subr.bf16.mxu0 %v951
        %3440 = vmatpush1.bf16.msra.mxu0 %v950
        %3441 = vmatprep.subr.bf16.mxu0 %v953
        %3442 = vmatpush1.bf16.msra.mxu0 %v952
        %3443 = vmatprep.subr.bf16.mxu0 %v955
        %3444 = vmatpush1.bf16.msra.mxu0 %v954
        %3445 = vmatprep.subr.bf16.mxu0 %v957
        %3446 = vmatpush1.bf16.msra.mxu0 %v956
        %3447 = vmatprep.subr.bf16.mxu0 0
        %3448 = vmatpush1.bf16.msra.mxu0 0
        %3449 = vmatprep.subr.bf16.mxu0 0
        %3450 = vmatpush1.bf16.msra.mxu0 0
        %3451 = vmatprep.subr.bf16.mxu0 0
        %3452 = vmatpush1.bf16.msra.mxu0 0
        %3453 = vmatprep.subr.bf16.mxu0 0
        %3454 = vmatpush1.bf16.msra.mxu0 0
        %3455 = vmatprep.subr.bf16.mxu0 0
        %3456 = vmatpush1.bf16.msra.mxu0 0
        %3457 = vmatprep.subr.bf16.mxu0 0
        %3458 = vmatpush1.bf16.msra.mxu0 0
        %3459 = vmatprep.subr.bf16.mxu0 0
        %3460 = vmatpush1.bf16.msra.mxu0 0
        %3461 = vmatprep.subr.bf16.mxu0 0
        %3462 = vmatpush1.bf16.msra.mxu0 0
        %3463 = vmatprep.subr.bf16.mxu0 0
        %3464 = vmatpush1.bf16.msra.mxu0 0
        %3465 = vmatprep.subr.bf16.mxu0 0
        %3466 = vmatpush1.bf16.msra.mxu0 0
        %3467 = vmatprep.mubr.bf16.mxu0 0
        %3468 = vmatmul.mubr.bf16.gmra.mrb[0].mxu0 %v3430
        %v3469 = vpop.f32.mrb[0].mxu0
        %v3470 = vadd.f32 %v3401, %v3469
        %v3471 = vpop.f32.mrb[0].mxu0
        %v3472 = vadd.f32 %v3403, %v3471
        %v3473 = vpop.f32.mrb[0].mxu0
        %v3474 = vadd.f32 %v3405, %v3473
        %v3475 = vpop.f32.mrb[0].mxu0
        %v3476 = vadd.f32 %v3407, %v3475
        %3477 = vmatprep.mubr.bf16.mxu0 0
        %3478 = vmatmul.mubr.bf16.gmra.mrb[0].mxu0 %v3433
        %v3479 = vpop.f32.mrb[0].mxu0
        %v3480 = vadd.f32 %v3411, %v3479
        %v3481 = vpop.f32.mrb[0].mxu0
        %v3482 = vadd.f32 %v3413, %v3481
        %v3483 = vpop.f32.mrb[0].mxu0
        %v3484 = vadd.f32 %v3415, %v3483
        %v3485 = vpop.f32.mrb[0].mxu0
        %v3486 = vadd.f32 %v3417, %v3485
        %3487 = vdwg.mxu0
        %s3488 = scalar_lea.vmem %s5, 224
        %v3489 = vld [vmem:[%s3488] sm:$0xff]
        %v3490 = vld [vmem:[%s3488 + $0x8] sm:$0xff]
        %v3491 = vld [vmem:[%s3488 + $0x10] sm:$0xff]
        %v3492 = vld [vmem:[%s3488 + $0x18] sm:$0xff]
        %3494 = vset.pattern.permute.xlu0 0
        %3495 = vperm.xlu0 %3494, %v3489
        %v3496 = vpop.permute.xlu0 %3495
        %3499 = vset.pattern.permute.xlu0 0
        %3500 = vperm.xlu0 %3499, %v3490
        %v3501 = vpop.permute.xlu0 %3500
        %3504 = vset.pattern.permute.xlu0 0
        %3505 = vperm.xlu0 %3504, %v3491
        %v3506 = vpop.permute.xlu0 %3505
        %3509 = vset.pattern.permute.xlu0 0
        %3510 = vperm.xlu0 %3509, %v3492
        %v3511 = vpop.permute.xlu0 %3510
        %v3513 = vadd.f32 %v3470, %v3496
        %v3514 = vadd.f32 %v3472, %v3496
        %v3515 = vadd.f32 %v3474, %v3501
        %v3516 = vadd.f32 %v3476, %v3501
        %v3517 = vadd.f32 %v3480, %v3506
        %v3518 = vadd.f32 %v3482, %v3506
        %v3519 = vadd.f32 %v3484, %v3511
        %v3520 = vadd.f32 %v3486, %v3511
        %vm3521 = vcmp.gt.f32.partialorder %v3513, 0.0
        %vm3522 = vcmp.gt.f32.partialorder %v3514, 0.0
        %vm3523 = vcmp.gt.f32.partialorder %v3515, 0.0
        %vm3524 = vcmp.gt.f32.partialorder %v3516, 0.0
        %vm3525 = vcmp.gt.f32.partialorder %v3517, 0.0
        %vm3526 = vcmp.gt.f32.partialorder %v3518, 0.0
        %vm3527 = vcmp.gt.f32.partialorder %v3519, 0.0
        %vm3528 = vcmp.gt.f32.partialorder %v3520, 0.0
        %v3529 = vmul.f32 %v3513, 0.01
        %v3530 = vmul.f32 %v3514, 0.01
        %v3531 = vmul.f32 %v3515, 0.01
        %v3532 = vmul.f32 %v3516, 0.01
        %v3533 = vmul.f32 %v3517, 0.01
        %v3534 = vmul.f32 %v3518, 0.01
        %v3535 = vmul.f32 %v3519, 0.01
        %v3536 = vmul.f32 %v3520, 0.01
        %v3537 = vsel %vm3521, %v3513, %v3529
        %v3538 = vsel %vm3522, %v3514, %v3530
        %v3539 = vsel %vm3523, %v3515, %v3531
        %v3540 = vsel %vm3524, %v3516, %v3532
        %v3541 = vsel %vm3525, %v3517, %v3533
        %v3542 = vsel %vm3526, %v3518, %v3534
        %v3543 = vsel %vm3527, %v3519, %v3535
        %v3544 = vsel %vm3528, %v3520, %v3536
        %v3545 = vadd.f32 %v3537, %v3538
        %3546 = vadd.xlane.f32.xlu0 %v3545
        %v3547 = vpop.xlane.xlu0 %3546
        %v3548 = vadd.f32 %v3539, %v3540
        %3549 = vadd.xlane.f32.xlu0 %v3548
        %v3550 = vpop.xlane.xlu0 %3549
        %v3551 = vadd.f32 %v3541, %v3542
        %3552 = vadd.xlane.f32.xlu0 %v3551
        %v3553 = vpop.xlane.xlu0 %3552
        %v3554 = vadd.f32 %v3543, %v3544
        %3555 = vadd.xlane.f32.xlu0 %v3554
        %v3556 = vpop.xlane.xlu0 %3555
        %v3557 = vmul.f32 %v3547, %v765
        %v3558 = vmul.f32 %v3550, %v765
        %v3559 = vmul.f32 %v3553, %v765
        %v3560 = vmul.f32 %v3556, %v765
        %v3561 = vsub.f32 %v3537, %v3557
        %v3562 = vsub.f32 %v3538, %v3557
        %v3563 = vsub.f32 %v3539, %v3558
        %v3564 = vsub.f32 %v3540, %v3558
        %v3565 = vsub.f32 %v3541, %v3559
        %v3566 = vsub.f32 %v3542, %v3559
        %v3567 = vsub.f32 %v3543, %v3560
        %v3568 = vsub.f32 %v3544, %v3560
        %v3569 = vmul.f32 %v3561, %v3561
        %v3570 = vmul.f32 %v3562, %v3562
        %v3571 = vmul.f32 %v3563, %v3563
        %v3572 = vmul.f32 %v3564, %v3564
        %v3573 = vmul.f32 %v3565, %v3565
        %v3574 = vmul.f32 %v3566, %v3566
        %v3575 = vmul.f32 %v3567, %v3567
        %v3576 = vmul.f32 %v3568, %v3568
        %v3577 = vadd.f32 %v3569, %v3570
        %3578 = vadd.xlane.f32.xlu0 %v3577
        %v3579 = vpop.xlane.xlu0 %3578
        %v3580 = vadd.f32 %v3571, %v3572
        %3581 = vadd.xlane.f32.xlu0 %v3580
        %v3582 = vpop.xlane.xlu0 %3581
        %v3583 = vadd.f32 %v3573, %v3574
        %3584 = vadd.xlane.f32.xlu0 %v3583
        %v3585 = vpop.xlane.xlu0 %3584
        %v3586 = vadd.f32 %v3575, %v3576
        %3587 = vadd.xlane.f32.xlu0 %v3586
        %v3588 = vpop.xlane.xlu0 %3587
        %v3589 = vmul.f32 %v3579, %v765
        %v3590 = vmul.f32 %v3582, %v765
        %v3591 = vmul.f32 %v3585, %v765
        %v3592 = vmul.f32 %v3588, %v765
        %v3593 = vadd.f32 %v3589, 1e-05
        %v3594 = vadd.f32 %v3590, 1e-05
        %v3595 = vadd.f32 %v3591, 1e-05
        %v3596 = vadd.f32 %v3592, 1e-05
        %v3597 = vrsqrt.pop %v3593
        %v3598 = vrsqrt.pop %v3594
        %v3599 = vrsqrt.pop %v3595
        %v3600 = vrsqrt.pop %v3596
        %v3601 = vmul.f32 %v3561, %v3597
        %v3602 = vmul.f32 %v3562, %v3597
        %v3603 = vmul.f32 %v3563, %v3598
        %v3604 = vmul.f32 %v3564, %v3598
        %v3605 = vmul.f32 %v3565, %v3599
        %v3606 = vmul.f32 %v3566, %v3599
        %v3607 = vmul.f32 %v3567, %v3600
        %v3608 = vmul.f32 %v3568, %v3600
        %s3609 = scalar_lea.vmem %s6, 224
        %v3610 = vld [vmem:[%s3609] sm:$0xff]
        %v3611 = vld [vmem:[%s3609 + $0x8] sm:$0xff]
        %v3612 = vld [vmem:[%s3609 + $0x10] sm:$0xff]
        %v3613 = vld [vmem:[%s3609 + $0x18] sm:$0xff]
        %3615 = vset.pattern.permute.xlu0 0
        %3616 = vperm.xlu0 %3615, %v3610
        %v3617 = vpop.permute.xlu0 %3616
        %3620 = vset.pattern.permute.xlu0 0
        %3621 = vperm.xlu0 %3620, %v3611
        %v3622 = vpop.permute.xlu0 %3621
        %3625 = vset.pattern.permute.xlu0 0
        %3626 = vperm.xlu0 %3625, %v3612
        %v3627 = vpop.permute.xlu0 %3626
        %3630 = vset.pattern.permute.xlu0 0
        %3631 = vperm.xlu0 %3630, %v3613
        %v3632 = vpop.permute.xlu0 %3631
        %v3634 = vmul.f32 %v3601, %v3617
        %v3635 = vmul.f32 %v3602, %v3617
        %v3636 = vmul.f32 %v3603, %v3622
        %v3637 = vmul.f32 %v3604, %v3622
        %v3638 = vmul.f32 %v3605, %v3627
        %v3639 = vmul.f32 %v3606, %v3627
        %v3640 = vmul.f32 %v3607, %v3632
        %v3641 = vmul.f32 %v3608, %v3632
        %s3642 = scalar_lea.vmem %s7, 224
        %v3643 = vld [vmem:[%s3642] sm:$0xff]
        %v3644 = vld [vmem:[%s3642 + $0x8] sm:$0xff]
        %v3645 = vld [vmem:[%s3642 + $0x10] sm:$0xff]
        %v3646 = vld [vmem:[%s3642 + $0x18] sm:$0xff]
        %3648 = vset.pattern.permute.xlu0 0
        %3649 = vperm.xlu0 %3648, %v3643
        %v3650 = vpop.permute.xlu0 %3649
        %3653 = vset.pattern.permute.xlu0 0
        %3654 = vperm.xlu0 %3653, %v3644
        %v3655 = vpop.permute.xlu0 %3654
        %3658 = vset.pattern.permute.xlu0 0
        %3659 = vperm.xlu0 %3658, %v3645
        %v3660 = vpop.permute.xlu0 %3659
        %3663 = vset.pattern.permute.xlu0 0
        %3664 = vperm.xlu0 %3663, %v3646
        %v3665 = vpop.permute.xlu0 %3664
        %v3667 = vadd.f32 %v3634, %v3650
        %v3668 = vadd.f32 %v3635, %v3650
        %v3669 = vadd.f32 %v3636, %v3655
        %v3670 = vadd.f32 %v3637, %v3655
        %v3671 = vadd.f32 %v3638, %v3660
        %v3672 = vadd.f32 %v3639, %v3660
        %v3673 = vadd.f32 %v3640, %v3665
        %v3674 = vadd.f32 %v3641, %v3665
        %3675 = vrot.lane.b32.xlu0 %v3667, 1
        %v3676 = vpop.permute.xlu0 %3675
        %3677 = vrot.lane.b32.xlu0 %v3669, 1
        %v3678 = vpop.permute.xlu0 %3677
        %3679 = vrot.lane.b32.xlu0 %v3671, 1
        %v3680 = vpop.permute.xlu0 %3679
        %3681 = vrot.lane.b32.xlu0 %v3673, 1
        %v3682 = vpop.permute.xlu0 %3681
        %3683 = vrot.lane.b32.xlu0 %v3668, 1
        %v3684 = vpop.permute.xlu0 %3683
        %3685 = vrot.lane.b32.xlu0 %v3670, 1
        %v3686 = vpop.permute.xlu0 %3685
        %3687 = vrot.lane.b32.xlu0 %v3672, 1
        %v3688 = vpop.permute.xlu0 %3687
        %3689 = vrot.lane.b32.xlu0 %v3674, 1
        %v3690 = vpop.permute.xlu0 %3689
        %v3691 = vsel %vm340, %v3676, %v3684
        %v3692 = vsel %vm340, %v3678, %v3686
        %v3693 = vsel %vm340, %v3680, %v3688
        %v3694 = vsel %vm340, %v3682, %v3690
        %v3695 = vsel %vm340, %v3684, %v3676
        %v3696 = vsel %vm340, %v3686, %v3678
        %v3697 = vsel %vm340, %v3688, %v3680
        %v3698 = vsel %vm340, %v3690, %v3682
        %v3699 = vsel %vm328, %v3695, 0.0
        %v3700 = vsel %vm329, %v3691, 0.0
        %v3701 = vsel %vm328, %v3696, 0.0
        %v3702 = vsel %vm329, %v3692, 0.0
        %v3703 = vsel %vm328, %v3697, 0.0
        %v3704 = vsel %vm329, %v3693, 0.0
        %v3705 = vsel %vm328, %v3698, 0.0
        %v3706 = vsel %vm329, %v3694, 0.0
        %3707 = vrot.lane.b32.xlu0 %v3667, 127
        %v3708 = vpop.permute.xlu0 %3707
        %3709 = vrot.lane.b32.xlu0 %v3669, 127
        %v3710 = vpop.permute.xlu0 %3709
        %3711 = vrot.lane.b32.xlu0 %v3671, 127
        %v3712 = vpop.permute.xlu0 %3711
        %3713 = vrot.lane.b32.xlu0 %v3673, 127
        %v3714 = vpop.permute.xlu0 %3713
        %3715 = vrot.lane.b32.xlu0 %v3668, 127
        %v3716 = vpop.permute.xlu0 %3715
        %3717 = vrot.lane.b32.xlu0 %v3670, 127
        %v3718 = vpop.permute.xlu0 %3717
        %3719 = vrot.lane.b32.xlu0 %v3672, 127
        %v3720 = vpop.permute.xlu0 %3719
        %3721 = vrot.lane.b32.xlu0 %v3674, 127
        %v3722 = vpop.permute.xlu0 %3721
        %v3723 = vsel %vm349, %v3708, %v3716
        %v3724 = vsel %vm349, %v3710, %v3718
        %v3725 = vsel %vm349, %v3712, %v3720
        %v3726 = vsel %vm349, %v3714, %v3722
        %v3727 = vsel %vm349, %v3716, %v3708
        %v3728 = vsel %vm349, %v3718, %v3710
        %v3729 = vsel %vm349, %v3720, %v3712
        %v3730 = vsel %vm349, %v3722, %v3714
        %v3731 = vsel %vm330, %v3723, 0.0
        %v3732 = vsel %vm331, %v3727, 0.0
        %v3733 = vsel %vm330, %v3724, 0.0
        %v3734 = vsel %vm331, %v3728, 0.0
        %v3735 = vsel %vm330, %v3725, 0.0
        %v3736 = vsel %vm331, %v3729, 0.0
        %v3737 = vsel %vm330, %v3726, 0.0
        %v3738 = vsel %vm331, %v3730, 0.0
        %v3739 = vpack.c.bf16 %v3701, %v3699
        %v3740 = vpack.c.bf16 %v3702, %v3700
        %v3741 = vpack.c.bf16 %v3705, %v3703
        %v3742 = vpack.c.bf16 %v3706, %v3704
        %v3743 = vpack.c.bf16 %v3669, %v3667
        %v3744 = vpack.c.bf16 %v3670, %v3668
        %v3745 = vpack.c.bf16 %v3673, %v3671
        %v3746 = vpack.c.bf16 %v3674, %v3672
        %v3747 = vpack.c.bf16 %v3733, %v3731
        %v3748 = vpack.c.bf16 %v3734, %v3732
        %v3749 = vpack.c.bf16 %v3737, %v3735
        %v3750 = vpack.c.bf16 %v3738, %v3736
        %s3751 = scalar_lea.vmem %s3, 96
        %v3752 = vld [vmem:[%s3751] sm:$0xf]
        %v3753 = vld [vmem:[%s3751 + $0x4] sm:$0xf]
        %v3754 = vld [vmem:[%s3751 + $0x8] sm:$0xf]
        %v3755 = vld [vmem:[%s3751 + $0xc] sm:$0xf]
        %s3756 = scalar_lea.vmem %s4, 96
        %v3757 = vld [vmem:[%s3756] sm:$0xf]
        %v3758 = vld [vmem:[%s3756 + $0x4] sm:$0xf]
        %v3759 = vld [vmem:[%s3756 + $0x8] sm:$0xf]
        %v3760 = vld [vmem:[%s3756 + $0xc] sm:$0xf]
        %v3765 = vunpack.c.l.b16 %v3757
        %v3766 = vunpack.c.l.b16 %v3758
        %v3767 = vunpack.c.l.b16 %v3759
        %v3768 = vunpack.c.l.b16 %v3760
        %v3769 = vpack.c.b16 %v3766, %v3765
        %v3770 = vpack.c.b16 %v3768, %v3767
        %v3772 = vsel %vm997, %v3769, 0
        %v3775 = vsel %vm997, %v3770, 0
        %3777 = vmatprep.subr.bf16.mxu0 %v3740
        %3778 = vmatpush1.bf16.msra.mxu0 %v3739
        %3779 = vmatprep.subr.bf16.mxu0 %v3742
        %3780 = vmatpush1.bf16.msra.mxu0 %v3741
        %3781 = vmatprep.subr.bf16.mxu0 %v3744
        %3782 = vmatpush1.bf16.msra.mxu0 %v3743
        %3783 = vmatprep.subr.bf16.mxu0 %v3746
        %3784 = vmatpush1.bf16.msra.mxu0 %v3745
        %3785 = vmatprep.subr.bf16.mxu0 %v3748
        %3786 = vmatpush1.bf16.msra.mxu0 %v3747
        %3787 = vmatprep.subr.bf16.mxu0 %v3750
        %3788 = vmatpush1.bf16.msra.mxu0 %v3749
        %3789 = vmatprep.subr.bf16.mxu0 0
        %3790 = vmatpush1.bf16.msra.mxu0 0
        %3791 = vmatprep.subr.bf16.mxu0 0
        %3792 = vmatpush1.bf16.msra.mxu0 0
        %3793 = vmatprep.subr.bf16.mxu0 0
        %3794 = vmatpush1.bf16.msra.mxu0 0
        %3795 = vmatprep.subr.bf16.mxu0 0
        %3796 = vmatpush1.bf16.msra.mxu0 0
        %3797 = vmatprep.subr.bf16.mxu0 0
        %3798 = vmatpush1.bf16.msra.mxu0 0
        %3799 = vmatprep.subr.bf16.mxu0 0
        %3800 = vmatpush1.bf16.msra.mxu0 0
        %3801 = vmatprep.subr.bf16.mxu0 0
        %3802 = vmatpush1.bf16.msra.mxu0 0
        %3803 = vmatprep.subr.bf16.mxu0 0
        %3804 = vmatpush1.bf16.msra.mxu0 0
        %3805 = vmatprep.subr.bf16.mxu0 0
        %3806 = vmatpush1.bf16.msra.mxu0 0
        %3807 = vmatprep.subr.bf16.mxu0 0
        %3808 = vmatpush1.bf16.msra.mxu0 0
        %3809 = vmatprep.mubr.bf16.mxu0 0
        %3810 = vmatmul.mubr.bf16.gmra.mrb[0].mxu0 %v3772
        %v3811 = vpop.f32.mrb[0].mxu0
        %v3812 = vadd.f32 0.0, %v3811
        %v3813 = vpop.f32.mrb[0].mxu0
        %v3814 = vadd.f32 0.0, %v3813
        %v3815 = vpop.f32.mrb[0].mxu0
        %v3816 = vadd.f32 0.0, %v3815
        %v3817 = vpop.f32.mrb[0].mxu0
        %v3818 = vadd.f32 0.0, %v3817
        %3819 = vmatprep.mubr.bf16.mxu0 0
        %3820 = vmatmul.mubr.bf16.gmra.mrb[0].mxu0 %v3775
        %v3821 = vpop.f32.mrb[0].mxu0
        %v3822 = vadd.f32 0.0, %v3821
        %v3823 = vpop.f32.mrb[0].mxu0
        %v3824 = vadd.f32 0.0, %v3823
        %v3825 = vpop.f32.mrb[0].mxu0
        %v3826 = vadd.f32 0.0, %v3825
        %v3827 = vpop.f32.mrb[0].mxu0
        %v3828 = vadd.f32 0.0, %v3827
        %3829 = vdwg.mxu0
        %v3834 = vunpack.c.l.b16 %v3752
        %v3835 = vunpack.c.l.b16 %v3753
        %v3836 = vunpack.c.l.b16 %v3754
        %v3837 = vunpack.c.l.b16 %v3755
        %v3838 = vpack.c.b16 %v3835, %v3834
        %v3839 = vpack.c.b16 %v3837, %v3836
        %v3841 = vsel %vm997, %v3838, 0
        %v3844 = vsel %vm997, %v3839, 0
        %3846 = vmatprep.subr.bf16.mxu0 %v947
        %3847 = vmatpush1.bf16.msra.mxu0 %v946
        %3848 = vmatprep.subr.bf16.mxu0 %v949
        %3849 = vmatpush1.bf16.msra.mxu0 %v948
        %3850 = vmatprep.subr.bf16.mxu0 %v951
        %3851 = vmatpush1.bf16.msra.mxu0 %v950
        %3852 = vmatprep.subr.bf16.mxu0 %v953
        %3853 = vmatpush1.bf16.msra.mxu0 %v952
        %3854 = vmatprep.subr.bf16.mxu0 %v955
        %3855 = vmatpush1.bf16.msra.mxu0 %v954
        %3856 = vmatprep.subr.bf16.mxu0 %v957
        %3857 = vmatpush1.bf16.msra.mxu0 %v956
        %3858 = vmatprep.subr.bf16.mxu0 0
        %3859 = vmatpush1.bf16.msra.mxu0 0
        %3860 = vmatprep.subr.bf16.mxu0 0
        %3861 = vmatpush1.bf16.msra.mxu0 0
        %3862 = vmatprep.subr.bf16.mxu0 0
        %3863 = vmatpush1.bf16.msra.mxu0 0
        %3864 = vmatprep.subr.bf16.mxu0 0
        %3865 = vmatpush1.bf16.msra.mxu0 0
        %3866 = vmatprep.subr.bf16.mxu0 0
        %3867 = vmatpush1.bf16.msra.mxu0 0
        %3868 = vmatprep.subr.bf16.mxu0 0
        %3869 = vmatpush1.bf16.msra.mxu0 0
        %3870 = vmatprep.subr.bf16.mxu0 0
        %3871 = vmatpush1.bf16.msra.mxu0 0
        %3872 = vmatprep.subr.bf16.mxu0 0
        %3873 = vmatpush1.bf16.msra.mxu0 0
        %3874 = vmatprep.subr.bf16.mxu0 0
        %3875 = vmatpush1.bf16.msra.mxu0 0
        %3876 = vmatprep.subr.bf16.mxu0 0
        %3877 = vmatpush1.bf16.msra.mxu0 0
        %3878 = vmatprep.mubr.bf16.mxu0 0
        %3879 = vmatmul.mubr.bf16.gmra.mrb[0].mxu0 %v3841
        %v3880 = vpop.f32.mrb[0].mxu0
        %v3881 = vadd.f32 %v3812, %v3880
        %v3882 = vpop.f32.mrb[0].mxu0
        %v3883 = vadd.f32 %v3814, %v3882
        %v3884 = vpop.f32.mrb[0].mxu0
        %v3885 = vadd.f32 %v3816, %v3884
        %v3886 = vpop.f32.mrb[0].mxu0
        %v3887 = vadd.f32 %v3818, %v3886
        %3888 = vmatprep.mubr.bf16.mxu0 0
        %3889 = vmatmul.mubr.bf16.gmra.mrb[0].mxu0 %v3844
        %v3890 = vpop.f32.mrb[0].mxu0
        %v3891 = vadd.f32 %v3822, %v3890
        %v3892 = vpop.f32.mrb[0].mxu0
        %v3893 = vadd.f32 %v3824, %v3892
        %v3894 = vpop.f32.mrb[0].mxu0
        %v3895 = vadd.f32 %v3826, %v3894
        %v3896 = vpop.f32.mrb[0].mxu0
        %v3897 = vadd.f32 %v3828, %v3896
        %3898 = vdwg.mxu0
        %s3899 = scalar_lea.vmem %s5, 256
        %v3900 = vld [vmem:[%s3899] sm:$0xff]
        %v3901 = vld [vmem:[%s3899 + $0x8] sm:$0xff]
        %v3902 = vld [vmem:[%s3899 + $0x10] sm:$0xff]
        %v3903 = vld [vmem:[%s3899 + $0x18] sm:$0xff]
        %3905 = vset.pattern.permute.xlu0 0
        %3906 = vperm.xlu0 %3905, %v3900
        %v3907 = vpop.permute.xlu0 %3906
        %3910 = vset.pattern.permute.xlu0 0
        %3911 = vperm.xlu0 %3910, %v3901
        %v3912 = vpop.permute.xlu0 %3911
        %3915 = vset.pattern.permute.xlu0 0
        %3916 = vperm.xlu0 %3915, %v3902
        %v3917 = vpop.permute.xlu0 %3916
        %3920 = vset.pattern.permute.xlu0 0
        %3921 = vperm.xlu0 %3920, %v3903
        %v3922 = vpop.permute.xlu0 %3921
        %v3924 = vadd.f32 %v3881, %v3907
        %v3925 = vadd.f32 %v3883, %v3907
        %v3926 = vadd.f32 %v3885, %v3912
        %v3927 = vadd.f32 %v3887, %v3912
        %v3928 = vadd.f32 %v3891, %v3917
        %v3929 = vadd.f32 %v3893, %v3917
        %v3930 = vadd.f32 %v3895, %v3922
        %v3931 = vadd.f32 %v3897, %v3922
        %vm3932 = vcmp.gt.f32.partialorder %v3924, 0.0
        %vm3933 = vcmp.gt.f32.partialorder %v3925, 0.0
        %vm3934 = vcmp.gt.f32.partialorder %v3926, 0.0
        %vm3935 = vcmp.gt.f32.partialorder %v3927, 0.0
        %vm3936 = vcmp.gt.f32.partialorder %v3928, 0.0
        %vm3937 = vcmp.gt.f32.partialorder %v3929, 0.0
        %vm3938 = vcmp.gt.f32.partialorder %v3930, 0.0
        %vm3939 = vcmp.gt.f32.partialorder %v3931, 0.0
        %v3940 = vmul.f32 %v3924, 0.01
        %v3941 = vmul.f32 %v3925, 0.01
        %v3942 = vmul.f32 %v3926, 0.01
        %v3943 = vmul.f32 %v3927, 0.01
        %v3944 = vmul.f32 %v3928, 0.01
        %v3945 = vmul.f32 %v3929, 0.01
        %v3946 = vmul.f32 %v3930, 0.01
        %v3947 = vmul.f32 %v3931, 0.01
        %v3948 = vsel %vm3932, %v3924, %v3940
        %v3949 = vsel %vm3933, %v3925, %v3941
        %v3950 = vsel %vm3934, %v3926, %v3942
        %v3951 = vsel %vm3935, %v3927, %v3943
        %v3952 = vsel %vm3936, %v3928, %v3944
        %v3953 = vsel %vm3937, %v3929, %v3945
        %v3954 = vsel %vm3938, %v3930, %v3946
        %v3955 = vsel %vm3939, %v3931, %v3947
        %v3956 = vadd.f32 %v3948, %v3949
        %3957 = vadd.xlane.f32.xlu0 %v3956
        %v3958 = vpop.xlane.xlu0 %3957
        %v3959 = vadd.f32 %v3950, %v3951
        %3960 = vadd.xlane.f32.xlu0 %v3959
        %v3961 = vpop.xlane.xlu0 %3960
        %v3962 = vadd.f32 %v3952, %v3953
        %3963 = vadd.xlane.f32.xlu0 %v3962
        %v3964 = vpop.xlane.xlu0 %3963
        %v3965 = vadd.f32 %v3954, %v3955
        %3966 = vadd.xlane.f32.xlu0 %v3965
        %v3967 = vpop.xlane.xlu0 %3966
        %v3968 = vmul.f32 %v3958, %v765
        %v3969 = vmul.f32 %v3961, %v765
        %v3970 = vmul.f32 %v3964, %v765
        %v3971 = vmul.f32 %v3967, %v765
        %v3972 = vsub.f32 %v3948, %v3968
        %v3973 = vsub.f32 %v3949, %v3968
        %v3974 = vsub.f32 %v3950, %v3969
        %v3975 = vsub.f32 %v3951, %v3969
        %v3976 = vsub.f32 %v3952, %v3970
        %v3977 = vsub.f32 %v3953, %v3970
        %v3978 = vsub.f32 %v3954, %v3971
        %v3979 = vsub.f32 %v3955, %v3971
        %v3980 = vmul.f32 %v3972, %v3972
        %v3981 = vmul.f32 %v3973, %v3973
        %v3982 = vmul.f32 %v3974, %v3974
        %v3983 = vmul.f32 %v3975, %v3975
        %v3984 = vmul.f32 %v3976, %v3976
        %v3985 = vmul.f32 %v3977, %v3977
        %v3986 = vmul.f32 %v3978, %v3978
        %v3987 = vmul.f32 %v3979, %v3979
        %v3988 = vadd.f32 %v3980, %v3981
        %3989 = vadd.xlane.f32.xlu0 %v3988
        %v3990 = vpop.xlane.xlu0 %3989
        %v3991 = vadd.f32 %v3982, %v3983
        %3992 = vadd.xlane.f32.xlu0 %v3991
        %v3993 = vpop.xlane.xlu0 %3992
        %v3994 = vadd.f32 %v3984, %v3985
        %3995 = vadd.xlane.f32.xlu0 %v3994
        %v3996 = vpop.xlane.xlu0 %3995
        %v3997 = vadd.f32 %v3986, %v3987
        %3998 = vadd.xlane.f32.xlu0 %v3997
        %v3999 = vpop.xlane.xlu0 %3998
        %v4000 = vmul.f32 %v3990, %v765
        %v4001 = vmul.f32 %v3993, %v765
        %v4002 = vmul.f32 %v3996, %v765
        %v4003 = vmul.f32 %v3999, %v765
        %v4004 = vadd.f32 %v4000, 1e-05
        %v4005 = vadd.f32 %v4001, 1e-05
        %v4006 = vadd.f32 %v4002, 1e-05
        %v4007 = vadd.f32 %v4003, 1e-05
        %v4008 = vrsqrt.pop %v4004
        %v4009 = vrsqrt.pop %v4005
        %v4010 = vrsqrt.pop %v4006
        %v4011 = vrsqrt.pop %v4007
        %v4012 = vmul.f32 %v3972, %v4008
        %v4013 = vmul.f32 %v3973, %v4008
        %v4014 = vmul.f32 %v3974, %v4009
        %v4015 = vmul.f32 %v3975, %v4009
        %v4016 = vmul.f32 %v3976, %v4010
        %v4017 = vmul.f32 %v3977, %v4010
        %v4018 = vmul.f32 %v3978, %v4011
        %v4019 = vmul.f32 %v3979, %v4011
        %s4020 = scalar_lea.vmem %s6, 256
        %v4021 = vld [vmem:[%s4020] sm:$0xff]
        %v4022 = vld [vmem:[%s4020 + $0x8] sm:$0xff]
        %v4023 = vld [vmem:[%s4020 + $0x10] sm:$0xff]
        %v4024 = vld [vmem:[%s4020 + $0x18] sm:$0xff]
        %4026 = vset.pattern.permute.xlu0 0
        %4027 = vperm.xlu0 %4026, %v4021
        %v4028 = vpop.permute.xlu0 %4027
        %4031 = vset.pattern.permute.xlu0 0
        %4032 = vperm.xlu0 %4031, %v4022
        %v4033 = vpop.permute.xlu0 %4032
        %4036 = vset.pattern.permute.xlu0 0
        %4037 = vperm.xlu0 %4036, %v4023
        %v4038 = vpop.permute.xlu0 %4037
        %4041 = vset.pattern.permute.xlu0 0
        %4042 = vperm.xlu0 %4041, %v4024
        %v4043 = vpop.permute.xlu0 %4042
        %v4045 = vmul.f32 %v4012, %v4028
        %v4046 = vmul.f32 %v4013, %v4028
        %v4047 = vmul.f32 %v4014, %v4033
        %v4048 = vmul.f32 %v4015, %v4033
        %v4049 = vmul.f32 %v4016, %v4038
        %v4050 = vmul.f32 %v4017, %v4038
        %v4051 = vmul.f32 %v4018, %v4043
        %v4052 = vmul.f32 %v4019, %v4043
        %s4053 = scalar_lea.vmem %s7, 256
        %v4054 = vld [vmem:[%s4053] sm:$0xff]
        %v4055 = vld [vmem:[%s4053 + $0x8] sm:$0xff]
        %v4056 = vld [vmem:[%s4053 + $0x10] sm:$0xff]
        %v4057 = vld [vmem:[%s4053 + $0x18] sm:$0xff]
        %4059 = vset.pattern.permute.xlu0 0
        %4060 = vperm.xlu0 %4059, %v4054
        %v4061 = vpop.permute.xlu0 %4060
        %4064 = vset.pattern.permute.xlu0 0
        %4065 = vperm.xlu0 %4064, %v4055
        %v4066 = vpop.permute.xlu0 %4065
        %4069 = vset.pattern.permute.xlu0 0
        %4070 = vperm.xlu0 %4069, %v4056
        %v4071 = vpop.permute.xlu0 %4070
        %4074 = vset.pattern.permute.xlu0 0
        %4075 = vperm.xlu0 %4074, %v4057
        %v4076 = vpop.permute.xlu0 %4075
        %v4078 = vadd.f32 %v4045, %v4061
        %v4079 = vadd.f32 %v4046, %v4061
        %v4080 = vadd.f32 %v4047, %v4066
        %v4081 = vadd.f32 %v4048, %v4066
        %v4082 = vadd.f32 %v4049, %v4071
        %v4083 = vadd.f32 %v4050, %v4071
        %v4084 = vadd.f32 %v4051, %v4076
        %v4085 = vadd.f32 %v4052, %v4076
        %4086 = vrot.lane.b32.xlu0 %v4078, 1
        %v4087 = vpop.permute.xlu0 %4086
        %4088 = vrot.lane.b32.xlu0 %v4080, 1
        %v4089 = vpop.permute.xlu0 %4088
        %4090 = vrot.lane.b32.xlu0 %v4082, 1
        %v4091 = vpop.permute.xlu0 %4090
        %4092 = vrot.lane.b32.xlu0 %v4084, 1
        %v4093 = vpop.permute.xlu0 %4092
        %4094 = vrot.lane.b32.xlu0 %v4079, 1
        %v4095 = vpop.permute.xlu0 %4094
        %4096 = vrot.lane.b32.xlu0 %v4081, 1
        %v4097 = vpop.permute.xlu0 %4096
        %4098 = vrot.lane.b32.xlu0 %v4083, 1
        %v4099 = vpop.permute.xlu0 %4098
        %4100 = vrot.lane.b32.xlu0 %v4085, 1
        %v4101 = vpop.permute.xlu0 %4100
        %v4102 = vsel %vm340, %v4087, %v4095
        %v4103 = vsel %vm340, %v4089, %v4097
        %v4104 = vsel %vm340, %v4091, %v4099
        %v4105 = vsel %vm340, %v4093, %v4101
        %v4106 = vsel %vm340, %v4095, %v4087
        %v4107 = vsel %vm340, %v4097, %v4089
        %v4108 = vsel %vm340, %v4099, %v4091
        %v4109 = vsel %vm340, %v4101, %v4093
        %v4110 = vsel %vm328, %v4106, 0.0
        %v4111 = vsel %vm329, %v4102, 0.0
        %v4112 = vsel %vm328, %v4107, 0.0
        %v4113 = vsel %vm329, %v4103, 0.0
        %v4114 = vsel %vm328, %v4108, 0.0
        %v4115 = vsel %vm329, %v4104, 0.0
        %v4116 = vsel %vm328, %v4109, 0.0
        %v4117 = vsel %vm329, %v4105, 0.0
        %4118 = vrot.lane.b32.xlu0 %v4078, 127
        %v4119 = vpop.permute.xlu0 %4118
        %4120 = vrot.lane.b32.xlu0 %v4080, 127
        %v4121 = vpop.permute.xlu0 %4120
        %4122 = vrot.lane.b32.xlu0 %v4082, 127
        %v4123 = vpop.permute.xlu0 %4122
        %4124 = vrot.lane.b32.xlu0 %v4084, 127
        %v4125 = vpop.permute.xlu0 %4124
        %4126 = vrot.lane.b32.xlu0 %v4079, 127
        %v4127 = vpop.permute.xlu0 %4126
        %4128 = vrot.lane.b32.xlu0 %v4081, 127
        %v4129 = vpop.permute.xlu0 %4128
        %4130 = vrot.lane.b32.xlu0 %v4083, 127
        %v4131 = vpop.permute.xlu0 %4130
        %4132 = vrot.lane.b32.xlu0 %v4085, 127
        %v4133 = vpop.permute.xlu0 %4132
        %v4134 = vsel %vm349, %v4119, %v4127
        %v4135 = vsel %vm349, %v4121, %v4129
        %v4136 = vsel %vm349, %v4123, %v4131
        %v4137 = vsel %vm349, %v4125, %v4133
        %v4138 = vsel %vm349, %v4127, %v4119
        %v4139 = vsel %vm349, %v4129, %v4121
        %v4140 = vsel %vm349, %v4131, %v4123
        %v4141 = vsel %vm349, %v4133, %v4125
        %v4142 = vsel %vm330, %v4134, 0.0
        %v4143 = vsel %vm331, %v4138, 0.0
        %v4144 = vsel %vm330, %v4135, 0.0
        %v4145 = vsel %vm331, %v4139, 0.0
        %v4146 = vsel %vm330, %v4136, 0.0
        %v4147 = vsel %vm331, %v4140, 0.0
        %v4148 = vsel %vm330, %v4137, 0.0
        %v4149 = vsel %vm331, %v4141, 0.0
        %v4150 = vpack.c.bf16 %v4112, %v4110
        %v4151 = vpack.c.bf16 %v4113, %v4111
        %v4152 = vpack.c.bf16 %v4116, %v4114
        %v4153 = vpack.c.bf16 %v4117, %v4115
        %v4154 = vpack.c.bf16 %v4080, %v4078
        %v4155 = vpack.c.bf16 %v4081, %v4079
        %v4156 = vpack.c.bf16 %v4084, %v4082
        %v4157 = vpack.c.bf16 %v4085, %v4083
        %v4158 = vpack.c.bf16 %v4144, %v4142
        %v4159 = vpack.c.bf16 %v4145, %v4143
        %v4160 = vpack.c.bf16 %v4148, %v4146
        %v4161 = vpack.c.bf16 %v4149, %v4147
        %s4162 = scalar_lea.vmem %s3, 112
        %v4163 = vld [vmem:[%s4162] sm:$0xf]
        %v4164 = vld [vmem:[%s4162 + $0x4] sm:$0xf]
        %v4165 = vld [vmem:[%s4162 + $0x8] sm:$0xf]
        %v4166 = vld [vmem:[%s4162 + $0xc] sm:$0xf]
        %s4167 = scalar_lea.vmem %s4, 112
        %v4168 = vld [vmem:[%s4167] sm:$0xf]
        %v4169 = vld [vmem:[%s4167 + $0x4] sm:$0xf]
        %v4170 = vld [vmem:[%s4167 + $0x8] sm:$0xf]
        %v4171 = vld [vmem:[%s4167 + $0xc] sm:$0xf]
        %v4176 = vunpack.c.l.b16 %v4168
        %v4177 = vunpack.c.l.b16 %v4169
        %v4178 = vunpack.c.l.b16 %v4170
        %v4179 = vunpack.c.l.b16 %v4171
        %v4180 = vpack.c.b16 %v4177, %v4176
        %v4181 = vpack.c.b16 %v4179, %v4178
        %v4183 = vsel %vm997, %v4180, 0
        %v4186 = vsel %vm997, %v4181, 0
        %4188 = vmatprep.subr.bf16.mxu0 %v4151
        %4189 = vmatpush1.bf16.msra.mxu0 %v4150
        %4190 = vmatprep.subr.bf16.mxu0 %v4153
        %4191 = vmatpush1.bf16.msra.mxu0 %v4152
        %4192 = vmatprep.subr.bf16.mxu0 %v4155
        %4193 = vmatpush1.bf16.msra.mxu0 %v4154
        %4194 = vmatprep.subr.bf16.mxu0 %v4157
        %4195 = vmatpush1.bf16.msra.mxu0 %v4156
        %4196 = vmatprep.subr.bf16.mxu0 %v4159
        %4197 = vmatpush1.bf16.msra.mxu0 %v4158
        %4198 = vmatprep.subr.bf16.mxu0 %v4161
        %4199 = vmatpush1.bf16.msra.mxu0 %v4160
        %4200 = vmatprep.subr.bf16.mxu0 0
        %4201 = vmatpush1.bf16.msra.mxu0 0
        %4202 = vmatprep.subr.bf16.mxu0 0
        %4203 = vmatpush1.bf16.msra.mxu0 0
        %4204 = vmatprep.subr.bf16.mxu0 0
        %4205 = vmatpush1.bf16.msra.mxu0 0
        %4206 = vmatprep.subr.bf16.mxu0 0
        %4207 = vmatpush1.bf16.msra.mxu0 0
        %4208 = vmatprep.subr.bf16.mxu0 0
        %4209 = vmatpush1.bf16.msra.mxu0 0
        %4210 = vmatprep.subr.bf16.mxu0 0
        %4211 = vmatpush1.bf16.msra.mxu0 0
        %4212 = vmatprep.subr.bf16.mxu0 0
        %4213 = vmatpush1.bf16.msra.mxu0 0
        %4214 = vmatprep.subr.bf16.mxu0 0
        %4215 = vmatpush1.bf16.msra.mxu0 0
        %4216 = vmatprep.subr.bf16.mxu0 0
        %4217 = vmatpush1.bf16.msra.mxu0 0
        %4218 = vmatprep.subr.bf16.mxu0 0
        %4219 = vmatpush1.bf16.msra.mxu0 0
        %4220 = vmatprep.mubr.bf16.mxu0 0
        %4221 = vmatmul.mubr.bf16.gmra.mrb[0].mxu0 %v4183
        %v4222 = vpop.f32.mrb[0].mxu0
        %v4223 = vadd.f32 0.0, %v4222
        %v4224 = vpop.f32.mrb[0].mxu0
        %v4225 = vadd.f32 0.0, %v4224
        %v4226 = vpop.f32.mrb[0].mxu0
        %v4227 = vadd.f32 0.0, %v4226
        %v4228 = vpop.f32.mrb[0].mxu0
        %v4229 = vadd.f32 0.0, %v4228
        %4230 = vmatprep.mubr.bf16.mxu0 0
        %4231 = vmatmul.mubr.bf16.gmra.mrb[0].mxu0 %v4186
        %v4232 = vpop.f32.mrb[0].mxu0
        %v4233 = vadd.f32 0.0, %v4232
        %v4234 = vpop.f32.mrb[0].mxu0
        %v4235 = vadd.f32 0.0, %v4234
        %v4236 = vpop.f32.mrb[0].mxu0
        %v4237 = vadd.f32 0.0, %v4236
        %v4238 = vpop.f32.mrb[0].mxu0
        %v4239 = vadd.f32 0.0, %v4238
        %4240 = vdwg.mxu0
        %v4245 = vunpack.c.l.b16 %v4163
        %v4246 = vunpack.c.l.b16 %v4164
        %v4247 = vunpack.c.l.b16 %v4165
        %v4248 = vunpack.c.l.b16 %v4166
        %v4249 = vpack.c.b16 %v4246, %v4245
        %v4250 = vpack.c.b16 %v4248, %v4247
        %v4252 = vsel %vm997, %v4249, 0
        %v4255 = vsel %vm997, %v4250, 0
        %4257 = vmatprep.subr.bf16.mxu0 %v947
        %4258 = vmatpush1.bf16.msra.mxu0 %v946
        %4259 = vmatprep.subr.bf16.mxu0 %v949
        %4260 = vmatpush1.bf16.msra.mxu0 %v948
        %4261 = vmatprep.subr.bf16.mxu0 %v951
        %4262 = vmatpush1.bf16.msra.mxu0 %v950
        %4263 = vmatprep.subr.bf16.mxu0 %v953
        %4264 = vmatpush1.bf16.msra.mxu0 %v952
        %4265 = vmatprep.subr.bf16.mxu0 %v955
        %4266 = vmatpush1.bf16.msra.mxu0 %v954
        %4267 = vmatprep.subr.bf16.mxu0 %v957
        %4268 = vmatpush1.bf16.msra.mxu0 %v956
        %4269 = vmatprep.subr.bf16.mxu0 0
        %4270 = vmatpush1.bf16.msra.mxu0 0
        %4271 = vmatprep.subr.bf16.mxu0 0
        %4272 = vmatpush1.bf16.msra.mxu0 0
        %4273 = vmatprep.subr.bf16.mxu0 0
        %4274 = vmatpush1.bf16.msra.mxu0 0
        %4275 = vmatprep.subr.bf16.mxu0 0
        %4276 = vmatpush1.bf16.msra.mxu0 0
        %4277 = vmatprep.subr.bf16.mxu0 0
        %4278 = vmatpush1.bf16.msra.mxu0 0
        %4279 = vmatprep.subr.bf16.mxu0 0
        %4280 = vmatpush1.bf16.msra.mxu0 0
        %4281 = vmatprep.subr.bf16.mxu0 0
        %4282 = vmatpush1.bf16.msra.mxu0 0
        %4283 = vmatprep.subr.bf16.mxu0 0
        %4284 = vmatpush1.bf16.msra.mxu0 0
        %4285 = vmatprep.subr.bf16.mxu0 0
        %4286 = vmatpush1.bf16.msra.mxu0 0
        %4287 = vmatprep.subr.bf16.mxu0 0
        %4288 = vmatpush1.bf16.msra.mxu0 0
        %4289 = vmatprep.mubr.bf16.mxu0 0
        %4290 = vmatmul.mubr.bf16.gmra.mrb[0].mxu0 %v4252
        %v4291 = vpop.f32.mrb[0].mxu0
        %v4292 = vadd.f32 %v4223, %v4291
        %v4293 = vpop.f32.mrb[0].mxu0
        %v4294 = vadd.f32 %v4225, %v4293
        %v4295 = vpop.f32.mrb[0].mxu0
        %v4296 = vadd.f32 %v4227, %v4295
        %v4297 = vpop.f32.mrb[0].mxu0
        %v4298 = vadd.f32 %v4229, %v4297
        %4299 = vmatprep.mubr.bf16.mxu0 0
        %4300 = vmatmul.mubr.bf16.gmra.mrb[0].mxu0 %v4255
        %v4301 = vpop.f32.mrb[0].mxu0
        %v4302 = vadd.f32 %v4233, %v4301
        %v4303 = vpop.f32.mrb[0].mxu0
        %v4304 = vadd.f32 %v4235, %v4303
        %v4305 = vpop.f32.mrb[0].mxu0
        %v4306 = vadd.f32 %v4237, %v4305
        %v4307 = vpop.f32.mrb[0].mxu0
        %v4308 = vadd.f32 %v4239, %v4307
        %4309 = vdwg.mxu0
        %s4310 = scalar_lea.vmem %s5, 288
        %v4311 = vld [vmem:[%s4310] sm:$0xff]
        %v4312 = vld [vmem:[%s4310 + $0x8] sm:$0xff]
        %v4313 = vld [vmem:[%s4310 + $0x10] sm:$0xff]
        %v4314 = vld [vmem:[%s4310 + $0x18] sm:$0xff]
        %4316 = vset.pattern.permute.xlu0 0
        %4317 = vperm.xlu0 %4316, %v4311
        %v4318 = vpop.permute.xlu0 %4317
        %4321 = vset.pattern.permute.xlu0 0
        %4322 = vperm.xlu0 %4321, %v4312
        %v4323 = vpop.permute.xlu0 %4322
        %4326 = vset.pattern.permute.xlu0 0
        %4327 = vperm.xlu0 %4326, %v4313
        %v4328 = vpop.permute.xlu0 %4327
        %4331 = vset.pattern.permute.xlu0 0
        %4332 = vperm.xlu0 %4331, %v4314
        %v4333 = vpop.permute.xlu0 %4332
        %v4335 = vadd.f32 %v4292, %v4318
        %v4336 = vadd.f32 %v4294, %v4318
        %v4337 = vadd.f32 %v4296, %v4323
        %v4338 = vadd.f32 %v4298, %v4323
        %v4339 = vadd.f32 %v4302, %v4328
        %v4340 = vadd.f32 %v4304, %v4328
        %v4341 = vadd.f32 %v4306, %v4333
        %v4342 = vadd.f32 %v4308, %v4333
        %vm4343 = vcmp.gt.f32.partialorder %v4335, 0.0
        %vm4344 = vcmp.gt.f32.partialorder %v4336, 0.0
        %vm4345 = vcmp.gt.f32.partialorder %v4337, 0.0
        %vm4346 = vcmp.gt.f32.partialorder %v4338, 0.0
        %vm4347 = vcmp.gt.f32.partialorder %v4339, 0.0
        %vm4348 = vcmp.gt.f32.partialorder %v4340, 0.0
        %vm4349 = vcmp.gt.f32.partialorder %v4341, 0.0
        %vm4350 = vcmp.gt.f32.partialorder %v4342, 0.0
        %v4351 = vmul.f32 %v4335, 0.01
        %v4352 = vmul.f32 %v4336, 0.01
        %v4353 = vmul.f32 %v4337, 0.01
        %v4354 = vmul.f32 %v4338, 0.01
        %v4355 = vmul.f32 %v4339, 0.01
        %v4356 = vmul.f32 %v4340, 0.01
        %v4357 = vmul.f32 %v4341, 0.01
        %v4358 = vmul.f32 %v4342, 0.01
        %v4359 = vsel %vm4343, %v4335, %v4351
        %v4360 = vsel %vm4344, %v4336, %v4352
        %v4361 = vsel %vm4345, %v4337, %v4353
        %v4362 = vsel %vm4346, %v4338, %v4354
        %v4363 = vsel %vm4347, %v4339, %v4355
        %v4364 = vsel %vm4348, %v4340, %v4356
        %v4365 = vsel %vm4349, %v4341, %v4357
        %v4366 = vsel %vm4350, %v4342, %v4358
        %v4367 = vadd.f32 %v4359, %v4360
        %4368 = vadd.xlane.f32.xlu0 %v4367
        %v4369 = vpop.xlane.xlu0 %4368
        %v4370 = vadd.f32 %v4361, %v4362
        %4371 = vadd.xlane.f32.xlu0 %v4370
        %v4372 = vpop.xlane.xlu0 %4371
        %v4373 = vadd.f32 %v4363, %v4364
        %4374 = vadd.xlane.f32.xlu0 %v4373
        %v4375 = vpop.xlane.xlu0 %4374
        %v4376 = vadd.f32 %v4365, %v4366
        %4377 = vadd.xlane.f32.xlu0 %v4376
        %v4378 = vpop.xlane.xlu0 %4377
        %v4379 = vmul.f32 %v4369, %v765
        %v4380 = vmul.f32 %v4372, %v765
        %v4381 = vmul.f32 %v4375, %v765
        %v4382 = vmul.f32 %v4378, %v765
        %v4383 = vsub.f32 %v4359, %v4379
        %v4384 = vsub.f32 %v4360, %v4379
        %v4385 = vsub.f32 %v4361, %v4380
        %v4386 = vsub.f32 %v4362, %v4380
        %v4387 = vsub.f32 %v4363, %v4381
        %v4388 = vsub.f32 %v4364, %v4381
        %v4389 = vsub.f32 %v4365, %v4382
        %v4390 = vsub.f32 %v4366, %v4382
        %v4391 = vmul.f32 %v4383, %v4383
        %v4392 = vmul.f32 %v4384, %v4384
        %v4393 = vmul.f32 %v4385, %v4385
        %v4394 = vmul.f32 %v4386, %v4386
        %v4395 = vmul.f32 %v4387, %v4387
        %v4396 = vmul.f32 %v4388, %v4388
        %v4397 = vmul.f32 %v4389, %v4389
        %v4398 = vmul.f32 %v4390, %v4390
        %v4399 = vadd.f32 %v4391, %v4392
        %4400 = vadd.xlane.f32.xlu0 %v4399
        %v4401 = vpop.xlane.xlu0 %4400
        %v4402 = vadd.f32 %v4393, %v4394
        %4403 = vadd.xlane.f32.xlu0 %v4402
        %v4404 = vpop.xlane.xlu0 %4403
        %v4405 = vadd.f32 %v4395, %v4396
        %4406 = vadd.xlane.f32.xlu0 %v4405
        %v4407 = vpop.xlane.xlu0 %4406
        %v4408 = vadd.f32 %v4397, %v4398
        %4409 = vadd.xlane.f32.xlu0 %v4408
        %v4410 = vpop.xlane.xlu0 %4409
        %v4411 = vmul.f32 %v4401, %v765
        %v4412 = vmul.f32 %v4404, %v765
        %v4413 = vmul.f32 %v4407, %v765
        %v4414 = vmul.f32 %v4410, %v765
        %v4415 = vadd.f32 %v4411, 1e-05
        %v4416 = vadd.f32 %v4412, 1e-05
        %v4417 = vadd.f32 %v4413, 1e-05
        %v4418 = vadd.f32 %v4414, 1e-05
        %v4419 = vrsqrt.pop %v4415
        %v4420 = vrsqrt.pop %v4416
        %v4421 = vrsqrt.pop %v4417
        %v4422 = vrsqrt.pop %v4418
        %v4423 = vmul.f32 %v4383, %v4419
        %v4424 = vmul.f32 %v4384, %v4419
        %v4425 = vmul.f32 %v4385, %v4420
        %v4426 = vmul.f32 %v4386, %v4420
        %v4427 = vmul.f32 %v4387, %v4421
        %v4428 = vmul.f32 %v4388, %v4421
        %v4429 = vmul.f32 %v4389, %v4422
        %v4430 = vmul.f32 %v4390, %v4422
        %s4431 = scalar_lea.vmem %s6, 288
        %v4432 = vld [vmem:[%s4431] sm:$0xff]
        %v4433 = vld [vmem:[%s4431 + $0x8] sm:$0xff]
        %v4434 = vld [vmem:[%s4431 + $0x10] sm:$0xff]
        %v4435 = vld [vmem:[%s4431 + $0x18] sm:$0xff]
        %4437 = vset.pattern.permute.xlu0 0
        %4438 = vperm.xlu0 %4437, %v4432
        %v4439 = vpop.permute.xlu0 %4438
        %4442 = vset.pattern.permute.xlu0 0
        %4443 = vperm.xlu0 %4442, %v4433
        %v4444 = vpop.permute.xlu0 %4443
        %4447 = vset.pattern.permute.xlu0 0
        %4448 = vperm.xlu0 %4447, %v4434
        %v4449 = vpop.permute.xlu0 %4448
        %4452 = vset.pattern.permute.xlu0 0
        %4453 = vperm.xlu0 %4452, %v4435
        %v4454 = vpop.permute.xlu0 %4453
        %v4456 = vmul.f32 %v4423, %v4439
        %v4457 = vmul.f32 %v4424, %v4439
        %v4458 = vmul.f32 %v4425, %v4444
        %v4459 = vmul.f32 %v4426, %v4444
        %v4460 = vmul.f32 %v4427, %v4449
        %v4461 = vmul.f32 %v4428, %v4449
        %v4462 = vmul.f32 %v4429, %v4454
        %v4463 = vmul.f32 %v4430, %v4454
        %s4464 = scalar_lea.vmem %s7, 288
        %v4465 = vld [vmem:[%s4464] sm:$0xff]
        %v4466 = vld [vmem:[%s4464 + $0x8] sm:$0xff]
        %v4467 = vld [vmem:[%s4464 + $0x10] sm:$0xff]
        %v4468 = vld [vmem:[%s4464 + $0x18] sm:$0xff]
        %4470 = vset.pattern.permute.xlu0 0
        %4471 = vperm.xlu0 %4470, %v4465
        %v4472 = vpop.permute.xlu0 %4471
        %4475 = vset.pattern.permute.xlu0 0
        %4476 = vperm.xlu0 %4475, %v4466
        %v4477 = vpop.permute.xlu0 %4476
        %4480 = vset.pattern.permute.xlu0 0
        %4481 = vperm.xlu0 %4480, %v4467
        %v4482 = vpop.permute.xlu0 %4481
        %4485 = vset.pattern.permute.xlu0 0
        %4486 = vperm.xlu0 %4485, %v4468
        %v4487 = vpop.permute.xlu0 %4486
        %v4489 = vadd.f32 %v4456, %v4472
        %v4490 = vadd.f32 %v4457, %v4472
        %v4491 = vadd.f32 %v4458, %v4477
        %v4492 = vadd.f32 %v4459, %v4477
        %v4493 = vadd.f32 %v4460, %v4482
        %v4494 = vadd.f32 %v4461, %v4482
        %v4495 = vadd.f32 %v4462, %v4487
        %v4496 = vadd.f32 %v4463, %v4487
        %4497 = vrot.lane.b32.xlu0 %v4489, 1
        %v4498 = vpop.permute.xlu0 %4497
        %4499 = vrot.lane.b32.xlu0 %v4491, 1
        %v4500 = vpop.permute.xlu0 %4499
        %4501 = vrot.lane.b32.xlu0 %v4493, 1
        %v4502 = vpop.permute.xlu0 %4501
        %4503 = vrot.lane.b32.xlu0 %v4495, 1
        %v4504 = vpop.permute.xlu0 %4503
        %4505 = vrot.lane.b32.xlu0 %v4490, 1
        %v4506 = vpop.permute.xlu0 %4505
        %4507 = vrot.lane.b32.xlu0 %v4492, 1
        %v4508 = vpop.permute.xlu0 %4507
        %4509 = vrot.lane.b32.xlu0 %v4494, 1
        %v4510 = vpop.permute.xlu0 %4509
        %4511 = vrot.lane.b32.xlu0 %v4496, 1
        %v4512 = vpop.permute.xlu0 %4511
        %v4513 = vsel %vm340, %v4498, %v4506
        %v4514 = vsel %vm340, %v4500, %v4508
        %v4515 = vsel %vm340, %v4502, %v4510
        %v4516 = vsel %vm340, %v4504, %v4512
        %v4517 = vsel %vm340, %v4506, %v4498
        %v4518 = vsel %vm340, %v4508, %v4500
        %v4519 = vsel %vm340, %v4510, %v4502
        %v4520 = vsel %vm340, %v4512, %v4504
        %v4521 = vsel %vm328, %v4517, 0.0
        %v4522 = vsel %vm329, %v4513, 0.0
        %v4523 = vsel %vm328, %v4518, 0.0
        %v4524 = vsel %vm329, %v4514, 0.0
        %v4525 = vsel %vm328, %v4519, 0.0
        %v4526 = vsel %vm329, %v4515, 0.0
        %v4527 = vsel %vm328, %v4520, 0.0
        %v4528 = vsel %vm329, %v4516, 0.0
        %4529 = vrot.lane.b32.xlu0 %v4489, 127
        %v4530 = vpop.permute.xlu0 %4529
        %4531 = vrot.lane.b32.xlu0 %v4491, 127
        %v4532 = vpop.permute.xlu0 %4531
        %4533 = vrot.lane.b32.xlu0 %v4493, 127
        %v4534 = vpop.permute.xlu0 %4533
        %4535 = vrot.lane.b32.xlu0 %v4495, 127
        %v4536 = vpop.permute.xlu0 %4535
        %4537 = vrot.lane.b32.xlu0 %v4490, 127
        %v4538 = vpop.permute.xlu0 %4537
        %4539 = vrot.lane.b32.xlu0 %v4492, 127
        %v4540 = vpop.permute.xlu0 %4539
        %4541 = vrot.lane.b32.xlu0 %v4494, 127
        %v4542 = vpop.permute.xlu0 %4541
        %4543 = vrot.lane.b32.xlu0 %v4496, 127
        %v4544 = vpop.permute.xlu0 %4543
        %v4545 = vsel %vm349, %v4530, %v4538
        %v4546 = vsel %vm349, %v4532, %v4540
        %v4547 = vsel %vm349, %v4534, %v4542
        %v4548 = vsel %vm349, %v4536, %v4544
        %v4549 = vsel %vm349, %v4538, %v4530
        %v4550 = vsel %vm349, %v4540, %v4532
        %v4551 = vsel %vm349, %v4542, %v4534
        %v4552 = vsel %vm349, %v4544, %v4536
        %v4553 = vsel %vm330, %v4545, 0.0
        %v4554 = vsel %vm331, %v4549, 0.0
        %v4555 = vsel %vm330, %v4546, 0.0
        %v4556 = vsel %vm331, %v4550, 0.0
        %v4557 = vsel %vm330, %v4547, 0.0
        %v4558 = vsel %vm331, %v4551, 0.0
        %v4559 = vsel %vm330, %v4548, 0.0
        %v4560 = vsel %vm331, %v4552, 0.0
        %v4561 = vpack.c.bf16 %v4523, %v4521
        %v4562 = vpack.c.bf16 %v4524, %v4522
        %v4563 = vpack.c.bf16 %v4527, %v4525
        %v4564 = vpack.c.bf16 %v4528, %v4526
        %v4565 = vpack.c.bf16 %v4491, %v4489
        %v4566 = vpack.c.bf16 %v4492, %v4490
        %v4567 = vpack.c.bf16 %v4495, %v4493
        %v4568 = vpack.c.bf16 %v4496, %v4494
        %v4569 = vpack.c.bf16 %v4555, %v4553
        %v4570 = vpack.c.bf16 %v4556, %v4554
        %v4571 = vpack.c.bf16 %v4559, %v4557
        %v4572 = vpack.c.bf16 %v4560, %v4558
        %s4573 = scalar_lea.vmem %s3, 128
        %v4574 = vld [vmem:[%s4573] sm:$0xf]
        %v4575 = vld [vmem:[%s4573 + $0x4] sm:$0xf]
        %v4576 = vld [vmem:[%s4573 + $0x8] sm:$0xf]
        %v4577 = vld [vmem:[%s4573 + $0xc] sm:$0xf]
        %s4578 = scalar_lea.vmem %s4, 128
        %v4579 = vld [vmem:[%s4578] sm:$0xf]
        %v4580 = vld [vmem:[%s4578 + $0x4] sm:$0xf]
        %v4581 = vld [vmem:[%s4578 + $0x8] sm:$0xf]
        %v4582 = vld [vmem:[%s4578 + $0xc] sm:$0xf]
        %v4587 = vunpack.c.l.b16 %v4579
        %v4588 = vunpack.c.l.b16 %v4580
        %v4589 = vunpack.c.l.b16 %v4581
        %v4590 = vunpack.c.l.b16 %v4582
        %v4591 = vpack.c.b16 %v4588, %v4587
        %v4592 = vpack.c.b16 %v4590, %v4589
        %v4594 = vsel %vm997, %v4591, 0
        %v4597 = vsel %vm997, %v4592, 0
        %4599 = vmatprep.subr.bf16.mxu0 %v4562
        %4600 = vmatpush1.bf16.msra.mxu0 %v4561
        %4601 = vmatprep.subr.bf16.mxu0 %v4564
        %4602 = vmatpush1.bf16.msra.mxu0 %v4563
        %4603 = vmatprep.subr.bf16.mxu0 %v4566
        %4604 = vmatpush1.bf16.msra.mxu0 %v4565
        %4605 = vmatprep.subr.bf16.mxu0 %v4568
        %4606 = vmatpush1.bf16.msra.mxu0 %v4567
        %4607 = vmatprep.subr.bf16.mxu0 %v4570
        %4608 = vmatpush1.bf16.msra.mxu0 %v4569
        %4609 = vmatprep.subr.bf16.mxu0 %v4572
        %4610 = vmatpush1.bf16.msra.mxu0 %v4571
        %4611 = vmatprep.subr.bf16.mxu0 0
        %4612 = vmatpush1.bf16.msra.mxu0 0
        %4613 = vmatprep.subr.bf16.mxu0 0
        %4614 = vmatpush1.bf16.msra.mxu0 0
        %4615 = vmatprep.subr.bf16.mxu0 0
        %4616 = vmatpush1.bf16.msra.mxu0 0
        %4617 = vmatprep.subr.bf16.mxu0 0
        %4618 = vmatpush1.bf16.msra.mxu0 0
        %4619 = vmatprep.subr.bf16.mxu0 0
        %4620 = vmatpush1.bf16.msra.mxu0 0
        %4621 = vmatprep.subr.bf16.mxu0 0
        %4622 = vmatpush1.bf16.msra.mxu0 0
        %4623 = vmatprep.subr.bf16.mxu0 0
        %4624 = vmatpush1.bf16.msra.mxu0 0
        %4625 = vmatprep.subr.bf16.mxu0 0
        %4626 = vmatpush1.bf16.msra.mxu0 0
        %4627 = vmatprep.subr.bf16.mxu0 0
        %4628 = vmatpush1.bf16.msra.mxu0 0
        %4629 = vmatprep.subr.bf16.mxu0 0
        %4630 = vmatpush1.bf16.msra.mxu0 0
        %4631 = vmatprep.mubr.bf16.mxu0 0
        %4632 = vmatmul.mubr.bf16.gmra.mrb[0].mxu0 %v4594
        %v4633 = vpop.f32.mrb[0].mxu0
        %v4634 = vadd.f32 0.0, %v4633
        %v4635 = vpop.f32.mrb[0].mxu0
        %v4636 = vadd.f32 0.0, %v4635
        %v4637 = vpop.f32.mrb[0].mxu0
        %v4638 = vadd.f32 0.0, %v4637
        %v4639 = vpop.f32.mrb[0].mxu0
        %v4640 = vadd.f32 0.0, %v4639
        %4641 = vmatprep.mubr.bf16.mxu0 0
        %4642 = vmatmul.mubr.bf16.gmra.mrb[0].mxu0 %v4597
        %v4643 = vpop.f32.mrb[0].mxu0
        %v4644 = vadd.f32 0.0, %v4643
        %v4645 = vpop.f32.mrb[0].mxu0
        %v4646 = vadd.f32 0.0, %v4645
        %v4647 = vpop.f32.mrb[0].mxu0
        %v4648 = vadd.f32 0.0, %v4647
        %v4649 = vpop.f32.mrb[0].mxu0
        %v4650 = vadd.f32 0.0, %v4649
        %4651 = vdwg.mxu0
        %v4656 = vunpack.c.l.b16 %v4574
        %v4657 = vunpack.c.l.b16 %v4575
        %v4658 = vunpack.c.l.b16 %v4576
        %v4659 = vunpack.c.l.b16 %v4577
        %v4660 = vpack.c.b16 %v4657, %v4656
        %v4661 = vpack.c.b16 %v4659, %v4658
        %v4663 = vsel %vm997, %v4660, 0
        %v4666 = vsel %vm997, %v4661, 0
        %4668 = vmatprep.subr.bf16.mxu0 %v947
        %4669 = vmatpush1.bf16.msra.mxu0 %v946
        %4670 = vmatprep.subr.bf16.mxu0 %v949
        %4671 = vmatpush1.bf16.msra.mxu0 %v948
        %4672 = vmatprep.subr.bf16.mxu0 %v951
        %4673 = vmatpush1.bf16.msra.mxu0 %v950
        %4674 = vmatprep.subr.bf16.mxu0 %v953
        %4675 = vmatpush1.bf16.msra.mxu0 %v952
        %4676 = vmatprep.subr.bf16.mxu0 %v955
        %4677 = vmatpush1.bf16.msra.mxu0 %v954
        %4678 = vmatprep.subr.bf16.mxu0 %v957
        %4679 = vmatpush1.bf16.msra.mxu0 %v956
        %4680 = vmatprep.subr.bf16.mxu0 0
        %4681 = vmatpush1.bf16.msra.mxu0 0
        %4682 = vmatprep.subr.bf16.mxu0 0
        %4683 = vmatpush1.bf16.msra.mxu0 0
        %4684 = vmatprep.subr.bf16.mxu0 0
        %4685 = vmatpush1.bf16.msra.mxu0 0
        %4686 = vmatprep.subr.bf16.mxu0 0
        %4687 = vmatpush1.bf16.msra.mxu0 0
        %4688 = vmatprep.subr.bf16.mxu0 0
        %4689 = vmatpush1.bf16.msra.mxu0 0
        %4690 = vmatprep.subr.bf16.mxu0 0
        %4691 = vmatpush1.bf16.msra.mxu0 0
        %4692 = vmatprep.subr.bf16.mxu0 0
        %4693 = vmatpush1.bf16.msra.mxu0 0
        %4694 = vmatprep.subr.bf16.mxu0 0
        %4695 = vmatpush1.bf16.msra.mxu0 0
        %4696 = vmatprep.subr.bf16.mxu0 0
        %4697 = vmatpush1.bf16.msra.mxu0 0
        %4698 = vmatprep.subr.bf16.mxu0 0
        %4699 = vmatpush1.bf16.msra.mxu0 0
        %4700 = vmatprep.mubr.bf16.mxu0 0
        %4701 = vmatmul.mubr.bf16.gmra.mrb[0].mxu0 %v4663
        %v4702 = vpop.f32.mrb[0].mxu0
        %v4703 = vadd.f32 %v4634, %v4702
        %v4704 = vpop.f32.mrb[0].mxu0
        %v4705 = vadd.f32 %v4636, %v4704
        %v4706 = vpop.f32.mrb[0].mxu0
        %v4707 = vadd.f32 %v4638, %v4706
        %v4708 = vpop.f32.mrb[0].mxu0
        %v4709 = vadd.f32 %v4640, %v4708
        %4710 = vmatprep.mubr.bf16.mxu0 0
        %4711 = vmatmul.mubr.bf16.gmra.mrb[0].mxu0 %v4666
        %v4712 = vpop.f32.mrb[0].mxu0
        %v4713 = vadd.f32 %v4644, %v4712
        %v4714 = vpop.f32.mrb[0].mxu0
        %v4715 = vadd.f32 %v4646, %v4714
        %v4716 = vpop.f32.mrb[0].mxu0
        %v4717 = vadd.f32 %v4648, %v4716
        %v4718 = vpop.f32.mrb[0].mxu0
        %v4719 = vadd.f32 %v4650, %v4718
        %4720 = vdwg.mxu0
        %s4721 = scalar_lea.vmem %s5, 320
        %v4722 = vld [vmem:[%s4721] sm:$0xff]
        %v4723 = vld [vmem:[%s4721 + $0x8] sm:$0xff]
        %v4724 = vld [vmem:[%s4721 + $0x10] sm:$0xff]
        %v4725 = vld [vmem:[%s4721 + $0x18] sm:$0xff]
        %4727 = vset.pattern.permute.xlu0 0
        %4728 = vperm.xlu0 %4727, %v4722
        %v4729 = vpop.permute.xlu0 %4728
        %4732 = vset.pattern.permute.xlu0 0
        %4733 = vperm.xlu0 %4732, %v4723
        %v4734 = vpop.permute.xlu0 %4733
        %4737 = vset.pattern.permute.xlu0 0
        %4738 = vperm.xlu0 %4737, %v4724
        %v4739 = vpop.permute.xlu0 %4738
        %4742 = vset.pattern.permute.xlu0 0
        %4743 = vperm.xlu0 %4742, %v4725
        %v4744 = vpop.permute.xlu0 %4743
        %v4746 = vadd.f32 %v4703, %v4729
        %v4747 = vadd.f32 %v4705, %v4729
        %v4748 = vadd.f32 %v4707, %v4734
        %v4749 = vadd.f32 %v4709, %v4734
        %v4750 = vadd.f32 %v4713, %v4739
        %v4751 = vadd.f32 %v4715, %v4739
        %v4752 = vadd.f32 %v4717, %v4744
        %v4753 = vadd.f32 %v4719, %v4744
        %vm4754 = vcmp.gt.f32.partialorder %v4746, 0.0
        %vm4755 = vcmp.gt.f32.partialorder %v4747, 0.0
        %vm4756 = vcmp.gt.f32.partialorder %v4748, 0.0
        %vm4757 = vcmp.gt.f32.partialorder %v4749, 0.0
        %vm4758 = vcmp.gt.f32.partialorder %v4750, 0.0
        %vm4759 = vcmp.gt.f32.partialorder %v4751, 0.0
        %vm4760 = vcmp.gt.f32.partialorder %v4752, 0.0
        %vm4761 = vcmp.gt.f32.partialorder %v4753, 0.0
        %v4762 = vmul.f32 %v4746, 0.01
        %v4763 = vmul.f32 %v4747, 0.01
        %v4764 = vmul.f32 %v4748, 0.01
        %v4765 = vmul.f32 %v4749, 0.01
        %v4766 = vmul.f32 %v4750, 0.01
        %v4767 = vmul.f32 %v4751, 0.01
        %v4768 = vmul.f32 %v4752, 0.01
        %v4769 = vmul.f32 %v4753, 0.01
        %v4770 = vsel %vm4754, %v4746, %v4762
        %v4771 = vsel %vm4755, %v4747, %v4763
        %v4772 = vsel %vm4756, %v4748, %v4764
        %v4773 = vsel %vm4757, %v4749, %v4765
        %v4774 = vsel %vm4758, %v4750, %v4766
        %v4775 = vsel %vm4759, %v4751, %v4767
        %v4776 = vsel %vm4760, %v4752, %v4768
        %v4777 = vsel %vm4761, %v4753, %v4769
        %v4778 = vadd.f32 %v4770, %v4771
        %4779 = vadd.xlane.f32.xlu0 %v4778
        %v4780 = vpop.xlane.xlu0 %4779
        %v4781 = vadd.f32 %v4772, %v4773
        %4782 = vadd.xlane.f32.xlu0 %v4781
        %v4783 = vpop.xlane.xlu0 %4782
        %v4784 = vadd.f32 %v4774, %v4775
        %4785 = vadd.xlane.f32.xlu0 %v4784
        %v4786 = vpop.xlane.xlu0 %4785
        %v4787 = vadd.f32 %v4776, %v4777
        %4788 = vadd.xlane.f32.xlu0 %v4787
        %v4789 = vpop.xlane.xlu0 %4788
        %v4790 = vmul.f32 %v4780, %v765
        %v4791 = vmul.f32 %v4783, %v765
        %v4792 = vmul.f32 %v4786, %v765
        %v4793 = vmul.f32 %v4789, %v765
        %v4794 = vsub.f32 %v4770, %v4790
        %v4795 = vsub.f32 %v4771, %v4790
        %v4796 = vsub.f32 %v4772, %v4791
        %v4797 = vsub.f32 %v4773, %v4791
        %v4798 = vsub.f32 %v4774, %v4792
        %v4799 = vsub.f32 %v4775, %v4792
        %v4800 = vsub.f32 %v4776, %v4793
        %v4801 = vsub.f32 %v4777, %v4793
        %v4802 = vmul.f32 %v4794, %v4794
        %v4803 = vmul.f32 %v4795, %v4795
        %v4804 = vmul.f32 %v4796, %v4796
        %v4805 = vmul.f32 %v4797, %v4797
        %v4806 = vmul.f32 %v4798, %v4798
        %v4807 = vmul.f32 %v4799, %v4799
        %v4808 = vmul.f32 %v4800, %v4800
        %v4809 = vmul.f32 %v4801, %v4801
        %v4810 = vadd.f32 %v4802, %v4803
        %4811 = vadd.xlane.f32.xlu0 %v4810
        %v4812 = vpop.xlane.xlu0 %4811
        %v4813 = vadd.f32 %v4804, %v4805
        %4814 = vadd.xlane.f32.xlu0 %v4813
        %v4815 = vpop.xlane.xlu0 %4814
        %v4816 = vadd.f32 %v4806, %v4807
        %4817 = vadd.xlane.f32.xlu0 %v4816
        %v4818 = vpop.xlane.xlu0 %4817
        %v4819 = vadd.f32 %v4808, %v4809
        %4820 = vadd.xlane.f32.xlu0 %v4819
        %v4821 = vpop.xlane.xlu0 %4820
        %v4822 = vmul.f32 %v4812, %v765
        %v4823 = vmul.f32 %v4815, %v765
        %v4824 = vmul.f32 %v4818, %v765
        %v4825 = vmul.f32 %v4821, %v765
        %v4826 = vadd.f32 %v4822, 1e-05
        %v4827 = vadd.f32 %v4823, 1e-05
        %v4828 = vadd.f32 %v4824, 1e-05
        %v4829 = vadd.f32 %v4825, 1e-05
        %v4830 = vrsqrt.pop %v4826
        %v4831 = vrsqrt.pop %v4827
        %v4832 = vrsqrt.pop %v4828
        %v4833 = vrsqrt.pop %v4829
        %v4834 = vmul.f32 %v4794, %v4830
        %v4835 = vmul.f32 %v4795, %v4830
        %v4836 = vmul.f32 %v4796, %v4831
        %v4837 = vmul.f32 %v4797, %v4831
        %v4838 = vmul.f32 %v4798, %v4832
        %v4839 = vmul.f32 %v4799, %v4832
        %v4840 = vmul.f32 %v4800, %v4833
        %v4841 = vmul.f32 %v4801, %v4833
        %s4842 = scalar_lea.vmem %s6, 320
        %v4843 = vld [vmem:[%s4842] sm:$0xff]
        %v4844 = vld [vmem:[%s4842 + $0x8] sm:$0xff]
        %v4845 = vld [vmem:[%s4842 + $0x10] sm:$0xff]
        %v4846 = vld [vmem:[%s4842 + $0x18] sm:$0xff]
        %4848 = vset.pattern.permute.xlu0 0
        %4849 = vperm.xlu0 %4848, %v4843
        %v4850 = vpop.permute.xlu0 %4849
        %4853 = vset.pattern.permute.xlu0 0
        %4854 = vperm.xlu0 %4853, %v4844
        %v4855 = vpop.permute.xlu0 %4854
        %4858 = vset.pattern.permute.xlu0 0
        %4859 = vperm.xlu0 %4858, %v4845
        %v4860 = vpop.permute.xlu0 %4859
        %4863 = vset.pattern.permute.xlu0 0
        %4864 = vperm.xlu0 %4863, %v4846
        %v4865 = vpop.permute.xlu0 %4864
        %v4867 = vmul.f32 %v4834, %v4850
        %v4868 = vmul.f32 %v4835, %v4850
        %v4869 = vmul.f32 %v4836, %v4855
        %v4870 = vmul.f32 %v4837, %v4855
        %v4871 = vmul.f32 %v4838, %v4860
        %v4872 = vmul.f32 %v4839, %v4860
        %v4873 = vmul.f32 %v4840, %v4865
        %v4874 = vmul.f32 %v4841, %v4865
        %s4875 = scalar_lea.vmem %s7, 320
        %v4876 = vld [vmem:[%s4875] sm:$0xff]
        %v4877 = vld [vmem:[%s4875 + $0x8] sm:$0xff]
        %v4878 = vld [vmem:[%s4875 + $0x10] sm:$0xff]
        %v4879 = vld [vmem:[%s4875 + $0x18] sm:$0xff]
        %4881 = vset.pattern.permute.xlu0 0
        %4882 = vperm.xlu0 %4881, %v4876
        %v4883 = vpop.permute.xlu0 %4882
        %4886 = vset.pattern.permute.xlu0 0
        %4887 = vperm.xlu0 %4886, %v4877
        %v4888 = vpop.permute.xlu0 %4887
        %4891 = vset.pattern.permute.xlu0 0
        %4892 = vperm.xlu0 %4891, %v4878
        %v4893 = vpop.permute.xlu0 %4892
        %4896 = vset.pattern.permute.xlu0 0
        %4897 = vperm.xlu0 %4896, %v4879
        %v4898 = vpop.permute.xlu0 %4897
        %v4900 = vadd.f32 %v4867, %v4883
        %v4901 = vadd.f32 %v4868, %v4883
        %v4902 = vadd.f32 %v4869, %v4888
        %v4903 = vadd.f32 %v4870, %v4888
        %v4904 = vadd.f32 %v4871, %v4893
        %v4905 = vadd.f32 %v4872, %v4893
        %v4906 = vadd.f32 %v4873, %v4898
        %v4907 = vadd.f32 %v4874, %v4898
        %4908 = vst [vmem:[%s323] sm:$0xff] %v4900
        %4909 = vst [vmem:[%s323 + $0x8] sm:$0xff] %v4901
        %4910 = vst [vmem:[%s323 + $0x10] sm:$0xff] %v4902
        %4911 = vst [vmem:[%s323 + $0x18] sm:$0xff] %v4903
        %4912 = vst [vmem:[%s323 + $0x20] sm:$0xff] %v4904
        %4913 = vst [vmem:[%s323 + $0x28] sm:$0xff] %v4905
        %4914 = vst [vmem:[%s323 + $0x30] sm:$0xff] %v4906
        %4915 = vst [vmem:[%s323 + $0x38] sm:$0xff] %v4907
        %p4916 = scmp.lt.s32.totalorder %s22, 1
        %s4917 = scalar_select %p4916, %s22, 1
        %s4918 = smul.addr %s4917, 8
        %s4919 = smul.addr %s4918, 8
        %s4920 = scalar_lea.vmem %s8, %s4919
        // Predicated region
        $region57: #{redundant_decoder_forward.2} parent=51 // pred_check
          %p4921 = pneg %p213
        $region58: #{redundant_decoder_forward.2} parent=51 // pred_check_branch
          %4923 = sbr.rel (%p4921) target = $region60
        $region59: #{redundant_decoder_forward.2} parent=51 // pred_region
          _
        $region60: #{redundant_decoder_forward.2} parent=51 // pred_fallthru
          _
      $region52: #{redundant_decoder_forward.2} parent=5 // pred_fallthru
        _
      %p4924 = scmp.le.s32.totalorder 2, %s17
      // Predicated region
      $region61: #{redundant_decoder_forward.2} parent=5 // pred_check
        %p4925 = pneg %p4924
      $region62: #{redundant_decoder_forward.2} parent=5 // pred_check_branch
        %4927 = sbr.rel (%p4925) target = $region64
      $region63: #{redundant_decoder_forward.2} parent=5 // pred_region
        %s4928 = ssub.s32 %s17, 2
        // Predicated region
        $region65: #{redundant_decoder_forward.2} parent=63 // pred_check
          %p4929 = pneg %p219
        $region66: #{redundant_decoder_forward.2} parent=63 // pred_check_branch
          %4931 = sbr.rel (%p4929) target = $region68
        $region67: #{redundant_decoder_forward.2} parent=63 // pred_region
          %p4932 = scmp.lt.s32.totalorder %s23, 1
          %s4933 = scalar_select %p4932, %s23, 1
          %s4934 = smul.addr %s4933, 8
          %s4935 = smul.addr %s4934, 8
          %s4936 = scalar_lea.vmem %s8, %s4935
        $region68: #{redundant_decoder_forward.2} parent=63 // pred_fallthru
          _
      $region64: #{redundant_decoder_forward.2} parent=5 // pred_fallthru
        _
    $region6: #{redundant_decoder_forward.2} parent=1 // loop_footer
      %s21 = sadd.s32 1, %s17
    $region7: #{redundant_decoder_forward.2} parent=1 // loop_footer_branch
      %16 = sbr.rel target = $region3
    $region8: #{redundant_decoder_forward.2} parent=1 // loop_exit
      _
    %4937 = vsyncpa [#allocation3], 1
    %s4938 = scalar_lea.sflag [#allocation3], 1
    %4939 = vsyncpa %s4938, 1

// kernel: redundant_decoder_forward.3
$region0: #{redundant_decoder_forward.3}
  #allocation0 [shape = 'u32[]', space=smem, size = 0x4, offset = 0x4, fixed_abs, tag = 'smem constant byte address 0x4 - core index']
  #allocation1 [shape = 'u32[144,128]{1,0:T(1,128)}', space=vmem, size = 0x12000, scoped, tag = 'internal scratch']
  #allocation2 [shape = 'f32[1,1]{1,0:T(1,128)S(1)}', space=vmem, size = 0x200, scoped, tag = 'scoped memory for redundant_decoder_forward.3']
  #allocation3 [shape = 'f32[1,1]{1,0:T(1,128)S(1)}', space=vmem, size = 0x200, scoped, tag = 'scoped memory for redundant_decoder_forward.3']
  %s0 = inlined_call_operand.vmem [shape: f32[2,8192], index: 0, kind: input, shape index: {}]
  %s1 = inlined_call_operand.vmem [shape: f32[8192,64], index: 1, kind: input, shape index: {}]
  %s2 = inlined_call_operand.<no memory space> [shape: f32[1,1], index: 2, kind: input, shape index: {}]
  %s3 = inlined_call_operand.vmem [shape: f32[64,64], index: 3, kind: input, shape index: {}]
  %s4 = inlined_call_operand.<no memory space> [shape: f32[1,1], index: 4, kind: input, shape index: {}]
  %s5 = inlined_call_operand.vmem [shape: f32[2,64], index: 5, kind: output, shape index: {}]
  %s6 = sld [smem:[#allocation0]]
  $region30: #{redundant_decoder_forward.3} parent=0
    _
  %s8 = ssub.s32 1, %s6
  %s9 = scalar_select 0, %s8, %s6
  %v10 = vstv %s2
  %11 = vst [vmem:[#allocation2] sm:$0x1] %v10
  %v12 = vstv %s4
  %13 = vst [vmem:[#allocation3] sm:$0x1] %v12
  // Predicated region
  $region2: #{redundant_decoder_forward.3} parent=0 // pred_check
    _
  $region3: #{redundant_decoder_forward.3} parent=0 // pred_check_branch
    %15 = sbr.rel (0) target = $region5
  $region4: #{redundant_decoder_forward.3} parent=0 // pred_region
    _
  $region5: #{redundant_decoder_forward.3} parent=0 // pred_fallthru
    _
  // Predicated region
  $region6: #{redundant_decoder_forward.3} parent=0 // pred_check
    _
  $region7: #{redundant_decoder_forward.3} parent=0 // pred_check_branch
    %17 = sbr.rel (0) target = $region9
  $region8: #{redundant_decoder_forward.3} parent=0 // pred_region
    _
  $region9: #{redundant_decoder_forward.3} parent=0 // pred_fallthru
    _
  // Predicated region
  $region10: #{redundant_decoder_forward.3} parent=0 // pred_check
    _
  $region11: #{redundant_decoder_forward.3} parent=0 // pred_check_branch
    %19 = sbr.rel (0) target = $region13
  $region12: #{redundant_decoder_forward.3} parent=0 // pred_region
    _
  $region13: #{redundant_decoder_forward.3} parent=0 // pred_fallthru
    _
  // Predicated region
  $region14: #{redundant_decoder_forward.3} parent=0 // pred_check
    _
  $region15: #{redundant_decoder_forward.3} parent=0 // pred_check_branch
    %21 = sbr.rel (0) target = $region17
  $region16: #{redundant_decoder_forward.3} parent=0 // pred_region
    _
  $region17: #{redundant_decoder_forward.3} parent=0 // pred_fallthru
    _
  // Predicated region
  $region18: #{redundant_decoder_forward.3} parent=0 // pred_check
    _
  $region19: #{redundant_decoder_forward.3} parent=0 // pred_check_branch
    %23 = sbr.rel (0) target = $region21
  $region20: #{redundant_decoder_forward.3} parent=0 // pred_region
    _
  $region21: #{redundant_decoder_forward.3} parent=0 // pred_fallthru
    _
  %v24 = vld [vmem:[%s0] sm:$0xff]
  %v25 = vld [vmem:[%s0 + $0x8] sm:$0xff]
  %v26 = vld [vmem:[%s0 + $0x10] sm:$0xff]
  %v27 = vld [vmem:[%s0 + $0x18] sm:$0xff]
  %v28 = vld [vmem:[%s0 + $0x20] sm:$0xff]
  %v29 = vld [vmem:[%s0 + $0x28] sm:$0xff]
  %v30 = vld [vmem:[%s0 + $0x30] sm:$0xff]
  %v31 = vld [vmem:[%s0 + $0x38] sm:$0xff]
  %v32 = vld [vmem:[%s0 + $0x40] sm:$0xff]
  %v33 = vld [vmem:[%s0 + $0x48] sm:$0xff]
  %v34 = vld [vmem:[%s0 + $0x50] sm:$0xff]
  %v35 = vld [vmem:[%s0 + $0x58] sm:$0xff]
  %v36 = vld [vmem:[%s0 + $0x60] sm:$0xff]
  %v37 = vld [vmem:[%s0 + $0x68] sm:$0xff]
  %v38 = vld [vmem:[%s0 + $0x70] sm:$0xff]
  %v39 = vld [vmem:[%s0 + $0x78] sm:$0xff]
  %v40 = vld [vmem:[%s1] sm:$0xff]
  %v41 = vld [vmem:[%s1 + $0x8] sm:$0xff]
  %v42 = vld [vmem:[%s1 + $0x10] sm:$0xff]
  %v43 = vld [vmem:[%s1 + $0x18] sm:$0xff]
  %v44 = vld [vmem:[%s1 + $0x20] sm:$0xff]
  %v45 = vld [vmem:[%s1 + $0x28] sm:$0xff]
  %v46 = vld [vmem:[%s1 + $0x30] sm:$0xff]
  %v47 = vld [vmem:[%s1 + $0x38] sm:$0xff]
  %v48 = vld [vmem:[%s1 + $0x40] sm:$0xff]
  %v49 = vld [vmem:[%s1 + $0x48] sm:$0xff]
  %v50 = vld [vmem:[%s1 + $0x50] sm:$0xff]
  %v51 = vld [vmem:[%s1 + $0x58] sm:$0xff]
  %v52 = vld [vmem:[%s1 + $0x60] sm:$0xff]
  %v53 = vld [vmem:[%s1 + $0x68] sm:$0xff]
  %v54 = vld [vmem:[%s1 + $0x70] sm:$0xff]
  %v55 = vld [vmem:[%s1 + $0x78] sm:$0xff]
  %v56 = vld [vmem:[%s1 + $0x80] sm:$0xff]
  %v57 = vld [vmem:[%s1 + $0x88] sm:$0xff]
  %v58 = vld [vmem:[%s1 + $0x90] sm:$0xff]
  %v59 = vld [vmem:[%s1 + $0x98] sm:$0xff]
  %v60 = vld [vmem:[%s1 + $0xa0] sm:$0xff]
  %v61 = vld [vmem:[%s1 + $0xa8] sm:$0xff]
  %v62 = vld [vmem:[%s1 + $0xb0] sm:$0xff]
  %v63 = vld [vmem:[%s1 + $0xb8] sm:$0xff]
  %v64 = vld [vmem:[%s1 + $0xc0] sm:$0xff]
  %v65 = vld [vmem:[%s1 + $0xc8] sm:$0xff]
  %v66 = vld [vmem:[%s1 + $0xd0] sm:$0xff]
  %v67 = vld [vmem:[%s1 + $0xd8] sm:$0xff]
  %v68 = vld [vmem:[%s1 + $0xe0] sm:$0xff]
  %v69 = vld [vmem:[%s1 + $0xe8] sm:$0xff]
  %v70 = vld [vmem:[%s1 + $0xf0] sm:$0xff]
  %v71 = vld [vmem:[%s1 + $0xf8] sm:$0xff]
  %v72 = vld [vmem:[%s1 + $0x100] sm:$0xff]
  %v73 = vld [vmem:[%s1 + $0x108] sm:$0xff]
  %v74 = vld [vmem:[%s1 + $0x110] sm:$0xff]
  %v75 = vld [vmem:[%s1 + $0x118] sm:$0xff]
  %v76 = vld [vmem:[%s1 + $0x120] sm:$0xff]
  %v77 = vld [vmem:[%s1 + $0x128] sm:$0xff]
  %v78 = vld [vmem:[%s1 + $0x130] sm:$0xff]
  %v79 = vld [vmem:[%s1 + $0x138] sm:$0xff]
  %v80 = vld [vmem:[%s1 + $0x140] sm:$0xff]
  %v81 = vld [vmem:[%s1 + $0x148] sm:$0xff]
  %v82 = vld [vmem:[%s1 + $0x150] sm:$0xff]
  %v83 = vld [vmem:[%s1 + $0x158] sm:$0xff]
  %v84 = vld [vmem:[%s1 + $0x160] sm:$0xff]
  %v85 = vld [vmem:[%s1 + $0x168] sm:$0xff]
  %v86 = vld [vmem:[%s1 + $0x170] sm:$0xff]
  %v87 = vld [vmem:[%s1 + $0x178] sm:$0xff]
  %v88 = vld [vmem:[%s1 + $0x180] sm:$0xff]
  %v89 = vld [vmem:[%s1 + $0x188] sm:$0xff]
  %v90 = vld [vmem:[%s1 + $0x190] sm:$0xff]
  %v91 = vld [vmem:[%s1 + $0x198] sm:$0xff]
  %v92 = vld [vmem:[%s1 + $0x1a0] sm:$0xff]
  %v93 = vld [vmem:[%s1 + $0x1a8] sm:$0xff]
  %v94 = vld [vmem:[%s1 + $0x1b0] sm:$0xff]
  %v95 = vld [vmem:[%s1 + $0x1b8] sm:$0xff]
  %v96 = vld [vmem:[%s1 + $0x1c0] sm:$0xff]
  %v97 = vld [vmem:[%s1 + $0x1c8] sm:$0xff]
  %v98 = vld [vmem:[%s1 + $0x1d0] sm:$0xff]
  %v99 = vld [vmem:[%s1 + $0x1d8] sm:$0xff]
  %v100 = vld [vmem:[%s1 + $0x1e0] sm:$0xff]
  %v101 = vld [vmem:[%s1 + $0x1e8] sm:$0xff]
  %v102 = vld [vmem:[%s1 + $0x1f0] sm:$0xff]
  %v103 = vld [vmem:[%s1 + $0x1f8] sm:$0xff]
  %v104 = vld [vmem:[%s1 + $0x200] sm:$0xff]
  %v105 = vld [vmem:[%s1 + $0x208] sm:$0xff]
  %v106 = vld [vmem:[%s1 + $0x210] sm:$0xff]
  %v107 = vld [vmem:[%s1 + $0x218] sm:$0xff]
  %v108 = vld [vmem:[%s1 + $0x220] sm:$0xff]
  %v109 = vld [vmem:[%s1 + $0x228] sm:$0xff]
  %v110 = vld [vmem:[%s1 + $0x230] sm:$0xff]
  %v111 = vld [vmem:[%s1 + $0x238] sm:$0xff]
  %v112 = vld [vmem:[%s1 + $0x240] sm:$0xff]
  %v113 = vld [vmem:[%s1 + $0x248] sm:$0xff]
  %v114 = vld [vmem:[%s1 + $0x250] sm:$0xff]
  %v115 = vld [vmem:[%s1 + $0x258] sm:$0xff]
  %v116 = vld [vmem:[%s1 + $0x260] sm:$0xff]
  %v117 = vld [vmem:[%s1 + $0x268] sm:$0xff]
  %v118 = vld [vmem:[%s1 + $0x270] sm:$0xff]
  %v119 = vld [vmem:[%s1 + $0x278] sm:$0xff]
  %v120 = vld [vmem:[%s1 + $0x280] sm:$0xff]
  %v121 = vld [vmem:[%s1 + $0x288] sm:$0xff]
  %v122 = vld [vmem:[%s1 + $0x290] sm:$0xff]
  %v123 = vld [vmem:[%s1 + $0x298] sm:$0xff]
  %v124 = vld [vmem:[%s1 + $0x2a0] sm:$0xff]
  %v125 = vld [vmem:[%s1 + $0x2a8] sm:$0xff]
  %v126 = vld [vmem:[%s1 + $0x2b0] sm:$0xff]
  %v127 = vld [vmem:[%s1 + $0x2b8] sm:$0xff]
  %v128 = vld [vmem:[%s1 + $0x2c0] sm:$0xff]
  %v129 = vld [vmem:[%s1 + $0x2c8] sm:$0xff]
  %v130 = vld [vmem:[%s1 + $0x2d0] sm:$0xff]
  %v131 = vld [vmem:[%s1 + $0x2d8] sm:$0xff]
  %v132 = vld [vmem:[%s1 + $0x2e0] sm:$0xff]
  %v133 = vld [vmem:[%s1 + $0x2e8] sm:$0xff]
  %v134 = vld [vmem:[%s1 + $0x2f0] sm:$0xff]
  %v135 = vld [vmem:[%s1 + $0x2f8] sm:$0xff]
  %v136 = vld [vmem:[%s1 + $0x300] sm:$0xff]
  %v137 = vld [vmem:[%s1 + $0x308] sm:$0xff]
  %v138 = vld [vmem:[%s1 + $0x310] sm:$0xff]
  %v139 = vld [vmem:[%s1 + $0x318] sm:$0xff]
  %v140 = vld [vmem:[%s1 + $0x320] sm:$0xff]
  %v141 = vld [vmem:[%s1 + $0x328] sm:$0xff]
  %v142 = vld [vmem:[%s1 + $0x330] sm:$0xff]
  %v143 = vld [vmem:[%s1 + $0x338] sm:$0xff]
  %v144 = vld [vmem:[%s1 + $0x340] sm:$0xff]
  %v145 = vld [vmem:[%s1 + $0x348] sm:$0xff]
  %v146 = vld [vmem:[%s1 + $0x350] sm:$0xff]
  %v147 = vld [vmem:[%s1 + $0x358] sm:$0xff]
  %v148 = vld [vmem:[%s1 + $0x360] sm:$0xff]
  %v149 = vld [vmem:[%s1 + $0x368] sm:$0xff]
  %v150 = vld [vmem:[%s1 + $0x370] sm:$0xff]
  %v151 = vld [vmem:[%s1 + $0x378] sm:$0xff]
  %v152 = vld [vmem:[%s1 + $0x380] sm:$0xff]
  %v153 = vld [vmem:[%s1 + $0x388] sm:$0xff]
  %v154 = vld [vmem:[%s1 + $0x390] sm:$0xff]
  %v155 = vld [vmem:[%s1 + $0x398] sm:$0xff]
  %v156 = vld [vmem:[%s1 + $0x3a0] sm:$0xff]
  %v157 = vld [vmem:[%s1 + $0x3a8] sm:$0xff]
  %v158 = vld [vmem:[%s1 + $0x3b0] sm:$0xff]
  %v159 = vld [vmem:[%s1 + $0x3b8] sm:$0xff]
  %v160 = vld [vmem:[%s1 + $0x3c0] sm:$0xff]
  %v161 = vld [vmem:[%s1 + $0x3c8] sm:$0xff]
  %v162 = vld [vmem:[%s1 + $0x3d0] sm:$0xff]
  %v163 = vld [vmem:[%s1 + $0x3d8] sm:$0xff]
  %v164 = vld [vmem:[%s1 + $0x3e0] sm:$0xff]
  %v165 = vld [vmem:[%s1 + $0x3e8] sm:$0xff]
  %v166 = vld [vmem:[%s1 + $0x3f0] sm:$0xff]
  %v167 = vld [vmem:[%s1 + $0x3f8] sm:$0xff]
  %v168 = vld [vmem:[%s1 + $0x400] sm:$0xff]
  %v169 = vld [vmem:[%s1 + $0x408] sm:$0xff]
  %v170 = vld [vmem:[%s1 + $0x410] sm:$0xff]
  %v171 = vld [vmem:[%s1 + $0x418] sm:$0xff]
  %v172 = vld [vmem:[%s1 + $0x420] sm:$0xff]
  %v173 = vld [vmem:[%s1 + $0x428] sm:$0xff]
  %v174 = vld [vmem:[%s1 + $0x430] sm:$0xff]
  %v175 = vld [vmem:[%s1 + $0x438] sm:$0xff]
  %v176 = vld [vmem:[%s1 + $0x440] sm:$0xff]
  %v177 = vld [vmem:[%s1 + $0x448] sm:$0xff]
  %v178 = vld [vmem:[%s1 + $0x450] sm:$0xff]
  %v179 = vld [vmem:[%s1 + $0x458] sm:$0xff]
  %v180 = vld [vmem:[%s1 + $0x460] sm:$0xff]
  %v181 = vld [vmem:[%s1 + $0x468] sm:$0xff]
  %v182 = vld [vmem:[%s1 + $0x470] sm:$0xff]
  %v183 = vld [vmem:[%s1 + $0x478] sm:$0xff]
  %v184 = vld [vmem:[%s1 + $0x480] sm:$0xff]
  %v185 = vld [vmem:[%s1 + $0x488] sm:$0xff]
  %v186 = vld [vmem:[%s1 + $0x490] sm:$0xff]
  %v187 = vld [vmem:[%s1 + $0x498] sm:$0xff]
  %v188 = vld [vmem:[%s1 + $0x4a0] sm:$0xff]
  %v189 = vld [vmem:[%s1 + $0x4a8] sm:$0xff]
  %v190 = vld [vmem:[%s1 + $0x4b0] sm:$0xff]
  %v191 = vld [vmem:[%s1 + $0x4b8] sm:$0xff]
  %v192 = vld [vmem:[%s1 + $0x4c0] sm:$0xff]
  %v193 = vld [vmem:[%s1 + $0x4c8] sm:$0xff]
  %v194 = vld [vmem:[%s1 + $0x4d0] sm:$0xff]
  %v195 = vld [vmem:[%s1 + $0x4d8] sm:$0xff]
  %v196 = vld [vmem:[%s1 + $0x4e0] sm:$0xff]
  %v197 = vld [vmem:[%s1 + $0x4e8] sm:$0xff]
  %v198 = vld [vmem:[%s1 + $0x4f0] sm:$0xff]
  %v199 = vld [vmem:[%s1 + $0x4f8] sm:$0xff]
  %v200 = vld [vmem:[%s1 + $0x500] sm:$0xff]
  %v201 = vld [vmem:[%s1 + $0x508] sm:$0xff]
  %v202 = vld [vmem:[%s1 + $0x510] sm:$0xff]
  %v203 = vld [vmem:[%s1 + $0x518] sm:$0xff]
  %v204 = vld [vmem:[%s1 + $0x520] sm:$0xff]
  %v205 = vld [vmem:[%s1 + $0x528] sm:$0xff]
  %v206 = vld [vmem:[%s1 + $0x530] sm:$0xff]
  %v207 = vld [vmem:[%s1 + $0x538] sm:$0xff]
  %v208 = vld [vmem:[%s1 + $0x540] sm:$0xff]
  %v209 = vld [vmem:[%s1 + $0x548] sm:$0xff]
  %v210 = vld [vmem:[%s1 + $0x550] sm:$0xff]
  %v211 = vld [vmem:[%s1 + $0x558] sm:$0xff]
  %v212 = vld [vmem:[%s1 + $0x560] sm:$0xff]
  %v213 = vld [vmem:[%s1 + $0x568] sm:$0xff]
  %v214 = vld [vmem:[%s1 + $0x570] sm:$0xff]
  %v215 = vld [vmem:[%s1 + $0x578] sm:$0xff]
  %v216 = vld [vmem:[%s1 + $0x580] sm:$0xff]
  %v217 = vld [vmem:[%s1 + $0x588] sm:$0xff]
  %v218 = vld [vmem:[%s1 + $0x590] sm:$0xff]
  %v219 = vld [vmem:[%s1 + $0x598] sm:$0xff]
  %v220 = vld [vmem:[%s1 + $0x5a0] sm:$0xff]
  %v221 = vld [vmem:[%s1 + $0x5a8] sm:$0xff]
  %v222 = vld [vmem:[%s1 + $0x5b0] sm:$0xff]
  %v223 = vld [vmem:[%s1 + $0x5b8] sm:$0xff]
  %v224 = vld [vmem:[%s1 + $0x5c0] sm:$0xff]
  %v225 = vld [vmem:[%s1 + $0x5c8] sm:$0xff]
  %v226 = vld [vmem:[%s1 + $0x5d0] sm:$0xff]
  %v227 = vld [vmem:[%s1 + $0x5d8] sm:$0xff]
  %v228 = vld [vmem:[%s1 + $0x5e0] sm:$0xff]
  %v229 = vld [vmem:[%s1 + $0x5e8] sm:$0xff]
  %v230 = vld [vmem:[%s1 + $0x5f0] sm:$0xff]
  %v231 = vld [vmem:[%s1 + $0x5f8] sm:$0xff]
  %v232 = vld [vmem:[%s1 + $0x600] sm:$0xff]
  %v233 = vld [vmem:[%s1 + $0x608] sm:$0xff]
  %v234 = vld [vmem:[%s1 + $0x610] sm:$0xff]
  %v235 = vld [vmem:[%s1 + $0x618] sm:$0xff]
  %v236 = vld [vmem:[%s1 + $0x620] sm:$0xff]
  %v237 = vld [vmem:[%s1 + $0x628] sm:$0xff]
  %v238 = vld [vmem:[%s1 + $0x630] sm:$0xff]
  %v239 = vld [vmem:[%s1 + $0x638] sm:$0xff]
  %v240 = vld [vmem:[%s1 + $0x640] sm:$0xff]
  %v241 = vld [vmem:[%s1 + $0x648] sm:$0xff]
  %v242 = vld [vmem:[%s1 + $0x650] sm:$0xff]
  %v243 = vld [vmem:[%s1 + $0x658] sm:$0xff]
  %v244 = vld [vmem:[%s1 + $0x660] sm:$0xff]
  %v245 = vld [vmem:[%s1 + $0x668] sm:$0xff]
  %v246 = vld [vmem:[%s1 + $0x670] sm:$0xff]
  %v247 = vld [vmem:[%s1 + $0x678] sm:$0xff]
  %v248 = vld [vmem:[%s1 + $0x680] sm:$0xff]
  %v249 = vld [vmem:[%s1 + $0x688] sm:$0xff]
  %v250 = vld [vmem:[%s1 + $0x690] sm:$0xff]
  %v251 = vld [vmem:[%s1 + $0x698] sm:$0xff]
  %v252 = vld [vmem:[%s1 + $0x6a0] sm:$0xff]
  %v253 = vld [vmem:[%s1 + $0x6a8] sm:$0xff]
  %v254 = vld [vmem:[%s1 + $0x6b0] sm:$0xff]
  %v255 = vld [vmem:[%s1 + $0x6b8] sm:$0xff]
  %v256 = vld [vmem:[%s1 + $0x6c0] sm:$0xff]
  %v257 = vld [vmem:[%s1 + $0x6c8] sm:$0xff]
  %v258 = vld [vmem:[%s1 + $0x6d0] sm:$0xff]
  %v259 = vld [vmem:[%s1 + $0x6d8] sm:$0xff]
  %v260 = vld [vmem:[%s1 + $0x6e0] sm:$0xff]
  %v261 = vld [vmem:[%s1 + $0x6e8] sm:$0xff]
  %v262 = vld [vmem:[%s1 + $0x6f0] sm:$0xff]
  %v263 = vld [vmem:[%s1 + $0x6f8] sm:$0xff]
  %v264 = vld [vmem:[%s1 + $0x700] sm:$0xff]
  %v265 = vld [vmem:[%s1 + $0x708] sm:$0xff]
  %v266 = vld [vmem:[%s1 + $0x710] sm:$0xff]
  %v267 = vld [vmem:[%s1 + $0x718] sm:$0xff]
  %v268 = vld [vmem:[%s1 + $0x720] sm:$0xff]
  %v269 = vld [vmem:[%s1 + $0x728] sm:$0xff]
  %v270 = vld [vmem:[%s1 + $0x730] sm:$0xff]
  %v271 = vld [vmem:[%s1 + $0x738] sm:$0xff]
  %v272 = vld [vmem:[%s1 + $0x740] sm:$0xff]
  %v273 = vld [vmem:[%s1 + $0x748] sm:$0xff]
  %v274 = vld [vmem:[%s1 + $0x750] sm:$0xff]
  %v275 = vld [vmem:[%s1 + $0x758] sm:$0xff]
  %v276 = vld [vmem:[%s1 + $0x760] sm:$0xff]
  %v277 = vld [vmem:[%s1 + $0x768] sm:$0xff]
  %v278 = vld [vmem:[%s1 + $0x770] sm:$0xff]
  %v279 = vld [vmem:[%s1 + $0x778] sm:$0xff]
  %v280 = vld [vmem:[%s1 + $0x780] sm:$0xff]
  %v281 = vld [vmem:[%s1 + $0x788] sm:$0xff]
  %v282 = vld [vmem:[%s1 + $0x790] sm:$0xff]
  %v283 = vld [vmem:[%s1 + $0x798] sm:$0xff]
  %v284 = vld [vmem:[%s1 + $0x7a0] sm:$0xff]
  %v285 = vld [vmem:[%s1 + $0x7a8] sm:$0xff]
  %v286 = vld [vmem:[%s1 + $0x7b0] sm:$0xff]
  %v287 = vld [vmem:[%s1 + $0x7b8] sm:$0xff]
  %v288 = vld [vmem:[%s1 + $0x7c0] sm:$0xff]
  %v289 = vld [vmem:[%s1 + $0x7c8] sm:$0xff]
  %v290 = vld [vmem:[%s1 + $0x7d0] sm:$0xff]
  %v291 = vld [vmem:[%s1 + $0x7d8] sm:$0xff]
  %v292 = vld [vmem:[%s1 + $0x7e0] sm:$0xff]
  %v293 = vld [vmem:[%s1 + $0x7e8] sm:$0xff]
  %v294 = vld [vmem:[%s1 + $0x7f0] sm:$0xff]
  %v295 = vld [vmem:[%s1 + $0x7f8] sm:$0xff]
  %v296 = vld [vmem:[%s1 + $0x800] sm:$0xff]
  %v297 = vld [vmem:[%s1 + $0x808] sm:$0xff]
  %v298 = vld [vmem:[%s1 + $0x810] sm:$0xff]
  %v299 = vld [vmem:[%s1 + $0x818] sm:$0xff]
  %v300 = vld [vmem:[%s1 + $0x820] sm:$0xff]
  %v301 = vld [vmem:[%s1 + $0x828] sm:$0xff]
  %v302 = vld [vmem:[%s1 + $0x830] sm:$0xff]
  %v303 = vld [vmem:[%s1 + $0x838] sm:$0xff]
  %v304 = vld [vmem:[%s1 + $0x840] sm:$0xff]
  %v305 = vld [vmem:[%s1 + $0x848] sm:$0xff]
  %v306 = vld [vmem:[%s1 + $0x850] sm:$0xff]
  %v307 = vld [vmem:[%s1 + $0x858] sm:$0xff]
  %v308 = vld [vmem:[%s1 + $0x860] sm:$0xff]
  %v309 = vld [vmem:[%s1 + $0x868] sm:$0xff]
  %v310 = vld [vmem:[%s1 + $0x870] sm:$0xff]
  %v311 = vld [vmem:[%s1 + $0x878] sm:$0xff]
  %v312 = vld [vmem:[%s1 + $0x880] sm:$0xff]
  %v313 = vld [vmem:[%s1 + $0x888] sm:$0xff]
  %v314 = vld [vmem:[%s1 + $0x890] sm:$0xff]
  %v315 = vld [vmem:[%s1 + $0x898] sm:$0xff]
  %v316 = vld [vmem:[%s1 + $0x8a0] sm:$0xff]
  %v317 = vld [vmem:[%s1 + $0x8a8] sm:$0xff]
  %v318 = vld [vmem:[%s1 + $0x8b0] sm:$0xff]
  %v319 = vld [vmem:[%s1 + $0x8b8] sm:$0xff]
  %v320 = vld [vmem:[%s1 + $0x8c0] sm:$0xff]
  %v321 = vld [vmem:[%s1 + $0x8c8] sm:$0xff]
  %v322 = vld [vmem:[%s1 + $0x8d0] sm:$0xff]
  %v323 = vld [vmem:[%s1 + $0x8d8] sm:$0xff]
  %v324 = vld [vmem:[%s1 + $0x8e0] sm:$0xff]
  %v325 = vld [vmem:[%s1 + $0x8e8] sm:$0xff]
  %v326 = vld [vmem:[%s1 + $0x8f0] sm:$0xff]
  %v327 = vld [vmem:[%s1 + $0x8f8] sm:$0xff]
  %v328 = vld [vmem:[%s1 + $0x900] sm:$0xff]
  %v329 = vld [vmem:[%s1 + $0x908] sm:$0xff]
  %v330 = vld [vmem:[%s1 + $0x910] sm:$0xff]
  %v331 = vld [vmem:[%s1 + $0x918] sm:$0xff]
  %v332 = vld [vmem:[%s1 + $0x920] sm:$0xff]
  %v333 = vld [vmem:[%s1 + $0x928] sm:$0xff]
  %v334 = vld [vmem:[%s1 + $0x930] sm:$0xff]
  %v335 = vld [vmem:[%s1 + $0x938] sm:$0xff]
  %v336 = vld [vmem:[%s1 + $0x940] sm:$0xff]
  %v337 = vld [vmem:[%s1 + $0x948] sm:$0xff]
  %v338 = vld [vmem:[%s1 + $0x950] sm:$0xff]
  %v339 = vld [vmem:[%s1 + $0x958] sm:$0xff]
  %v340 = vld [vmem:[%s1 + $0x960] sm:$0xff]
  %v341 = vld [vmem:[%s1 + $0x968] sm:$0xff]
  %v342 = vld [vmem:[%s1 + $0x970] sm:$0xff]
  %v343 = vld [vmem:[%s1 + $0x978] sm:$0xff]
  %v344 = vld [vmem:[%s1 + $0x980] sm:$0xff]
  %v345 = vld [vmem:[%s1 + $0x988] sm:$0xff]
  %v346 = vld [vmem:[%s1 + $0x990] sm:$0xff]
  %v347 = vld [vmem:[%s1 + $0x998] sm:$0xff]
  %v348 = vld [vmem:[%s1 + $0x9a0] sm:$0xff]
  %v349 = vld [vmem:[%s1 + $0x9a8] sm:$0xff]
  %v350 = vld [vmem:[%s1 + $0x9b0] sm:$0xff]
  %v351 = vld [vmem:[%s1 + $0x9b8] sm:$0xff]
  %v352 = vld [vmem:[%s1 + $0x9c0] sm:$0xff]
  %v353 = vld [vmem:[%s1 + $0x9c8] sm:$0xff]
  %v354 = vld [vmem:[%s1 + $0x9d0] sm:$0xff]
  %v355 = vld [vmem:[%s1 + $0x9d8] sm:$0xff]
  %v356 = vld [vmem:[%s1 + $0x9e0] sm:$0xff]
  %v357 = vld [vmem:[%s1 + $0x9e8] sm:$0xff]
  %v358 = vld [vmem:[%s1 + $0x9f0] sm:$0xff]
  %v359 = vld [vmem:[%s1 + $0x9f8] sm:$0xff]
  %v360 = vld [vmem:[%s1 + $0xa00] sm:$0xff]
  %v361 = vld [vmem:[%s1 + $0xa08] sm:$0xff]
  %v362 = vld [vmem:[%s1 + $0xa10] sm:$0xff]
  %v363 = vld [vmem:[%s1 + $0xa18] sm:$0xff]
  %v364 = vld [vmem:[%s1 + $0xa20] sm:$0xff]
  %v365 = vld [vmem:[%s1 + $0xa28] sm:$0xff]
  %v366 = vld [vmem:[%s1 + $0xa30] sm:$0xff]
  %v367 = vld [vmem:[%s1 + $0xa38] sm:$0xff]
  %v368 = vld [vmem:[%s1 + $0xa40] sm:$0xff]
  %v369 = vld [vmem:[%s1 + $0xa48] sm:$0xff]
  %v370 = vld [vmem:[%s1 + $0xa50] sm:$0xff]
  %v371 = vld [vmem:[%s1 + $0xa58] sm:$0xff]
  %v372 = vld [vmem:[%s1 + $0xa60] sm:$0xff]
  %v373 = vld [vmem:[%s1 + $0xa68] sm:$0xff]
  %v374 = vld [vmem:[%s1 + $0xa70] sm:$0xff]
  %v375 = vld [vmem:[%s1 + $0xa78] sm:$0xff]
  %v376 = vld [vmem:[%s1 + $0xa80] sm:$0xff]
  %v377 = vld [vmem:[%s1 + $0xa88] sm:$0xff]
  %v378 = vld [vmem:[%s1 + $0xa90] sm:$0xff]
  %v379 = vld [vmem:[%s1 + $0xa98] sm:$0xff]
  %v380 = vld [vmem:[%s1 + $0xaa0] sm:$0xff]
  %v381 = vld [vmem:[%s1 + $0xaa8] sm:$0xff]
  %v382 = vld [vmem:[%s1 + $0xab0] sm:$0xff]
  %v383 = vld [vmem:[%s1 + $0xab8] sm:$0xff]
  %v384 = vld [vmem:[%s1 + $0xac0] sm:$0xff]
  %v385 = vld [vmem:[%s1 + $0xac8] sm:$0xff]
  %v386 = vld [vmem:[%s1 + $0xad0] sm:$0xff]
  %v387 = vld [vmem:[%s1 + $0xad8] sm:$0xff]
  %v388 = vld [vmem:[%s1 + $0xae0] sm:$0xff]
  %v389 = vld [vmem:[%s1 + $0xae8] sm:$0xff]
  %v390 = vld [vmem:[%s1 + $0xaf0] sm:$0xff]
  %v391 = vld [vmem:[%s1 + $0xaf8] sm:$0xff]
  %v392 = vld [vmem:[%s1 + $0xb00] sm:$0xff]
  %v393 = vld [vmem:[%s1 + $0xb08] sm:$0xff]
  %v394 = vld [vmem:[%s1 + $0xb10] sm:$0xff]
  %v395 = vld [vmem:[%s1 + $0xb18] sm:$0xff]
  %v396 = vld [vmem:[%s1 + $0xb20] sm:$0xff]
  %v397 = vld [vmem:[%s1 + $0xb28] sm:$0xff]
  %v398 = vld [vmem:[%s1 + $0xb30] sm:$0xff]
  %v399 = vld [vmem:[%s1 + $0xb38] sm:$0xff]
  %v400 = vld [vmem:[%s1 + $0xb40] sm:$0xff]
  %v401 = vld [vmem:[%s1 + $0xb48] sm:$0xff]
  %v402 = vld [vmem:[%s1 + $0xb50] sm:$0xff]
  %v403 = vld [vmem:[%s1 + $0xb58] sm:$0xff]
  %v404 = vld [vmem:[%s1 + $0xb60] sm:$0xff]
  %v405 = vld [vmem:[%s1 + $0xb68] sm:$0xff]
  %v406 = vld [vmem:[%s1 + $0xb70] sm:$0xff]
  %v407 = vld [vmem:[%s1 + $0xb78] sm:$0xff]
  %v408 = vld [vmem:[%s1 + $0xb80] sm:$0xff]
  %v409 = vld [vmem:[%s1 + $0xb88] sm:$0xff]
  %v410 = vld [vmem:[%s1 + $0xb90] sm:$0xff]
  %v411 = vld [vmem:[%s1 + $0xb98] sm:$0xff]
  %v412 = vld [vmem:[%s1 + $0xba0] sm:$0xff]
  %v413 = vld [vmem:[%s1 + $0xba8] sm:$0xff]
  %v414 = vld [vmem:[%s1 + $0xbb0] sm:$0xff]
  %v415 = vld [vmem:[%s1 + $0xbb8] sm:$0xff]
  %v416 = vld [vmem:[%s1 + $0xbc0] sm:$0xff]
  %v417 = vld [vmem:[%s1 + $0xbc8] sm:$0xff]
  %v418 = vld [vmem:[%s1 + $0xbd0] sm:$0xff]
  %v419 = vld [vmem:[%s1 + $0xbd8] sm:$0xff]
  %v420 = vld [vmem:[%s1 + $0xbe0] sm:$0xff]
  %v421 = vld [vmem:[%s1 + $0xbe8] sm:$0xff]
  %v422 = vld [vmem:[%s1 + $0xbf0] sm:$0xff]
  %v423 = vld [vmem:[%s1 + $0xbf8] sm:$0xff]
  %v424 = vld [vmem:[%s1 + $0xc00] sm:$0xff]
  %v425 = vld [vmem:[%s1 + $0xc08] sm:$0xff]
  %v426 = vld [vmem:[%s1 + $0xc10] sm:$0xff]
  %v427 = vld [vmem:[%s1 + $0xc18] sm:$0xff]
  %v428 = vld [vmem:[%s1 + $0xc20] sm:$0xff]
  %v429 = vld [vmem:[%s1 + $0xc28] sm:$0xff]
  %v430 = vld [vmem:[%s1 + $0xc30] sm:$0xff]
  %v431 = vld [vmem:[%s1 + $0xc38] sm:$0xff]
  %v432 = vld [vmem:[%s1 + $0xc40] sm:$0xff]
  %v433 = vld [vmem:[%s1 + $0xc48] sm:$0xff]
  %v434 = vld [vmem:[%s1 + $0xc50] sm:$0xff]
  %v435 = vld [vmem:[%s1 + $0xc58] sm:$0xff]
  %v436 = vld [vmem:[%s1 + $0xc60] sm:$0xff]
  %v437 = vld [vmem:[%s1 + $0xc68] sm:$0xff]
  %v438 = vld [vmem:[%s1 + $0xc70] sm:$0xff]
  %v439 = vld [vmem:[%s1 + $0xc78] sm:$0xff]
  %v440 = vld [vmem:[%s1 + $0xc80] sm:$0xff]
  %v441 = vld [vmem:[%s1 + $0xc88] sm:$0xff]
  %v442 = vld [vmem:[%s1 + $0xc90] sm:$0xff]
  %v443 = vld [vmem:[%s1 + $0xc98] sm:$0xff]
  %v444 = vld [vmem:[%s1 + $0xca0] sm:$0xff]
  %v445 = vld [vmem:[%s1 + $0xca8] sm:$0xff]
  %v446 = vld [vmem:[%s1 + $0xcb0] sm:$0xff]
  %v447 = vld [vmem:[%s1 + $0xcb8] sm:$0xff]
  %v448 = vld [vmem:[%s1 + $0xcc0] sm:$0xff]
  %v449 = vld [vmem:[%s1 + $0xcc8] sm:$0xff]
  %v450 = vld [vmem:[%s1 + $0xcd0] sm:$0xff]
  %v451 = vld [vmem:[%s1 + $0xcd8] sm:$0xff]
  %v452 = vld [vmem:[%s1 + $0xce0] sm:$0xff]
  %v453 = vld [vmem:[%s1 + $0xce8] sm:$0xff]
  %v454 = vld [vmem:[%s1 + $0xcf0] sm:$0xff]
  %v455 = vld [vmem:[%s1 + $0xcf8] sm:$0xff]
  %v456 = vld [vmem:[%s1 + $0xd00] sm:$0xff]
  %v457 = vld [vmem:[%s1 + $0xd08] sm:$0xff]
  %v458 = vld [vmem:[%s1 + $0xd10] sm:$0xff]
  %v459 = vld [vmem:[%s1 + $0xd18] sm:$0xff]
  %v460 = vld [vmem:[%s1 + $0xd20] sm:$0xff]
  %v461 = vld [vmem:[%s1 + $0xd28] sm:$0xff]
  %v462 = vld [vmem:[%s1 + $0xd30] sm:$0xff]
  %v463 = vld [vmem:[%s1 + $0xd38] sm:$0xff]
  %v464 = vld [vmem:[%s1 + $0xd40] sm:$0xff]
  %v465 = vld [vmem:[%s1 + $0xd48] sm:$0xff]
  %v466 = vld [vmem:[%s1 + $0xd50] sm:$0xff]
  %v467 = vld [vmem:[%s1 + $0xd58] sm:$0xff]
  %v468 = vld [vmem:[%s1 + $0xd60] sm:$0xff]
  %v469 = vld [vmem:[%s1 + $0xd68] sm:$0xff]
  %v470 = vld [vmem:[%s1 + $0xd70] sm:$0xff]
  %v471 = vld [vmem:[%s1 + $0xd78] sm:$0xff]
  %v472 = vld [vmem:[%s1 + $0xd80] sm:$0xff]
  %v473 = vld [vmem:[%s1 + $0xd88] sm:$0xff]
  %v474 = vld [vmem:[%s1 + $0xd90] sm:$0xff]
  %v475 = vld [vmem:[%s1 + $0xd98] sm:$0xff]
  %v476 = vld [vmem:[%s1 + $0xda0] sm:$0xff]
  %v477 = vld [vmem:[%s1 + $0xda8] sm:$0xff]
  %v478 = vld [vmem:[%s1 + $0xdb0] sm:$0xff]
  %v479 = vld [vmem:[%s1 + $0xdb8] sm:$0xff]
  %v480 = vld [vmem:[%s1 + $0xdc0] sm:$0xff]
  %v481 = vld [vmem:[%s1 + $0xdc8] sm:$0xff]
  %v482 = vld [vmem:[%s1 + $0xdd0] sm:$0xff]
  %v483 = vld [vmem:[%s1 + $0xdd8] sm:$0xff]
  %v484 = vld [vmem:[%s1 + $0xde0] sm:$0xff]
  %v485 = vld [vmem:[%s1 + $0xde8] sm:$0xff]
  %v486 = vld [vmem:[%s1 + $0xdf0] sm:$0xff]
  %v487 = vld [vmem:[%s1 + $0xdf8] sm:$0xff]
  %v488 = vld [vmem:[%s1 + $0xe00] sm:$0xff]
  %v489 = vld [vmem:[%s1 + $0xe08] sm:$0xff]
  %v490 = vld [vmem:[%s1 + $0xe10] sm:$0xff]
  %v491 = vld [vmem:[%s1 + $0xe18] sm:$0xff]
  %v492 = vld [vmem:[%s1 + $0xe20] sm:$0xff]
  %v493 = vld [vmem:[%s1 + $0xe28] sm:$0xff]
  %v494 = vld [vmem:[%s1 + $0xe30] sm:$0xff]
  %v495 = vld [vmem:[%s1 + $0xe38] sm:$0xff]
  %v496 = vld [vmem:[%s1 + $0xe40] sm:$0xff]
  %v497 = vld [vmem:[%s1 + $0xe48] sm:$0xff]
  %v498 = vld [vmem:[%s1 + $0xe50] sm:$0xff]
  %v499 = vld [vmem:[%s1 + $0xe58] sm:$0xff]
  %v500 = vld [vmem:[%s1 + $0xe60] sm:$0xff]
  %v501 = vld [vmem:[%s1 + $0xe68] sm:$0xff]
  %v502 = vld [vmem:[%s1 + $0xe70] sm:$0xff]
  %v503 = vld [vmem:[%s1 + $0xe78] sm:$0xff]
  %v504 = vld [vmem:[%s1 + $0xe80] sm:$0xff]
  %v505 = vld [vmem:[%s1 + $0xe88] sm:$0xff]
  %v506 = vld [vmem:[%s1 + $0xe90] sm:$0xff]
  %v507 = vld [vmem:[%s1 + $0xe98] sm:$0xff]
  %v508 = vld [vmem:[%s1 + $0xea0] sm:$0xff]
  %v509 = vld [vmem:[%s1 + $0xea8] sm:$0xff]
  %v510 = vld [vmem:[%s1 + $0xeb0] sm:$0xff]
  %v511 = vld [vmem:[%s1 + $0xeb8] sm:$0xff]
  %v512 = vld [vmem:[%s1 + $0xec0] sm:$0xff]
  %v513 = vld [vmem:[%s1 + $0xec8] sm:$0xff]
  %v514 = vld [vmem:[%s1 + $0xed0] sm:$0xff]
  %v515 = vld [vmem:[%s1 + $0xed8] sm:$0xff]
  %v516 = vld [vmem:[%s1 + $0xee0] sm:$0xff]
  %v517 = vld [vmem:[%s1 + $0xee8] sm:$0xff]
  %v518 = vld [vmem:[%s1 + $0xef0] sm:$0xff]
  %v519 = vld [vmem:[%s1 + $0xef8] sm:$0xff]
  %v520 = vld [vmem:[%s1 + $0xf00] sm:$0xff]
  %v521 = vld [vmem:[%s1 + $0xf08] sm:$0xff]
  %v522 = vld [vmem:[%s1 + $0xf10] sm:$0xff]
  %v523 = vld [vmem:[%s1 + $0xf18] sm:$0xff]
  %v524 = vld [vmem:[%s1 + $0xf20] sm:$0xff]
  %v525 = vld [vmem:[%s1 + $0xf28] sm:$0xff]
  %v526 = vld [vmem:[%s1 + $0xf30] sm:$0xff]
  %v527 = vld [vmem:[%s1 + $0xf38] sm:$0xff]
  %v528 = vld [vmem:[%s1 + $0xf40] sm:$0xff]
  %v529 = vld [vmem:[%s1 + $0xf48] sm:$0xff]
  %v530 = vld [vmem:[%s1 + $0xf50] sm:$0xff]
  %v531 = vld [vmem:[%s1 + $0xf58] sm:$0xff]
  %v532 = vld [vmem:[%s1 + $0xf60] sm:$0xff]
  %v533 = vld [vmem:[%s1 + $0xf68] sm:$0xff]
  %v534 = vld [vmem:[%s1 + $0xf70] sm:$0xff]
  %v535 = vld [vmem:[%s1 + $0xf78] sm:$0xff]
  %v536 = vld [vmem:[%s1 + $0xf80] sm:$0xff]
  %v537 = vld [vmem:[%s1 + $0xf88] sm:$0xff]
  %v538 = vld [vmem:[%s1 + $0xf90] sm:$0xff]
  %v539 = vld [vmem:[%s1 + $0xf98] sm:$0xff]
  %v540 = vld [vmem:[%s1 + $0xfa0] sm:$0xff]
  %v541 = vld [vmem:[%s1 + $0xfa8] sm:$0xff]
  %v542 = vld [vmem:[%s1 + $0xfb0] sm:$0xff]
  %v543 = vld [vmem:[%s1 + $0xfb8] sm:$0xff]
  %v544 = vld [vmem:[%s1 + $0xfc0] sm:$0xff]
  %v545 = vld [vmem:[%s1 + $0xfc8] sm:$0xff]
  %v546 = vld [vmem:[%s1 + $0xfd0] sm:$0xff]
  %v547 = vld [vmem:[%s1 + $0xfd8] sm:$0xff]
  %v548 = vld [vmem:[%s1 + $0xfe0] sm:$0xff]
  %v549 = vld [vmem:[%s1 + $0xfe8] sm:$0xff]
  %v550 = vld [vmem:[%s1 + $0xff0] sm:$0xff]
  %v551 = vld [vmem:[%s1 + $0xff8] sm:$0xff]
  %v552 = vld [vmem:[%s1 + $0x1000] sm:$0xff]
  %v553 = vld [vmem:[%s1 + $0x1008] sm:$0xff]
  %v554 = vld [vmem:[%s1 + $0x1010] sm:$0xff]
  %v555 = vld [vmem:[%s1 + $0x1018] sm:$0xff]
  %v556 = vld [vmem:[%s1 + $0x1020] sm:$0xff]
  %v557 = vld [vmem:[%s1 + $0x1028] sm:$0xff]
  %v558 = vld [vmem:[%s1 + $0x1030] sm:$0xff]
  %v559 = vld [vmem:[%s1 + $0x1038] sm:$0xff]
  %v560 = vld [vmem:[%s1 + $0x1040] sm:$0xff]
  %v561 = vld [vmem:[%s1 + $0x1048] sm:$0xff]
  %v562 = vld [vmem:[%s1 + $0x1050] sm:$0xff]
  %v563 = vld [vmem:[%s1 + $0x1058] sm:$0xff]
  %v564 = vld [vmem:[%s1 + $0x1060] sm:$0xff]
  %v565 = vld [vmem:[%s1 + $0x1068] sm:$0xff]
  %v566 = vld [vmem:[%s1 + $0x1070] sm:$0xff]
  %v567 = vld [vmem:[%s1 + $0x1078] sm:$0xff]
  %v568 = vld [vmem:[%s1 + $0x1080] sm:$0xff]
  %v569 = vld [vmem:[%s1 + $0x1088] sm:$0xff]
  %v570 = vld [vmem:[%s1 + $0x1090] sm:$0xff]
  %v571 = vld [vmem:[%s1 + $0x1098] sm:$0xff]
  %v572 = vld [vmem:[%s1 + $0x10a0] sm:$0xff]
  %v573 = vld [vmem:[%s1 + $0x10a8] sm:$0xff]
  %v574 = vld [vmem:[%s1 + $0x10b0] sm:$0xff]
  %v575 = vld [vmem:[%s1 + $0x10b8] sm:$0xff]
  %v576 = vld [vmem:[%s1 + $0x10c0] sm:$0xff]
  %v577 = vld [vmem:[%s1 + $0x10c8] sm:$0xff]
  %v578 = vld [vmem:[%s1 + $0x10d0] sm:$0xff]
  %v579 = vld [vmem:[%s1 + $0x10d8] sm:$0xff]
  %v580 = vld [vmem:[%s1 + $0x10e0] sm:$0xff]
  %v581 = vld [vmem:[%s1 + $0x10e8] sm:$0xff]
  %v582 = vld [vmem:[%s1 + $0x10f0] sm:$0xff]
  %v583 = vld [vmem:[%s1 + $0x10f8] sm:$0xff]
  %v584 = vld [vmem:[%s1 + $0x1100] sm:$0xff]
  %v585 = vld [vmem:[%s1 + $0x1108] sm:$0xff]
  %v586 = vld [vmem:[%s1 + $0x1110] sm:$0xff]
  %v587 = vld [vmem:[%s1 + $0x1118] sm:$0xff]
  %v588 = vld [vmem:[%s1 + $0x1120] sm:$0xff]
  %v589 = vld [vmem:[%s1 + $0x1128] sm:$0xff]
  %v590 = vld [vmem:[%s1 + $0x1130] sm:$0xff]
  %v591 = vld [vmem:[%s1 + $0x1138] sm:$0xff]
  %v592 = vld [vmem:[%s1 + $0x1140] sm:$0xff]
  %v593 = vld [vmem:[%s1 + $0x1148] sm:$0xff]
  %v594 = vld [vmem:[%s1 + $0x1150] sm:$0xff]
  %v595 = vld [vmem:[%s1 + $0x1158] sm:$0xff]
  %v596 = vld [vmem:[%s1 + $0x1160] sm:$0xff]
  %v597 = vld [vmem:[%s1 + $0x1168] sm:$0xff]
  %v598 = vld [vmem:[%s1 + $0x1170] sm:$0xff]
  %v599 = vld [vmem:[%s1 + $0x1178] sm:$0xff]
  %v600 = vld [vmem:[%s1 + $0x1180] sm:$0xff]
  %v601 = vld [vmem:[%s1 + $0x1188] sm:$0xff]
  %v602 = vld [vmem:[%s1 + $0x1190] sm:$0xff]
  %v603 = vld [vmem:[%s1 + $0x1198] sm:$0xff]
  %v604 = vld [vmem:[%s1 + $0x11a0] sm:$0xff]
  %v605 = vld [vmem:[%s1 + $0x11a8] sm:$0xff]
  %v606 = vld [vmem:[%s1 + $0x11b0] sm:$0xff]
  %v607 = vld [vmem:[%s1 + $0x11b8] sm:$0xff]
  %v608 = vld [vmem:[%s1 + $0x11c0] sm:$0xff]
  %v609 = vld [vmem:[%s1 + $0x11c8] sm:$0xff]
  %v610 = vld [vmem:[%s1 + $0x11d0] sm:$0xff]
  %v611 = vld [vmem:[%s1 + $0x11d8] sm:$0xff]
  %v612 = vld [vmem:[%s1 + $0x11e0] sm:$0xff]
  %v613 = vld [vmem:[%s1 + $0x11e8] sm:$0xff]
  %v614 = vld [vmem:[%s1 + $0x11f0] sm:$0xff]
  %v615 = vld [vmem:[%s1 + $0x11f8] sm:$0xff]
  %v616 = vld [vmem:[%s1 + $0x1200] sm:$0xff]
  %v617 = vld [vmem:[%s1 + $0x1208] sm:$0xff]
  %v618 = vld [vmem:[%s1 + $0x1210] sm:$0xff]
  %v619 = vld [vmem:[%s1 + $0x1218] sm:$0xff]
  %v620 = vld [vmem:[%s1 + $0x1220] sm:$0xff]
  %v621 = vld [vmem:[%s1 + $0x1228] sm:$0xff]
  %v622 = vld [vmem:[%s1 + $0x1230] sm:$0xff]
  %v623 = vld [vmem:[%s1 + $0x1238] sm:$0xff]
  %v624 = vld [vmem:[%s1 + $0x1240] sm:$0xff]
  %v625 = vld [vmem:[%s1 + $0x1248] sm:$0xff]
  %v626 = vld [vmem:[%s1 + $0x1250] sm:$0xff]
  %v627 = vld [vmem:[%s1 + $0x1258] sm:$0xff]
  %v628 = vld [vmem:[%s1 + $0x1260] sm:$0xff]
  %v629 = vld [vmem:[%s1 + $0x1268] sm:$0xff]
  %v630 = vld [vmem:[%s1 + $0x1270] sm:$0xff]
  %v631 = vld [vmem:[%s1 + $0x1278] sm:$0xff]
  %v632 = vld [vmem:[%s1 + $0x1280] sm:$0xff]
  %v633 = vld [vmem:[%s1 + $0x1288] sm:$0xff]
  %v634 = vld [vmem:[%s1 + $0x1290] sm:$0xff]
  %v635 = vld [vmem:[%s1 + $0x1298] sm:$0xff]
  %v636 = vld [vmem:[%s1 + $0x12a0] sm:$0xff]
  %v637 = vld [vmem:[%s1 + $0x12a8] sm:$0xff]
  %v638 = vld [vmem:[%s1 + $0x12b0] sm:$0xff]
  %v639 = vld [vmem:[%s1 + $0x12b8] sm:$0xff]
  %v640 = vld [vmem:[%s1 + $0x12c0] sm:$0xff]
  %v641 = vld [vmem:[%s1 + $0x12c8] sm:$0xff]
  %v642 = vld [vmem:[%s1 + $0x12d0] sm:$0xff]
  %v643 = vld [vmem:[%s1 + $0x12d8] sm:$0xff]
  %v644 = vld [vmem:[%s1 + $0x12e0] sm:$0xff]
  %v645 = vld [vmem:[%s1 + $0x12e8] sm:$0xff]
  %v646 = vld [vmem:[%s1 + $0x12f0] sm:$0xff]
  %v647 = vld [vmem:[%s1 + $0x12f8] sm:$0xff]
  %v648 = vld [vmem:[%s1 + $0x1300] sm:$0xff]
  %v649 = vld [vmem:[%s1 + $0x1308] sm:$0xff]
  %v650 = vld [vmem:[%s1 + $0x1310] sm:$0xff]
  %v651 = vld [vmem:[%s1 + $0x1318] sm:$0xff]
  %v652 = vld [vmem:[%s1 + $0x1320] sm:$0xff]
  %v653 = vld [vmem:[%s1 + $0x1328] sm:$0xff]
  %v654 = vld [vmem:[%s1 + $0x1330] sm:$0xff]
  %v655 = vld [vmem:[%s1 + $0x1338] sm:$0xff]
  %v656 = vld [vmem:[%s1 + $0x1340] sm:$0xff]
  %v657 = vld [vmem:[%s1 + $0x1348] sm:$0xff]
  %v658 = vld [vmem:[%s1 + $0x1350] sm:$0xff]
  %v659 = vld [vmem:[%s1 + $0x1358] sm:$0xff]
  %v660 = vld [vmem:[%s1 + $0x1360] sm:$0xff]
  %v661 = vld [vmem:[%s1 + $0x1368] sm:$0xff]
  %v662 = vld [vmem:[%s1 + $0x1370] sm:$0xff]
  %v663 = vld [vmem:[%s1 + $0x1378] sm:$0xff]
  %v664 = vld [vmem:[%s1 + $0x1380] sm:$0xff]
  %v665 = vld [vmem:[%s1 + $0x1388] sm:$0xff]
  %v666 = vld [vmem:[%s1 + $0x1390] sm:$0xff]
  %v667 = vld [vmem:[%s1 + $0x1398] sm:$0xff]
  %v668 = vld [vmem:[%s1 + $0x13a0] sm:$0xff]
  %v669 = vld [vmem:[%s1 + $0x13a8] sm:$0xff]
  %v670 = vld [vmem:[%s1 + $0x13b0] sm:$0xff]
  %v671 = vld [vmem:[%s1 + $0x13b8] sm:$0xff]
  %v672 = vld [vmem:[%s1 + $0x13c0] sm:$0xff]
  %v673 = vld [vmem:[%s1 + $0x13c8] sm:$0xff]
  %v674 = vld [vmem:[%s1 + $0x13d0] sm:$0xff]
  %v675 = vld [vmem:[%s1 + $0x13d8] sm:$0xff]
  %v676 = vld [vmem:[%s1 + $0x13e0] sm:$0xff]
  %v677 = vld [vmem:[%s1 + $0x13e8] sm:$0xff]
  %v678 = vld [vmem:[%s1 + $0x13f0] sm:$0xff]
  %v679 = vld [vmem:[%s1 + $0x13f8] sm:$0xff]
  %v680 = vld [vmem:[%s1 + $0x1400] sm:$0xff]
  %v681 = vld [vmem:[%s1 + $0x1408] sm:$0xff]
  %v682 = vld [vmem:[%s1 + $0x1410] sm:$0xff]
  %v683 = vld [vmem:[%s1 + $0x1418] sm:$0xff]
  %v684 = vld [vmem:[%s1 + $0x1420] sm:$0xff]
  %v685 = vld [vmem:[%s1 + $0x1428] sm:$0xff]
  %v686 = vld [vmem:[%s1 + $0x1430] sm:$0xff]
  %v687 = vld [vmem:[%s1 + $0x1438] sm:$0xff]
  %v688 = vld [vmem:[%s1 + $0x1440] sm:$0xff]
  %v689 = vld [vmem:[%s1 + $0x1448] sm:$0xff]
  %v690 = vld [vmem:[%s1 + $0x1450] sm:$0xff]
  %v691 = vld [vmem:[%s1 + $0x1458] sm:$0xff]
  %v692 = vld [vmem:[%s1 + $0x1460] sm:$0xff]
  %v693 = vld [vmem:[%s1 + $0x1468] sm:$0xff]
  %v694 = vld [vmem:[%s1 + $0x1470] sm:$0xff]
  %v695 = vld [vmem:[%s1 + $0x1478] sm:$0xff]
  %v696 = vld [vmem:[%s1 + $0x1480] sm:$0xff]
  %v697 = vld [vmem:[%s1 + $0x1488] sm:$0xff]
  %v698 = vld [vmem:[%s1 + $0x1490] sm:$0xff]
  %v699 = vld [vmem:[%s1 + $0x1498] sm:$0xff]
  %v700 = vld [vmem:[%s1 + $0x14a0] sm:$0xff]
  %v701 = vld [vmem:[%s1 + $0x14a8] sm:$0xff]
  %v702 = vld [vmem:[%s1 + $0x14b0] sm:$0xff]
  %v703 = vld [vmem:[%s1 + $0x14b8] sm:$0xff]
  %v704 = vld [vmem:[%s1 + $0x14c0] sm:$0xff]
  %v705 = vld [vmem:[%s1 + $0x14c8] sm:$0xff]
  %v706 = vld [vmem:[%s1 + $0x14d0] sm:$0xff]
  %v707 = vld [vmem:[%s1 + $0x14d8] sm:$0xff]
  %v708 = vld [vmem:[%s1 + $0x14e0] sm:$0xff]
  %v709 = vld [vmem:[%s1 + $0x14e8] sm:$0xff]
  %v710 = vld [vmem:[%s1 + $0x14f0] sm:$0xff]
  %v711 = vld [vmem:[%s1 + $0x14f8] sm:$0xff]
  %v712 = vld [vmem:[%s1 + $0x1500] sm:$0xff]
  %v713 = vld [vmem:[%s1 + $0x1508] sm:$0xff]
  %v714 = vld [vmem:[%s1 + $0x1510] sm:$0xff]
  %v715 = vld [vmem:[%s1 + $0x1518] sm:$0xff]
  %v716 = vld [vmem:[%s1 + $0x1520] sm:$0xff]
  %v717 = vld [vmem:[%s1 + $0x1528] sm:$0xff]
  %v718 = vld [vmem:[%s1 + $0x1530] sm:$0xff]
  %v719 = vld [vmem:[%s1 + $0x1538] sm:$0xff]
  %v720 = vld [vmem:[%s1 + $0x1540] sm:$0xff]
  %v721 = vld [vmem:[%s1 + $0x1548] sm:$0xff]
  %v722 = vld [vmem:[%s1 + $0x1550] sm:$0xff]
  %v723 = vld [vmem:[%s1 + $0x1558] sm:$0xff]
  %v724 = vld [vmem:[%s1 + $0x1560] sm:$0xff]
  %v725 = vld [vmem:[%s1 + $0x1568] sm:$0xff]
  %v726 = vld [vmem:[%s1 + $0x1570] sm:$0xff]
  %v727 = vld [vmem:[%s1 + $0x1578] sm:$0xff]
  %v728 = vld [vmem:[%s1 + $0x1580] sm:$0xff]
  %v729 = vld [vmem:[%s1 + $0x1588] sm:$0xff]
  %v730 = vld [vmem:[%s1 + $0x1590] sm:$0xff]
  %v731 = vld [vmem:[%s1 + $0x1598] sm:$0xff]
  %v732 = vld [vmem:[%s1 + $0x15a0] sm:$0xff]
  %v733 = vld [vmem:[%s1 + $0x15a8] sm:$0xff]
  %v734 = vld [vmem:[%s1 + $0x15b0] sm:$0xff]
  %v735 = vld [vmem:[%s1 + $0x15b8] sm:$0xff]
  %v736 = vld [vmem:[%s1 + $0x15c0] sm:$0xff]
  %v737 = vld [vmem:[%s1 + $0x15c8] sm:$0xff]
  %v738 = vld [vmem:[%s1 + $0x15d0] sm:$0xff]
  %v739 = vld [vmem:[%s1 + $0x15d8] sm:$0xff]
  %v740 = vld [vmem:[%s1 + $0x15e0] sm:$0xff]
  %v741 = vld [vmem:[%s1 + $0x15e8] sm:$0xff]
  %v742 = vld [vmem:[%s1 + $0x15f0] sm:$0xff]
  %v743 = vld [vmem:[%s1 + $0x15f8] sm:$0xff]
  %v744 = vld [vmem:[%s1 + $0x1600] sm:$0xff]
  %v745 = vld [vmem:[%s1 + $0x1608] sm:$0xff]
  %v746 = vld [vmem:[%s1 + $0x1610] sm:$0xff]
  %v747 = vld [vmem:[%s1 + $0x1618] sm:$0xff]
  %v748 = vld [vmem:[%s1 + $0x1620] sm:$0xff]
  %v749 = vld [vmem:[%s1 + $0x1628] sm:$0xff]
  %v750 = vld [vmem:[%s1 + $0x1630] sm:$0xff]
  %v751 = vld [vmem:[%s1 + $0x1638] sm:$0xff]
  %v752 = vld [vmem:[%s1 + $0x1640] sm:$0xff]
  %v753 = vld [vmem:[%s1 + $0x1648] sm:$0xff]
  %v754 = vld [vmem:[%s1 + $0x1650] sm:$0xff]
  %v755 = vld [vmem:[%s1 + $0x1658] sm:$0xff]
  %v756 = vld [vmem:[%s1 + $0x1660] sm:$0xff]
  %v757 = vld [vmem:[%s1 + $0x1668] sm:$0xff]
  %v758 = vld [vmem:[%s1 + $0x1670] sm:$0xff]
  %v759 = vld [vmem:[%s1 + $0x1678] sm:$0xff]
  %v760 = vld [vmem:[%s1 + $0x1680] sm:$0xff]
  %v761 = vld [vmem:[%s1 + $0x1688] sm:$0xff]
  %v762 = vld [vmem:[%s1 + $0x1690] sm:$0xff]
  %v763 = vld [vmem:[%s1 + $0x1698] sm:$0xff]
  %v764 = vld [vmem:[%s1 + $0x16a0] sm:$0xff]
  %v765 = vld [vmem:[%s1 + $0x16a8] sm:$0xff]
  %v766 = vld [vmem:[%s1 + $0x16b0] sm:$0xff]
  %v767 = vld [vmem:[%s1 + $0x16b8] sm:$0xff]
  %v768 = vld [vmem:[%s1 + $0x16c0] sm:$0xff]
  %v769 = vld [vmem:[%s1 + $0x16c8] sm:$0xff]
  %v770 = vld [vmem:[%s1 + $0x16d0] sm:$0xff]
  %v771 = vld [vmem:[%s1 + $0x16d8] sm:$0xff]
  %v772 = vld [vmem:[%s1 + $0x16e0] sm:$0xff]
  %v773 = vld [vmem:[%s1 + $0x16e8] sm:$0xff]
  %v774 = vld [vmem:[%s1 + $0x16f0] sm:$0xff]
  %v775 = vld [vmem:[%s1 + $0x16f8] sm:$0xff]
  %v776 = vld [vmem:[%s1 + $0x1700] sm:$0xff]
  %v777 = vld [vmem:[%s1 + $0x1708] sm:$0xff]
  %v778 = vld [vmem:[%s1 + $0x1710] sm:$0xff]
  %v779 = vld [vmem:[%s1 + $0x1718] sm:$0xff]
  %v780 = vld [vmem:[%s1 + $0x1720] sm:$0xff]
  %v781 = vld [vmem:[%s1 + $0x1728] sm:$0xff]
  %v782 = vld [vmem:[%s1 + $0x1730] sm:$0xff]
  %v783 = vld [vmem:[%s1 + $0x1738] sm:$0xff]
  %v784 = vld [vmem:[%s1 + $0x1740] sm:$0xff]
  %v785 = vld [vmem:[%s1 + $0x1748] sm:$0xff]
  %v786 = vld [vmem:[%s1 + $0x1750] sm:$0xff]
  %v787 = vld [vmem:[%s1 + $0x1758] sm:$0xff]
  %v788 = vld [vmem:[%s1 + $0x1760] sm:$0xff]
  %v789 = vld [vmem:[%s1 + $0x1768] sm:$0xff]
  %v790 = vld [vmem:[%s1 + $0x1770] sm:$0xff]
  %v791 = vld [vmem:[%s1 + $0x1778] sm:$0xff]
  %v792 = vld [vmem:[%s1 + $0x1780] sm:$0xff]
  %v793 = vld [vmem:[%s1 + $0x1788] sm:$0xff]
  %v794 = vld [vmem:[%s1 + $0x1790] sm:$0xff]
  %v795 = vld [vmem:[%s1 + $0x1798] sm:$0xff]
  %v796 = vld [vmem:[%s1 + $0x17a0] sm:$0xff]
  %v797 = vld [vmem:[%s1 + $0x17a8] sm:$0xff]
  %v798 = vld [vmem:[%s1 + $0x17b0] sm:$0xff]
  %v799 = vld [vmem:[%s1 + $0x17b8] sm:$0xff]
  %v800 = vld [vmem:[%s1 + $0x17c0] sm:$0xff]
  %v801 = vld [vmem:[%s1 + $0x17c8] sm:$0xff]
  %v802 = vld [vmem:[%s1 + $0x17d0] sm:$0xff]
  %v803 = vld [vmem:[%s1 + $0x17d8] sm:$0xff]
  %v804 = vld [vmem:[%s1 + $0x17e0] sm:$0xff]
  %v805 = vld [vmem:[%s1 + $0x17e8] sm:$0xff]
  %v806 = vld [vmem:[%s1 + $0x17f0] sm:$0xff]
  %v807 = vld [vmem:[%s1 + $0x17f8] sm:$0xff]
  %v808 = vld [vmem:[%s1 + $0x1800] sm:$0xff]
  %v809 = vld [vmem:[%s1 + $0x1808] sm:$0xff]
  %v810 = vld [vmem:[%s1 + $0x1810] sm:$0xff]
  %v811 = vld [vmem:[%s1 + $0x1818] sm:$0xff]
  %v812 = vld [vmem:[%s1 + $0x1820] sm:$0xff]
  %v813 = vld [vmem:[%s1 + $0x1828] sm:$0xff]
  %v814 = vld [vmem:[%s1 + $0x1830] sm:$0xff]
  %v815 = vld [vmem:[%s1 + $0x1838] sm:$0xff]
  %v816 = vld [vmem:[%s1 + $0x1840] sm:$0xff]
  %v817 = vld [vmem:[%s1 + $0x1848] sm:$0xff]
  %v818 = vld [vmem:[%s1 + $0x1850] sm:$0xff]
  %v819 = vld [vmem:[%s1 + $0x1858] sm:$0xff]
  %v820 = vld [vmem:[%s1 + $0x1860] sm:$0xff]
  %v821 = vld [vmem:[%s1 + $0x1868] sm:$0xff]
  %v822 = vld [vmem:[%s1 + $0x1870] sm:$0xff]
  %v823 = vld [vmem:[%s1 + $0x1878] sm:$0xff]
  %v824 = vld [vmem:[%s1 + $0x1880] sm:$0xff]
  %v825 = vld [vmem:[%s1 + $0x1888] sm:$0xff]
  %v826 = vld [vmem:[%s1 + $0x1890] sm:$0xff]
  %v827 = vld [vmem:[%s1 + $0x1898] sm:$0xff]
  %v828 = vld [vmem:[%s1 + $0x18a0] sm:$0xff]
  %v829 = vld [vmem:[%s1 + $0x18a8] sm:$0xff]
  %v830 = vld [vmem:[%s1 + $0x18b0] sm:$0xff]
  %v831 = vld [vmem:[%s1 + $0x18b8] sm:$0xff]
  %v832 = vld [vmem:[%s1 + $0x18c0] sm:$0xff]
  %v833 = vld [vmem:[%s1 + $0x18c8] sm:$0xff]
  %v834 = vld [vmem:[%s1 + $0x18d0] sm:$0xff]
  %v835 = vld [vmem:[%s1 + $0x18d8] sm:$0xff]
  %v836 = vld [vmem:[%s1 + $0x18e0] sm:$0xff]
  %v837 = vld [vmem:[%s1 + $0x18e8] sm:$0xff]
  %v838 = vld [vmem:[%s1 + $0x18f0] sm:$0xff]
  %v839 = vld [vmem:[%s1 + $0x18f8] sm:$0xff]
  %v840 = vld [vmem:[%s1 + $0x1900] sm:$0xff]
  %v841 = vld [vmem:[%s1 + $0x1908] sm:$0xff]
  %v842 = vld [vmem:[%s1 + $0x1910] sm:$0xff]
  %v843 = vld [vmem:[%s1 + $0x1918] sm:$0xff]
  %v844 = vld [vmem:[%s1 + $0x1920] sm:$0xff]
  %v845 = vld [vmem:[%s1 + $0x1928] sm:$0xff]
  %v846 = vld [vmem:[%s1 + $0x1930] sm:$0xff]
  %v847 = vld [vmem:[%s1 + $0x1938] sm:$0xff]
  %v848 = vld [vmem:[%s1 + $0x1940] sm:$0xff]
  %v849 = vld [vmem:[%s1 + $0x1948] sm:$0xff]
  %v850 = vld [vmem:[%s1 + $0x1950] sm:$0xff]
  %v851 = vld [vmem:[%s1 + $0x1958] sm:$0xff]
  %v852 = vld [vmem:[%s1 + $0x1960] sm:$0xff]
  %v853 = vld [vmem:[%s1 + $0x1968] sm:$0xff]
  %v854 = vld [vmem:[%s1 + $0x1970] sm:$0xff]
  %v855 = vld [vmem:[%s1 + $0x1978] sm:$0xff]
  %v856 = vld [vmem:[%s1 + $0x1980] sm:$0xff]
  %v857 = vld [vmem:[%s1 + $0x1988] sm:$0xff]
  %v858 = vld [vmem:[%s1 + $0x1990] sm:$0xff]
  %v859 = vld [vmem:[%s1 + $0x1998] sm:$0xff]
  %v860 = vld [vmem:[%s1 + $0x19a0] sm:$0xff]
  %v861 = vld [vmem:[%s1 + $0x19a8] sm:$0xff]
  %v862 = vld [vmem:[%s1 + $0x19b0] sm:$0xff]
  %v863 = vld [vmem:[%s1 + $0x19b8] sm:$0xff]
  %v864 = vld [vmem:[%s1 + $0x19c0] sm:$0xff]
  %v865 = vld [vmem:[%s1 + $0x19c8] sm:$0xff]
  %v866 = vld [vmem:[%s1 + $0x19d0] sm:$0xff]
  %v867 = vld [vmem:[%s1 + $0x19d8] sm:$0xff]
  %v868 = vld [vmem:[%s1 + $0x19e0] sm:$0xff]
  %v869 = vld [vmem:[%s1 + $0x19e8] sm:$0xff]
  %v870 = vld [vmem:[%s1 + $0x19f0] sm:$0xff]
  %v871 = vld [vmem:[%s1 + $0x19f8] sm:$0xff]
  %v872 = vld [vmem:[%s1 + $0x1a00] sm:$0xff]
  %v873 = vld [vmem:[%s1 + $0x1a08] sm:$0xff]
  %v874 = vld [vmem:[%s1 + $0x1a10] sm:$0xff]
  %v875 = vld [vmem:[%s1 + $0x1a18] sm:$0xff]
  %v876 = vld [vmem:[%s1 + $0x1a20] sm:$0xff]
  %v877 = vld [vmem:[%s1 + $0x1a28] sm:$0xff]
  %v878 = vld [vmem:[%s1 + $0x1a30] sm:$0xff]
  %v879 = vld [vmem:[%s1 + $0x1a38] sm:$0xff]
  %v880 = vld [vmem:[%s1 + $0x1a40] sm:$0xff]
  %v881 = vld [vmem:[%s1 + $0x1a48] sm:$0xff]
  %v882 = vld [vmem:[%s1 + $0x1a50] sm:$0xff]
  %v883 = vld [vmem:[%s1 + $0x1a58] sm:$0xff]
  %v884 = vld [vmem:[%s1 + $0x1a60] sm:$0xff]
  %v885 = vld [vmem:[%s1 + $0x1a68] sm:$0xff]
  %v886 = vld [vmem:[%s1 + $0x1a70] sm:$0xff]
  %v887 = vld [vmem:[%s1 + $0x1a78] sm:$0xff]
  %v888 = vld [vmem:[%s1 + $0x1a80] sm:$0xff]
  %v889 = vld [vmem:[%s1 + $0x1a88] sm:$0xff]
  %v890 = vld [vmem:[%s1 + $0x1a90] sm:$0xff]
  %v891 = vld [vmem:[%s1 + $0x1a98] sm:$0xff]
  %v892 = vld [vmem:[%s1 + $0x1aa0] sm:$0xff]
  %v893 = vld [vmem:[%s1 + $0x1aa8] sm:$0xff]
  %v894 = vld [vmem:[%s1 + $0x1ab0] sm:$0xff]
  %v895 = vld [vmem:[%s1 + $0x1ab8] sm:$0xff]
  %v896 = vld [vmem:[%s1 + $0x1ac0] sm:$0xff]
  %v897 = vld [vmem:[%s1 + $0x1ac8] sm:$0xff]
  %v898 = vld [vmem:[%s1 + $0x1ad0] sm:$0xff]
  %v899 = vld [vmem:[%s1 + $0x1ad8] sm:$0xff]
  %v900 = vld [vmem:[%s1 + $0x1ae0] sm:$0xff]
  %v901 = vld [vmem:[%s1 + $0x1ae8] sm:$0xff]
  %v902 = vld [vmem:[%s1 + $0x1af0] sm:$0xff]
  %v903 = vld [vmem:[%s1 + $0x1af8] sm:$0xff]
  %v904 = vld [vmem:[%s1 + $0x1b00] sm:$0xff]
  %v905 = vld [vmem:[%s1 + $0x1b08] sm:$0xff]
  %v906 = vld [vmem:[%s1 + $0x1b10] sm:$0xff]
  %v907 = vld [vmem:[%s1 + $0x1b18] sm:$0xff]
  %v908 = vld [vmem:[%s1 + $0x1b20] sm:$0xff]
  %v909 = vld [vmem:[%s1 + $0x1b28] sm:$0xff]
  %v910 = vld [vmem:[%s1 + $0x1b30] sm:$0xff]
  %v911 = vld [vmem:[%s1 + $0x1b38] sm:$0xff]
  %v912 = vld [vmem:[%s1 + $0x1b40] sm:$0xff]
  %v913 = vld [vmem:[%s1 + $0x1b48] sm:$0xff]
  %v914 = vld [vmem:[%s1 + $0x1b50] sm:$0xff]
  %v915 = vld [vmem:[%s1 + $0x1b58] sm:$0xff]
  %v916 = vld [vmem:[%s1 + $0x1b60] sm:$0xff]
  %v917 = vld [vmem:[%s1 + $0x1b68] sm:$0xff]
  %v918 = vld [vmem:[%s1 + $0x1b70] sm:$0xff]
  %v919 = vld [vmem:[%s1 + $0x1b78] sm:$0xff]
  %v920 = vld [vmem:[%s1 + $0x1b80] sm:$0xff]
  %v921 = vld [vmem:[%s1 + $0x1b88] sm:$0xff]
  %v922 = vld [vmem:[%s1 + $0x1b90] sm:$0xff]
  %v923 = vld [vmem:[%s1 + $0x1b98] sm:$0xff]
  %v924 = vld [vmem:[%s1 + $0x1ba0] sm:$0xff]
  %v925 = vld [vmem:[%s1 + $0x1ba8] sm:$0xff]
  %v926 = vld [vmem:[%s1 + $0x1bb0] sm:$0xff]
  %v927 = vld [vmem:[%s1 + $0x1bb8] sm:$0xff]
  %v928 = vld [vmem:[%s1 + $0x1bc0] sm:$0xff]
  %v929 = vld [vmem:[%s1 + $0x1bc8] sm:$0xff]
  %v930 = vld [vmem:[%s1 + $0x1bd0] sm:$0xff]
  %v931 = vld [vmem:[%s1 + $0x1bd8] sm:$0xff]
  %v932 = vld [vmem:[%s1 + $0x1be0] sm:$0xff]
  %v933 = vld [vmem:[%s1 + $0x1be8] sm:$0xff]
  %v934 = vld [vmem:[%s1 + $0x1bf0] sm:$0xff]
  %v935 = vld [vmem:[%s1 + $0x1bf8] sm:$0xff]
  %v936 = vld [vmem:[%s1 + $0x1c00] sm:$0xff]
  %v937 = vld [vmem:[%s1 + $0x1c08] sm:$0xff]
  %v938 = vld [vmem:[%s1 + $0x1c10] sm:$0xff]
  %v939 = vld [vmem:[%s1 + $0x1c18] sm:$0xff]
  %v940 = vld [vmem:[%s1 + $0x1c20] sm:$0xff]
  %v941 = vld [vmem:[%s1 + $0x1c28] sm:$0xff]
  %v942 = vld [vmem:[%s1 + $0x1c30] sm:$0xff]
  %v943 = vld [vmem:[%s1 + $0x1c38] sm:$0xff]
  %v944 = vld [vmem:[%s1 + $0x1c40] sm:$0xff]
  %v945 = vld [vmem:[%s1 + $0x1c48] sm:$0xff]
  %v946 = vld [vmem:[%s1 + $0x1c50] sm:$0xff]
  %v947 = vld [vmem:[%s1 + $0x1c58] sm:$0xff]
  %v948 = vld [vmem:[%s1 + $0x1c60] sm:$0xff]
  %v949 = vld [vmem:[%s1 + $0x1c68] sm:$0xff]
  %v950 = vld [vmem:[%s1 + $0x1c70] sm:$0xff]
  %v951 = vld [vmem:[%s1 + $0x1c78] sm:$0xff]
  %v952 = vld [vmem:[%s1 + $0x1c80] sm:$0xff]
  %v953 = vld [vmem:[%s1 + $0x1c88] sm:$0xff]
  %v954 = vld [vmem:[%s1 + $0x1c90] sm:$0xff]
  %v955 = vld [vmem:[%s1 + $0x1c98] sm:$0xff]
  %v956 = vld [vmem:[%s1 + $0x1ca0] sm:$0xff]
  %v957 = vld [vmem:[%s1 + $0x1ca8] sm:$0xff]
  %v958 = vld [vmem:[%s1 + $0x1cb0] sm:$0xff]
  %v959 = vld [vmem:[%s1 + $0x1cb8] sm:$0xff]
  %v960 = vld [vmem:[%s1 + $0x1cc0] sm:$0xff]
  %v961 = vld [vmem:[%s1 + $0x1cc8] sm:$0xff]
  %v962 = vld [vmem:[%s1 + $0x1cd0] sm:$0xff]
  %v963 = vld [vmem:[%s1 + $0x1cd8] sm:$0xff]
  %v964 = vld [vmem:[%s1 + $0x1ce0] sm:$0xff]
  %v965 = vld [vmem:[%s1 + $0x1ce8] sm:$0xff]
  %v966 = vld [vmem:[%s1 + $0x1cf0] sm:$0xff]
  %v967 = vld [vmem:[%s1 + $0x1cf8] sm:$0xff]
  %v968 = vld [vmem:[%s1 + $0x1d00] sm:$0xff]
  %v969 = vld [vmem:[%s1 + $0x1d08] sm:$0xff]
  %v970 = vld [vmem:[%s1 + $0x1d10] sm:$0xff]
  %v971 = vld [vmem:[%s1 + $0x1d18] sm:$0xff]
  %v972 = vld [vmem:[%s1 + $0x1d20] sm:$0xff]
  %v973 = vld [vmem:[%s1 + $0x1d28] sm:$0xff]
  %v974 = vld [vmem:[%s1 + $0x1d30] sm:$0xff]
  %v975 = vld [vmem:[%s1 + $0x1d38] sm:$0xff]
  %v976 = vld [vmem:[%s1 + $0x1d40] sm:$0xff]
  %v977 = vld [vmem:[%s1 + $0x1d48] sm:$0xff]
  %v978 = vld [vmem:[%s1 + $0x1d50] sm:$0xff]
  %v979 = vld [vmem:[%s1 + $0x1d58] sm:$0xff]
  %v980 = vld [vmem:[%s1 + $0x1d60] sm:$0xff]
  %v981 = vld [vmem:[%s1 + $0x1d68] sm:$0xff]
  %v982 = vld [vmem:[%s1 + $0x1d70] sm:$0xff]
  %v983 = vld [vmem:[%s1 + $0x1d78] sm:$0xff]
  %v984 = vld [vmem:[%s1 + $0x1d80] sm:$0xff]
  %v985 = vld [vmem:[%s1 + $0x1d88] sm:$0xff]
  %v986 = vld [vmem:[%s1 + $0x1d90] sm:$0xff]
  %v987 = vld [vmem:[%s1 + $0x1d98] sm:$0xff]
  %v988 = vld [vmem:[%s1 + $0x1da0] sm:$0xff]
  %v989 = vld [vmem:[%s1 + $0x1da8] sm:$0xff]
  %v990 = vld [vmem:[%s1 + $0x1db0] sm:$0xff]
  %v991 = vld [vmem:[%s1 + $0x1db8] sm:$0xff]
  %v992 = vld [vmem:[%s1 + $0x1dc0] sm:$0xff]
  %v993 = vld [vmem:[%s1 + $0x1dc8] sm:$0xff]
  %v994 = vld [vmem:[%s1 + $0x1dd0] sm:$0xff]
  %v995 = vld [vmem:[%s1 + $0x1dd8] sm:$0xff]
  %v996 = vld [vmem:[%s1 + $0x1de0] sm:$0xff]
  %v997 = vld [vmem:[%s1 + $0x1de8] sm:$0xff]
  %v998 = vld [vmem:[%s1 + $0x1df0] sm:$0xff]
  %v999 = vld [vmem:[%s1 + $0x1df8] sm:$0xff]
  %v1000 = vld [vmem:[%s1 + $0x1e00] sm:$0xff]
  %v1001 = vld [vmem:[%s1 + $0x1e08] sm:$0xff]
  %v1002 = vld [vmem:[%s1 + $0x1e10] sm:$0xff]
  %v1003 = vld [vmem:[%s1 + $0x1e18] sm:$0xff]
  %v1004 = vld [vmem:[%s1 + $0x1e20] sm:$0xff]
  %v1005 = vld [vmem:[%s1 + $0x1e28] sm:$0xff]
  %v1006 = vld [vmem:[%s1 + $0x1e30] sm:$0xff]
  %v1007 = vld [vmem:[%s1 + $0x1e38] sm:$0xff]
  %v1008 = vld [vmem:[%s1 + $0x1e40] sm:$0xff]
  %v1009 = vld [vmem:[%s1 + $0x1e48] sm:$0xff]
  %v1010 = vld [vmem:[%s1 + $0x1e50] sm:$0xff]
  %v1011 = vld [vmem:[%s1 + $0x1e58] sm:$0xff]
  %v1012 = vld [vmem:[%s1 + $0x1e60] sm:$0xff]
  %v1013 = vld [vmem:[%s1 + $0x1e68] sm:$0xff]
  %v1014 = vld [vmem:[%s1 + $0x1e70] sm:$0xff]
  %v1015 = vld [vmem:[%s1 + $0x1e78] sm:$0xff]
  %v1016 = vld [vmem:[%s1 + $0x1e80] sm:$0xff]
  %v1017 = vld [vmem:[%s1 + $0x1e88] sm:$0xff]
  %v1018 = vld [vmem:[%s1 + $0x1e90] sm:$0xff]
  %v1019 = vld [vmem:[%s1 + $0x1e98] sm:$0xff]
  %v1020 = vld [vmem:[%s1 + $0x1ea0] sm:$0xff]
  %v1021 = vld [vmem:[%s1 + $0x1ea8] sm:$0xff]
  %v1022 = vld [vmem:[%s1 + $0x1eb0] sm:$0xff]
  %v1023 = vld [vmem:[%s1 + $0x1eb8] sm:$0xff]
  %v1024 = vld [vmem:[%s1 + $0x1ec0] sm:$0xff]
  %v1025 = vld [vmem:[%s1 + $0x1ec8] sm:$0xff]
  %v1026 = vld [vmem:[%s1 + $0x1ed0] sm:$0xff]
  %v1027 = vld [vmem:[%s1 + $0x1ed8] sm:$0xff]
  %v1028 = vld [vmem:[%s1 + $0x1ee0] sm:$0xff]
  %v1029 = vld [vmem:[%s1 + $0x1ee8] sm:$0xff]
  %v1030 = vld [vmem:[%s1 + $0x1ef0] sm:$0xff]
  %v1031 = vld [vmem:[%s1 + $0x1ef8] sm:$0xff]
  %v1032 = vld [vmem:[%s1 + $0x1f00] sm:$0xff]
  %v1033 = vld [vmem:[%s1 + $0x1f08] sm:$0xff]
  %v1034 = vld [vmem:[%s1 + $0x1f10] sm:$0xff]
  %v1035 = vld [vmem:[%s1 + $0x1f18] sm:$0xff]
  %v1036 = vld [vmem:[%s1 + $0x1f20] sm:$0xff]
  %v1037 = vld [vmem:[%s1 + $0x1f28] sm:$0xff]
  %v1038 = vld [vmem:[%s1 + $0x1f30] sm:$0xff]
  %v1039 = vld [vmem:[%s1 + $0x1f38] sm:$0xff]
  %v1040 = vld [vmem:[%s1 + $0x1f40] sm:$0xff]
  %v1041 = vld [vmem:[%s1 + $0x1f48] sm:$0xff]
  %v1042 = vld [vmem:[%s1 + $0x1f50] sm:$0xff]
  %v1043 = vld [vmem:[%s1 + $0x1f58] sm:$0xff]
  %v1044 = vld [vmem:[%s1 + $0x1f60] sm:$0xff]
  %v1045 = vld [vmem:[%s1 + $0x1f68] sm:$0xff]
  %v1046 = vld [vmem:[%s1 + $0x1f70] sm:$0xff]
  %v1047 = vld [vmem:[%s1 + $0x1f78] sm:$0xff]
  %v1048 = vld [vmem:[%s1 + $0x1f80] sm:$0xff]
  %v1049 = vld [vmem:[%s1 + $0x1f88] sm:$0xff]
  %v1050 = vld [vmem:[%s1 + $0x1f90] sm:$0xff]
  %v1051 = vld [vmem:[%s1 + $0x1f98] sm:$0xff]
  %v1052 = vld [vmem:[%s1 + $0x1fa0] sm:$0xff]
  %v1053 = vld [vmem:[%s1 + $0x1fa8] sm:$0xff]
  %v1054 = vld [vmem:[%s1 + $0x1fb0] sm:$0xff]
  %v1055 = vld [vmem:[%s1 + $0x1fb8] sm:$0xff]
  %v1056 = vld [vmem:[%s1 + $0x1fc0] sm:$0xff]
  %v1057 = vld [vmem:[%s1 + $0x1fc8] sm:$0xff]
  %v1058 = vld [vmem:[%s1 + $0x1fd0] sm:$0xff]
  %v1059 = vld [vmem:[%s1 + $0x1fd8] sm:$0xff]
  %v1060 = vld [vmem:[%s1 + $0x1fe0] sm:$0xff]
  %v1061 = vld [vmem:[%s1 + $0x1fe8] sm:$0xff]
  %v1062 = vld [vmem:[%s1 + $0x1ff0] sm:$0xff]
  %v1063 = vld [vmem:[%s1 + $0x1ff8] sm:$0xff]
  %v1064 = vld [vmem:[#allocation2] sm:$0x1]
  %v1066 = vlaneseq
  %v1067 = vshrl.u32 %v1066, 7
  %v1068 = vsub.s32 0, %v1067
  %v1069 = vrot.slane %v1064, %v1068
  %1070 = vset.pattern.permute.xlu0 0
  %1071 = vperm.xlu0 %1070, %v1069
  %v1072 = vpop.permute.xlu0 %1071
  %v1090 = vcombine.high %v24, %v24
  %v1092 = vunpack.c.l.s4 1983009808
  %v1093 = vunpack.c.0.s8 %v1092
  %v1094 = vlaneseq
  %v1095 = vshrl.u32 %v1094, 7
  %v1096 = vsub.s32 %v1093, %v1095
  %v1097 = vrot.slane %v24, %v1096
  %v1099 = vunpack.c.l.s4 1983009808
  %v1100 = vunpack.c.0.s8 %v1099
  %v1101 = vlaneseq
  %v1102 = vshrl.u32 %v1101, 7
  %v1103 = vsub.s32 %v1100, %v1102
  %v1104 = vrot.slane %v1090, %v1103
  %v1105 = vcombine.high %v1097, %v1097
  %v1106 = vcombine.high %v1104, %v1104
  %v1107 = vcombine.high %v25, %v25
  %v1109 = vunpack.c.l.s4 1983009808
  %v1110 = vunpack.c.0.s8 %v1109
  %v1111 = vlaneseq
  %v1112 = vshrl.u32 %v1111, 7
  %v1113 = vsub.s32 %v1110, %v1112
  %v1114 = vrot.slane %v25, %v1113
  %v1116 = vunpack.c.l.s4 1983009808
  %v1117 = vunpack.c.0.s8 %v1116
  %v1118 = vlaneseq
  %v1119 = vshrl.u32 %v1118, 7
  %v1120 = vsub.s32 %v1117, %v1119
  %v1121 = vrot.slane %v1107, %v1120
  %v1122 = vcombine.high %v1114, %v1114
  %v1123 = vcombine.high %v1121, %v1121
  %v1124 = vcombine.high %v26, %v26
  %v1126 = vunpack.c.l.s4 1983009808
  %v1127 = vunpack.c.0.s8 %v1126
  %v1128 = vlaneseq
  %v1129 = vshrl.u32 %v1128, 7
  %v1130 = vsub.s32 %v1127, %v1129
  %v1131 = vrot.slane %v26, %v1130
  %v1133 = vunpack.c.l.s4 1983009808
  %v1134 = vunpack.c.0.s8 %v1133
  %v1135 = vlaneseq
  %v1136 = vshrl.u32 %v1135, 7
  %v1137 = vsub.s32 %v1134, %v1136
  %v1138 = vrot.slane %v1124, %v1137
  %v1139 = vcombine.high %v1131, %v1131
  %v1140 = vcombine.high %v1138, %v1138
  %v1141 = vcombine.high %v27, %v27
  %v1143 = vunpack.c.l.s4 1983009808
  %v1144 = vunpack.c.0.s8 %v1143
  %v1145 = vlaneseq
  %v1146 = vshrl.u32 %v1145, 7
  %v1147 = vsub.s32 %v1144, %v1146
  %v1148 = vrot.slane %v27, %v1147
  %v1150 = vunpack.c.l.s4 1983009808
  %v1151 = vunpack.c.0.s8 %v1150
  %v1152 = vlaneseq
  %v1153 = vshrl.u32 %v1152, 7
  %v1154 = vsub.s32 %v1151, %v1153
  %v1155 = vrot.slane %v1141, %v1154
  %v1156 = vcombine.high %v1148, %v1148
  %v1157 = vcombine.high %v1155, %v1155
  %v1158 = vcombine.high %v28, %v28
  %v1160 = vunpack.c.l.s4 1983009808
  %v1161 = vunpack.c.0.s8 %v1160
  %v1162 = vlaneseq
  %v1163 = vshrl.u32 %v1162, 7
  %v1164 = vsub.s32 %v1161, %v1163
  %v1165 = vrot.slane %v28, %v1164
  %v1167 = vunpack.c.l.s4 1983009808
  %v1168 = vunpack.c.0.s8 %v1167
  %v1169 = vlaneseq
  %v1170 = vshrl.u32 %v1169, 7
  %v1171 = vsub.s32 %v1168, %v1170
  %v1172 = vrot.slane %v1158, %v1171
  %v1173 = vcombine.high %v1165, %v1165
  %v1174 = vcombine.high %v1172, %v1172
  %v1175 = vcombine.high %v29, %v29
  %v1177 = vunpack.c.l.s4 1983009808
  %v1178 = vunpack.c.0.s8 %v1177
  %v1179 = vlaneseq
  %v1180 = vshrl.u32 %v1179, 7
  %v1181 = vsub.s32 %v1178, %v1180
  %v1182 = vrot.slane %v29, %v1181
  %v1184 = vunpack.c.l.s4 1983009808
  %v1185 = vunpack.c.0.s8 %v1184
  %v1186 = vlaneseq
  %v1187 = vshrl.u32 %v1186, 7
  %v1188 = vsub.s32 %v1185, %v1187
  %v1189 = vrot.slane %v1175, %v1188
  %v1190 = vcombine.high %v1182, %v1182
  %v1191 = vcombine.high %v1189, %v1189
  %v1192 = vcombine.high %v30, %v30
  %v1194 = vunpack.c.l.s4 1983009808
  %v1195 = vunpack.c.0.s8 %v1194
  %v1196 = vlaneseq
  %v1197 = vshrl.u32 %v1196, 7
  %v1198 = vsub.s32 %v1195, %v1197
  %v1199 = vrot.slane %v30, %v1198
  %v1201 = vunpack.c.l.s4 1983009808
  %v1202 = vunpack.c.0.s8 %v1201
  %v1203 = vlaneseq
  %v1204 = vshrl.u32 %v1203, 7
  %v1205 = vsub.s32 %v1202, %v1204
  %v1206 = vrot.slane %v1192, %v1205
  %v1207 = vcombine.high %v1199, %v1199
  %v1208 = vcombine.high %v1206, %v1206
  %v1209 = vcombine.high %v31, %v31
  %v1211 = vunpack.c.l.s4 1983009808
  %v1212 = vunpack.c.0.s8 %v1211
  %v1213 = vlaneseq
  %v1214 = vshrl.u32 %v1213, 7
  %v1215 = vsub.s32 %v1212, %v1214
  %v1216 = vrot.slane %v31, %v1215
  %v1218 = vunpack.c.l.s4 1983009808
  %v1219 = vunpack.c.0.s8 %v1218
  %v1220 = vlaneseq
  %v1221 = vshrl.u32 %v1220, 7
  %v1222 = vsub.s32 %v1219, %v1221
  %v1223 = vrot.slane %v1209, %v1222
  %v1224 = vcombine.high %v1216, %v1216
  %v1225 = vcombine.high %v1223, %v1223
  %v1226 = vcombine.high %v32, %v32
  %v1228 = vunpack.c.l.s4 1983009808
  %v1229 = vunpack.c.0.s8 %v1228
  %v1230 = vlaneseq
  %v1231 = vshrl.u32 %v1230, 7
  %v1232 = vsub.s32 %v1229, %v1231
  %v1233 = vrot.slane %v32, %v1232
  %v1235 = vunpack.c.l.s4 1983009808
  %v1236 = vunpack.c.0.s8 %v1235
  %v1237 = vlaneseq
  %v1238 = vshrl.u32 %v1237, 7
  %v1239 = vsub.s32 %v1236, %v1238
  %v1240 = vrot.slane %v1226, %v1239
  %v1241 = vcombine.high %v1233, %v1233
  %v1242 = vcombine.high %v1240, %v1240
  %v1243 = vcombine.high %v33, %v33
  %v1245 = vunpack.c.l.s4 1983009808
  %v1246 = vunpack.c.0.s8 %v1245
  %v1247 = vlaneseq
  %v1248 = vshrl.u32 %v1247, 7
  %v1249 = vsub.s32 %v1246, %v1248
  %v1250 = vrot.slane %v33, %v1249
  %v1252 = vunpack.c.l.s4 1983009808
  %v1253 = vunpack.c.0.s8 %v1252
  %v1254 = vlaneseq
  %v1255 = vshrl.u32 %v1254, 7
  %v1256 = vsub.s32 %v1253, %v1255
  %v1257 = vrot.slane %v1243, %v1256
  %v1258 = vcombine.high %v1250, %v1250
  %v1259 = vcombine.high %v1257, %v1257
  %v1260 = vcombine.high %v34, %v34
  %v1262 = vunpack.c.l.s4 1983009808
  %v1263 = vunpack.c.0.s8 %v1262
  %v1264 = vlaneseq
  %v1265 = vshrl.u32 %v1264, 7
  %v1266 = vsub.s32 %v1263, %v1265
  %v1267 = vrot.slane %v34, %v1266
  %v1269 = vunpack.c.l.s4 1983009808
  %v1270 = vunpack.c.0.s8 %v1269
  %v1271 = vlaneseq
  %v1272 = vshrl.u32 %v1271, 7
  %v1273 = vsub.s32 %v1270, %v1272
  %v1274 = vrot.slane %v1260, %v1273
  %v1275 = vcombine.high %v1267, %v1267
  %v1276 = vcombine.high %v1274, %v1274
  %v1277 = vcombine.high %v35, %v35
  %v1279 = vunpack.c.l.s4 1983009808
  %v1280 = vunpack.c.0.s8 %v1279
  %v1281 = vlaneseq
  %v1282 = vshrl.u32 %v1281, 7
  %v1283 = vsub.s32 %v1280, %v1282
  %v1284 = vrot.slane %v35, %v1283
  %v1286 = vunpack.c.l.s4 1983009808
  %v1287 = vunpack.c.0.s8 %v1286
  %v1288 = vlaneseq
  %v1289 = vshrl.u32 %v1288, 7
  %v1290 = vsub.s32 %v1287, %v1289
  %v1291 = vrot.slane %v1277, %v1290
  %v1292 = vcombine.high %v1284, %v1284
  %v1293 = vcombine.high %v1291, %v1291
  %v1294 = vcombine.high %v36, %v36
  %v1296 = vunpack.c.l.s4 1983009808
  %v1297 = vunpack.c.0.s8 %v1296
  %v1298 = vlaneseq
  %v1299 = vshrl.u32 %v1298, 7
  %v1300 = vsub.s32 %v1297, %v1299
  %v1301 = vrot.slane %v36, %v1300
  %v1303 = vunpack.c.l.s4 1983009808
  %v1304 = vunpack.c.0.s8 %v1303
  %v1305 = vlaneseq
  %v1306 = vshrl.u32 %v1305, 7
  %v1307 = vsub.s32 %v1304, %v1306
  %v1308 = vrot.slane %v1294, %v1307
  %v1309 = vcombine.high %v1301, %v1301
  %v1310 = vcombine.high %v1308, %v1308
  %v1311 = vcombine.high %v37, %v37
  %v1313 = vunpack.c.l.s4 1983009808
  %v1314 = vunpack.c.0.s8 %v1313
  %v1315 = vlaneseq
  %v1316 = vshrl.u32 %v1315, 7
  %v1317 = vsub.s32 %v1314, %v1316
  %v1318 = vrot.slane %v37, %v1317
  %v1320 = vunpack.c.l.s4 1983009808
  %v1321 = vunpack.c.0.s8 %v1320
  %v1322 = vlaneseq
  %v1323 = vshrl.u32 %v1322, 7
  %v1324 = vsub.s32 %v1321, %v1323
  %v1325 = vrot.slane %v1311, %v1324
  %v1326 = vcombine.high %v1318, %v1318
  %v1327 = vcombine.high %v1325, %v1325
  %v1328 = vcombine.high %v38, %v38
  %v1330 = vunpack.c.l.s4 1983009808
  %v1331 = vunpack.c.0.s8 %v1330
  %v1332 = vlaneseq
  %v1333 = vshrl.u32 %v1332, 7
  %v1334 = vsub.s32 %v1331, %v1333
  %v1335 = vrot.slane %v38, %v1334
  %v1337 = vunpack.c.l.s4 1983009808
  %v1338 = vunpack.c.0.s8 %v1337
  %v1339 = vlaneseq
  %v1340 = vshrl.u32 %v1339, 7
  %v1341 = vsub.s32 %v1338, %v1340
  %v1342 = vrot.slane %v1328, %v1341
  %v1343 = vcombine.high %v1335, %v1335
  %v1344 = vcombine.high %v1342, %v1342
  %v1345 = vcombine.high %v39, %v39
  %v1347 = vunpack.c.l.s4 1983009808
  %v1348 = vunpack.c.0.s8 %v1347
  %v1349 = vlaneseq
  %v1350 = vshrl.u32 %v1349, 7
  %v1351 = vsub.s32 %v1348, %v1350
  %v1352 = vrot.slane %v39, %v1351
  %v1354 = vunpack.c.l.s4 1983009808
  %v1355 = vunpack.c.0.s8 %v1354
  %v1356 = vlaneseq
  %v1357 = vshrl.u32 %v1356, 7
  %v1358 = vsub.s32 %v1355, %v1357
  %v1359 = vrot.slane %v1345, %v1358
  %v1360 = vcombine.high %v1352, %v1352
  %v1361 = vcombine.high %v1359, %v1359
  %1426 = vmatprep.subr.mxu0 0.0
  %1427 = vmatpush1.msra.mxu0 %v40
  %1428 = vmatprep.subr.mxu0 0.0
  %1429 = vmatpush1.msra.mxu0 %v41
  %1430 = vmatprep.subr.mxu0 0.0
  %1431 = vmatpush1.msra.mxu0 %v42
  %1432 = vmatprep.subr.mxu0 0.0
  %1433 = vmatpush1.msra.mxu0 %v43
  %1434 = vmatprep.subr.mxu0 0.0
  %1435 = vmatpush1.msra.mxu0 %v44
  %1436 = vmatprep.subr.mxu0 0.0
  %1437 = vmatpush1.msra.mxu0 %v45
  %1438 = vmatprep.subr.mxu0 0.0
  %1439 = vmatpush1.msra.mxu0 %v46
  %1440 = vmatprep.subr.mxu0 0.0
  %1441 = vmatpush1.msra.mxu0 %v47
  %1442 = vmatprep.subr.mxu0 0.0
  %1443 = vmatpush1.msra.mxu0 %v48
  %1444 = vmatprep.subr.mxu0 0.0
  %1445 = vmatpush1.msra.mxu0 %v49
  %1446 = vmatprep.subr.mxu0 0.0
  %1447 = vmatpush1.msra.mxu0 %v50
  %1448 = vmatprep.subr.mxu0 0.0
  %1449 = vmatpush1.msra.mxu0 %v51
  %1450 = vmatprep.subr.mxu0 0.0
  %1451 = vmatpush1.msra.mxu0 %v52
  %1452 = vmatprep.subr.mxu0 0.0
  %1453 = vmatpush1.msra.mxu0 %v53
  %1454 = vmatprep.subr.mxu0 0.0
  %1455 = vmatpush1.msra.mxu0 %v54
  %1456 = vmatprep.subr.mxu0 0.0
  %1457 = vmatpush1.msra.mxu0 %v55
  %1458 = vmatprep.subr.mxu0 0.0
  %1459 = vmatpush1.msra.mxu0 %v56
  %1460 = vmatprep.subr.mxu0 0.0
  %1461 = vmatpush1.msra.mxu0 %v57
  %1462 = vmatprep.subr.mxu0 0.0
  %1463 = vmatpush1.msra.mxu0 %v58
  %1464 = vmatprep.subr.mxu0 0.0
  %1465 = vmatpush1.msra.mxu0 %v59
  %1466 = vmatprep.subr.mxu0 0.0
  %1467 = vmatpush1.msra.mxu0 %v60
  %1468 = vmatprep.subr.mxu0 0.0
  %1469 = vmatpush1.msra.mxu0 %v61
  %1470 = vmatprep.subr.mxu0 0.0
  %1471 = vmatpush1.msra.mxu0 %v62
  %1472 = vmatprep.subr.mxu0 0.0
  %1473 = vmatpush1.msra.mxu0 %v63
  %1474 = vmatprep.subr.mxu0 0.0
  %1475 = vmatpush1.msra.mxu0 %v64
  %1476 = vmatprep.subr.mxu0 0.0
  %1477 = vmatpush1.msra.mxu0 %v65
  %1478 = vmatprep.subr.mxu0 0.0
  %1479 = vmatpush1.msra.mxu0 %v66
  %1480 = vmatprep.subr.mxu0 0.0
  %1481 = vmatpush1.msra.mxu0 %v67
  %1482 = vmatprep.subr.mxu0 0.0
  %1483 = vmatpush1.msra.mxu0 %v68
  %1484 = vmatprep.subr.mxu0 0.0
  %1485 = vmatpush1.msra.mxu0 %v69
  %1486 = vmatprep.subr.mxu0 0.0
  %1487 = vmatpush1.msra.mxu0 %v70
  %1488 = vmatprep.subr.mxu0 0.0
  %1489 = vmatpush1.msra.mxu0 %v71
  %1490 = vmatprep.mubr.f32.mxu0 %v1105
  %1491 = vmatmul.mubr.f32.gmra.mrb[0].mxu0 %v1097
  %v1492 = vpop.f32.mrb[0].mxu0
  %v1493 = vadd.f32 %v1072, %v1492
  %v1494 = vpop.f32.mrb[0].mxu0
  %1495 = vdwg.mxu0
  %1496 = vmatprep.subr.mxu0 0.0
  %1497 = vmatpush1.msra.mxu0 %v72
  %1498 = vmatprep.subr.mxu0 0.0
  %1499 = vmatpush1.msra.mxu0 %v73
  %1500 = vmatprep.subr.mxu0 0.0
  %1501 = vmatpush1.msra.mxu0 %v74
  %1502 = vmatprep.subr.mxu0 0.0
  %1503 = vmatpush1.msra.mxu0 %v75
  %1504 = vmatprep.subr.mxu0 0.0
  %1505 = vmatpush1.msra.mxu0 %v76
  %1506 = vmatprep.subr.mxu0 0.0
  %1507 = vmatpush1.msra.mxu0 %v77
  %1508 = vmatprep.subr.mxu0 0.0
  %1509 = vmatpush1.msra.mxu0 %v78
  %1510 = vmatprep.subr.mxu0 0.0
  %1511 = vmatpush1.msra.mxu0 %v79
  %1512 = vmatprep.subr.mxu0 0.0
  %1513 = vmatpush1.msra.mxu0 %v80
  %1514 = vmatprep.subr.mxu0 0.0
  %1515 = vmatpush1.msra.mxu0 %v81
  %1516 = vmatprep.subr.mxu0 0.0
  %1517 = vmatpush1.msra.mxu0 %v82
  %1518 = vmatprep.subr.mxu0 0.0
  %1519 = vmatpush1.msra.mxu0 %v83
  %1520 = vmatprep.subr.mxu0 0.0
  %1521 = vmatpush1.msra.mxu0 %v84
  %1522 = vmatprep.subr.mxu0 0.0
  %1523 = vmatpush1.msra.mxu0 %v85
  %1524 = vmatprep.subr.mxu0 0.0
  %1525 = vmatpush1.msra.mxu0 %v86
  %1526 = vmatprep.subr.mxu0 0.0
  %1527 = vmatpush1.msra.mxu0 %v87
  %1528 = vmatprep.subr.mxu0 0.0
  %1529 = vmatpush1.msra.mxu0 %v88
  %1530 = vmatprep.subr.mxu0 0.0
  %1531 = vmatpush1.msra.mxu0 %v89
  %1532 = vmatprep.subr.mxu0 0.0
  %1533 = vmatpush1.msra.mxu0 %v90
  %1534 = vmatprep.subr.mxu0 0.0
  %1535 = vmatpush1.msra.mxu0 %v91
  %1536 = vmatprep.subr.mxu0 0.0
  %1537 = vmatpush1.msra.mxu0 %v92
  %1538 = vmatprep.subr.mxu0 0.0
  %1539 = vmatpush1.msra.mxu0 %v93
  %1540 = vmatprep.subr.mxu0 0.0
  %1541 = vmatpush1.msra.mxu0 %v94
  %1542 = vmatprep.subr.mxu0 0.0
  %1543 = vmatpush1.msra.mxu0 %v95
  %1544 = vmatprep.subr.mxu0 0.0
  %1545 = vmatpush1.msra.mxu0 %v96
  %1546 = vmatprep.subr.mxu0 0.0
  %1547 = vmatpush1.msra.mxu0 %v97
  %1548 = vmatprep.subr.mxu0 0.0
  %1549 = vmatpush1.msra.mxu0 %v98
  %1550 = vmatprep.subr.mxu0 0.0
  %1551 = vmatpush1.msra.mxu0 %v99
  %1552 = vmatprep.subr.mxu0 0.0
  %1553 = vmatpush1.msra.mxu0 %v100
  %1554 = vmatprep.subr.mxu0 0.0
  %1555 = vmatpush1.msra.mxu0 %v101
  %1556 = vmatprep.subr.mxu0 0.0
  %1557 = vmatpush1.msra.mxu0 %v102
  %1558 = vmatprep.subr.mxu0 0.0
  %1559 = vmatpush1.msra.mxu0 %v103
  %1560 = vmatprep.mubr.f32.mxu0 %v1106
  %1561 = vmatmul.mubr.f32.gmra.mrb[0].mxu0 %v1104
  %v1562 = vpop.f32.mrb[0].mxu0
  %v1563 = vadd.f32 %v1493, %v1562
  %v1564 = vpop.f32.mrb[0].mxu0
  %1565 = vdwg.mxu0
  %1566 = vmatprep.subr.mxu0 0.0
  %1567 = vmatpush1.msra.mxu0 %v104
  %1568 = vmatprep.subr.mxu0 0.0
  %1569 = vmatpush1.msra.mxu0 %v105
  %1570 = vmatprep.subr.mxu0 0.0
  %1571 = vmatpush1.msra.mxu0 %v106
  %1572 = vmatprep.subr.mxu0 0.0
  %1573 = vmatpush1.msra.mxu0 %v107
  %1574 = vmatprep.subr.mxu0 0.0
  %1575 = vmatpush1.msra.mxu0 %v108
  %1576 = vmatprep.subr.mxu0 0.0
  %1577 = vmatpush1.msra.mxu0 %v109
  %1578 = vmatprep.subr.mxu0 0.0
  %1579 = vmatpush1.msra.mxu0 %v110
  %1580 = vmatprep.subr.mxu0 0.0
  %1581 = vmatpush1.msra.mxu0 %v111
  %1582 = vmatprep.subr.mxu0 0.0
  %1583 = vmatpush1.msra.mxu0 %v112
  %1584 = vmatprep.subr.mxu0 0.0
  %1585 = vmatpush1.msra.mxu0 %v113
  %1586 = vmatprep.subr.mxu0 0.0
  %1587 = vmatpush1.msra.mxu0 %v114
  %1588 = vmatprep.subr.mxu0 0.0
  %1589 = vmatpush1.msra.mxu0 %v115
  %1590 = vmatprep.subr.mxu0 0.0
  %1591 = vmatpush1.msra.mxu0 %v116
  %1592 = vmatprep.subr.mxu0 0.0
  %1593 = vmatpush1.msra.mxu0 %v117
  %1594 = vmatprep.subr.mxu0 0.0
  %1595 = vmatpush1.msra.mxu0 %v118
  %1596 = vmatprep.subr.mxu0 0.0
  %1597 = vmatpush1.msra.mxu0 %v119
  %1598 = vmatprep.subr.mxu0 0.0
  %1599 = vmatpush1.msra.mxu0 %v120
  %1600 = vmatprep.subr.mxu0 0.0
  %1601 = vmatpush1.msra.mxu0 %v121
  %1602 = vmatprep.subr.mxu0 0.0
  %1603 = vmatpush1.msra.mxu0 %v122
  %1604 = vmatprep.subr.mxu0 0.0
  %1605 = vmatpush1.msra.mxu0 %v123
  %1606 = vmatprep.subr.mxu0 0.0
  %1607 = vmatpush1.msra.mxu0 %v124
  %1608 = vmatprep.subr.mxu0 0.0
  %1609 = vmatpush1.msra.mxu0 %v125
  %1610 = vmatprep.subr.mxu0 0.0
  %1611 = vmatpush1.msra.mxu0 %v126
  %1612 = vmatprep.subr.mxu0 0.0
  %1613 = vmatpush1.msra.mxu0 %v127
  %1614 = vmatprep.subr.mxu0 0.0
  %1615 = vmatpush1.msra.mxu0 %v128
  %1616 = vmatprep.subr.mxu0 0.0
  %1617 = vmatpush1.msra.mxu0 %v129
  %1618 = vmatprep.subr.mxu0 0.0
  %1619 = vmatpush1.msra.mxu0 %v130
  %1620 = vmatprep.subr.mxu0 0.0
  %1621 = vmatpush1.msra.mxu0 %v131
  %1622 = vmatprep.subr.mxu0 0.0
  %1623 = vmatpush1.msra.mxu0 %v132
  %1624 = vmatprep.subr.mxu0 0.0
  %1625 = vmatpush1.msra.mxu0 %v133
  %1626 = vmatprep.subr.mxu0 0.0
  %1627 = vmatpush1.msra.mxu0 %v134
  %1628 = vmatprep.subr.mxu0 0.0
  %1629 = vmatpush1.msra.mxu0 %v135
  %1630 = vmatprep.mubr.f32.mxu0 %v1122
  %1631 = vmatmul.mubr.f32.gmra.mrb[0].mxu0 %v1114
  %v1632 = vpop.f32.mrb[0].mxu0
  %v1633 = vadd.f32 %v1563, %v1632
  %v1634 = vpop.f32.mrb[0].mxu0
  %1635 = vdwg.mxu0
  %1636 = vmatprep.subr.mxu0 0.0
  %1637 = vmatpush1.msra.mxu0 %v136
  %1638 = vmatprep.subr.mxu0 0.0
  %1639 = vmatpush1.msra.mxu0 %v137
  %1640 = vmatprep.subr.mxu0 0.0
  %1641 = vmatpush1.msra.mxu0 %v138
  %1642 = vmatprep.subr.mxu0 0.0
  %1643 = vmatpush1.msra.mxu0 %v139
  %1644 = vmatprep.subr.mxu0 0.0
  %1645 = vmatpush1.msra.mxu0 %v140
  %1646 = vmatprep.subr.mxu0 0.0
  %1647 = vmatpush1.msra.mxu0 %v141
  %1648 = vmatprep.subr.mxu0 0.0
  %1649 = vmatpush1.msra.mxu0 %v142
  %1650 = vmatprep.subr.mxu0 0.0
  %1651 = vmatpush1.msra.mxu0 %v143
  %1652 = vmatprep.subr.mxu0 0.0
  %1653 = vmatpush1.msra.mxu0 %v144
  %1654 = vmatprep.subr.mxu0 0.0
  %1655 = vmatpush1.msra.mxu0 %v145
  %1656 = vmatprep.subr.mxu0 0.0
  %1657 = vmatpush1.msra.mxu0 %v146
  %1658 = vmatprep.subr.mxu0 0.0
  %1659 = vmatpush1.msra.mxu0 %v147
  %1660 = vmatprep.subr.mxu0 0.0
  %1661 = vmatpush1.msra.mxu0 %v148
  %1662 = vmatprep.subr.mxu0 0.0
  %1663 = vmatpush1.msra.mxu0 %v149
  %1664 = vmatprep.subr.mxu0 0.0
  %1665 = vmatpush1.msra.mxu0 %v150
  %1666 = vmatprep.subr.mxu0 0.0
  %1667 = vmatpush1.msra.mxu0 %v151
  %1668 = vmatprep.subr.mxu0 0.0
  %1669 = vmatpush1.msra.mxu0 %v152
  %1670 = vmatprep.subr.mxu0 0.0
  %1671 = vmatpush1.msra.mxu0 %v153
  %1672 = vmatprep.subr.mxu0 0.0
  %1673 = vmatpush1.msra.mxu0 %v154
  %1674 = vmatprep.subr.mxu0 0.0
  %1675 = vmatpush1.msra.mxu0 %v155
  %1676 = vmatprep.subr.mxu0 0.0
  %1677 = vmatpush1.msra.mxu0 %v156
  %1678 = vmatprep.subr.mxu0 0.0
  %1679 = vmatpush1.msra.mxu0 %v157
  %1680 = vmatprep.subr.mxu0 0.0
  %1681 = vmatpush1.msra.mxu0 %v158
  %1682 = vmatprep.subr.mxu0 0.0
  %1683 = vmatpush1.msra.mxu0 %v159
  %1684 = vmatprep.subr.mxu0 0.0
  %1685 = vmatpush1.msra.mxu0 %v160
  %1686 = vmatprep.subr.mxu0 0.0
  %1687 = vmatpush1.msra.mxu0 %v161
  %1688 = vmatprep.subr.mxu0 0.0
  %1689 = vmatpush1.msra.mxu0 %v162
  %1690 = vmatprep.subr.mxu0 0.0
  %1691 = vmatpush1.msra.mxu0 %v163
  %1692 = vmatprep.subr.mxu0 0.0
  %1693 = vmatpush1.msra.mxu0 %v164
  %1694 = vmatprep.subr.mxu0 0.0
  %1695 = vmatpush1.msra.mxu0 %v165
  %1696 = vmatprep.subr.mxu0 0.0
  %1697 = vmatpush1.msra.mxu0 %v166
  %1698 = vmatprep.subr.mxu0 0.0
  %1699 = vmatpush1.msra.mxu0 %v167
  %1700 = vmatprep.mubr.f32.mxu0 %v1123
  %1701 = vmatmul.mubr.f32.gmra.mrb[0].mxu0 %v1121
  %v1702 = vpop.f32.mrb[0].mxu0
  %v1703 = vadd.f32 %v1633, %v1702
  %v1704 = vpop.f32.mrb[0].mxu0
  %1705 = vdwg.mxu0
  %1706 = vmatprep.subr.mxu0 0.0
  %1707 = vmatpush1.msra.mxu0 %v168
  %1708 = vmatprep.subr.mxu0 0.0
  %1709 = vmatpush1.msra.mxu0 %v169
  %1710 = vmatprep.subr.mxu0 0.0
  %1711 = vmatpush1.msra.mxu0 %v170
  %1712 = vmatprep.subr.mxu0 0.0
  %1713 = vmatpush1.msra.mxu0 %v171
  %1714 = vmatprep.subr.mxu0 0.0
  %1715 = vmatpush1.msra.mxu0 %v172
  %1716 = vmatprep.subr.mxu0 0.0
  %1717 = vmatpush1.msra.mxu0 %v173
  %1718 = vmatprep.subr.mxu0 0.0
  %1719 = vmatpush1.msra.mxu0 %v174
  %1720 = vmatprep.subr.mxu0 0.0
  %1721 = vmatpush1.msra.mxu0 %v175
  %1722 = vmatprep.subr.mxu0 0.0
  %1723 = vmatpush1.msra.mxu0 %v176
  %1724 = vmatprep.subr.mxu0 0.0
  %1725 = vmatpush1.msra.mxu0 %v177
  %1726 = vmatprep.subr.mxu0 0.0
  %1727 = vmatpush1.msra.mxu0 %v178
  %1728 = vmatprep.subr.mxu0 0.0
  %1729 = vmatpush1.msra.mxu0 %v179
  %1730 = vmatprep.subr.mxu0 0.0
  %1731 = vmatpush1.msra.mxu0 %v180
  %1732 = vmatprep.subr.mxu0 0.0
  %1733 = vmatpush1.msra.mxu0 %v181
  %1734 = vmatprep.subr.mxu0 0.0
  %1735 = vmatpush1.msra.mxu0 %v182
  %1736 = vmatprep.subr.mxu0 0.0
  %1737 = vmatpush1.msra.mxu0 %v183
  %1738 = vmatprep.subr.mxu0 0.0
  %1739 = vmatpush1.msra.mxu0 %v184
  %1740 = vmatprep.subr.mxu0 0.0
  %1741 = vmatpush1.msra.mxu0 %v185
  %1742 = vmatprep.subr.mxu0 0.0
  %1743 = vmatpush1.msra.mxu0 %v186
  %1744 = vmatprep.subr.mxu0 0.0
  %1745 = vmatpush1.msra.mxu0 %v187
  %1746 = vmatprep.subr.mxu0 0.0
  %1747 = vmatpush1.msra.mxu0 %v188
  %1748 = vmatprep.subr.mxu0 0.0
  %1749 = vmatpush1.msra.mxu0 %v189
  %1750 = vmatprep.subr.mxu0 0.0
  %1751 = vmatpush1.msra.mxu0 %v190
  %1752 = vmatprep.subr.mxu0 0.0
  %1753 = vmatpush1.msra.mxu0 %v191
  %1754 = vmatprep.subr.mxu0 0.0
  %1755 = vmatpush1.msra.mxu0 %v192
  %1756 = vmatprep.subr.mxu0 0.0
  %1757 = vmatpush1.msra.mxu0 %v193
  %1758 = vmatprep.subr.mxu0 0.0
  %1759 = vmatpush1.msra.mxu0 %v194
  %1760 = vmatprep.subr.mxu0 0.0
  %1761 = vmatpush1.msra.mxu0 %v195
  %1762 = vmatprep.subr.mxu0 0.0
  %1763 = vmatpush1.msra.mxu0 %v196
  %1764 = vmatprep.subr.mxu0 0.0
  %1765 = vmatpush1.msra.mxu0 %v197
  %1766 = vmatprep.subr.mxu0 0.0
  %1767 = vmatpush1.msra.mxu0 %v198
  %1768 = vmatprep.subr.mxu0 0.0
  %1769 = vmatpush1.msra.mxu0 %v199
  %1770 = vmatprep.mubr.f32.mxu0 %v1139
  %1771 = vmatmul.mubr.f32.gmra.mrb[0].mxu0 %v1131
  %v1772 = vpop.f32.mrb[0].mxu0
  %v1773 = vadd.f32 %v1703, %v1772
  %v1774 = vpop.f32.mrb[0].mxu0
  %1775 = vdwg.mxu0
  %1776 = vmatprep.subr.mxu0 0.0
  %1777 = vmatpush1.msra.mxu0 %v200
  %1778 = vmatprep.subr.mxu0 0.0
  %1779 = vmatpush1.msra.mxu0 %v201
  %1780 = vmatprep.subr.mxu0 0.0
  %1781 = vmatpush1.msra.mxu0 %v202
  %1782 = vmatprep.subr.mxu0 0.0
  %1783 = vmatpush1.msra.mxu0 %v203
  %1784 = vmatprep.subr.mxu0 0.0
  %1785 = vmatpush1.msra.mxu0 %v204
  %1786 = vmatprep.subr.mxu0 0.0
  %1787 = vmatpush1.msra.mxu0 %v205
  %1788 = vmatprep.subr.mxu0 0.0
  %1789 = vmatpush1.msra.mxu0 %v206
  %1790 = vmatprep.subr.mxu0 0.0
  %1791 = vmatpush1.msra.mxu0 %v207
  %1792 = vmatprep.subr.mxu0 0.0
  %1793 = vmatpush1.msra.mxu0 %v208
  %1794 = vmatprep.subr.mxu0 0.0
  %1795 = vmatpush1.msra.mxu0 %v209
  %1796 = vmatprep.subr.mxu0 0.0
  %1797 = vmatpush1.msra.mxu0 %v210
  %1798 = vmatprep.subr.mxu0 0.0
  %1799 = vmatpush1.msra.mxu0 %v211
  %1800 = vmatprep.subr.mxu0 0.0
  %1801 = vmatpush1.msra.mxu0 %v212
  %1802 = vmatprep.subr.mxu0 0.0
  %1803 = vmatpush1.msra.mxu0 %v213
  %1804 = vmatprep.subr.mxu0 0.0
  %1805 = vmatpush1.msra.mxu0 %v214
  %1806 = vmatprep.subr.mxu0 0.0
  %1807 = vmatpush1.msra.mxu0 %v215
  %1808 = vmatprep.subr.mxu0 0.0
  %1809 = vmatpush1.msra.mxu0 %v216
  %1810 = vmatprep.subr.mxu0 0.0
  %1811 = vmatpush1.msra.mxu0 %v217
  %1812 = vmatprep.subr.mxu0 0.0
  %1813 = vmatpush1.msra.mxu0 %v218
  %1814 = vmatprep.subr.mxu0 0.0
  %1815 = vmatpush1.msra.mxu0 %v219
  %1816 = vmatprep.subr.mxu0 0.0
  %1817 = vmatpush1.msra.mxu0 %v220
  %1818 = vmatprep.subr.mxu0 0.0
  %1819 = vmatpush1.msra.mxu0 %v221
  %1820 = vmatprep.subr.mxu0 0.0
  %1821 = vmatpush1.msra.mxu0 %v222
  %1822 = vmatprep.subr.mxu0 0.0
  %1823 = vmatpush1.msra.mxu0 %v223
  %1824 = vmatprep.subr.mxu0 0.0
  %1825 = vmatpush1.msra.mxu0 %v224
  %1826 = vmatprep.subr.mxu0 0.0
  %1827 = vmatpush1.msra.mxu0 %v225
  %1828 = vmatprep.subr.mxu0 0.0
  %1829 = vmatpush1.msra.mxu0 %v226
  %1830 = vmatprep.subr.mxu0 0.0
  %1831 = vmatpush1.msra.mxu0 %v227
  %1832 = vmatprep.subr.mxu0 0.0
  %1833 = vmatpush1.msra.mxu0 %v228
  %1834 = vmatprep.subr.mxu0 0.0
  %1835 = vmatpush1.msra.mxu0 %v229
  %1836 = vmatprep.subr.mxu0 0.0
  %1837 = vmatpush1.msra.mxu0 %v230
  %1838 = vmatprep.subr.mxu0 0.0
  %1839 = vmatpush1.msra.mxu0 %v231
  %1840 = vmatprep.mubr.f32.mxu0 %v1140
  %1841 = vmatmul.mubr.f32.gmra.mrb[0].mxu0 %v1138
  %v1842 = vpop.f32.mrb[0].mxu0
  %v1843 = vadd.f32 %v1773, %v1842
  %v1844 = vpop.f32.mrb[0].mxu0
  %1845 = vdwg.mxu0
  %1846 = vmatprep.subr.mxu0 0.0
  %1847 = vmatpush1.msra.mxu0 %v232
  %1848 = vmatprep.subr.mxu0 0.0
  %1849 = vmatpush1.msra.mxu0 %v233
  %1850 = vmatprep.subr.mxu0 0.0
  %1851 = vmatpush1.msra.mxu0 %v234
  %1852 = vmatprep.subr.mxu0 0.0
  %1853 = vmatpush1.msra.mxu0 %v235
  %1854 = vmatprep.subr.mxu0 0.0
  %1855 = vmatpush1.msra.mxu0 %v236
  %1856 = vmatprep.subr.mxu0 0.0
  %1857 = vmatpush1.msra.mxu0 %v237
  %1858 = vmatprep.subr.mxu0 0.0
  %1859 = vmatpush1.msra.mxu0 %v238
  %1860 = vmatprep.subr.mxu0 0.0
  %1861 = vmatpush1.msra.mxu0 %v239
  %1862 = vmatprep.subr.mxu0 0.0
  %1863 = vmatpush1.msra.mxu0 %v240
  %1864 = vmatprep.subr.mxu0 0.0
  %1865 = vmatpush1.msra.mxu0 %v241
  %1866 = vmatprep.subr.mxu0 0.0
  %1867 = vmatpush1.msra.mxu0 %v242
  %1868 = vmatprep.subr.mxu0 0.0
  %1869 = vmatpush1.msra.mxu0 %v243
  %1870 = vmatprep.subr.mxu0 0.0
  %1871 = vmatpush1.msra.mxu0 %v244
  %1872 = vmatprep.subr.mxu0 0.0
  %1873 = vmatpush1.msra.mxu0 %v245
  %1874 = vmatprep.subr.mxu0 0.0
  %1875 = vmatpush1.msra.mxu0 %v246
  %1876 = vmatprep.subr.mxu0 0.0
  %1877 = vmatpush1.msra.mxu0 %v247
  %1878 = vmatprep.subr.mxu0 0.0
  %1879 = vmatpush1.msra.mxu0 %v248
  %1880 = vmatprep.subr.mxu0 0.0
  %1881 = vmatpush1.msra.mxu0 %v249
  %1882 = vmatprep.subr.mxu0 0.0
  %1883 = vmatpush1.msra.mxu0 %v250
  %1884 = vmatprep.subr.mxu0 0.0
  %1885 = vmatpush1.msra.mxu0 %v251
  %1886 = vmatprep.subr.mxu0 0.0
  %1887 = vmatpush1.msra.mxu0 %v252
  %1888 = vmatprep.subr.mxu0 0.0
  %1889 = vmatpush1.msra.mxu0 %v253
  %1890 = vmatprep.subr.mxu0 0.0
  %1891 = vmatpush1.msra.mxu0 %v254
  %1892 = vmatprep.subr.mxu0 0.0
  %1893 = vmatpush1.msra.mxu0 %v255
  %1894 = vmatprep.subr.mxu0 0.0
  %1895 = vmatpush1.msra.mxu0 %v256
  %1896 = vmatprep.subr.mxu0 0.0
  %1897 = vmatpush1.msra.mxu0 %v257
  %1898 = vmatprep.subr.mxu0 0.0
  %1899 = vmatpush1.msra.mxu0 %v258
  %1900 = vmatprep.subr.mxu0 0.0
  %1901 = vmatpush1.msra.mxu0 %v259
  %1902 = vmatprep.subr.mxu0 0.0
  %1903 = vmatpush1.msra.mxu0 %v260
  %1904 = vmatprep.subr.mxu0 0.0
  %1905 = vmatpush1.msra.mxu0 %v261
  %1906 = vmatprep.subr.mxu0 0.0
  %1907 = vmatpush1.msra.mxu0 %v262
  %1908 = vmatprep.subr.mxu0 0.0
  %1909 = vmatpush1.msra.mxu0 %v263
  %1910 = vmatprep.mubr.f32.mxu0 %v1156
  %1911 = vmatmul.mubr.f32.gmra.mrb[0].mxu0 %v1148
  %v1912 = vpop.f32.mrb[0].mxu0
  %v1913 = vadd.f32 %v1843, %v1912
  %v1914 = vpop.f32.mrb[0].mxu0
  %1915 = vdwg.mxu0
  %1916 = vmatprep.subr.mxu0 0.0
  %1917 = vmatpush1.msra.mxu0 %v264
  %1918 = vmatprep.subr.mxu0 0.0
  %1919 = vmatpush1.msra.mxu0 %v265
  %1920 = vmatprep.subr.mxu0 0.0
  %1921 = vmatpush1.msra.mxu0 %v266
  %1922 = vmatprep.subr.mxu0 0.0
  %1923 = vmatpush1.msra.mxu0 %v267
  %1924 = vmatprep.subr.mxu0 0.0
  %1925 = vmatpush1.msra.mxu0 %v268
  %1926 = vmatprep.subr.mxu0 0.0
  %1927 = vmatpush1.msra.mxu0 %v269
  %1928 = vmatprep.subr.mxu0 0.0
  %1929 = vmatpush1.msra.mxu0 %v270
  %1930 = vmatprep.subr.mxu0 0.0
  %1931 = vmatpush1.msra.mxu0 %v271
  %1932 = vmatprep.subr.mxu0 0.0
  %1933 = vmatpush1.msra.mxu0 %v272
  %1934 = vmatprep.subr.mxu0 0.0
  %1935 = vmatpush1.msra.mxu0 %v273
  %1936 = vmatprep.subr.mxu0 0.0
  %1937 = vmatpush1.msra.mxu0 %v274
  %1938 = vmatprep.subr.mxu0 0.0
  %1939 = vmatpush1.msra.mxu0 %v275
  %1940 = vmatprep.subr.mxu0 0.0
  %1941 = vmatpush1.msra.mxu0 %v276
  %1942 = vmatprep.subr.mxu0 0.0
  %1943 = vmatpush1.msra.mxu0 %v277
  %1944 = vmatprep.subr.mxu0 0.0
  %1945 = vmatpush1.msra.mxu0 %v278
  %1946 = vmatprep.subr.mxu0 0.0
  %1947 = vmatpush1.msra.mxu0 %v279
  %1948 = vmatprep.subr.mxu0 0.0
  %1949 = vmatpush1.msra.mxu0 %v280
  %1950 = vmatprep.subr.mxu0 0.0
  %1951 = vmatpush1.msra.mxu0 %v281
  %1952 = vmatprep.subr.mxu0 0.0
  %1953 = vmatpush1.msra.mxu0 %v282
  %1954 = vmatprep.subr.mxu0 0.0
  %1955 = vmatpush1.msra.mxu0 %v283
  %1956 = vmatprep.subr.mxu0 0.0
  %1957 = vmatpush1.msra.mxu0 %v284
  %1958 = vmatprep.subr.mxu0 0.0
  %1959 = vmatpush1.msra.mxu0 %v285
  %1960 = vmatprep.subr.mxu0 0.0
  %1961 = vmatpush1.msra.mxu0 %v286
  %1962 = vmatprep.subr.mxu0 0.0
  %1963 = vmatpush1.msra.mxu0 %v287
  %1964 = vmatprep.subr.mxu0 0.0
  %1965 = vmatpush1.msra.mxu0 %v288
  %1966 = vmatprep.subr.mxu0 0.0
  %1967 = vmatpush1.msra.mxu0 %v289
  %1968 = vmatprep.subr.mxu0 0.0
  %1969 = vmatpush1.msra.mxu0 %v290
  %1970 = vmatprep.subr.mxu0 0.0
  %1971 = vmatpush1.msra.mxu0 %v291
  %1972 = vmatprep.subr.mxu0 0.0
  %1973 = vmatpush1.msra.mxu0 %v292
  %1974 = vmatprep.subr.mxu0 0.0
  %1975 = vmatpush1.msra.mxu0 %v293
  %1976 = vmatprep.subr.mxu0 0.0
  %1977 = vmatpush1.msra.mxu0 %v294
  %1978 = vmatprep.subr.mxu0 0.0
  %1979 = vmatpush1.msra.mxu0 %v295
  %1980 = vmatprep.mubr.f32.mxu0 %v1157
  %1981 = vmatmul.mubr.f32.gmra.mrb[0].mxu0 %v1155
  %v1982 = vpop.f32.mrb[0].mxu0
  %v1983 = vadd.f32 %v1913, %v1982
  %v1984 = vpop.f32.mrb[0].mxu0
  %1985 = vdwg.mxu0
  %1986 = vmatprep.subr.mxu0 0.0
  %1987 = vmatpush1.msra.mxu0 %v296
  %1988 = vmatprep.subr.mxu0 0.0
  %1989 = vmatpush1.msra.mxu0 %v297
  %1990 = vmatprep.subr.mxu0 0.0
  %1991 = vmatpush1.msra.mxu0 %v298
  %1992 = vmatprep.subr.mxu0 0.0
  %1993 = vmatpush1.msra.mxu0 %v299
  %1994 = vmatprep.subr.mxu0 0.0
  %1995 = vmatpush1.msra.mxu0 %v300
  %1996 = vmatprep.subr.mxu0 0.0
  %1997 = vmatpush1.msra.mxu0 %v301
  %1998 = vmatprep.subr.mxu0 0.0
  %1999 = vmatpush1.msra.mxu0 %v302
  %2000 = vmatprep.subr.mxu0 0.0
  %2001 = vmatpush1.msra.mxu0 %v303
  %2002 = vmatprep.subr.mxu0 0.0
  %2003 = vmatpush1.msra.mxu0 %v304
  %2004 = vmatprep.subr.mxu0 0.0
  %2005 = vmatpush1.msra.mxu0 %v305
  %2006 = vmatprep.subr.mxu0 0.0
  %2007 = vmatpush1.msra.mxu0 %v306
  %2008 = vmatprep.subr.mxu0 0.0
  %2009 = vmatpush1.msra.mxu0 %v307
  %2010 = vmatprep.subr.mxu0 0.0
  %2011 = vmatpush1.msra.mxu0 %v308
  %2012 = vmatprep.subr.mxu0 0.0
  %2013 = vmatpush1.msra.mxu0 %v309
  %2014 = vmatprep.subr.mxu0 0.0
  %2015 = vmatpush1.msra.mxu0 %v310
  %2016 = vmatprep.subr.mxu0 0.0
  %2017 = vmatpush1.msra.mxu0 %v311
  %2018 = vmatprep.subr.mxu0 0.0
  %2019 = vmatpush1.msra.mxu0 %v312
  %2020 = vmatprep.subr.mxu0 0.0
  %2021 = vmatpush1.msra.mxu0 %v313
  %2022 = vmatprep.subr.mxu0 0.0
  %2023 = vmatpush1.msra.mxu0 %v314
  %2024 = vmatprep.subr.mxu0 0.0
  %2025 = vmatpush1.msra.mxu0 %v315
  %2026 = vmatprep.subr.mxu0 0.0
  %2027 = vmatpush1.msra.mxu0 %v316
  %2028 = vmatprep.subr.mxu0 0.0
  %2029 = vmatpush1.msra.mxu0 %v317
  %2030 = vmatprep.subr.mxu0 0.0
  %2031 = vmatpush1.msra.mxu0 %v318
  %2032 = vmatprep.subr.mxu0 0.0
  %2033 = vmatpush1.msra.mxu0 %v319
  %2034 = vmatprep.subr.mxu0 0.0
  %2035 = vmatpush1.msra.mxu0 %v320
  %2036 = vmatprep.subr.mxu0 0.0
  %2037 = vmatpush1.msra.mxu0 %v321
  %2038 = vmatprep.subr.mxu0 0.0
  %2039 = vmatpush1.msra.mxu0 %v322
  %2040 = vmatprep.subr.mxu0 0.0
  %2041 = vmatpush1.msra.mxu0 %v323
  %2042 = vmatprep.subr.mxu0 0.0
  %2043 = vmatpush1.msra.mxu0 %v324
  %2044 = vmatprep.subr.mxu0 0.0
  %2045 = vmatpush1.msra.mxu0 %v325
  %2046 = vmatprep.subr.mxu0 0.0
  %2047 = vmatpush1.msra.mxu0 %v326
  %2048 = vmatprep.subr.mxu0 0.0
  %2049 = vmatpush1.msra.mxu0 %v327
  %2050 = vmatprep.mubr.f32.mxu0 %v1173
  %2051 = vmatmul.mubr.f32.gmra.mrb[0].mxu0 %v1165
  %v2052 = vpop.f32.mrb[0].mxu0
  %v2053 = vadd.f32 %v1983, %v2052
  %v2054 = vpop.f32.mrb[0].mxu0
  %2055 = vdwg.mxu0
  %2056 = vmatprep.subr.mxu0 0.0
  %2057 = vmatpush1.msra.mxu0 %v328
  %2058 = vmatprep.subr.mxu0 0.0
  %2059 = vmatpush1.msra.mxu0 %v329
  %2060 = vmatprep.subr.mxu0 0.0
  %2061 = vmatpush1.msra.mxu0 %v330
  %2062 = vmatprep.subr.mxu0 0.0
  %2063 = vmatpush1.msra.mxu0 %v331
  %2064 = vmatprep.subr.mxu0 0.0
  %2065 = vmatpush1.msra.mxu0 %v332
  %2066 = vmatprep.subr.mxu0 0.0
  %2067 = vmatpush1.msra.mxu0 %v333
  %2068 = vmatprep.subr.mxu0 0.0
  %2069 = vmatpush1.msra.mxu0 %v334
  %2070 = vmatprep.subr.mxu0 0.0
  %2071 = vmatpush1.msra.mxu0 %v335
  %2072 = vmatprep.subr.mxu0 0.0
  %2073 = vmatpush1.msra.mxu0 %v336
  %2074 = vmatprep.subr.mxu0 0.0
  %2075 = vmatpush1.msra.mxu0 %v337
  %2076 = vmatprep.subr.mxu0 0.0
  %2077 = vmatpush1.msra.mxu0 %v338
  %2078 = vmatprep.subr.mxu0 0.0
  %2079 = vmatpush1.msra.mxu0 %v339
  %2080 = vmatprep.subr.mxu0 0.0
  %2081 = vmatpush1.msra.mxu0 %v340
  %2082 = vmatprep.subr.mxu0 0.0
  %2083 = vmatpush1.msra.mxu0 %v341
  %2084 = vmatprep.subr.mxu0 0.0
  %2085 = vmatpush1.msra.mxu0 %v342
  %2086 = vmatprep.subr.mxu0 0.0
  %2087 = vmatpush1.msra.mxu0 %v343
  %2088 = vmatprep.subr.mxu0 0.0
  %2089 = vmatpush1.msra.mxu0 %v344
  %2090 = vmatprep.subr.mxu0 0.0
  %2091 = vmatpush1.msra.mxu0 %v345
  %2092 = vmatprep.subr.mxu0 0.0
  %2093 = vmatpush1.msra.mxu0 %v346
  %2094 = vmatprep.subr.mxu0 0.0
  %2095 = vmatpush1.msra.mxu0 %v347
  %2096 = vmatprep.subr.mxu0 0.0
  %2097 = vmatpush1.msra.mxu0 %v348
  %2098 = vmatprep.subr.mxu0 0.0
  %2099 = vmatpush1.msra.mxu0 %v349
  %2100 = vmatprep.subr.mxu0 0.0
  %2101 = vmatpush1.msra.mxu0 %v350
  %2102 = vmatprep.subr.mxu0 0.0
  %2103 = vmatpush1.msra.mxu0 %v351
  %2104 = vmatprep.subr.mxu0 0.0
  %2105 = vmatpush1.msra.mxu0 %v352
  %2106 = vmatprep.subr.mxu0 0.0
  %2107 = vmatpush1.msra.mxu0 %v353
  %2108 = vmatprep.subr.mxu0 0.0
  %2109 = vmatpush1.msra.mxu0 %v354
  %2110 = vmatprep.subr.mxu0 0.0
  %2111 = vmatpush1.msra.mxu0 %v355
  %2112 = vmatprep.subr.mxu0 0.0
  %2113 = vmatpush1.msra.mxu0 %v356
  %2114 = vmatprep.subr.mxu0 0.0
  %2115 = vmatpush1.msra.mxu0 %v357
  %2116 = vmatprep.subr.mxu0 0.0
  %2117 = vmatpush1.msra.mxu0 %v358
  %2118 = vmatprep.subr.mxu0 0.0
  %2119 = vmatpush1.msra.mxu0 %v359
  %2120 = vmatprep.mubr.f32.mxu0 %v1174
  %2121 = vmatmul.mubr.f32.gmra.mrb[0].mxu0 %v1172
  %v2122 = vpop.f32.mrb[0].mxu0
  %v2123 = vadd.f32 %v2053, %v2122
  %v2124 = vpop.f32.mrb[0].mxu0
  %2125 = vdwg.mxu0
  %2126 = vmatprep.subr.mxu0 0.0
  %2127 = vmatpush1.msra.mxu0 %v360
  %2128 = vmatprep.subr.mxu0 0.0
  %2129 = vmatpush1.msra.mxu0 %v361
  %2130 = vmatprep.subr.mxu0 0.0
  %2131 = vmatpush1.msra.mxu0 %v362
  %2132 = vmatprep.subr.mxu0 0.0
  %2133 = vmatpush1.msra.mxu0 %v363
  %2134 = vmatprep.subr.mxu0 0.0
  %2135 = vmatpush1.msra.mxu0 %v364
  %2136 = vmatprep.subr.mxu0 0.0
  %2137 = vmatpush1.msra.mxu0 %v365
  %2138 = vmatprep.subr.mxu0 0.0
  %2139 = vmatpush1.msra.mxu0 %v366
  %2140 = vmatprep.subr.mxu0 0.0
  %2141 = vmatpush1.msra.mxu0 %v367
  %2142 = vmatprep.subr.mxu0 0.0
  %2143 = vmatpush1.msra.mxu0 %v368
  %2144 = vmatprep.subr.mxu0 0.0
  %2145 = vmatpush1.msra.mxu0 %v369
  %2146 = vmatprep.subr.mxu0 0.0
  %2147 = vmatpush1.msra.mxu0 %v370
  %2148 = vmatprep.subr.mxu0 0.0
  %2149 = vmatpush1.msra.mxu0 %v371
  %2150 = vmatprep.subr.mxu0 0.0
  %2151 = vmatpush1.msra.mxu0 %v372
  %2152 = vmatprep.subr.mxu0 0.0
  %2153 = vmatpush1.msra.mxu0 %v373
  %2154 = vmatprep.subr.mxu0 0.0
  %2155 = vmatpush1.msra.mxu0 %v374
  %2156 = vmatprep.subr.mxu0 0.0
  %2157 = vmatpush1.msra.mxu0 %v375
  %2158 = vmatprep.subr.mxu0 0.0
  %2159 = vmatpush1.msra.mxu0 %v376
  %2160 = vmatprep.subr.mxu0 0.0
  %2161 = vmatpush1.msra.mxu0 %v377
  %2162 = vmatprep.subr.mxu0 0.0
  %2163 = vmatpush1.msra.mxu0 %v378
  %2164 = vmatprep.subr.mxu0 0.0
  %2165 = vmatpush1.msra.mxu0 %v379
  %2166 = vmatprep.subr.mxu0 0.0
  %2167 = vmatpush1.msra.mxu0 %v380
  %2168 = vmatprep.subr.mxu0 0.0
  %2169 = vmatpush1.msra.mxu0 %v381
  %2170 = vmatprep.subr.mxu0 0.0
  %2171 = vmatpush1.msra.mxu0 %v382
  %2172 = vmatprep.subr.mxu0 0.0
  %2173 = vmatpush1.msra.mxu0 %v383
  %2174 = vmatprep.subr.mxu0 0.0
  %2175 = vmatpush1.msra.mxu0 %v384
  %2176 = vmatprep.subr.mxu0 0.0
  %2177 = vmatpush1.msra.mxu0 %v385
  %2178 = vmatprep.subr.mxu0 0.0
  %2179 = vmatpush1.msra.mxu0 %v386
  %2180 = vmatprep.subr.mxu0 0.0
  %2181 = vmatpush1.msra.mxu0 %v387
  %2182 = vmatprep.subr.mxu0 0.0
  %2183 = vmatpush1.msra.mxu0 %v388
  %2184 = vmatprep.subr.mxu0 0.0
  %2185 = vmatpush1.msra.mxu0 %v389
  %2186 = vmatprep.subr.mxu0 0.0
  %2187 = vmatpush1.msra.mxu0 %v390
  %2188 = vmatprep.subr.mxu0 0.0
  %2189 = vmatpush1.msra.mxu0 %v391
  %2190 = vmatprep.mubr.f32.mxu0 %v1190
  %2191 = vmatmul.mubr.f32.gmra.mrb[0].mxu0 %v1182
  %v2192 = vpop.f32.mrb[0].mxu0
  %v2193 = vadd.f32 %v2123, %v2192
  %v2194 = vpop.f32.mrb[0].mxu0
  %2195 = vdwg.mxu0
  %2196 = vmatprep.subr.mxu0 0.0
  %2197 = vmatpush1.msra.mxu0 %v392
  %2198 = vmatprep.subr.mxu0 0.0
  %2199 = vmatpush1.msra.mxu0 %v393
  %2200 = vmatprep.subr.mxu0 0.0
  %2201 = vmatpush1.msra.mxu0 %v394
  %2202 = vmatprep.subr.mxu0 0.0
  %2203 = vmatpush1.msra.mxu0 %v395
  %2204 = vmatprep.subr.mxu0 0.0
  %2205 = vmatpush1.msra.mxu0 %v396
  %2206 = vmatprep.subr.mxu0 0.0
  %2207 = vmatpush1.msra.mxu0 %v397
  %2208 = vmatprep.subr.mxu0 0.0
  %2209 = vmatpush1.msra.mxu0 %v398
  %2210 = vmatprep.subr.mxu0 0.0
  %2211 = vmatpush1.msra.mxu0 %v399
  %2212 = vmatprep.subr.mxu0 0.0
  %2213 = vmatpush1.msra.mxu0 %v400
  %2214 = vmatprep.subr.mxu0 0.0
  %2215 = vmatpush1.msra.mxu0 %v401
  %2216 = vmatprep.subr.mxu0 0.0
  %2217 = vmatpush1.msra.mxu0 %v402
  %2218 = vmatprep.subr.mxu0 0.0
  %2219 = vmatpush1.msra.mxu0 %v403
  %2220 = vmatprep.subr.mxu0 0.0
  %2221 = vmatpush1.msra.mxu0 %v404
  %2222 = vmatprep.subr.mxu0 0.0
  %2223 = vmatpush1.msra.mxu0 %v405
  %2224 = vmatprep.subr.mxu0 0.0
  %2225 = vmatpush1.msra.mxu0 %v406
  %2226 = vmatprep.subr.mxu0 0.0
  %2227 = vmatpush1.msra.mxu0 %v407
  %2228 = vmatprep.subr.mxu0 0.0
  %2229 = vmatpush1.msra.mxu0 %v408
  %2230 = vmatprep.subr.mxu0 0.0
  %2231 = vmatpush1.msra.mxu0 %v409
  %2232 = vmatprep.subr.mxu0 0.0
  %2233 = vmatpush1.msra.mxu0 %v410
  %2234 = vmatprep.subr.mxu0 0.0
  %2235 = vmatpush1.msra.mxu0 %v411
  %2236 = vmatprep.subr.mxu0 0.0
  %2237 = vmatpush1.msra.mxu0 %v412
  %2238 = vmatprep.subr.mxu0 0.0
  %2239 = vmatpush1.msra.mxu0 %v413
  %2240 = vmatprep.subr.mxu0 0.0
  %2241 = vmatpush1.msra.mxu0 %v414
  %2242 = vmatprep.subr.mxu0 0.0
  %2243 = vmatpush1.msra.mxu0 %v415
  %2244 = vmatprep.subr.mxu0 0.0
  %2245 = vmatpush1.msra.mxu0 %v416
  %2246 = vmatprep.subr.mxu0 0.0
  %2247 = vmatpush1.msra.mxu0 %v417
  %2248 = vmatprep.subr.mxu0 0.0
  %2249 = vmatpush1.msra.mxu0 %v418
  %2250 = vmatprep.subr.mxu0 0.0
  %2251 = vmatpush1.msra.mxu0 %v419
  %2252 = vmatprep.subr.mxu0 0.0
  %2253 = vmatpush1.msra.mxu0 %v420
  %2254 = vmatprep.subr.mxu0 0.0
  %2255 = vmatpush1.msra.mxu0 %v421
  %2256 = vmatprep.subr.mxu0 0.0
  %2257 = vmatpush1.msra.mxu0 %v422
  %2258 = vmatprep.subr.mxu0 0.0
  %2259 = vmatpush1.msra.mxu0 %v423
  %2260 = vmatprep.mubr.f32.mxu0 %v1191
  %2261 = vmatmul.mubr.f32.gmra.mrb[0].mxu0 %v1189
  %v2262 = vpop.f32.mrb[0].mxu0
  %v2263 = vadd.f32 %v2193, %v2262
  %v2264 = vpop.f32.mrb[0].mxu0
  %2265 = vdwg.mxu0
  %2266 = vmatprep.subr.mxu0 0.0
  %2267 = vmatpush1.msra.mxu0 %v424
  %2268 = vmatprep.subr.mxu0 0.0
  %2269 = vmatpush1.msra.mxu0 %v425
  %2270 = vmatprep.subr.mxu0 0.0
  %2271 = vmatpush1.msra.mxu0 %v426
  %2272 = vmatprep.subr.mxu0 0.0
  %2273 = vmatpush1.msra.mxu0 %v427
  %2274 = vmatprep.subr.mxu0 0.0
  %2275 = vmatpush1.msra.mxu0 %v428
  %2276 = vmatprep.subr.mxu0 0.0
  %2277 = vmatpush1.msra.mxu0 %v429
  %2278 = vmatprep.subr.mxu0 0.0
  %2279 = vmatpush1.msra.mxu0 %v430
  %2280 = vmatprep.subr.mxu0 0.0
  %2281 = vmatpush1.msra.mxu0 %v431
  %2282 = vmatprep.subr.mxu0 0.0
  %2283 = vmatpush1.msra.mxu0 %v432
  %2284 = vmatprep.subr.mxu0 0.0
  %2285 = vmatpush1.msra.mxu0 %v433
  %2286 = vmatprep.subr.mxu0 0.0
  %2287 = vmatpush1.msra.mxu0 %v434
  %2288 = vmatprep.subr.mxu0 0.0
  %2289 = vmatpush1.msra.mxu0 %v435
  %2290 = vmatprep.subr.mxu0 0.0
  %2291 = vmatpush1.msra.mxu0 %v436
  %2292 = vmatprep.subr.mxu0 0.0
  %2293 = vmatpush1.msra.mxu0 %v437
  %2294 = vmatprep.subr.mxu0 0.0
  %2295 = vmatpush1.msra.mxu0 %v438
  %2296 = vmatprep.subr.mxu0 0.0
  %2297 = vmatpush1.msra.mxu0 %v439
  %2298 = vmatprep.subr.mxu0 0.0
  %2299 = vmatpush1.msra.mxu0 %v440
  %2300 = vmatprep.subr.mxu0 0.0
  %2301 = vmatpush1.msra.mxu0 %v441
  %2302 = vmatprep.subr.mxu0 0.0
  %2303 = vmatpush1.msra.mxu0 %v442
  %2304 = vmatprep.subr.mxu0 0.0
  %2305 = vmatpush1.msra.mxu0 %v443
  %2306 = vmatprep.subr.mxu0 0.0
  %2307 = vmatpush1.msra.mxu0 %v444
  %2308 = vmatprep.subr.mxu0 0.0
  %2309 = vmatpush1.msra.mxu0 %v445
  %2310 = vmatprep.subr.mxu0 0.0
  %2311 = vmatpush1.msra.mxu0 %v446
  %2312 = vmatprep.subr.mxu0 0.0
  %2313 = vmatpush1.msra.mxu0 %v447
  %2314 = vmatprep.subr.mxu0 0.0
  %2315 = vmatpush1.msra.mxu0 %v448
  %2316 = vmatprep.subr.mxu0 0.0
  %2317 = vmatpush1.msra.mxu0 %v449
  %2318 = vmatprep.subr.mxu0 0.0
  %2319 = vmatpush1.msra.mxu0 %v450
  %2320 = vmatprep.subr.mxu0 0.0
  %2321 = vmatpush1.msra.mxu0 %v451
  %2322 = vmatprep.subr.mxu0 0.0
  %2323 = vmatpush1.msra.mxu0 %v452
  %2324 = vmatprep.subr.mxu0 0.0
  %2325 = vmatpush1.msra.mxu0 %v453
  %2326 = vmatprep.subr.mxu0 0.0
  %2327 = vmatpush1.msra.mxu0 %v454
  %2328 = vmatprep.subr.mxu0 0.0
  %2329 = vmatpush1.msra.mxu0 %v455
  %2330 = vmatprep.mubr.f32.mxu0 %v1207
  %2331 = vmatmul.mubr.f32.gmra.mrb[0].mxu0 %v1199
  %v2332 = vpop.f32.mrb[0].mxu0
  %v2333 = vadd.f32 %v2263, %v2332
  %v2334 = vpop.f32.mrb[0].mxu0
  %2335 = vdwg.mxu0
  %2336 = vmatprep.subr.mxu0 0.0
  %2337 = vmatpush1.msra.mxu0 %v456
  %2338 = vmatprep.subr.mxu0 0.0
  %2339 = vmatpush1.msra.mxu0 %v457
  %2340 = vmatprep.subr.mxu0 0.0
  %2341 = vmatpush1.msra.mxu0 %v458
  %2342 = vmatprep.subr.mxu0 0.0
  %2343 = vmatpush1.msra.mxu0 %v459
  %2344 = vmatprep.subr.mxu0 0.0
  %2345 = vmatpush1.msra.mxu0 %v460
  %2346 = vmatprep.subr.mxu0 0.0
  %2347 = vmatpush1.msra.mxu0 %v461
  %2348 = vmatprep.subr.mxu0 0.0
  %2349 = vmatpush1.msra.mxu0 %v462
  %2350 = vmatprep.subr.mxu0 0.0
  %2351 = vmatpush1.msra.mxu0 %v463
  %2352 = vmatprep.subr.mxu0 0.0
  %2353 = vmatpush1.msra.mxu0 %v464
  %2354 = vmatprep.subr.mxu0 0.0
  %2355 = vmatpush1.msra.mxu0 %v465
  %2356 = vmatprep.subr.mxu0 0.0
  %2357 = vmatpush1.msra.mxu0 %v466
  %2358 = vmatprep.subr.mxu0 0.0
  %2359 = vmatpush1.msra.mxu0 %v467
  %2360 = vmatprep.subr.mxu0 0.0
  %2361 = vmatpush1.msra.mxu0 %v468
  %2362 = vmatprep.subr.mxu0 0.0
  %2363 = vmatpush1.msra.mxu0 %v469
  %2364 = vmatprep.subr.mxu0 0.0
  %2365 = vmatpush1.msra.mxu0 %v470
  %2366 = vmatprep.subr.mxu0 0.0
  %2367 = vmatpush1.msra.mxu0 %v471
  %2368 = vmatprep.subr.mxu0 0.0
  %2369 = vmatpush1.msra.mxu0 %v472
  %2370 = vmatprep.subr.mxu0 0.0
  %2371 = vmatpush1.msra.mxu0 %v473
  %2372 = vmatprep.subr.mxu0 0.0
  %2373 = vmatpush1.msra.mxu0 %v474
  %2374 = vmatprep.subr.mxu0 0.0
  %2375 = vmatpush1.msra.mxu0 %v475
  %2376 = vmatprep.subr.mxu0 0.0
  %2377 = vmatpush1.msra.mxu0 %v476
  %2378 = vmatprep.subr.mxu0 0.0
  %2379 = vmatpush1.msra.mxu0 %v477
  %2380 = vmatprep.subr.mxu0 0.0
  %2381 = vmatpush1.msra.mxu0 %v478
  %2382 = vmatprep.subr.mxu0 0.0
  %2383 = vmatpush1.msra.mxu0 %v479
  %2384 = vmatprep.subr.mxu0 0.0
  %2385 = vmatpush1.msra.mxu0 %v480
  %2386 = vmatprep.subr.mxu0 0.0
  %2387 = vmatpush1.msra.mxu0 %v481
  %2388 = vmatprep.subr.mxu0 0.0
  %2389 = vmatpush1.msra.mxu0 %v482
  %2390 = vmatprep.subr.mxu0 0.0
  %2391 = vmatpush1.msra.mxu0 %v483
  %2392 = vmatprep.subr.mxu0 0.0
  %2393 = vmatpush1.msra.mxu0 %v484
  %2394 = vmatprep.subr.mxu0 0.0
  %2395 = vmatpush1.msra.mxu0 %v485
  %2396 = vmatprep.subr.mxu0 0.0
  %2397 = vmatpush1.msra.mxu0 %v486
  %2398 = vmatprep.subr.mxu0 0.0
  %2399 = vmatpush1.msra.mxu0 %v487
  %2400 = vmatprep.mubr.f32.mxu0 %v1208
  %2401 = vmatmul.mubr.f32.gmra.mrb[0].mxu0 %v1206
  %v2402 = vpop.f32.mrb[0].mxu0
  %v2403 = vadd.f32 %v2333, %v2402
  %v2404 = vpop.f32.mrb[0].mxu0
  %2405 = vdwg.mxu0
  %2406 = vmatprep.subr.mxu0 0.0
  %2407 = vmatpush1.msra.mxu0 %v488
  %2408 = vmatprep.subr.mxu0 0.0
  %2409 = vmatpush1.msra.mxu0 %v489
  %2410 = vmatprep.subr.mxu0 0.0
  %2411 = vmatpush1.msra.mxu0 %v490
  %2412 = vmatprep.subr.mxu0 0.0
  %2413 = vmatpush1.msra.mxu0 %v491
  %2414 = vmatprep.subr.mxu0 0.0
  %2415 = vmatpush1.msra.mxu0 %v492
  %2416 = vmatprep.subr.mxu0 0.0
  %2417 = vmatpush1.msra.mxu0 %v493
  %2418 = vmatprep.subr.mxu0 0.0
  %2419 = vmatpush1.msra.mxu0 %v494
  %2420 = vmatprep.subr.mxu0 0.0
  %2421 = vmatpush1.msra.mxu0 %v495
  %2422 = vmatprep.subr.mxu0 0.0
  %2423 = vmatpush1.msra.mxu0 %v496
  %2424 = vmatprep.subr.mxu0 0.0
  %2425 = vmatpush1.msra.mxu0 %v497
  %2426 = vmatprep.subr.mxu0 0.0
  %2427 = vmatpush1.msra.mxu0 %v498
  %2428 = vmatprep.subr.mxu0 0.0
  %2429 = vmatpush1.msra.mxu0 %v499
  %2430 = vmatprep.subr.mxu0 0.0
  %2431 = vmatpush1.msra.mxu0 %v500
  %2432 = vmatprep.subr.mxu0 0.0
  %2433 = vmatpush1.msra.mxu0 %v501
  %2434 = vmatprep.subr.mxu0 0.0
  %2435 = vmatpush1.msra.mxu0 %v502
  %2436 = vmatprep.subr.mxu0 0.0
  %2437 = vmatpush1.msra.mxu0 %v503
  %2438 = vmatprep.subr.mxu0 0.0
  %2439 = vmatpush1.msra.mxu0 %v504
  %2440 = vmatprep.subr.mxu0 0.0
  %2441 = vmatpush1.msra.mxu0 %v505
  %2442 = vmatprep.subr.mxu0 0.0
  %2443 = vmatpush1.msra.mxu0 %v506
  %2444 = vmatprep.subr.mxu0 0.0
  %2445 = vmatpush1.msra.mxu0 %v507
  %2446 = vmatprep.subr.mxu0 0.0
  %2447 = vmatpush1.msra.mxu0 %v508
  %2448 = vmatprep.subr.mxu0 0.0
  %2449 = vmatpush1.msra.mxu0 %v509
  %2450 = vmatprep.subr.mxu0 0.0
  %2451 = vmatpush1.msra.mxu0 %v510
  %2452 = vmatprep.subr.mxu0 0.0
  %2453 = vmatpush1.msra.mxu0 %v511
  %2454 = vmatprep.subr.mxu0 0.0
  %2455 = vmatpush1.msra.mxu0 %v512
  %2456 = vmatprep.subr.mxu0 0.0
  %2457 = vmatpush1.msra.mxu0 %v513
  %2458 = vmatprep.subr.mxu0 0.0
  %2459 = vmatpush1.msra.mxu0 %v514
  %2460 = vmatprep.subr.mxu0 0.0
  %2461 = vmatpush1.msra.mxu0 %v515
  %2462 = vmatprep.subr.mxu0 0.0
  %2463 = vmatpush1.msra.mxu0 %v516
  %2464 = vmatprep.subr.mxu0 0.0
  %2465 = vmatpush1.msra.mxu0 %v517
  %2466 = vmatprep.subr.mxu0 0.0
  %2467 = vmatpush1.msra.mxu0 %v518
  %2468 = vmatprep.subr.mxu0 0.0
  %2469 = vmatpush1.msra.mxu0 %v519
  %2470 = vmatprep.mubr.f32.mxu0 %v1224
  %2471 = vmatmul.mubr.f32.gmra.mrb[0].mxu0 %v1216
  %v2472 = vpop.f32.mrb[0].mxu0
  %v2473 = vadd.f32 %v2403, %v2472
  %v2474 = vpop.f32.mrb[0].mxu0
  %2475 = vdwg.mxu0
  %2476 = vmatprep.subr.mxu0 0.0
  %2477 = vmatpush1.msra.mxu0 %v520
  %2478 = vmatprep.subr.mxu0 0.0
  %2479 = vmatpush1.msra.mxu0 %v521
  %2480 = vmatprep.subr.mxu0 0.0
  %2481 = vmatpush1.msra.mxu0 %v522
  %2482 = vmatprep.subr.mxu0 0.0
  %2483 = vmatpush1.msra.mxu0 %v523
  %2484 = vmatprep.subr.mxu0 0.0
  %2485 = vmatpush1.msra.mxu0 %v524
  %2486 = vmatprep.subr.mxu0 0.0
  %2487 = vmatpush1.msra.mxu0 %v525
  %2488 = vmatprep.subr.mxu0 0.0
  %2489 = vmatpush1.msra.mxu0 %v526
  %2490 = vmatprep.subr.mxu0 0.0
  %2491 = vmatpush1.msra.mxu0 %v527
  %2492 = vmatprep.subr.mxu0 0.0
  %2493 = vmatpush1.msra.mxu0 %v528
  %2494 = vmatprep.subr.mxu0 0.0
  %2495 = vmatpush1.msra.mxu0 %v529
  %2496 = vmatprep.subr.mxu0 0.0
  %2497 = vmatpush1.msra.mxu0 %v530
  %2498 = vmatprep.subr.mxu0 0.0
  %2499 = vmatpush1.msra.mxu0 %v531
  %2500 = vmatprep.subr.mxu0 0.0
  %2501 = vmatpush1.msra.mxu0 %v532
  %2502 = vmatprep.subr.mxu0 0.0
  %2503 = vmatpush1.msra.mxu0 %v533
  %2504 = vmatprep.subr.mxu0 0.0
  %2505 = vmatpush1.msra.mxu0 %v534
  %2506 = vmatprep.subr.mxu0 0.0
  %2507 = vmatpush1.msra.mxu0 %v535
  %2508 = vmatprep.subr.mxu0 0.0
  %2509 = vmatpush1.msra.mxu0 %v536
  %2510 = vmatprep.subr.mxu0 0.0
  %2511 = vmatpush1.msra.mxu0 %v537
  %2512 = vmatprep.subr.mxu0 0.0
  %2513 = vmatpush1.msra.mxu0 %v538
  %2514 = vmatprep.subr.mxu0 0.0
  %2515 = vmatpush1.msra.mxu0 %v539
  %2516 = vmatprep.subr.mxu0 0.0
  %2517 = vmatpush1.msra.mxu0 %v540
  %2518 = vmatprep.subr.mxu0 0.0
  %2519 = vmatpush1.msra.mxu0 %v541
  %2520 = vmatprep.subr.mxu0 0.0
  %2521 = vmatpush1.msra.mxu0 %v542
  %2522 = vmatprep.subr.mxu0 0.0
  %2523 = vmatpush1.msra.mxu0 %v543
  %2524 = vmatprep.subr.mxu0 0.0
  %2525 = vmatpush1.msra.mxu0 %v544
  %2526 = vmatprep.subr.mxu0 0.0
  %2527 = vmatpush1.msra.mxu0 %v545
  %2528 = vmatprep.subr.mxu0 0.0
  %2529 = vmatpush1.msra.mxu0 %v546
  %2530 = vmatprep.subr.mxu0 0.0
  %2531 = vmatpush1.msra.mxu0 %v547
  %2532 = vmatprep.subr.mxu0 0.0
  %2533 = vmatpush1.msra.mxu0 %v548
  %2534 = vmatprep.subr.mxu0 0.0
  %2535 = vmatpush1.msra.mxu0 %v549
  %2536 = vmatprep.subr.mxu0 0.0
  %2537 = vmatpush1.msra.mxu0 %v550
  %2538 = vmatprep.subr.mxu0 0.0
  %2539 = vmatpush1.msra.mxu0 %v551
  %2540 = vmatprep.mubr.f32.mxu0 %v1225
  %2541 = vmatmul.mubr.f32.gmra.mrb[0].mxu0 %v1223
  %v2542 = vpop.f32.mrb[0].mxu0
  %v2543 = vadd.f32 %v2473, %v2542
  %v2544 = vpop.f32.mrb[0].mxu0
  %2545 = vdwg.mxu0
  %2546 = vmatprep.subr.mxu0 0.0
  %2547 = vmatpush1.msra.mxu0 %v552
  %2548 = vmatprep.subr.mxu0 0.0
  %2549 = vmatpush1.msra.mxu0 %v553
  %2550 = vmatprep.subr.mxu0 0.0
  %2551 = vmatpush1.msra.mxu0 %v554
  %2552 = vmatprep.subr.mxu0 0.0
  %2553 = vmatpush1.msra.mxu0 %v555
  %2554 = vmatprep.subr.mxu0 0.0
  %2555 = vmatpush1.msra.mxu0 %v556
  %2556 = vmatprep.subr.mxu0 0.0
  %2557 = vmatpush1.msra.mxu0 %v557
  %2558 = vmatprep.subr.mxu0 0.0
  %2559 = vmatpush1.msra.mxu0 %v558
  %2560 = vmatprep.subr.mxu0 0.0
  %2561 = vmatpush1.msra.mxu0 %v559
  %2562 = vmatprep.subr.mxu0 0.0
  %2563 = vmatpush1.msra.mxu0 %v560
  %2564 = vmatprep.subr.mxu0 0.0
  %2565 = vmatpush1.msra.mxu0 %v561
  %2566 = vmatprep.subr.mxu0 0.0
  %2567 = vmatpush1.msra.mxu0 %v562
  %2568 = vmatprep.subr.mxu0 0.0
  %2569 = vmatpush1.msra.mxu0 %v563
  %2570 = vmatprep.subr.mxu0 0.0
  %2571 = vmatpush1.msra.mxu0 %v564
  %2572 = vmatprep.subr.mxu0 0.0
  %2573 = vmatpush1.msra.mxu0 %v565
  %2574 = vmatprep.subr.mxu0 0.0
  %2575 = vmatpush1.msra.mxu0 %v566
  %2576 = vmatprep.subr.mxu0 0.0
  %2577 = vmatpush1.msra.mxu0 %v567
  %2578 = vmatprep.subr.mxu0 0.0
  %2579 = vmatpush1.msra.mxu0 %v568
  %2580 = vmatprep.subr.mxu0 0.0
  %2581 = vmatpush1.msra.mxu0 %v569
  %2582 = vmatprep.subr.mxu0 0.0
  %2583 = vmatpush1.msra.mxu0 %v570
  %2584 = vmatprep.subr.mxu0 0.0
  %2585 = vmatpush1.msra.mxu0 %v571
  %2586 = vmatprep.subr.mxu0 0.0
  %2587 = vmatpush1.msra.mxu0 %v572
  %2588 = vmatprep.subr.mxu0 0.0
  %2589 = vmatpush1.msra.mxu0 %v573
  %2590 = vmatprep.subr.mxu0 0.0
  %2591 = vmatpush1.msra.mxu0 %v574
  %2592 = vmatprep.subr.mxu0 0.0
  %2593 = vmatpush1.msra.mxu0 %v575
  %2594 = vmatprep.subr.mxu0 0.0
  %2595 = vmatpush1.msra.mxu0 %v576
  %2596 = vmatprep.subr.mxu0 0.0
  %2597 = vmatpush1.msra.mxu0 %v577
  %2598 = vmatprep.subr.mxu0 0.0
  %2599 = vmatpush1.msra.mxu0 %v578
  %2600 = vmatprep.subr.mxu0 0.0
  %2601 = vmatpush1.msra.mxu0 %v579
  %2602 = vmatprep.subr.mxu0 0.0
  %2603 = vmatpush1.msra.mxu0 %v580
  %2604 = vmatprep.subr.mxu0 0.0
  %2605 = vmatpush1.msra.mxu0 %v581
  %2606 = vmatprep.subr.mxu0 0.0
  %2607 = vmatpush1.msra.mxu0 %v582
  %2608 = vmatprep.subr.mxu0 0.0
  %2609 = vmatpush1.msra.mxu0 %v583
  %2610 = vmatprep.mubr.f32.mxu0 %v1241
  %2611 = vmatmul.mubr.f32.gmra.mrb[0].mxu0 %v1233
  %v2612 = vpop.f32.mrb[0].mxu0
  %v2613 = vadd.f32 %v2543, %v2612
  %v2614 = vpop.f32.mrb[0].mxu0
  %2615 = vdwg.mxu0
  %2616 = vmatprep.subr.mxu0 0.0
  %2617 = vmatpush1.msra.mxu0 %v584
  %2618 = vmatprep.subr.mxu0 0.0
  %2619 = vmatpush1.msra.mxu0 %v585
  %2620 = vmatprep.subr.mxu0 0.0
  %2621 = vmatpush1.msra.mxu0 %v586
  %2622 = vmatprep.subr.mxu0 0.0
  %2623 = vmatpush1.msra.mxu0 %v587
  %2624 = vmatprep.subr.mxu0 0.0
  %2625 = vmatpush1.msra.mxu0 %v588
  %2626 = vmatprep.subr.mxu0 0.0
  %2627 = vmatpush1.msra.mxu0 %v589
  %2628 = vmatprep.subr.mxu0 0.0
  %2629 = vmatpush1.msra.mxu0 %v590
  %2630 = vmatprep.subr.mxu0 0.0
  %2631 = vmatpush1.msra.mxu0 %v591
  %2632 = vmatprep.subr.mxu0 0.0
  %2633 = vmatpush1.msra.mxu0 %v592
  %2634 = vmatprep.subr.mxu0 0.0
  %2635 = vmatpush1.msra.mxu0 %v593
  %2636 = vmatprep.subr.mxu0 0.0
  %2637 = vmatpush1.msra.mxu0 %v594
  %2638 = vmatprep.subr.mxu0 0.0
  %2639 = vmatpush1.msra.mxu0 %v595
  %2640 = vmatprep.subr.mxu0 0.0
  %2641 = vmatpush1.msra.mxu0 %v596
  %2642 = vmatprep.subr.mxu0 0.0
  %2643 = vmatpush1.msra.mxu0 %v597
  %2644 = vmatprep.subr.mxu0 0.0
  %2645 = vmatpush1.msra.mxu0 %v598
  %2646 = vmatprep.subr.mxu0 0.0
  %2647 = vmatpush1.msra.mxu0 %v599
  %2648 = vmatprep.subr.mxu0 0.0
  %2649 = vmatpush1.msra.mxu0 %v600
  %2650 = vmatprep.subr.mxu0 0.0
  %2651 = vmatpush1.msra.mxu0 %v601
  %2652 = vmatprep.subr.mxu0 0.0
  %2653 = vmatpush1.msra.mxu0 %v602
  %2654 = vmatprep.subr.mxu0 0.0
  %2655 = vmatpush1.msra.mxu0 %v603
  %2656 = vmatprep.subr.mxu0 0.0
  %2657 = vmatpush1.msra.mxu0 %v604
  %2658 = vmatprep.subr.mxu0 0.0
  %2659 = vmatpush1.msra.mxu0 %v605
  %2660 = vmatprep.subr.mxu0 0.0
  %2661 = vmatpush1.msra.mxu0 %v606
  %2662 = vmatprep.subr.mxu0 0.0
  %2663 = vmatpush1.msra.mxu0 %v607
  %2664 = vmatprep.subr.mxu0 0.0
  %2665 = vmatpush1.msra.mxu0 %v608
  %2666 = vmatprep.subr.mxu0 0.0
  %2667 = vmatpush1.msra.mxu0 %v609
  %2668 = vmatprep.subr.mxu0 0.0
  %2669 = vmatpush1.msra.mxu0 %v610
  %2670 = vmatprep.subr.mxu0 0.0
  %2671 = vmatpush1.msra.mxu0 %v611
  %2672 = vmatprep.subr.mxu0 0.0
  %2673 = vmatpush1.msra.mxu0 %v612
  %2674 = vmatprep.subr.mxu0 0.0
  %2675 = vmatpush1.msra.mxu0 %v613
  %2676 = vmatprep.subr.mxu0 0.0
  %2677 = vmatpush1.msra.mxu0 %v614
  %2678 = vmatprep.subr.mxu0 0.0
  %2679 = vmatpush1.msra.mxu0 %v615
  %2680 = vmatprep.mubr.f32.mxu0 %v1242
  %2681 = vmatmul.mubr.f32.gmra.mrb[0].mxu0 %v1240
  %v2682 = vpop.f32.mrb[0].mxu0
  %v2683 = vadd.f32 %v2613, %v2682
  %v2684 = vpop.f32.mrb[0].mxu0
  %2685 = vdwg.mxu0
  %2686 = vmatprep.subr.mxu0 0.0
  %2687 = vmatpush1.msra.mxu0 %v616
  %2688 = vmatprep.subr.mxu0 0.0
  %2689 = vmatpush1.msra.mxu0 %v617
  %2690 = vmatprep.subr.mxu0 0.0
  %2691 = vmatpush1.msra.mxu0 %v618
  %2692 = vmatprep.subr.mxu0 0.0
  %2693 = vmatpush1.msra.mxu0 %v619
  %2694 = vmatprep.subr.mxu0 0.0
  %2695 = vmatpush1.msra.mxu0 %v620
  %2696 = vmatprep.subr.mxu0 0.0
  %2697 = vmatpush1.msra.mxu0 %v621
  %2698 = vmatprep.subr.mxu0 0.0
  %2699 = vmatpush1.msra.mxu0 %v622
  %2700 = vmatprep.subr.mxu0 0.0
  %2701 = vmatpush1.msra.mxu0 %v623
  %2702 = vmatprep.subr.mxu0 0.0
  %2703 = vmatpush1.msra.mxu0 %v624
  %2704 = vmatprep.subr.mxu0 0.0
  %2705 = vmatpush1.msra.mxu0 %v625
  %2706 = vmatprep.subr.mxu0 0.0
  %2707 = vmatpush1.msra.mxu0 %v626
  %2708 = vmatprep.subr.mxu0 0.0
  %2709 = vmatpush1.msra.mxu0 %v627
  %2710 = vmatprep.subr.mxu0 0.0
  %2711 = vmatpush1.msra.mxu0 %v628
  %2712 = vmatprep.subr.mxu0 0.0
  %2713 = vmatpush1.msra.mxu0 %v629
  %2714 = vmatprep.subr.mxu0 0.0
  %2715 = vmatpush1.msra.mxu0 %v630
  %2716 = vmatprep.subr.mxu0 0.0
  %2717 = vmatpush1.msra.mxu0 %v631
  %2718 = vmatprep.subr.mxu0 0.0
  %2719 = vmatpush1.msra.mxu0 %v632
  %2720 = vmatprep.subr.mxu0 0.0
  %2721 = vmatpush1.msra.mxu0 %v633
  %2722 = vmatprep.subr.mxu0 0.0
  %2723 = vmatpush1.msra.mxu0 %v634
  %2724 = vmatprep.subr.mxu0 0.0
  %2725 = vmatpush1.msra.mxu0 %v635
  %2726 = vmatprep.subr.mxu0 0.0
  %2727 = vmatpush1.msra.mxu0 %v636
  %2728 = vmatprep.subr.mxu0 0.0
  %2729 = vmatpush1.msra.mxu0 %v637
  %2730 = vmatprep.subr.mxu0 0.0
  %2731 = vmatpush1.msra.mxu0 %v638
  %2732 = vmatprep.subr.mxu0 0.0
  %2733 = vmatpush1.msra.mxu0 %v639
  %2734 = vmatprep.subr.mxu0 0.0
  %2735 = vmatpush1.msra.mxu0 %v640
  %2736 = vmatprep.subr.mxu0 0.0
  %2737 = vmatpush1.msra.mxu0 %v641
  %2738 = vmatprep.subr.mxu0 0.0
  %2739 = vmatpush1.msra.mxu0 %v642
  %2740 = vmatprep.subr.mxu0 0.0
  %2741 = vmatpush1.msra.mxu0 %v643
  %2742 = vmatprep.subr.mxu0 0.0
  %2743 = vmatpush1.msra.mxu0 %v644
  %2744 = vmatprep.subr.mxu0 0.0
  %2745 = vmatpush1.msra.mxu0 %v645
  %2746 = vmatprep.subr.mxu0 0.0
  %2747 = vmatpush1.msra.mxu0 %v646
  %2748 = vmatprep.subr.mxu0 0.0
  %2749 = vmatpush1.msra.mxu0 %v647
  %2750 = vmatprep.mubr.f32.mxu0 %v1258
  %2751 = vmatmul.mubr.f32.gmra.mrb[0].mxu0 %v1250
  %v2752 = vpop.f32.mrb[0].mxu0
  %v2753 = vadd.f32 %v2683, %v2752
  %v2754 = vpop.f32.mrb[0].mxu0
  %2755 = vdwg.mxu0
  %2756 = vmatprep.subr.mxu0 0.0
  %2757 = vmatpush1.msra.mxu0 %v648
  %2758 = vmatprep.subr.mxu0 0.0
  %2759 = vmatpush1.msra.mxu0 %v649
  %2760 = vmatprep.subr.mxu0 0.0
  %2761 = vmatpush1.msra.mxu0 %v650
  %2762 = vmatprep.subr.mxu0 0.0
  %2763 = vmatpush1.msra.mxu0 %v651
  %2764 = vmatprep.subr.mxu0 0.0
  %2765 = vmatpush1.msra.mxu0 %v652
  %2766 = vmatprep.subr.mxu0 0.0
  %2767 = vmatpush1.msra.mxu0 %v653
  %2768 = vmatprep.subr.mxu0 0.0
  %2769 = vmatpush1.msra.mxu0 %v654
  %2770 = vmatprep.subr.mxu0 0.0
  %2771 = vmatpush1.msra.mxu0 %v655
  %2772 = vmatprep.subr.mxu0 0.0
  %2773 = vmatpush1.msra.mxu0 %v656
  %2774 = vmatprep.subr.mxu0 0.0
  %2775 = vmatpush1.msra.mxu0 %v657
  %2776 = vmatprep.subr.mxu0 0.0
  %2777 = vmatpush1.msra.mxu0 %v658
  %2778 = vmatprep.subr.mxu0 0.0
  %2779 = vmatpush1.msra.mxu0 %v659
  %2780 = vmatprep.subr.mxu0 0.0
  %2781 = vmatpush1.msra.mxu0 %v660
  %2782 = vmatprep.subr.mxu0 0.0
  %2783 = vmatpush1.msra.mxu0 %v661
  %2784 = vmatprep.subr.mxu0 0.0
  %2785 = vmatpush1.msra.mxu0 %v662
  %2786 = vmatprep.subr.mxu0 0.0
  %2787 = vmatpush1.msra.mxu0 %v663
  %2788 = vmatprep.subr.mxu0 0.0
  %2789 = vmatpush1.msra.mxu0 %v664
  %2790 = vmatprep.subr.mxu0 0.0
  %2791 = vmatpush1.msra.mxu0 %v665
  %2792 = vmatprep.subr.mxu0 0.0
  %2793 = vmatpush1.msra.mxu0 %v666
  %2794 = vmatprep.subr.mxu0 0.0
  %2795 = vmatpush1.msra.mxu0 %v667
  %2796 = vmatprep.subr.mxu0 0.0
  %2797 = vmatpush1.msra.mxu0 %v668
  %2798 = vmatprep.subr.mxu0 0.0
  %2799 = vmatpush1.msra.mxu0 %v669
  %2800 = vmatprep.subr.mxu0 0.0
  %2801 = vmatpush1.msra.mxu0 %v670
  %2802 = vmatprep.subr.mxu0 0.0
  %2803 = vmatpush1.msra.mxu0 %v671
  %2804 = vmatprep.subr.mxu0 0.0
  %2805 = vmatpush1.msra.mxu0 %v672
  %2806 = vmatprep.subr.mxu0 0.0
  %2807 = vmatpush1.msra.mxu0 %v673
  %2808 = vmatprep.subr.mxu0 0.0
  %2809 = vmatpush1.msra.mxu0 %v674
  %2810 = vmatprep.subr.mxu0 0.0
  %2811 = vmatpush1.msra.mxu0 %v675
  %2812 = vmatprep.subr.mxu0 0.0
  %2813 = vmatpush1.msra.mxu0 %v676
  %2814 = vmatprep.subr.mxu0 0.0
  %2815 = vmatpush1.msra.mxu0 %v677
  %2816 = vmatprep.subr.mxu0 0.0
  %2817 = vmatpush1.msra.mxu0 %v678
  %2818 = vmatprep.subr.mxu0 0.0
  %2819 = vmatpush1.msra.mxu0 %v679
  %2820 = vmatprep.mubr.f32.mxu0 %v1259
  %2821 = vmatmul.mubr.f32.gmra.mrb[0].mxu0 %v1257
  %v2822 = vpop.f32.mrb[0].mxu0
  %v2823 = vadd.f32 %v2753, %v2822
  %v2824 = vpop.f32.mrb[0].mxu0
  %2825 = vdwg.mxu0
  %2826 = vmatprep.subr.mxu0 0.0
  %2827 = vmatpush1.msra.mxu0 %v680
  %2828 = vmatprep.subr.mxu0 0.0
  %2829 = vmatpush1.msra.mxu0 %v681
  %2830 = vmatprep.subr.mxu0 0.0
  %2831 = vmatpush1.msra.mxu0 %v682
  %2832 = vmatprep.subr.mxu0 0.0
  %2833 = vmatpush1.msra.mxu0 %v683
  %2834 = vmatprep.subr.mxu0 0.0
  %2835 = vmatpush1.msra.mxu0 %v684
  %2836 = vmatprep.subr.mxu0 0.0
  %2837 = vmatpush1.msra.mxu0 %v685
  %2838 = vmatprep.subr.mxu0 0.0
  %2839 = vmatpush1.msra.mxu0 %v686
  %2840 = vmatprep.subr.mxu0 0.0
  %2841 = vmatpush1.msra.mxu0 %v687
  %2842 = vmatprep.subr.mxu0 0.0
  %2843 = vmatpush1.msra.mxu0 %v688
  %2844 = vmatprep.subr.mxu0 0.0
  %2845 = vmatpush1.msra.mxu0 %v689
  %2846 = vmatprep.subr.mxu0 0.0
  %2847 = vmatpush1.msra.mxu0 %v690
  %2848 = vmatprep.subr.mxu0 0.0
  %2849 = vmatpush1.msra.mxu0 %v691
  %2850 = vmatprep.subr.mxu0 0.0
  %2851 = vmatpush1.msra.mxu0 %v692
  %2852 = vmatprep.subr.mxu0 0.0
  %2853 = vmatpush1.msra.mxu0 %v693
  %2854 = vmatprep.subr.mxu0 0.0
  %2855 = vmatpush1.msra.mxu0 %v694
  %2856 = vmatprep.subr.mxu0 0.0
  %2857 = vmatpush1.msra.mxu0 %v695
  %2858 = vmatprep.subr.mxu0 0.0
  %2859 = vmatpush1.msra.mxu0 %v696
  %2860 = vmatprep.subr.mxu0 0.0
  %2861 = vmatpush1.msra.mxu0 %v697
  %2862 = vmatprep.subr.mxu0 0.0
  %2863 = vmatpush1.msra.mxu0 %v698
  %2864 = vmatprep.subr.mxu0 0.0
  %2865 = vmatpush1.msra.mxu0 %v699
  %2866 = vmatprep.subr.mxu0 0.0
  %2867 = vmatpush1.msra.mxu0 %v700
  %2868 = vmatprep.subr.mxu0 0.0
  %2869 = vmatpush1.msra.mxu0 %v701
  %2870 = vmatprep.subr.mxu0 0.0
  %2871 = vmatpush1.msra.mxu0 %v702
  %2872 = vmatprep.subr.mxu0 0.0
  %2873 = vmatpush1.msra.mxu0 %v703
  %2874 = vmatprep.subr.mxu0 0.0
  %2875 = vmatpush1.msra.mxu0 %v704
  %2876 = vmatprep.subr.mxu0 0.0
  %2877 = vmatpush1.msra.mxu0 %v705
  %2878 = vmatprep.subr.mxu0 0.0
  %2879 = vmatpush1.msra.mxu0 %v706
  %2880 = vmatprep.subr.mxu0 0.0
  %2881 = vmatpush1.msra.mxu0 %v707
  %2882 = vmatprep.subr.mxu0 0.0
  %2883 = vmatpush1.msra.mxu0 %v708
  %2884 = vmatprep.subr.mxu0 0.0
  %2885 = vmatpush1.msra.mxu0 %v709
  %2886 = vmatprep.subr.mxu0 0.0
  %2887 = vmatpush1.msra.mxu0 %v710
  %2888 = vmatprep.subr.mxu0 0.0
  %2889 = vmatpush1.msra.mxu0 %v711
  %2890 = vmatprep.mubr.f32.mxu0 %v1275
  %2891 = vmatmul.mubr.f32.gmra.mrb[0].mxu0 %v1267
  %v2892 = vpop.f32.mrb[0].mxu0
  %v2893 = vadd.f32 %v2823, %v2892
  %v2894 = vpop.f32.mrb[0].mxu0
  %2895 = vdwg.mxu0
  %2896 = vmatprep.subr.mxu0 0.0
  %2897 = vmatpush1.msra.mxu0 %v712
  %2898 = vmatprep.subr.mxu0 0.0
  %2899 = vmatpush1.msra.mxu0 %v713
  %2900 = vmatprep.subr.mxu0 0.0
  %2901 = vmatpush1.msra.mxu0 %v714
  %2902 = vmatprep.subr.mxu0 0.0
  %2903 = vmatpush1.msra.mxu0 %v715
  %2904 = vmatprep.subr.mxu0 0.0
  %2905 = vmatpush1.msra.mxu0 %v716
  %2906 = vmatprep.subr.mxu0 0.0
  %2907 = vmatpush1.msra.mxu0 %v717
  %2908 = vmatprep.subr.mxu0 0.0
  %2909 = vmatpush1.msra.mxu0 %v718
  %2910 = vmatprep.subr.mxu0 0.0
  %2911 = vmatpush1.msra.mxu0 %v719
  %2912 = vmatprep.subr.mxu0 0.0
  %2913 = vmatpush1.msra.mxu0 %v720
  %2914 = vmatprep.subr.mxu0 0.0
  %2915 = vmatpush1.msra.mxu0 %v721
  %2916 = vmatprep.subr.mxu0 0.0
  %2917 = vmatpush1.msra.mxu0 %v722
  %2918 = vmatprep.subr.mxu0 0.0
  %2919 = vmatpush1.msra.mxu0 %v723
  %2920 = vmatprep.subr.mxu0 0.0
  %2921 = vmatpush1.msra.mxu0 %v724
  %2922 = vmatprep.subr.mxu0 0.0
  %2923 = vmatpush1.msra.mxu0 %v725
  %2924 = vmatprep.subr.mxu0 0.0
  %2925 = vmatpush1.msra.mxu0 %v726
  %2926 = vmatprep.subr.mxu0 0.0
  %2927 = vmatpush1.msra.mxu0 %v727
  %2928 = vmatprep.subr.mxu0 0.0
  %2929 = vmatpush1.msra.mxu0 %v728
  %2930 = vmatprep.subr.mxu0 0.0
  %2931 = vmatpush1.msra.mxu0 %v729
  %2932 = vmatprep.subr.mxu0 0.0
  %2933 = vmatpush1.msra.mxu0 %v730
  %2934 = vmatprep.subr.mxu0 0.0
  %2935 = vmatpush1.msra.mxu0 %v731
  %2936 = vmatprep.subr.mxu0 0.0
  %2937 = vmatpush1.msra.mxu0 %v732
  %2938 = vmatprep.subr.mxu0 0.0
  %2939 = vmatpush1.msra.mxu0 %v733
  %2940 = vmatprep.subr.mxu0 0.0
  %2941 = vmatpush1.msra.mxu0 %v734
  %2942 = vmatprep.subr.mxu0 0.0
  %2943 = vmatpush1.msra.mxu0 %v735
  %2944 = vmatprep.subr.mxu0 0.0
  %2945 = vmatpush1.msra.mxu0 %v736
  %2946 = vmatprep.subr.mxu0 0.0
  %2947 = vmatpush1.msra.mxu0 %v737
  %2948 = vmatprep.subr.mxu0 0.0
  %2949 = vmatpush1.msra.mxu0 %v738
  %2950 = vmatprep.subr.mxu0 0.0
  %2951 = vmatpush1.msra.mxu0 %v739
  %2952 = vmatprep.subr.mxu0 0.0
  %2953 = vmatpush1.msra.mxu0 %v740
  %2954 = vmatprep.subr.mxu0 0.0
  %2955 = vmatpush1.msra.mxu0 %v741
  %2956 = vmatprep.subr.mxu0 0.0
  %2957 = vmatpush1.msra.mxu0 %v742
  %2958 = vmatprep.subr.mxu0 0.0
  %2959 = vmatpush1.msra.mxu0 %v743
  %2960 = vmatprep.mubr.f32.mxu0 %v1276
  %2961 = vmatmul.mubr.f32.gmra.mrb[0].mxu0 %v1274
  %v2962 = vpop.f32.mrb[0].mxu0
  %v2963 = vadd.f32 %v2893, %v2962
  %v2964 = vpop.f32.mrb[0].mxu0
  %2965 = vdwg.mxu0
  %2966 = vmatprep.subr.mxu0 0.0
  %2967 = vmatpush1.msra.mxu0 %v744
  %2968 = vmatprep.subr.mxu0 0.0
  %2969 = vmatpush1.msra.mxu0 %v745
  %2970 = vmatprep.subr.mxu0 0.0
  %2971 = vmatpush1.msra.mxu0 %v746
  %2972 = vmatprep.subr.mxu0 0.0
  %2973 = vmatpush1.msra.mxu0 %v747
  %2974 = vmatprep.subr.mxu0 0.0
  %2975 = vmatpush1.msra.mxu0 %v748
  %2976 = vmatprep.subr.mxu0 0.0
  %2977 = vmatpush1.msra.mxu0 %v749
  %2978 = vmatprep.subr.mxu0 0.0
  %2979 = vmatpush1.msra.mxu0 %v750
  %2980 = vmatprep.subr.mxu0 0.0
  %2981 = vmatpush1.msra.mxu0 %v751
  %2982 = vmatprep.subr.mxu0 0.0
  %2983 = vmatpush1.msra.mxu0 %v752
  %2984 = vmatprep.subr.mxu0 0.0
  %2985 = vmatpush1.msra.mxu0 %v753
  %2986 = vmatprep.subr.mxu0 0.0
  %2987 = vmatpush1.msra.mxu0 %v754
  %2988 = vmatprep.subr.mxu0 0.0
  %2989 = vmatpush1.msra.mxu0 %v755
  %2990 = vmatprep.subr.mxu0 0.0
  %2991 = vmatpush1.msra.mxu0 %v756
  %2992 = vmatprep.subr.mxu0 0.0
  %2993 = vmatpush1.msra.mxu0 %v757
  %2994 = vmatprep.subr.mxu0 0.0
  %2995 = vmatpush1.msra.mxu0 %v758
  %2996 = vmatprep.subr.mxu0 0.0
  %2997 = vmatpush1.msra.mxu0 %v759
  %2998 = vmatprep.subr.mxu0 0.0
  %2999 = vmatpush1.msra.mxu0 %v760
  %3000 = vmatprep.subr.mxu0 0.0
  %3001 = vmatpush1.msra.mxu0 %v761
  %3002 = vmatprep.subr.mxu0 0.0
  %3003 = vmatpush1.msra.mxu0 %v762
  %3004 = vmatprep.subr.mxu0 0.0
  %3005 = vmatpush1.msra.mxu0 %v763
  %3006 = vmatprep.subr.mxu0 0.0
  %3007 = vmatpush1.msra.mxu0 %v764
  %3008 = vmatprep.subr.mxu0 0.0
  %3009 = vmatpush1.msra.mxu0 %v765
  %3010 = vmatprep.subr.mxu0 0.0
  %3011 = vmatpush1.msra.mxu0 %v766
  %3012 = vmatprep.subr.mxu0 0.0
  %3013 = vmatpush1.msra.mxu0 %v767
  %3014 = vmatprep.subr.mxu0 0.0
  %3015 = vmatpush1.msra.mxu0 %v768
  %3016 = vmatprep.subr.mxu0 0.0
  %3017 = vmatpush1.msra.mxu0 %v769
  %3018 = vmatprep.subr.mxu0 0.0
  %3019 = vmatpush1.msra.mxu0 %v770
  %3020 = vmatprep.subr.mxu0 0.0
  %3021 = vmatpush1.msra.mxu0 %v771
  %3022 = vmatprep.subr.mxu0 0.0
  %3023 = vmatpush1.msra.mxu0 %v772
  %3024 = vmatprep.subr.mxu0 0.0
  %3025 = vmatpush1.msra.mxu0 %v773
  %3026 = vmatprep.subr.mxu0 0.0
  %3027 = vmatpush1.msra.mxu0 %v774
  %3028 = vmatprep.subr.mxu0 0.0
  %3029 = vmatpush1.msra.mxu0 %v775
  %3030 = vmatprep.mubr.f32.mxu0 %v1292
  %3031 = vmatmul.mubr.f32.gmra.mrb[0].mxu0 %v1284
  %v3032 = vpop.f32.mrb[0].mxu0
  %v3033 = vadd.f32 %v2963, %v3032
  %v3034 = vpop.f32.mrb[0].mxu0
  %3035 = vdwg.mxu0
  %3036 = vmatprep.subr.mxu0 0.0
  %3037 = vmatpush1.msra.mxu0 %v776
  %3038 = vmatprep.subr.mxu0 0.0
  %3039 = vmatpush1.msra.mxu0 %v777
  %3040 = vmatprep.subr.mxu0 0.0
  %3041 = vmatpush1.msra.mxu0 %v778
  %3042 = vmatprep.subr.mxu0 0.0
  %3043 = vmatpush1.msra.mxu0 %v779
  %3044 = vmatprep.subr.mxu0 0.0
  %3045 = vmatpush1.msra.mxu0 %v780
  %3046 = vmatprep.subr.mxu0 0.0
  %3047 = vmatpush1.msra.mxu0 %v781
  %3048 = vmatprep.subr.mxu0 0.0
  %3049 = vmatpush1.msra.mxu0 %v782
  %3050 = vmatprep.subr.mxu0 0.0
  %3051 = vmatpush1.msra.mxu0 %v783
  %3052 = vmatprep.subr.mxu0 0.0
  %3053 = vmatpush1.msra.mxu0 %v784
  %3054 = vmatprep.subr.mxu0 0.0
  %3055 = vmatpush1.msra.mxu0 %v785
  %3056 = vmatprep.subr.mxu0 0.0
  %3057 = vmatpush1.msra.mxu0 %v786
  %3058 = vmatprep.subr.mxu0 0.0
  %3059 = vmatpush1.msra.mxu0 %v787
  %3060 = vmatprep.subr.mxu0 0.0
  %3061 = vmatpush1.msra.mxu0 %v788
  %3062 = vmatprep.subr.mxu0 0.0
  %3063 = vmatpush1.msra.mxu0 %v789
  %3064 = vmatprep.subr.mxu0 0.0
  %3065 = vmatpush1.msra.mxu0 %v790
  %3066 = vmatprep.subr.mxu0 0.0
  %3067 = vmatpush1.msra.mxu0 %v791
  %3068 = vmatprep.subr.mxu0 0.0
  %3069 = vmatpush1.msra.mxu0 %v792
  %3070 = vmatprep.subr.mxu0 0.0
  %3071 = vmatpush1.msra.mxu0 %v793
  %3072 = vmatprep.subr.mxu0 0.0
  %3073 = vmatpush1.msra.mxu0 %v794
  %3074 = vmatprep.subr.mxu0 0.0
  %3075 = vmatpush1.msra.mxu0 %v795
  %3076 = vmatprep.subr.mxu0 0.0
  %3077 = vmatpush1.msra.mxu0 %v796
  %3078 = vmatprep.subr.mxu0 0.0
  %3079 = vmatpush1.msra.mxu0 %v797
  %3080 = vmatprep.subr.mxu0 0.0
  %3081 = vmatpush1.msra.mxu0 %v798
  %3082 = vmatprep.subr.mxu0 0.0
  %3083 = vmatpush1.msra.mxu0 %v799
  %3084 = vmatprep.subr.mxu0 0.0
  %3085 = vmatpush1.msra.mxu0 %v800
  %3086 = vmatprep.subr.mxu0 0.0
  %3087 = vmatpush1.msra.mxu0 %v801
  %3088 = vmatprep.subr.mxu0 0.0
  %3089 = vmatpush1.msra.mxu0 %v802
  %3090 = vmatprep.subr.mxu0 0.0
  %3091 = vmatpush1.msra.mxu0 %v803
  %3092 = vmatprep.subr.mxu0 0.0
  %3093 = vmatpush1.msra.mxu0 %v804
  %3094 = vmatprep.subr.mxu0 0.0
  %3095 = vmatpush1.msra.mxu0 %v805
  %3096 = vmatprep.subr.mxu0 0.0
  %3097 = vmatpush1.msra.mxu0 %v806
  %3098 = vmatprep.subr.mxu0 0.0
  %3099 = vmatpush1.msra.mxu0 %v807
  %3100 = vmatprep.mubr.f32.mxu0 %v1293
  %3101 = vmatmul.mubr.f32.gmra.mrb[0].mxu0 %v1291
  %v3102 = vpop.f32.mrb[0].mxu0
  %v3103 = vadd.f32 %v3033, %v3102
  %v3104 = vpop.f32.mrb[0].mxu0
  %3105 = vdwg.mxu0
  %3106 = vmatprep.subr.mxu0 0.0
  %3107 = vmatpush1.msra.mxu0 %v808
  %3108 = vmatprep.subr.mxu0 0.0
  %3109 = vmatpush1.msra.mxu0 %v809
  %3110 = vmatprep.subr.mxu0 0.0
  %3111 = vmatpush1.msra.mxu0 %v810
  %3112 = vmatprep.subr.mxu0 0.0
  %3113 = vmatpush1.msra.mxu0 %v811
  %3114 = vmatprep.subr.mxu0 0.0
  %3115 = vmatpush1.msra.mxu0 %v812
  %3116 = vmatprep.subr.mxu0 0.0
  %3117 = vmatpush1.msra.mxu0 %v813
  %3118 = vmatprep.subr.mxu0 0.0
  %3119 = vmatpush1.msra.mxu0 %v814
  %3120 = vmatprep.subr.mxu0 0.0
  %3121 = vmatpush1.msra.mxu0 %v815
  %3122 = vmatprep.subr.mxu0 0.0
  %3123 = vmatpush1.msra.mxu0 %v816
  %3124 = vmatprep.subr.mxu0 0.0
  %3125 = vmatpush1.msra.mxu0 %v817
  %3126 = vmatprep.subr.mxu0 0.0
  %3127 = vmatpush1.msra.mxu0 %v818
  %3128 = vmatprep.subr.mxu0 0.0
  %3129 = vmatpush1.msra.mxu0 %v819
  %3130 = vmatprep.subr.mxu0 0.0
  %3131 = vmatpush1.msra.mxu0 %v820
  %3132 = vmatprep.subr.mxu0 0.0
  %3133 = vmatpush1.msra.mxu0 %v821
  %3134 = vmatprep.subr.mxu0 0.0
  %3135 = vmatpush1.msra.mxu0 %v822
  %3136 = vmatprep.subr.mxu0 0.0
  %3137 = vmatpush1.msra.mxu0 %v823
  %3138 = vmatprep.subr.mxu0 0.0
  %3139 = vmatpush1.msra.mxu0 %v824
  %3140 = vmatprep.subr.mxu0 0.0
  %3141 = vmatpush1.msra.mxu0 %v825
  %3142 = vmatprep.subr.mxu0 0.0
  %3143 = vmatpush1.msra.mxu0 %v826
  %3144 = vmatprep.subr.mxu0 0.0
  %3145 = vmatpush1.msra.mxu0 %v827
  %3146 = vmatprep.subr.mxu0 0.0
  %3147 = vmatpush1.msra.mxu0 %v828
  %3148 = vmatprep.subr.mxu0 0.0
  %3149 = vmatpush1.msra.mxu0 %v829
  %3150 = vmatprep.subr.mxu0 0.0
  %3151 = vmatpush1.msra.mxu0 %v830
  %3152 = vmatprep.subr.mxu0 0.0
  %3153 = vmatpush1.msra.mxu0 %v831
  %3154 = vmatprep.subr.mxu0 0.0
  %3155 = vmatpush1.msra.mxu0 %v832
  %3156 = vmatprep.subr.mxu0 0.0
  %3157 = vmatpush1.msra.mxu0 %v833
  %3158 = vmatprep.subr.mxu0 0.0
  %3159 = vmatpush1.msra.mxu0 %v834
  %3160 = vmatprep.subr.mxu0 0.0
  %3161 = vmatpush1.msra.mxu0 %v835
  %3162 = vmatprep.subr.mxu0 0.0
  %3163 = vmatpush1.msra.mxu0 %v836
  %3164 = vmatprep.subr.mxu0 0.0
  %3165 = vmatpush1.msra.mxu0 %v837
  %3166 = vmatprep.subr.mxu0 0.0
  %3167 = vmatpush1.msra.mxu0 %v838
  %3168 = vmatprep.subr.mxu0 0.0
  %3169 = vmatpush1.msra.mxu0 %v839
  %3170 = vmatprep.mubr.f32.mxu0 %v1309
  %3171 = vmatmul.mubr.f32.gmra.mrb[0].mxu0 %v1301
  %v3172 = vpop.f32.mrb[0].mxu0
  %v3173 = vadd.f32 %v3103, %v3172
  %v3174 = vpop.f32.mrb[0].mxu0
  %3175 = vdwg.mxu0
  %3176 = vmatprep.subr.mxu0 0.0
  %3177 = vmatpush1.msra.mxu0 %v840
  %3178 = vmatprep.subr.mxu0 0.0
  %3179 = vmatpush1.msra.mxu0 %v841
  %3180 = vmatprep.subr.mxu0 0.0
  %3181 = vmatpush1.msra.mxu0 %v842
  %3182 = vmatprep.subr.mxu0 0.0
  %3183 = vmatpush1.msra.mxu0 %v843
  %3184 = vmatprep.subr.mxu0 0.0
  %3185 = vmatpush1.msra.mxu0 %v844
  %3186 = vmatprep.subr.mxu0 0.0
  %3187 = vmatpush1.msra.mxu0 %v845
  %3188 = vmatprep.subr.mxu0 0.0
  %3189 = vmatpush1.msra.mxu0 %v846
  %3190 = vmatprep.subr.mxu0 0.0
  %3191 = vmatpush1.msra.mxu0 %v847
  %3192 = vmatprep.subr.mxu0 0.0
  %3193 = vmatpush1.msra.mxu0 %v848
  %3194 = vmatprep.subr.mxu0 0.0
  %3195 = vmatpush1.msra.mxu0 %v849
  %3196 = vmatprep.subr.mxu0 0.0
  %3197 = vmatpush1.msra.mxu0 %v850
  %3198 = vmatprep.subr.mxu0 0.0
  %3199 = vmatpush1.msra.mxu0 %v851
  %3200 = vmatprep.subr.mxu0 0.0
  %3201 = vmatpush1.msra.mxu0 %v852
  %3202 = vmatprep.subr.mxu0 0.0
  %3203 = vmatpush1.msra.mxu0 %v853
  %3204 = vmatprep.subr.mxu0 0.0
  %3205 = vmatpush1.msra.mxu0 %v854
  %3206 = vmatprep.subr.mxu0 0.0
  %3207 = vmatpush1.msra.mxu0 %v855
  %3208 = vmatprep.subr.mxu0 0.0
  %3209 = vmatpush1.msra.mxu0 %v856
  %3210 = vmatprep.subr.mxu0 0.0
  %3211 = vmatpush1.msra.mxu0 %v857
  %3212 = vmatprep.subr.mxu0 0.0
  %3213 = vmatpush1.msra.mxu0 %v858
  %3214 = vmatprep.subr.mxu0 0.0
  %3215 = vmatpush1.msra.mxu0 %v859
  %3216 = vmatprep.subr.mxu0 0.0
  %3217 = vmatpush1.msra.mxu0 %v860
  %3218 = vmatprep.subr.mxu0 0.0
  %3219 = vmatpush1.msra.mxu0 %v861
  %3220 = vmatprep.subr.mxu0 0.0
  %3221 = vmatpush1.msra.mxu0 %v862
  %3222 = vmatprep.subr.mxu0 0.0
  %3223 = vmatpush1.msra.mxu0 %v863
  %3224 = vmatprep.subr.mxu0 0.0
  %3225 = vmatpush1.msra.mxu0 %v864
  %3226 = vmatprep.subr.mxu0 0.0
  %3227 = vmatpush1.msra.mxu0 %v865
  %3228 = vmatprep.subr.mxu0 0.0
  %3229 = vmatpush1.msra.mxu0 %v866
  %3230 = vmatprep.subr.mxu0 0.0
  %3231 = vmatpush1.msra.mxu0 %v867
  %3232 = vmatprep.subr.mxu0 0.0
  %3233 = vmatpush1.msra.mxu0 %v868
  %3234 = vmatprep.subr.mxu0 0.0
  %3235 = vmatpush1.msra.mxu0 %v869
  %3236 = vmatprep.subr.mxu0 0.0
  %3237 = vmatpush1.msra.mxu0 %v870
  %3238 = vmatprep.subr.mxu0 0.0
  %3239 = vmatpush1.msra.mxu0 %v871
  %3240 = vmatprep.mubr.f32.mxu0 %v1310
  %3241 = vmatmul.mubr.f32.gmra.mrb[0].mxu0 %v1308
  %v3242 = vpop.f32.mrb[0].mxu0
  %v3243 = vadd.f32 %v3173, %v3242
  %v3244 = vpop.f32.mrb[0].mxu0
  %3245 = vdwg.mxu0
  %3246 = vmatprep.subr.mxu0 0.0
  %3247 = vmatpush1.msra.mxu0 %v872
  %3248 = vmatprep.subr.mxu0 0.0
  %3249 = vmatpush1.msra.mxu0 %v873
  %3250 = vmatprep.subr.mxu0 0.0
  %3251 = vmatpush1.msra.mxu0 %v874
  %3252 = vmatprep.subr.mxu0 0.0
  %3253 = vmatpush1.msra.mxu0 %v875
  %3254 = vmatprep.subr.mxu0 0.0
  %3255 = vmatpush1.msra.mxu0 %v876
  %3256 = vmatprep.subr.mxu0 0.0
  %3257 = vmatpush1.msra.mxu0 %v877
  %3258 = vmatprep.subr.mxu0 0.0
  %3259 = vmatpush1.msra.mxu0 %v878
  %3260 = vmatprep.subr.mxu0 0.0
  %3261 = vmatpush1.msra.mxu0 %v879
  %3262 = vmatprep.subr.mxu0 0.0
  %3263 = vmatpush1.msra.mxu0 %v880
  %3264 = vmatprep.subr.mxu0 0.0
  %3265 = vmatpush1.msra.mxu0 %v881
  %3266 = vmatprep.subr.mxu0 0.0
  %3267 = vmatpush1.msra.mxu0 %v882
  %3268 = vmatprep.subr.mxu0 0.0
  %3269 = vmatpush1.msra.mxu0 %v883
  %3270 = vmatprep.subr.mxu0 0.0
  %3271 = vmatpush1.msra.mxu0 %v884
  %3272 = vmatprep.subr.mxu0 0.0
  %3273 = vmatpush1.msra.mxu0 %v885
  %3274 = vmatprep.subr.mxu0 0.0
  %3275 = vmatpush1.msra.mxu0 %v886
  %3276 = vmatprep.subr.mxu0 0.0
  %3277 = vmatpush1.msra.mxu0 %v887
  %3278 = vmatprep.subr.mxu0 0.0
  %3279 = vmatpush1.msra.mxu0 %v888
  %3280 = vmatprep.subr.mxu0 0.0
  %3281 = vmatpush1.msra.mxu0 %v889
  %3282 = vmatprep.subr.mxu0 0.0
  %3283 = vmatpush1.msra.mxu0 %v890
  %3284 = vmatprep.subr.mxu0 0.0
  %3285 = vmatpush1.msra.mxu0 %v891
  %3286 = vmatprep.subr.mxu0 0.0
  %3287 = vmatpush1.msra.mxu0 %v892
  %3288 = vmatprep.subr.mxu0 0.0
  %3289 = vmatpush1.msra.mxu0 %v893
  %3290 = vmatprep.subr.mxu0 0.0
  %3291 = vmatpush1.msra.mxu0 %v894
  %3292 = vmatprep.subr.mxu0 0.0
  %3293 = vmatpush1.msra.mxu0 %v895
  %3294 = vmatprep.subr.mxu0 0.0
  %3295 = vmatpush1.msra.mxu0 %v896
  %3296 = vmatprep.subr.mxu0 0.0
  %3297 = vmatpush1.msra.mxu0 %v897
  %3298 = vmatprep.subr.mxu0 0.0
  %3299 = vmatpush1.msra.mxu0 %v898
  %3300 = vmatprep.subr.mxu0 0.0
  %3301 = vmatpush1.msra.mxu0 %v899
  %3302 = vmatprep.subr.mxu0 0.0
  %3303 = vmatpush1.msra.mxu0 %v900
  %3304 = vmatprep.subr.mxu0 0.0
  %3305 = vmatpush1.msra.mxu0 %v901
  %3306 = vmatprep.subr.mxu0 0.0
  %3307 = vmatpush1.msra.mxu0 %v902
  %3308 = vmatprep.subr.mxu0 0.0
  %3309 = vmatpush1.msra.mxu0 %v903
  %3310 = vmatprep.mubr.f32.mxu0 %v1326
  %3311 = vmatmul.mubr.f32.gmra.mrb[0].mxu0 %v1318
  %v3312 = vpop.f32.mrb[0].mxu0
  %v3313 = vadd.f32 %v3243, %v3312
  %v3314 = vpop.f32.mrb[0].mxu0
  %3315 = vdwg.mxu0
  %3316 = vmatprep.subr.mxu0 0.0
  %3317 = vmatpush1.msra.mxu0 %v904
  %3318 = vmatprep.subr.mxu0 0.0
  %3319 = vmatpush1.msra.mxu0 %v905
  %3320 = vmatprep.subr.mxu0 0.0
  %3321 = vmatpush1.msra.mxu0 %v906
  %3322 = vmatprep.subr.mxu0 0.0
  %3323 = vmatpush1.msra.mxu0 %v907
  %3324 = vmatprep.subr.mxu0 0.0
  %3325 = vmatpush1.msra.mxu0 %v908
  %3326 = vmatprep.subr.mxu0 0.0
  %3327 = vmatpush1.msra.mxu0 %v909
  %3328 = vmatprep.subr.mxu0 0.0
  %3329 = vmatpush1.msra.mxu0 %v910
  %3330 = vmatprep.subr.mxu0 0.0
  %3331 = vmatpush1.msra.mxu0 %v911
  %3332 = vmatprep.subr.mxu0 0.0
  %3333 = vmatpush1.msra.mxu0 %v912
  %3334 = vmatprep.subr.mxu0 0.0
  %3335 = vmatpush1.msra.mxu0 %v913
  %3336 = vmatprep.subr.mxu0 0.0
  %3337 = vmatpush1.msra.mxu0 %v914
  %3338 = vmatprep.subr.mxu0 0.0
  %3339 = vmatpush1.msra.mxu0 %v915
  %3340 = vmatprep.subr.mxu0 0.0
  %3341 = vmatpush1.msra.mxu0 %v916
  %3342 = vmatprep.subr.mxu0 0.0
  %3343 = vmatpush1.msra.mxu0 %v917
  %3344 = vmatprep.subr.mxu0 0.0
  %3345 = vmatpush1.msra.mxu0 %v918
  %3346 = vmatprep.subr.mxu0 0.0
  %3347 = vmatpush1.msra.mxu0 %v919
  %3348 = vmatprep.subr.mxu0 0.0
  %3349 = vmatpush1.msra.mxu0 %v920
  %3350 = vmatprep.subr.mxu0 0.0
  %3351 = vmatpush1.msra.mxu0 %v921
  %3352 = vmatprep.subr.mxu0 0.0
  %3353 = vmatpush1.msra.mxu0 %v922
  %3354 = vmatprep.subr.mxu0 0.0
  %3355 = vmatpush1.msra.mxu0 %v923
  %3356 = vmatprep.subr.mxu0 0.0
  %3357 = vmatpush1.msra.mxu0 %v924
  %3358 = vmatprep.subr.mxu0 0.0
  %3359 = vmatpush1.msra.mxu0 %v925
  %3360 = vmatprep.subr.mxu0 0.0
  %3361 = vmatpush1.msra.mxu0 %v926
  %3362 = vmatprep.subr.mxu0 0.0
  %3363 = vmatpush1.msra.mxu0 %v927
  %3364 = vmatprep.subr.mxu0 0.0
  %3365 = vmatpush1.msra.mxu0 %v928
  %3366 = vmatprep.subr.mxu0 0.0
  %3367 = vmatpush1.msra.mxu0 %v929
  %3368 = vmatprep.subr.mxu0 0.0
  %3369 = vmatpush1.msra.mxu0 %v930
  %3370 = vmatprep.subr.mxu0 0.0
  %3371 = vmatpush1.msra.mxu0 %v931
  %3372 = vmatprep.subr.mxu0 0.0
  %3373 = vmatpush1.msra.mxu0 %v932
  %3374 = vmatprep.subr.mxu0 0.0
  %3375 = vmatpush1.msra.mxu0 %v933
  %3376 = vmatprep.subr.mxu0 0.0
  %3377 = vmatpush1.msra.mxu0 %v934
  %3378 = vmatprep.subr.mxu0 0.0
  %3379 = vmatpush1.msra.mxu0 %v935
  %3380 = vmatprep.mubr.f32.mxu0 %v1327
  %3381 = vmatmul.mubr.f32.gmra.mrb[0].mxu0 %v1325
  %v3382 = vpop.f32.mrb[0].mxu0
  %v3383 = vadd.f32 %v3313, %v3382
  %v3384 = vpop.f32.mrb[0].mxu0
  %3385 = vdwg.mxu0
  %3386 = vmatprep.subr.mxu0 0.0
  %3387 = vmatpush1.msra.mxu0 %v936
  %3388 = vmatprep.subr.mxu0 0.0
  %3389 = vmatpush1.msra.mxu0 %v937
  %3390 = vmatprep.subr.mxu0 0.0
  %3391 = vmatpush1.msra.mxu0 %v938
  %3392 = vmatprep.subr.mxu0 0.0
  %3393 = vmatpush1.msra.mxu0 %v939
  %3394 = vmatprep.subr.mxu0 0.0
  %3395 = vmatpush1.msra.mxu0 %v940
  %3396 = vmatprep.subr.mxu0 0.0
  %3397 = vmatpush1.msra.mxu0 %v941
  %3398 = vmatprep.subr.mxu0 0.0
  %3399 = vmatpush1.msra.mxu0 %v942
  %3400 = vmatprep.subr.mxu0 0.0
  %3401 = vmatpush1.msra.mxu0 %v943
  %3402 = vmatprep.subr.mxu0 0.0
  %3403 = vmatpush1.msra.mxu0 %v944
  %3404 = vmatprep.subr.mxu0 0.0
  %3405 = vmatpush1.msra.mxu0 %v945
  %3406 = vmatprep.subr.mxu0 0.0
  %3407 = vmatpush1.msra.mxu0 %v946
  %3408 = vmatprep.subr.mxu0 0.0
  %3409 = vmatpush1.msra.mxu0 %v947
  %3410 = vmatprep.subr.mxu0 0.0
  %3411 = vmatpush1.msra.mxu0 %v948
  %3412 = vmatprep.subr.mxu0 0.0
  %3413 = vmatpush1.msra.mxu0 %v949
  %3414 = vmatprep.subr.mxu0 0.0
  %3415 = vmatpush1.msra.mxu0 %v950
  %3416 = vmatprep.subr.mxu0 0.0
  %3417 = vmatpush1.msra.mxu0 %v951
  %3418 = vmatprep.subr.mxu0 0.0
  %3419 = vmatpush1.msra.mxu0 %v952
  %3420 = vmatprep.subr.mxu0 0.0
  %3421 = vmatpush1.msra.mxu0 %v953
  %3422 = vmatprep.subr.mxu0 0.0
  %3423 = vmatpush1.msra.mxu0 %v954
  %3424 = vmatprep.subr.mxu0 0.0
  %3425 = vmatpush1.msra.mxu0 %v955
  %3426 = vmatprep.subr.mxu0 0.0
  %3427 = vmatpush1.msra.mxu0 %v956
  %3428 = vmatprep.subr.mxu0 0.0
  %3429 = vmatpush1.msra.mxu0 %v957
  %3430 = vmatprep.subr.mxu0 0.0
  %3431 = vmatpush1.msra.mxu0 %v958
  %3432 = vmatprep.subr.mxu0 0.0
  %3433 = vmatpush1.msra.mxu0 %v959
  %3434 = vmatprep.subr.mxu0 0.0
  %3435 = vmatpush1.msra.mxu0 %v960
  %3436 = vmatprep.subr.mxu0 0.0
  %3437 = vmatpush1.msra.mxu0 %v961
  %3438 = vmatprep.subr.mxu0 0.0
  %3439 = vmatpush1.msra.mxu0 %v962
  %3440 = vmatprep.subr.mxu0 0.0
  %3441 = vmatpush1.msra.mxu0 %v963
  %3442 = vmatprep.subr.mxu0 0.0
  %3443 = vmatpush1.msra.mxu0 %v964
  %3444 = vmatprep.subr.mxu0 0.0
  %3445 = vmatpush1.msra.mxu0 %v965
  %3446 = vmatprep.subr.mxu0 0.0
  %3447 = vmatpush1.msra.mxu0 %v966
  %3448 = vmatprep.subr.mxu0 0.0
  %3449 = vmatpush1.msra.mxu0 %v967
  %3450 = vmatprep.mubr.f32.mxu0 %v1343
  %3451 = vmatmul.mubr.f32.gmra.mrb[0].mxu0 %v1335
  %v3452 = vpop.f32.mrb[0].mxu0
  %v3453 = vadd.f32 %v3383, %v3452
  %v3454 = vpop.f32.mrb[0].mxu0
  %3455 = vdwg.mxu0
  %3456 = vmatprep.subr.mxu0 0.0
  %3457 = vmatpush1.msra.mxu0 %v968
  %3458 = vmatprep.subr.mxu0 0.0
  %3459 = vmatpush1.msra.mxu0 %v969
  %3460 = vmatprep.subr.mxu0 0.0
  %3461 = vmatpush1.msra.mxu0 %v970
  %3462 = vmatprep.subr.mxu0 0.0
  %3463 = vmatpush1.msra.mxu0 %v971
  %3464 = vmatprep.subr.mxu0 0.0
  %3465 = vmatpush1.msra.mxu0 %v972
  %3466 = vmatprep.subr.mxu0 0.0
  %3467 = vmatpush1.msra.mxu0 %v973
  %3468 = vmatprep.subr.mxu0 0.0
  %3469 = vmatpush1.msra.mxu0 %v974
  %3470 = vmatprep.subr.mxu0 0.0
  %3471 = vmatpush1.msra.mxu0 %v975
  %3472 = vmatprep.subr.mxu0 0.0
  %3473 = vmatpush1.msra.mxu0 %v976
  %3474 = vmatprep.subr.mxu0 0.0
  %3475 = vmatpush1.msra.mxu0 %v977
  %3476 = vmatprep.subr.mxu0 0.0
  %3477 = vmatpush1.msra.mxu0 %v978
  %3478 = vmatprep.subr.mxu0 0.0
  %3479 = vmatpush1.msra.mxu0 %v979
  %3480 = vmatprep.subr.mxu0 0.0
  %3481 = vmatpush1.msra.mxu0 %v980
  %3482 = vmatprep.subr.mxu0 0.0
  %3483 = vmatpush1.msra.mxu0 %v981
  %3484 = vmatprep.subr.mxu0 0.0
  %3485 = vmatpush1.msra.mxu0 %v982
  %3486 = vmatprep.subr.mxu0 0.0
  %3487 = vmatpush1.msra.mxu0 %v983
  %3488 = vmatprep.subr.mxu0 0.0
  %3489 = vmatpush1.msra.mxu0 %v984
  %3490 = vmatprep.subr.mxu0 0.0
  %3491 = vmatpush1.msra.mxu0 %v985
  %3492 = vmatprep.subr.mxu0 0.0
  %3493 = vmatpush1.msra.mxu0 %v986
  %3494 = vmatprep.subr.mxu0 0.0
  %3495 = vmatpush1.msra.mxu0 %v987
  %3496 = vmatprep.subr.mxu0 0.0
  %3497 = vmatpush1.msra.mxu0 %v988
  %3498 = vmatprep.subr.mxu0 0.0
  %3499 = vmatpush1.msra.mxu0 %v989
  %3500 = vmatprep.subr.mxu0 0.0
  %3501 = vmatpush1.msra.mxu0 %v990
  %3502 = vmatprep.subr.mxu0 0.0
  %3503 = vmatpush1.msra.mxu0 %v991
  %3504 = vmatprep.subr.mxu0 0.0
  %3505 = vmatpush1.msra.mxu0 %v992
  %3506 = vmatprep.subr.mxu0 0.0
  %3507 = vmatpush1.msra.mxu0 %v993
  %3508 = vmatprep.subr.mxu0 0.0
  %3509 = vmatpush1.msra.mxu0 %v994
  %3510 = vmatprep.subr.mxu0 0.0
  %3511 = vmatpush1.msra.mxu0 %v995
  %3512 = vmatprep.subr.mxu0 0.0
  %3513 = vmatpush1.msra.mxu0 %v996
  %3514 = vmatprep.subr.mxu0 0.0
  %3515 = vmatpush1.msra.mxu0 %v997
  %3516 = vmatprep.subr.mxu0 0.0
  %3517 = vmatpush1.msra.mxu0 %v998
  %3518 = vmatprep.subr.mxu0 0.0
  %3519 = vmatpush1.msra.mxu0 %v999
  %3520 = vmatprep.mubr.f32.mxu0 %v1344
  %3521 = vmatmul.mubr.f32.gmra.mrb[0].mxu0 %v1342
  %v3522 = vpop.f32.mrb[0].mxu0
  %v3523 = vadd.f32 %v3453, %v3522
  %v3524 = vpop.f32.mrb[0].mxu0
  %3525 = vdwg.mxu0
  %3526 = vmatprep.subr.mxu0 0.0
  %3527 = vmatpush1.msra.mxu0 %v1000
  %3528 = vmatprep.subr.mxu0 0.0
  %3529 = vmatpush1.msra.mxu0 %v1001
  %3530 = vmatprep.subr.mxu0 0.0
  %3531 = vmatpush1.msra.mxu0 %v1002
  %3532 = vmatprep.subr.mxu0 0.0
  %3533 = vmatpush1.msra.mxu0 %v1003
  %3534 = vmatprep.subr.mxu0 0.0
  %3535 = vmatpush1.msra.mxu0 %v1004
  %3536 = vmatprep.subr.mxu0 0.0
  %3537 = vmatpush1.msra.mxu0 %v1005
  %3538 = vmatprep.subr.mxu0 0.0
  %3539 = vmatpush1.msra.mxu0 %v1006
  %3540 = vmatprep.subr.mxu0 0.0
  %3541 = vmatpush1.msra.mxu0 %v1007
  %3542 = vmatprep.subr.mxu0 0.0
  %3543 = vmatpush1.msra.mxu0 %v1008
  %3544 = vmatprep.subr.mxu0 0.0
  %3545 = vmatpush1.msra.mxu0 %v1009
  %3546 = vmatprep.subr.mxu0 0.0
  %3547 = vmatpush1.msra.mxu0 %v1010
  %3548 = vmatprep.subr.mxu0 0.0
  %3549 = vmatpush1.msra.mxu0 %v1011
  %3550 = vmatprep.subr.mxu0 0.0
  %3551 = vmatpush1.msra.mxu0 %v1012
  %3552 = vmatprep.subr.mxu0 0.0
  %3553 = vmatpush1.msra.mxu0 %v1013
  %3554 = vmatprep.subr.mxu0 0.0
  %3555 = vmatpush1.msra.mxu0 %v1014
  %3556 = vmatprep.subr.mxu0 0.0
  %3557 = vmatpush1.msra.mxu0 %v1015
  %3558 = vmatprep.subr.mxu0 0.0
  %3559 = vmatpush1.msra.mxu0 %v1016
  %3560 = vmatprep.subr.mxu0 0.0
  %3561 = vmatpush1.msra.mxu0 %v1017
  %3562 = vmatprep.subr.mxu0 0.0
  %3563 = vmatpush1.msra.mxu0 %v1018
  %3564 = vmatprep.subr.mxu0 0.0
  %3565 = vmatpush1.msra.mxu0 %v1019
  %3566 = vmatprep.subr.mxu0 0.0
  %3567 = vmatpush1.msra.mxu0 %v1020
  %3568 = vmatprep.subr.mxu0 0.0
  %3569 = vmatpush1.msra.mxu0 %v1021
  %3570 = vmatprep.subr.mxu0 0.0
  %3571 = vmatpush1.msra.mxu0 %v1022
  %3572 = vmatprep.subr.mxu0 0.0
  %3573 = vmatpush1.msra.mxu0 %v1023
  %3574 = vmatprep.subr.mxu0 0.0
  %3575 = vmatpush1.msra.mxu0 %v1024
  %3576 = vmatprep.subr.mxu0 0.0
  %3577 = vmatpush1.msra.mxu0 %v1025
  %3578 = vmatprep.subr.mxu0 0.0
  %3579 = vmatpush1.msra.mxu0 %v1026
  %3580 = vmatprep.subr.mxu0 0.0
  %3581 = vmatpush1.msra.mxu0 %v1027
  %3582 = vmatprep.subr.mxu0 0.0
  %3583 = vmatpush1.msra.mxu0 %v1028
  %3584 = vmatprep.subr.mxu0 0.0
  %3585 = vmatpush1.msra.mxu0 %v1029
  %3586 = vmatprep.subr.mxu0 0.0
  %3587 = vmatpush1.msra.mxu0 %v1030
  %3588 = vmatprep.subr.mxu0 0.0
  %3589 = vmatpush1.msra.mxu0 %v1031
  %3590 = vmatprep.mubr.f32.mxu0 %v1360
  %3591 = vmatmul.mubr.f32.gmra.mrb[0].mxu0 %v1352
  %v3592 = vpop.f32.mrb[0].mxu0
  %v3593 = vadd.f32 %v3523, %v3592
  %v3594 = vpop.f32.mrb[0].mxu0
  %3595 = vdwg.mxu0
  %3596 = vmatprep.subr.mxu0 0.0
  %3597 = vmatpush1.msra.mxu0 %v1032
  %3598 = vmatprep.subr.mxu0 0.0
  %3599 = vmatpush1.msra.mxu0 %v1033
  %3600 = vmatprep.subr.mxu0 0.0
  %3601 = vmatpush1.msra.mxu0 %v1034
  %3602 = vmatprep.subr.mxu0 0.0
  %3603 = vmatpush1.msra.mxu0 %v1035
  %3604 = vmatprep.subr.mxu0 0.0
  %3605 = vmatpush1.msra.mxu0 %v1036
  %3606 = vmatprep.subr.mxu0 0.0
  %3607 = vmatpush1.msra.mxu0 %v1037
  %3608 = vmatprep.subr.mxu0 0.0
  %3609 = vmatpush1.msra.mxu0 %v1038
  %3610 = vmatprep.subr.mxu0 0.0
  %3611 = vmatpush1.msra.mxu0 %v1039
  %3612 = vmatprep.subr.mxu0 0.0
  %3613 = vmatpush1.msra.mxu0 %v1040
  %3614 = vmatprep.subr.mxu0 0.0
  %3615 = vmatpush1.msra.mxu0 %v1041
  %3616 = vmatprep.subr.mxu0 0.0
  %3617 = vmatpush1.msra.mxu0 %v1042
  %3618 = vmatprep.subr.mxu0 0.0
  %3619 = vmatpush1.msra.mxu0 %v1043
  %3620 = vmatprep.subr.mxu0 0.0
  %3621 = vmatpush1.msra.mxu0 %v1044
  %3622 = vmatprep.subr.mxu0 0.0
  %3623 = vmatpush1.msra.mxu0 %v1045
  %3624 = vmatprep.subr.mxu0 0.0
  %3625 = vmatpush1.msra.mxu0 %v1046
  %3626 = vmatprep.subr.mxu0 0.0
  %3627 = vmatpush1.msra.mxu0 %v1047
  %3628 = vmatprep.subr.mxu0 0.0
  %3629 = vmatpush1.msra.mxu0 %v1048
  %3630 = vmatprep.subr.mxu0 0.0
  %3631 = vmatpush1.msra.mxu0 %v1049
  %3632 = vmatprep.subr.mxu0 0.0
  %3633 = vmatpush1.msra.mxu0 %v1050
  %3634 = vmatprep.subr.mxu0 0.0
  %3635 = vmatpush1.msra.mxu0 %v1051
  %3636 = vmatprep.subr.mxu0 0.0
  %3637 = vmatpush1.msra.mxu0 %v1052
  %3638 = vmatprep.subr.mxu0 0.0
  %3639 = vmatpush1.msra.mxu0 %v1053
  %3640 = vmatprep.subr.mxu0 0.0
  %3641 = vmatpush1.msra.mxu0 %v1054
  %3642 = vmatprep.subr.mxu0 0.0
  %3643 = vmatpush1.msra.mxu0 %v1055
  %3644 = vmatprep.subr.mxu0 0.0
  %3645 = vmatpush1.msra.mxu0 %v1056
  %3646 = vmatprep.subr.mxu0 0.0
  %3647 = vmatpush1.msra.mxu0 %v1057
  %3648 = vmatprep.subr.mxu0 0.0
  %3649 = vmatpush1.msra.mxu0 %v1058
  %3650 = vmatprep.subr.mxu0 0.0
  %3651 = vmatpush1.msra.mxu0 %v1059
  %3652 = vmatprep.subr.mxu0 0.0
  %3653 = vmatpush1.msra.mxu0 %v1060
  %3654 = vmatprep.subr.mxu0 0.0
  %3655 = vmatpush1.msra.mxu0 %v1061
  %3656 = vmatprep.subr.mxu0 0.0
  %3657 = vmatpush1.msra.mxu0 %v1062
  %3658 = vmatprep.subr.mxu0 0.0
  %3659 = vmatpush1.msra.mxu0 %v1063
  %3660 = vmatprep.mubr.f32.mxu0 %v1361
  %3661 = vmatmul.mubr.f32.gmra.mrb[0].mxu0 %v1359
  %v3662 = vpop.f32.mrb[0].mxu0
  %v3663 = vadd.f32 %v3593, %v3662
  %v3664 = vpop.f32.mrb[0].mxu0
  %3665 = vdwg.mxu0
  %v3666 = vld [vmem:[%s3] sm:$0xff]
  %v3667 = vld [vmem:[%s3 + $0x8] sm:$0xff]
  %v3668 = vld [vmem:[%s3 + $0x10] sm:$0xff]
  %v3669 = vld [vmem:[%s3 + $0x18] sm:$0xff]
  %v3670 = vld [vmem:[%s3 + $0x20] sm:$0xff]
  %v3671 = vld [vmem:[%s3 + $0x28] sm:$0xff]
  %v3672 = vld [vmem:[%s3 + $0x30] sm:$0xff]
  %v3673 = vld [vmem:[%s3 + $0x38] sm:$0xff]
  %v3674 = vld [vmem:[#allocation3] sm:$0x1]
  %v3676 = vlaneseq
  %v3677 = vshrl.u32 %v3676, 7
  %v3678 = vsub.s32 0, %v3677
  %v3679 = vrot.slane %v3674, %v3678
  %3680 = vset.pattern.permute.xlu0 0
  %3681 = vperm.xlu0 %3680, %v3679
  %v3682 = vpop.permute.xlu0 %3681
  %vm3684 = vcmask 523264
  %v3686 = vsel %vm3684, %v3663, 0
  %3688 = vmatprep.subr.mxu0 0.0
  %3689 = vmatpush1.msra.mxu0 %v3666
  %3690 = vmatprep.subr.mxu0 0.0
  %3691 = vmatpush1.msra.mxu0 %v3667
  %3692 = vmatprep.subr.mxu0 0.0
  %3693 = vmatpush1.msra.mxu0 %v3668
  %3694 = vmatprep.subr.mxu0 0.0
  %3695 = vmatpush1.msra.mxu0 %v3669
  %3696 = vmatprep.subr.mxu0 0.0
  %3697 = vmatpush1.msra.mxu0 %v3670
  %3698 = vmatprep.subr.mxu0 0.0
  %3699 = vmatpush1.msra.mxu0 %v3671
  %3700 = vmatprep.subr.mxu0 0.0
  %3701 = vmatpush1.msra.mxu0 %v3672
  %3702 = vmatprep.subr.mxu0 0.0
  %3703 = vmatpush1.msra.mxu0 %v3673
  %3704 = vmatprep.subr.mxu0 0.0
  %3705 = vmatpush1.msra.mxu0 0.0
  %3706 = vmatprep.subr.mxu0 0.0
  %3707 = vmatpush1.msra.mxu0 0.0
  %3708 = vmatprep.subr.mxu0 0.0
  %3709 = vmatpush1.msra.mxu0 0.0
  %3710 = vmatprep.subr.mxu0 0.0
  %3711 = vmatpush1.msra.mxu0 0.0
  %3712 = vmatprep.subr.mxu0 0.0
  %3713 = vmatpush1.msra.mxu0 0.0
  %3714 = vmatprep.subr.mxu0 0.0
  %3715 = vmatpush1.msra.mxu0 0.0
  %3716 = vmatprep.subr.mxu0 0.0
  %3717 = vmatpush1.msra.mxu0 0.0
  %3718 = vmatprep.subr.mxu0 0.0
  %3719 = vmatpush1.msra.mxu0 0.0
  %3720 = vmatprep.subr.mxu0 0.0
  %3721 = vmatpush1.msra.mxu0 0.0
  %3722 = vmatprep.subr.mxu0 0.0
  %3723 = vmatpush1.msra.mxu0 0.0
  %3724 = vmatprep.subr.mxu0 0.0
  %3725 = vmatpush1.msra.mxu0 0.0
  %3726 = vmatprep.subr.mxu0 0.0
  %3727 = vmatpush1.msra.mxu0 0.0
  %3728 = vmatprep.subr.mxu0 0.0
  %3729 = vmatpush1.msra.mxu0 0.0
  %3730 = vmatprep.subr.mxu0 0.0
  %3731 = vmatpush1.msra.mxu0 0.0
  %3732 = vmatprep.subr.mxu0 0.0
  %3733 = vmatpush1.msra.mxu0 0.0
  %3734 = vmatprep.subr.mxu0 0.0
  %3735 = vmatpush1.msra.mxu0 0.0
  %3736 = vmatprep.subr.mxu0 0.0
  %3737 = vmatpush1.msra.mxu0 0.0
  %3738 = vmatprep.subr.mxu0 0.0
  %3739 = vmatpush1.msra.mxu0 0.0
  %3740 = vmatprep.subr.mxu0 0.0
  %3741 = vmatpush1.msra.mxu0 0.0
  %3742 = vmatprep.subr.mxu0 0.0
  %3743 = vmatpush1.msra.mxu0 0.0
  %3744 = vmatprep.subr.mxu0 0.0
  %3745 = vmatpush1.msra.mxu0 0.0
  %3746 = vmatprep.subr.mxu0 0.0
  %3747 = vmatpush1.msra.mxu0 0.0
  %3748 = vmatprep.subr.mxu0 0.0
  %3749 = vmatpush1.msra.mxu0 0.0
  %3750 = vmatprep.subr.mxu0 0.0
  %3751 = vmatpush1.msra.mxu0 0.0
  %3752 = vmatprep.mubr.f32.mxu0 0.0
  %3753 = vmatmul.mubr.f32.gmra.mrb[0].mxu0 %v3686
  %v3754 = vpop.f32.mrb[0].mxu0
  %v3755 = vadd.f32 %v3682, %v3754
  %v3756 = vpop.f32.mrb[0].mxu0
  %3757 = vdwg.mxu0
  %vm3758 = vcmask 517120
  %3759 = vst.msk [vmem:[%s5] sm:$0x3] %vm3758, %v3755
  // Predicated region
  $region22: #{redundant_decoder_forward.3} parent=0 // pred_check
    _
  $region23: #{redundant_decoder_forward.3} parent=0 // pred_check_branch
    %3761 = sbr.rel (0) target = $region25
  $region24: #{redundant_decoder_forward.3} parent=0 // pred_region
    _
  $region25: #{redundant_decoder_forward.3} parent=0 // pred_fallthru
    _
  // Predicated region
  $region26: #{redundant_decoder_forward.3} parent=0 // pred_check
    _
  $region27: #{redundant_decoder_forward.3} parent=0 // pred_check_branch
    %3763 = sbr.rel (0) target = $region29
  $region28: #{redundant_decoder_forward.3} parent=0 // pred_region
    _
  $region29: #{redundant_decoder_forward.3} parent=0 // pred_fallthru
    _

</llo_original>
